<compile_context>
chip_gen: v7x
topology: tpu7x:2x2x1
jax: 0.10.0
libtpu: 0.0.40
codegen_flags: <defaults>
</compile_context>

<pallas_src>
import functools
import math

import jax
import jax.numpy as jnp
from jax import lax
from jax.experimental import pallas as pl
from jax.experimental.pallas import tpu as pltpu


def _round_up(n, m):
    return ((n + m - 1) // m) * m


def _vmem_capacity_bytes():
    """Per-core VMEM capacity; falls back to the smallest (v7x, 64 MiB/TC)."""
    try:
        return int(pltpu.get_tpu_info().vmem_capacity_bytes)
    except Exception:
        return 64 * 1024 * 1024


def _choose_tiling(n_frames, Ho, Wo, Hp, Wp, c_in_p, c_out_p, kh, kw,
                   x_itemsize, out_itemsize, vmem_budget):
    """Pick (FB frames per step, RT output rows per step).

    Two regimes:
      * large frames : FB = 1, RT = largest divisor of Ho keeping the matmul
        M-dim (RT*Wo) and the streamed f32 dot result bounded.
      * small frames : RT = Ho (whole frame) and FB > 1 frames are batched so
        the MXU M-dim stays large and the per-grid-step overhead is amortized.
    """
    K = kh * kw * c_in_p
    # Keep the f32 dot result <= ~256 KiB (it is produced by one dot and
    # immediately consumed) and the im2col scratch <= ~4 MiB.
    m_cap = max(Wo, (256 * 1024) // (4 * c_out_p))
    m_cap = max(Wo, min(m_cap, (4 * 1024 * 1024) // (2 * K)))

    rt = 1
    for cand in range(1, Ho + 1):
        if Ho % cand == 0 and cand * Wo <= m_cap:
            rt = cand

    fb = 1
    if rt == Ho:
        frame_bytes = (Hp * Wp * c_in_p * x_itemsize
                       + Ho * Wo * c_out_p * out_itemsize)
        for cand in range(1, n_frames + 1):
            if cand * Ho * Wo > m_cap:
                break
            col_bytes = cand * Ho * Wo * K * 2
            if 2 * cand * frame_bytes + col_bytes > vmem_budget:
                break
            fb = cand
    return fb, rt


# TODO(synk): groups > 1 not implemented (reference module default is groups=1).
def _tada_kernel(x_ref, *rest, kh, kw, sh, sw, dh, dw, rt, Wo, cal_dim):
    """One grid step = FB frames x RT output rows.

    x_ref  : (FB, Hp, Wp, Cin_p)       bf16 (alpha-prescaled for 'cin')
    a_ref  : (FB, 1, Cout_p)           f32  ('cout' only)
    w_ref  : (kh*kw*Cin_p, Cout_p)     bf16 tap-major im2col weight (resident)
    b_ref  : (1, Cout_p)               f32  (resident)
    o_ref  : (FB, RT, Wo, Cout_p)
    col_ref: (FB*RT*Wo, kh*kw*Cin_p)   bf16 VMEM im2col staging scratch
    """
    if cal_dim == 'cout':
        a_ref, w_ref, b_ref, o_ref, col_ref = rest
    else:
        a_ref = None
        w_ref, b_ref, o_ref, col_ref = rest

    fb = o_ref.shape[0]
    c_in = x_ref.shape[-1]
    c_out = o_ref.shape[-1]
    m = fb * rt * Wo

    r = pl.program_id(1)
    r0 = r * (rt * sh)                      # first padded input row of this chunk
    if (rt * sh) % 8 == 0:
        r0 = pl.multiple_of(r0, 8)

    row_span = (rt - 1) * sh + 1
    col_span = (Wo - 1) * sw + 1

    # Stage im2col patches into VMEM scratch: each tap is one lane-dense store
    # of an (m, Cin_p) slab read directly from the input ref (no full-block
    # value is ever held live).  The contraction then runs as a single deep
    # MXU matmul with K = kh*kw*Cin_p, so tap accumulation stays in the MXU.
    for i in range(kh):
        for j in range(kw):
            tap = i * kw + j
            patch = x_ref[:, pl.ds(r0 + i * dh, row_span),
                          pl.ds(j * dw, col_span), :]
            if sh > 1 or sw > 1:
                patch = patch[:, ::sh, ::sw, :]
            col_ref[:, tap * c_in:(tap + 1) * c_in] = patch.reshape(m, c_in)

    out = jnp.dot(col_ref[...], w_ref[...], preferred_element_type=jnp.float32)
    out = out.reshape(fb, rt, Wo, c_out)    # single reshape, needed for the store
    if cal_dim == 'cout':
        # conv(x, diag(a) @ W) == a * conv(x, W): one VPU scale on the result.
        out = out * a_ref[...].reshape(fb, 1, 1, c_out)
    out = out + b_ref[...].reshape(1, 1, 1, c_out)
    o_ref[...] = out.astype(o_ref.dtype)


@functools.partial(jax.jit,
                   static_argnames=("stride", "padding", "dilation", "cal_dim"))
def tada_conv2d(x, alpha, weight, bias, *, stride=(1, 1), padding=(1, 1),
                dilation=(1, 1), cal_dim='cin'):
    """Pallas TAdaConv2d forward.

    x:      (B, C_in, T, H, W)
    alpha:  (B, C_cal, T, 1, 1)  with C_cal = C_in ('cin') or C_out ('cout')
    weight: (1, 1, C_out, C_in, kh, kw)
    bias:   (C_out,) or None
    returns (B, C_out, T, Ho, Wo)
    """
    b, c_in, t, h, w = x.shape
    _, _, c_out, c_in_w, kh, kw = weight.shape
    assert c_in_w == c_in, "groups > 1 not supported"
    assert cal_dim in ('cin', 'cout')
    assert alpha.shape[1] == (c_in if cal_dim == 'cin' else c_out)
    sh, sw = stride
    ph, pw = padding
    dh, dw = dilation
    Ho = (h + 2 * ph - dh * (kh - 1) - 1) // sh + 1
    Wo = (w + 2 * pw - dw * (kw - 1) - 1) // sw + 1
    Hp, Wp = h + 2 * ph, w + 2 * pw

    # Lane-dense channel padding (unmasked stores, full MXU contraction/N).
    c_in_p = _round_up(c_in, 128)
    c_out_p = _round_up(c_out, 128)
    K = kh * kw * c_in_p

    out_dtype = x.dtype
    out_itemsize = jnp.dtype(out_dtype).itemsize

    # Chip-aware VMEM sizing: tight on v7x (64 MiB/TC), loose on v5e/v6e (128 MiB).
    vmem_cap = _vmem_capacity_bytes()
    vmem_limit = min(int(vmem_cap * 3 // 4), 100 * 1024 * 1024)
    w_bytes = K * c_out_p * 2
    vmem_budget = max(vmem_limit - 2 * w_bytes - 4 * 1024 * 1024, 4 * 1024 * 1024)

    fb, rt = _choose_tiling(b * t, Ho, Wo, Hp, Wp, c_in_p, c_out_p, kh, kw,
                            2, out_itemsize, vmem_budget)
    fb = min(fb, b * t)
    n_blocks = pl.cdiv(b * t, fb)
    n_pad = n_blocks * fb          # frames zero-padded so fb need not divide B*T

    # ---- layout glue (one fused XLA pass under jit) ----
    if cal_dim == 'cin':
        # Fold alpha into the input so every frame shares the base weight and
        # the kernel does no per-tap calibration work; fuses with the
        # transpose/pad/cast pass below (no extra HBM traffic).
        x = x * alpha                                 # broadcast over (H, W)
    x_bt = jnp.transpose(x, (0, 2, 3, 4, 1)).reshape(b * t, h, w, c_in)
    x_bt = jnp.pad(x_bt, ((0, n_pad - b * t), (ph, ph), (pw, pw),
                          (0, c_in_p - c_in))).astype(jnp.bfloat16)
    # TODO(synk): move the H/W halo zero-fill into the kernel (DMA the unpadded
    # frame and zero a scratch border) to shave wrapper-side HBM traffic.

    # weight (1,1,C_out,C_in,kh,kw) -> tap-major (kh*kw*C_in_p, C_out_p), bf16.
    w_k = jnp.transpose(weight[0, 0], (2, 3, 1, 0))   # (kh, kw, C_in, C_out)
    w_k = jnp.pad(w_k, ((0, 0), (0, 0), (0, c_in_p - c_in), (0, c_out_p - c_out)))
    w_k = w_k.reshape(K, c_out_p).astype(jnp.bfloat16)

    if bias is None:
        bias = jnp.zeros((c_out,), jnp.float32)
    b_k = jnp.pad(bias.astype(jnp.float32), (0, c_out_p - c_out)).reshape(1, c_out_p)

    inputs = [x_bt]
    in_specs = [pl.BlockSpec((fb, Hp, Wp, c_in_p), lambda i, r: (i, 0, 0, 0))]
    if cal_dim == 'cout':
        a_bt = jnp.transpose(alpha[..., 0, 0], (0, 2, 1)).reshape(b * t, 1, c_out)
        a_bt = jnp.pad(a_bt, ((0, n_pad - b * t), (0, 0),
                              (0, c_out_p - c_out))).astype(jnp.float32)
        inputs.append(a_bt)
        in_specs.append(pl.BlockSpec((fb, 1, c_out_p), lambda i, r: (i, 0, 0)))
    inputs += [w_k, b_k]
    # Shared operands: constant index_map -> copied once, resident.
    # TODO(synk): single-buffer these via pipeline_mode=pl.Buffered(1) to save a
    # few MiB on v7x once that path is validated on all generations.
    in_specs += [
        pl.BlockSpec((K, c_out_p), lambda i, r: (0, 0)),
        pl.BlockSpec((1, c_out_p), lambda i, r: (0, 0)),
    ]

    kernel = functools.partial(
        _tada_kernel, kh=kh, kw=kw, sh=sh, sw=sw, dh=dh, dw=dw,
        rt=rt, Wo=Wo, cal_dim=cal_dim)

    out_bt = pl.pallas_call(
        kernel,
        out_shape=jax.ShapeDtypeStruct((n_pad, Ho, Wo, c_out_p), out_dtype),
        grid_spec=pltpu.PrefetchScalarGridSpec(
            num_scalar_prefetch=0,
            grid=(n_blocks, Ho // rt),
            in_specs=in_specs,
            out_specs=pl.BlockSpec((fb, rt, Wo, c_out_p),
                                   lambda i, r: (i, r, 0, 0)),
            scratch_shapes=[pltpu.VMEM((fb * rt * Wo, K), jnp.bfloat16)],
        ),
        compiler_params=pltpu.CompilerParams(
            dimension_semantics=("parallel", "parallel"),
            vmem_limit_bytes=vmem_limit,
        ),
    )(*inputs)

    # Drop frame/channel padding; back to (B, C_out, T, Ho, Wo).
    out = out_bt[:b * t, :, :, :c_out].reshape(b, t, Ho, Wo, c_out)
    return out.transpose(0, 4, 1, 2, 3)


def tada_conv2d_ref(x, alpha, weight, bias, *, stride=(1, 1), padding=(1, 1),
                    dilation=(1, 1), cal_dim='cin'):
    """Pure-JAX reference mirroring the PyTorch forward (groups=1)."""
    b, c_in, t, h, w = x.shape
    _, _, c_out, _, kh, kw = weight.shape
    ph, pw = padding
    w_base = weight[0, 0]  # (C_out, C_in, kh, kw)
    outs = []
    for bi in range(b):
        for ti in range(t):
            a = alpha[bi, :, ti, 0, 0]
            if cal_dim == 'cin':
                w_cal = w_base * a[None, :, None, None]
            else:
                w_cal = w_base * a[:, None, None, None]
            xi = x[bi, :, ti][None]  # (1, C_in, H, W)
            o = lax.conv_general_dilated(
                xi.astype(jnp.float32), w_cal.astype(jnp.float32),
                window_strides=stride, padding=[(ph, ph), (pw, pw)],
                rhs_dilation=dilation,
                dimension_numbers=('NCHW', 'OIHW', 'NCHW'))
            if bias is not None:
                o = o + bias[None, :, None, None]
            outs.append(o[0])
    Ho, Wo = outs[0].shape[-2:]
    out = jnp.stack(outs).reshape(b, t, c_out, Ho, Wo).transpose(0, 2, 1, 3, 4)
    return out.astype(x.dtype)


if __name__ == "__main__":
    KH = KW = 3
    STRIDE, PAD, DIL = (1, 1), (1, 1), (1, 1)
    key = jax.random.PRNGKey(0)

    # Two configs: small frames (frame-batching regime) and a slightly larger
    # frame (row-tiling regime), each checked for both calibration modes.
    for (B, C_IN, C_OUT, T, H, W) in [(2, 4, 8, 4, 8, 8),
                                      (1, 4, 8, 3, 24, 24)]:
        key, kx, ka, ka2, kw_, kb = jax.random.split(key, 6)
        x = jax.random.normal(kx, (B, C_IN, T, H, W), jnp.float32)
        # alpha ~ calibration weights, centered around 1.
        alpha_cin = 1.0 + 0.1 * jax.random.normal(ka, (B, C_IN, T, 1, 1), jnp.float32)
        alpha_cout = 1.0 + 0.1 * jax.random.normal(ka2, (B, C_OUT, T, 1, 1), jnp.float32)

        # Deterministic init mirroring the module (kaiming_uniform_, a=sqrt(5)).
        fan_in = C_OUT * C_IN * KH * KW
        bound = 1.0 / math.sqrt(fan_in)
        weight = jax.random.uniform(kw_, (1, 1, C_OUT, C_IN, KH, KW), jnp.float32,
                                    minval=-bound, maxval=bound)
        bias = jax.random.uniform(kb, (C_OUT,), jnp.float32,
                                  minval=-bound, maxval=bound)

        for cal_dim, a in (('cin', alpha_cin), ('cout', alpha_cout)):
            out = tada_conv2d(x, a, weight, bias, stride=STRIDE, padding=PAD,
                              dilation=DIL, cal_dim=cal_dim)
            out = jax.block_until_ready(out)
            ref = tada_conv2d_ref(x, a, weight, bias, stride=STRIDE, padding=PAD,
                                  dilation=DIL, cal_dim=cal_dim)
            assert out.shape == ref.shape, (cal_dim, out.shape, ref.shape)
            # bf16 matmul inputs (f32 accumulation) -> looser tolerance than f32.
            assert jnp.allclose(out, ref, rtol=3e-2, atol=3e-2), (
                cal_dim, (H, W), float(jnp.max(jnp.abs(out - ref))))

    print("KERNEL_OK")
</pallas_src>

<mosaic_0001>
module attributes {stable_mosaic.version = 11 : i64} {
  func.func @_tada_kernel(%arg0: i32, %arg1: i32, %arg2: memref<8x10x10x128xbf16, #tpu.memory_space<vmem>>, %arg3: memref<1152x128xbf16, #tpu.memory_space<vmem>>, %arg4: memref<1x128xf32, #tpu.memory_space<vmem>>, %arg5: memref<8x8x8x128xf32, #tpu.memory_space<vmem>>, %arg6: memref<512x1152xbf16, #tpu.memory_space<vmem>>) attributes {dimension_semantics = [#tpu.dimension_semantics<parallel>, #tpu.dimension_semantics<parallel>], iteration_bounds = array<i64: 1, 1>, scalar_prefetch = 0 : i64, scratch_operands = 1 : i64, tpu.core_type = #tpu.core_type<tc>, window_params = [{transform_indices = @transform_0, window_bounds = array<i64: 8, 10, 10, 128>}, {pipeline_mode = #tpu.pipeline_mode<synchronous>, transform_indices = @transform_1, window_bounds = array<i64: 1152, 128>}, {pipeline_mode = #tpu.pipeline_mode<synchronous>, transform_indices = @transform_2, window_bounds = array<i64: 1, 128>}, {transform_indices = @transform_3, window_bounds = array<i64: 8, 8, 8, 128>}]} {
    %c8_i32 = arith.constant 8 : i32
    %0 = arith.muli %arg1, %c8_i32 : i32
    %1 = tpu.assume_multiple %0, 8 : i32
    %c0_i32 = arith.constant 0 : i32
    %2 = arith.addi %1, %c0_i32 : i32
    %c0 = arith.constant 0 : index
    %3 = arith.index_cast %2 : i32 to index
    %c0_0 = arith.constant 0 : index
    %c0_1 = arith.constant 0 : index
    %4 = vector.load %arg2[%c0, %3, %c0_0, %c0_1] : memref<8x10x10x128xbf16, #tpu.memory_space<vmem>>, vector<8x8x8x128xbf16>
    %5 = vector.shape_cast %4 : vector<8x8x8x128xbf16> to vector<512x128xbf16>
    %c0_2 = arith.constant 0 : index
    %c0_3 = arith.constant 0 : index
    %6 = vector.load %arg6[%c0_2, %c0_3] : memref<512x1152xbf16, #tpu.memory_space<vmem>>, vector<512x128xbf16>
    tpu.vector_store %arg6[%c0_2, %c0_3], %5 {strides = array<i32>} : memref<512x1152xbf16, #tpu.memory_space<vmem>>, vector<512x128xbf16>,
    %c0_i32_4 = arith.constant 0 : i32
    %7 = arith.addi %1, %c0_i32_4 : i32
    %c0_5 = arith.constant 0 : index
    %8 = arith.index_cast %7 : i32 to index
    %c1 = arith.constant 1 : index
    %c0_6 = arith.constant 0 : index
    %9 = vector.load %arg2[%c0_5, %8, %c1, %c0_6] : memref<8x10x10x128xbf16, #tpu.memory_space<vmem>>, vector<8x8x8x128xbf16>
    %10 = vector.shape_cast %9 : vector<8x8x8x128xbf16> to vector<512x128xbf16>
    %c0_7 = arith.constant 0 : index
    %c128 = arith.constant 128 : index
    %11 = vector.load %arg6[%c0_7, %c128] : memref<512x1152xbf16, #tpu.memory_space<vmem>>, vector<512x128xbf16>
    tpu.vector_store %arg6[%c0_7, %c128], %10 {strides = array<i32>} : memref<512x1152xbf16, #tpu.memory_space<vmem>>, vector<512x128xbf16>,
    %c0_i32_8 = arith.constant 0 : i32
    %12 = arith.addi %1, %c0_i32_8 : i32
    %c0_9 = arith.constant 0 : index
    %13 = arith.index_cast %12 : i32 to index
    %c2 = arith.constant 2 : index
    %c0_10 = arith.constant 0 : index
    %14 = vector.load %arg2[%c0_9, %13, %c2, %c0_10] : memref<8x10x10x128xbf16, #tpu.memory_space<vmem>>, vector<8x8x8x128xbf16>
    %15 = vector.shape_cast %14 : vector<8x8x8x128xbf16> to vector<512x128xbf16>
    %c0_11 = arith.constant 0 : index
    %c256 = arith.constant 256 : index
    %16 = vector.load %arg6[%c0_11, %c256] : memref<512x1152xbf16, #tpu.memory_space<vmem>>, vector<512x128xbf16>
    tpu.vector_store %arg6[%c0_11, %c256], %15 {strides = array<i32>} : memref<512x1152xbf16, #tpu.memory_space<vmem>>, vector<512x128xbf16>,
    %c1_i32 = arith.constant 1 : i32
    %17 = arith.addi %1, %c1_i32 : i32
    %c0_12 = arith.constant 0 : index
    %18 = arith.index_cast %17 : i32 to index
    %c0_13 = arith.constant 0 : index
    %c0_14 = arith.constant 0 : index
    %19 = vector.load %arg2[%c0_12, %18, %c0_13, %c0_14] : memref<8x10x10x128xbf16, #tpu.memory_space<vmem>>, vector<8x8x8x128xbf16>
    %20 = vector.shape_cast %19 : vector<8x8x8x128xbf16> to vector<512x128xbf16>
    %c0_15 = arith.constant 0 : index
    %c384 = arith.constant 384 : index
    %21 = vector.load %arg6[%c0_15, %c384] : memref<512x1152xbf16, #tpu.memory_space<vmem>>, vector<512x128xbf16>
    tpu.vector_store %arg6[%c0_15, %c384], %20 {strides = array<i32>} : memref<512x1152xbf16, #tpu.memory_space<vmem>>, vector<512x128xbf16>,
    %c1_i32_16 = arith.constant 1 : i32
    %22 = arith.addi %1, %c1_i32_16 : i32
    %c0_17 = arith.constant 0 : index
    %23 = arith.index_cast %22 : i32 to index
    %c1_18 = arith.constant 1 : index
    %c0_19 = arith.constant 0 : index
    %24 = vector.load %arg2[%c0_17, %23, %c1_18, %c0_19] : memref<8x10x10x128xbf16, #tpu.memory_space<vmem>>, vector<8x8x8x128xbf16>
    %25 = vector.shape_cast %24 : vector<8x8x8x128xbf16> to vector<512x128xbf16>
    %c0_20 = arith.constant 0 : index
    %c512 = arith.constant 512 : index
    %26 = vector.load %arg6[%c0_20, %c512] : memref<512x1152xbf16, #tpu.memory_space<vmem>>, vector<512x128xbf16>
    tpu.vector_store %arg6[%c0_20, %c512], %25 {strides = array<i32>} : memref<512x1152xbf16, #tpu.memory_space<vmem>>, vector<512x128xbf16>,
    %c1_i32_21 = arith.constant 1 : i32
    %27 = arith.addi %1, %c1_i32_21 : i32
    %c0_22 = arith.constant 0 : index
    %28 = arith.index_cast %27 : i32 to index
    %c2_23 = arith.constant 2 : index
    %c0_24 = arith.constant 0 : index
    %29 = vector.load %arg2[%c0_22, %28, %c2_23, %c0_24] : memref<8x10x10x128xbf16, #tpu.memory_space<vmem>>, vector<8x8x8x128xbf16>
    %30 = vector.shape_cast %29 : vector<8x8x8x128xbf16> to vector<512x128xbf16>
    %c0_25 = arith.constant 0 : index
    %c640 = arith.constant 640 : index
    %31 = vector.load %arg6[%c0_25, %c640] : memref<512x1152xbf16, #tpu.memory_space<vmem>>, vector<512x128xbf16>
    tpu.vector_store %arg6[%c0_25, %c640], %30 {strides = array<i32>} : memref<512x1152xbf16, #tpu.memory_space<vmem>>, vector<512x128xbf16>,
    %c2_i32 = arith.constant 2 : i32
    %32 = arith.addi %1, %c2_i32 : i32
    %c0_26 = arith.constant 0 : index
    %33 = arith.index_cast %32 : i32 to index
    %c0_27 = arith.constant 0 : index
    %c0_28 = arith.constant 0 : index
    %34 = vector.load %arg2[%c0_26, %33, %c0_27, %c0_28] : memref<8x10x10x128xbf16, #tpu.memory_space<vmem>>, vector<8x8x8x128xbf16>
    %35 = vector.shape_cast %34 : vector<8x8x8x128xbf16> to vector<512x128xbf16>
    %c0_29 = arith.constant 0 : index
    %c768 = arith.constant 768 : index
    %36 = vector.load %arg6[%c0_29, %c768] : memref<512x1152xbf16, #tpu.memory_space<vmem>>, vector<512x128xbf16>
    tpu.vector_store %arg6[%c0_29, %c768], %35 {strides = array<i32>} : memref<512x1152xbf16, #tpu.memory_space<vmem>>, vector<512x128xbf16>,
    %c2_i32_30 = arith.constant 2 : i32
    %37 = arith.addi %1, %c2_i32_30 : i32
    %c0_31 = arith.constant 0 : index
    %38 = arith.index_cast %37 : i32 to index
    %c1_32 = arith.constant 1 : index
    %c0_33 = arith.constant 0 : index
    %39 = vector.load %arg2[%c0_31, %38, %c1_32, %c0_33] : memref<8x10x10x128xbf16, #tpu.memory_space<vmem>>, vector<8x8x8x128xbf16>
    %40 = vector.shape_cast %39 : vector<8x8x8x128xbf16> to vector<512x128xbf16>
    %c0_34 = arith.constant 0 : index
    %c896 = arith.constant 896 : index
    %41 = vector.load %arg6[%c0_34, %c896] : memref<512x1152xbf16, #tpu.memory_space<vmem>>, vector<512x128xbf16>
    tpu.vector_store %arg6[%c0_34, %c896], %40 {strides = array<i32>} : memref<512x1152xbf16, #tpu.memory_space<vmem>>, vector<512x128xbf16>,
    %c2_i32_35 = arith.constant 2 : i32
    %42 = arith.addi %1, %c2_i32_35 : i32
    %c0_36 = arith.constant 0 : index
    %43 = arith.index_cast %42 : i32 to index
    %c2_37 = arith.constant 2 : index
    %c0_38 = arith.constant 0 : index
    %44 = vector.load %arg2[%c0_36, %43, %c2_37, %c0_38] : memref<8x10x10x128xbf16, #tpu.memory_space<vmem>>, vector<8x8x8x128xbf16>
    %45 = vector.shape_cast %44 : vector<8x8x8x128xbf16> to vector<512x128xbf16>
    %c0_39 = arith.constant 0 : index
    %c1024 = arith.constant 1024 : index
    %46 = vector.load %arg6[%c0_39, %c1024] : memref<512x1152xbf16, #tpu.memory_space<vmem>>, vector<512x128xbf16>
    tpu.vector_store %arg6[%c0_39, %c1024], %45 {strides = array<i32>} : memref<512x1152xbf16, #tpu.memory_space<vmem>>, vector<512x128xbf16>,
    %c0_40 = arith.constant 0 : index
    %c0_41 = arith.constant 0 : index
    %47 = vector.load %arg6[%c0_40, %c0_41] : memref<512x1152xbf16, #tpu.memory_space<vmem>>, vector<512x1152xbf16>
    %c0_42 = arith.constant 0 : index
    %c0_43 = arith.constant 0 : index
    %48 = vector.load %arg3[%c0_42, %c0_43] : memref<1152x128xbf16, #tpu.memory_space<vmem>>, vector<1152x128xbf16>
    %cst = arith.constant dense<0.000000e+00> : vector<512x128xf32>
    %49 = tpu.matmul %47, %48, %cst {dimension_numbers = #tpu.dot_dimension_numbers<[1], [0], [0], [1], [0, 0, 1, 1], [], []>} : vector<512x1152xbf16>, vector<1152x128xbf16>, vector<512x128xf32> -> vector<512x128xf32>
    %50 = vector.shape_cast %49 : vector<512x128xf32> to vector<8x8x8x128xf32>
    %c0_44 = arith.constant 0 : index
    %c0_45 = arith.constant 0 : index
    %51 = vector.load %arg4[%c0_44, %c0_45] : memref<1x128xf32, #tpu.memory_space<vmem>>, vector<1x128xf32>
    %52 = vector.shape_cast %51 : vector<1x128xf32> to vector<1x1x1x128xf32>
    %53 = vector.broadcast %52 : vector<1x1x1x128xf32> to vector<8x8x8x128xf32>
    %54 = arith.addf %50, %53 : vector<8x8x8x128xf32>
    %c0_46 = arith.constant 0 : index
    %c0_47 = arith.constant 0 : index
    %c0_48 = arith.constant 0 : index
    %c0_49 = arith.constant 0 : index
    %55 = vector.load %arg5[%c0_46, %c0_47, %c0_48, %c0_49] : memref<8x8x8x128xf32, #tpu.memory_space<vmem>>, vector<8x8x8x128xf32>
    tpu.vector_store %arg5[%c0_46, %c0_47, %c0_48, %c0_49], %54 {strides = array<i32>} : memref<8x8x8x128xf32, #tpu.memory_space<vmem>>, vector<8x8x8x128xf32>,
    return
  }
  func.func @transform_0(%arg0: i32, %arg1: i32) -> (i32, i32, i32, i32) {
    %c0_i32 = arith.constant 0 : i32
    %c0_i32_0 = arith.constant 0 : i32
    %c0_i32_1 = arith.constant 0 : i32
    %c0_i32_2 = arith.constant 0 : i32
    return %arg0, %c0_i32, %c0_i32_0, %c0_i32_1 : i32, i32, i32, i32
  }
  func.func @transform_1(%arg0: i32, %arg1: i32) -> (i32, i32) {
    %c0_i32 = arith.constant 0 : i32
    %c0_i32_0 = arith.constant 0 : i32
    %c0_i32_1 = arith.constant 0 : i32
    return %c0_i32, %c0_i32_0 : i32, i32
  }
  func.func @transform_2(%arg0: i32, %arg1: i32) -> (i32, i32) {
    %c0_i32 = arith.constant 0 : i32
    %c0_i32_0 = arith.constant 0 : i32
    %c0_i32_1 = arith.constant 0 : i32
    return %c0_i32, %c0_i32_0 : i32, i32
  }
  func.func @transform_3(%arg0: i32, %arg1: i32) -> (i32, i32, i32, i32) {
    %c0_i32 = arith.constant 0 : i32
    %c0_i32_0 = arith.constant 0 : i32
    %c0_i32_1 = arith.constant 0 : i32
    return %arg0, %arg1, %c0_i32, %c0_i32_0 : i32, i32, i32, i32
  }
}

</mosaic_0001>

<llo_original>
// kernel: tada_conv2d.1
$region0: #{tada_conv2d.1}
  #allocation0 [shape = 'u32[]', space=smem, size = 0x4, offset = 0x4, fixed_abs, tag = 'smem constant byte address 0x4 - core index']
  #allocation1 [shape = 'u32[144,128]{1,0:T(1,128)}', space=vmem, size = 0x12000, scoped, tag = 'internal scratch']
  #allocation2 [shape = 'bf16[512,1152]{1,0:T(16,128)(2,1)}', space=vmem, size = 0x120000, scoped, tag = 'scratch operand']
  %s0 = inlined_call_operand.vmem [shape: bf16[8,10,10,128], index: 0, kind: input, shape index: {}]
  %s1 = inlined_call_operand.vmem [shape: bf16[1152,128], index: 1, kind: input, shape index: {}]
  %s2 = inlined_call_operand.vmem [shape: f32[1,128], index: 2, kind: input, shape index: {}]
  %s3 = inlined_call_operand.vmem [shape: f32[8,8,8,128], index: 3, kind: output, shape index: {}]
  %s4 = sld [smem:[#allocation0]]
  $region22: #{tada_conv2d.1} parent=0
    _
  %s6 = ssub.s32 1, %s4
  %s7 = scalar_select 0, %s6, %s4
  // Predicated region
  $region2: #{tada_conv2d.1} parent=0 // pred_check
    _
  $region3: #{tada_conv2d.1} parent=0 // pred_check_branch
    %9 = sbr.rel (0) target = $region5
  $region4: #{tada_conv2d.1} parent=0 // pred_region
    _
  $region5: #{tada_conv2d.1} parent=0 // pred_fallthru
    _
  // Predicated region
  $region6: #{tada_conv2d.1} parent=0 // pred_check
    _
  $region7: #{tada_conv2d.1} parent=0 // pred_check_branch
    %11 = sbr.rel (0) target = $region9
  $region8: #{tada_conv2d.1} parent=0 // pred_region
    _
  $region9: #{tada_conv2d.1} parent=0 // pred_fallthru
    _
  // Predicated region
  $region10: #{tada_conv2d.1} parent=0 // pred_check
    _
  $region11: #{tada_conv2d.1} parent=0 // pred_check_branch
    %13 = sbr.rel (0) target = $region13
  $region12: #{tada_conv2d.1} parent=0 // pred_region
    _
  $region13: #{tada_conv2d.1} parent=0 // pred_fallthru
    _
  %s15 = smul.u32 0, 8
  %s16 = smul.u32 %s15, 2
  %s17 = smul.addr %s16, 4
  %s18 = scalar_lea.vmem %s0, %s17
  %v19 = vld [vmem:[%s18] sm:$0xf]
  %v20 = vld [vmem:[%s18 + $0x8] sm:$0xf]
  %v21 = vld [vmem:[%s18 + $0x10] sm:$0xf]
  %v22 = vld [vmem:[%s18 + $0x18] sm:$0xf]
  %v23 = vld [vmem:[%s18 + $0x20] sm:$0xf]
  %v24 = vld [vmem:[%s18 + $0x28] sm:$0xf]
  %v25 = vld [vmem:[%s18 + $0x30] sm:$0xf]
  %v26 = vld [vmem:[%s18 + $0x38] sm:$0xf]
  %v27 = vld [vmem:[%s18 + $0x50] sm:$0xf]
  %v28 = vld [vmem:[%s18 + $0x58] sm:$0xf]
  %v29 = vld [vmem:[%s18 + $0x60] sm:$0xf]
  %v30 = vld [vmem:[%s18 + $0x68] sm:$0xf]
  %v31 = vld [vmem:[%s18 + $0x70] sm:$0xf]
  %v32 = vld [vmem:[%s18 + $0x78] sm:$0xf]
  %v33 = vld [vmem:[%s18 + $0x80] sm:$0xf]
  %v34 = vld [vmem:[%s18 + $0x88] sm:$0xf]
  %v35 = vld [vmem:[%s18 + $0xa0] sm:$0xf]
  %v36 = vld [vmem:[%s18 + $0xa8] sm:$0xf]
  %v37 = vld [vmem:[%s18 + $0xb0] sm:$0xf]
  %v38 = vld [vmem:[%s18 + $0xb8] sm:$0xf]
  %v39 = vld [vmem:[%s18 + $0xc0] sm:$0xf]
  %v40 = vld [vmem:[%s18 + $0xc8] sm:$0xf]
  %v41 = vld [vmem:[%s18 + $0xd0] sm:$0xf]
  %v42 = vld [vmem:[%s18 + $0xd8] sm:$0xf]
  %v43 = vld [vmem:[%s18 + $0xf0] sm:$0xf]
  %v44 = vld [vmem:[%s18 + $0xf8] sm:$0xf]
  %v45 = vld [vmem:[%s18 + $0x100] sm:$0xf]
  %v46 = vld [vmem:[%s18 + $0x108] sm:$0xf]
  %v47 = vld [vmem:[%s18 + $0x110] sm:$0xf]
  %v48 = vld [vmem:[%s18 + $0x118] sm:$0xf]
  %v49 = vld [vmem:[%s18 + $0x120] sm:$0xf]
  %v50 = vld [vmem:[%s18 + $0x128] sm:$0xf]
  %v51 = vld [vmem:[%s18 + $0x140] sm:$0xf]
  %v52 = vld [vmem:[%s18 + $0x148] sm:$0xf]
  %v53 = vld [vmem:[%s18 + $0x150] sm:$0xf]
  %v54 = vld [vmem:[%s18 + $0x158] sm:$0xf]
  %v55 = vld [vmem:[%s18 + $0x160] sm:$0xf]
  %v56 = vld [vmem:[%s18 + $0x168] sm:$0xf]
  %v57 = vld [vmem:[%s18 + $0x170] sm:$0xf]
  %v58 = vld [vmem:[%s18 + $0x178] sm:$0xf]
  %v59 = vld [vmem:[%s18 + $0x190] sm:$0xf]
  %v60 = vld [vmem:[%s18 + $0x198] sm:$0xf]
  %v61 = vld [vmem:[%s18 + $0x1a0] sm:$0xf]
  %v62 = vld [vmem:[%s18 + $0x1a8] sm:$0xf]
  %v63 = vld [vmem:[%s18 + $0x1b0] sm:$0xf]
  %v64 = vld [vmem:[%s18 + $0x1b8] sm:$0xf]
  %v65 = vld [vmem:[%s18 + $0x1c0] sm:$0xf]
  %v66 = vld [vmem:[%s18 + $0x1c8] sm:$0xf]
  %v67 = vld [vmem:[%s18 + $0x1e0] sm:$0xf]
  %v68 = vld [vmem:[%s18 + $0x1e8] sm:$0xf]
  %v69 = vld [vmem:[%s18 + $0x1f0] sm:$0xf]
  %v70 = vld [vmem:[%s18 + $0x1f8] sm:$0xf]
  %v71 = vld [vmem:[%s18 + $0x200] sm:$0xf]
  %v72 = vld [vmem:[%s18 + $0x208] sm:$0xf]
  %v73 = vld [vmem:[%s18 + $0x210] sm:$0xf]
  %v74 = vld [vmem:[%s18 + $0x218] sm:$0xf]
  %v75 = vld [vmem:[%s18 + $0x230] sm:$0xf]
  %v76 = vld [vmem:[%s18 + $0x238] sm:$0xf]
  %v77 = vld [vmem:[%s18 + $0x240] sm:$0xf]
  %v78 = vld [vmem:[%s18 + $0x248] sm:$0xf]
  %v79 = vld [vmem:[%s18 + $0x250] sm:$0xf]
  %v80 = vld [vmem:[%s18 + $0x258] sm:$0xf]
  %v81 = vld [vmem:[%s18 + $0x260] sm:$0xf]
  %v82 = vld [vmem:[%s18 + $0x268] sm:$0xf]
  %v147 = vunpack.c.l.b16 %v19
  %v148 = vunpack.c.l.b16 %v20
  %v149 = vunpack.c.l.b16 %v21
  %v150 = vunpack.c.l.b16 %v22
  %v151 = vunpack.c.l.b16 %v23
  %v152 = vunpack.c.l.b16 %v24
  %v153 = vunpack.c.l.b16 %v25
  %v154 = vunpack.c.l.b16 %v26
  %v155 = vunpack.c.l.b16 %v27
  %v156 = vunpack.c.l.b16 %v28
  %v157 = vunpack.c.l.b16 %v29
  %v158 = vunpack.c.l.b16 %v30
  %v159 = vunpack.c.l.b16 %v31
  %v160 = vunpack.c.l.b16 %v32
  %v161 = vunpack.c.l.b16 %v33
  %v162 = vunpack.c.l.b16 %v34
  %v163 = vunpack.c.l.b16 %v35
  %v164 = vunpack.c.l.b16 %v36
  %v165 = vunpack.c.l.b16 %v37
  %v166 = vunpack.c.l.b16 %v38
  %v167 = vunpack.c.l.b16 %v39
  %v168 = vunpack.c.l.b16 %v40
  %v169 = vunpack.c.l.b16 %v41
  %v170 = vunpack.c.l.b16 %v42
  %v171 = vunpack.c.l.b16 %v43
  %v172 = vunpack.c.l.b16 %v44
  %v173 = vunpack.c.l.b16 %v45
  %v174 = vunpack.c.l.b16 %v46
  %v175 = vunpack.c.l.b16 %v47
  %v176 = vunpack.c.l.b16 %v48
  %v177 = vunpack.c.l.b16 %v49
  %v178 = vunpack.c.l.b16 %v50
  %v179 = vunpack.c.l.b16 %v51
  %v180 = vunpack.c.l.b16 %v52
  %v181 = vunpack.c.l.b16 %v53
  %v182 = vunpack.c.l.b16 %v54
  %v183 = vunpack.c.l.b16 %v55
  %v184 = vunpack.c.l.b16 %v56
  %v185 = vunpack.c.l.b16 %v57
  %v186 = vunpack.c.l.b16 %v58
  %v187 = vunpack.c.l.b16 %v59
  %v188 = vunpack.c.l.b16 %v60
  %v189 = vunpack.c.l.b16 %v61
  %v190 = vunpack.c.l.b16 %v62
  %v191 = vunpack.c.l.b16 %v63
  %v192 = vunpack.c.l.b16 %v64
  %v193 = vunpack.c.l.b16 %v65
  %v194 = vunpack.c.l.b16 %v66
  %v195 = vunpack.c.l.b16 %v67
  %v196 = vunpack.c.l.b16 %v68
  %v197 = vunpack.c.l.b16 %v69
  %v198 = vunpack.c.l.b16 %v70
  %v199 = vunpack.c.l.b16 %v71
  %v200 = vunpack.c.l.b16 %v72
  %v201 = vunpack.c.l.b16 %v73
  %v202 = vunpack.c.l.b16 %v74
  %v203 = vunpack.c.l.b16 %v75
  %v204 = vunpack.c.l.b16 %v76
  %v205 = vunpack.c.l.b16 %v77
  %v206 = vunpack.c.l.b16 %v78
  %v207 = vunpack.c.l.b16 %v79
  %v208 = vunpack.c.l.b16 %v80
  %v209 = vunpack.c.l.b16 %v81
  %v210 = vunpack.c.l.b16 %v82
  %v211 = vpack.c.b16 %v148, %v147
  %v212 = vpack.c.b16 %v150, %v149
  %v213 = vpack.c.b16 %v152, %v151
  %v214 = vpack.c.b16 %v154, %v153
  %v215 = vpack.c.b16 %v156, %v155
  %v216 = vpack.c.b16 %v158, %v157
  %v217 = vpack.c.b16 %v160, %v159
  %v218 = vpack.c.b16 %v162, %v161
  %v219 = vpack.c.b16 %v164, %v163
  %v220 = vpack.c.b16 %v166, %v165
  %v221 = vpack.c.b16 %v168, %v167
  %v222 = vpack.c.b16 %v170, %v169
  %v223 = vpack.c.b16 %v172, %v171
  %v224 = vpack.c.b16 %v174, %v173
  %v225 = vpack.c.b16 %v176, %v175
  %v226 = vpack.c.b16 %v178, %v177
  %v227 = vpack.c.b16 %v180, %v179
  %v228 = vpack.c.b16 %v182, %v181
  %v229 = vpack.c.b16 %v184, %v183
  %v230 = vpack.c.b16 %v186, %v185
  %v231 = vpack.c.b16 %v188, %v187
  %v232 = vpack.c.b16 %v190, %v189
  %v233 = vpack.c.b16 %v192, %v191
  %v234 = vpack.c.b16 %v194, %v193
  %v235 = vpack.c.b16 %v196, %v195
  %v236 = vpack.c.b16 %v198, %v197
  %v237 = vpack.c.b16 %v200, %v199
  %v238 = vpack.c.b16 %v202, %v201
  %v239 = vpack.c.b16 %v204, %v203
  %v240 = vpack.c.b16 %v206, %v205
  %v241 = vpack.c.b16 %v208, %v207
  %v242 = vpack.c.b16 %v210, %v209
  %275 = vst [vmem:[#allocation2] sm:$0xff] %v211
  %276 = vst [vmem:[#allocation2 + $0x48] sm:$0xff] %v212
  %277 = vst [vmem:[#allocation2 + $0x90] sm:$0xff] %v213
  %278 = vst [vmem:[#allocation2 + $0xd8] sm:$0xff] %v214
  %279 = vst [vmem:[#allocation2 + $0x120] sm:$0xff] %v215
  %280 = vst [vmem:[#allocation2 + $0x168] sm:$0xff] %v216
  %281 = vst [vmem:[#allocation2 + $0x1b0] sm:$0xff] %v217
  %282 = vst [vmem:[#allocation2 + $0x1f8] sm:$0xff] %v218
  %283 = vst [vmem:[#allocation2 + $0x240] sm:$0xff] %v219
  %284 = vst [vmem:[#allocation2 + $0x288] sm:$0xff] %v220
  %285 = vst [vmem:[#allocation2 + $0x2d0] sm:$0xff] %v221
  %286 = vst [vmem:[#allocation2 + $0x318] sm:$0xff] %v222
  %287 = vst [vmem:[#allocation2 + $0x360] sm:$0xff] %v223
  %288 = vst [vmem:[#allocation2 + $0x3a8] sm:$0xff] %v224
  %289 = vst [vmem:[#allocation2 + $0x3f0] sm:$0xff] %v225
  %290 = vst [vmem:[#allocation2 + $0x438] sm:$0xff] %v226
  %291 = vst [vmem:[#allocation2 + $0x480] sm:$0xff] %v227
  %292 = vst [vmem:[#allocation2 + $0x4c8] sm:$0xff] %v228
  %293 = vst [vmem:[#allocation2 + $0x510] sm:$0xff] %v229
  %294 = vst [vmem:[#allocation2 + $0x558] sm:$0xff] %v230
  %295 = vst [vmem:[#allocation2 + $0x5a0] sm:$0xff] %v231
  %296 = vst [vmem:[#allocation2 + $0x5e8] sm:$0xff] %v232
  %297 = vst [vmem:[#allocation2 + $0x630] sm:$0xff] %v233
  %298 = vst [vmem:[#allocation2 + $0x678] sm:$0xff] %v234
  %299 = vst [vmem:[#allocation2 + $0x6c0] sm:$0xff] %v235
  %300 = vst [vmem:[#allocation2 + $0x708] sm:$0xff] %v236
  %301 = vst [vmem:[#allocation2 + $0x750] sm:$0xff] %v237
  %302 = vst [vmem:[#allocation2 + $0x798] sm:$0xff] %v238
  %303 = vst [vmem:[#allocation2 + $0x7e0] sm:$0xff] %v239
  %304 = vst [vmem:[#allocation2 + $0x828] sm:$0xff] %v240
  %305 = vst [vmem:[#allocation2 + $0x870] sm:$0xff] %v241
  %306 = vst [vmem:[#allocation2 + $0x8b8] sm:$0xff] %v242
  %v307 = vld [vmem:[%s18] sm:$0xf]
  %v308 = vld [vmem:[%s18 + $0x4] sm:$0x1]
  %v309 = vld [vmem:[%s18 + $0x8] sm:$0xf]
  %v310 = vld [vmem:[%s18 + $0xc] sm:$0x1]
  %v311 = vld [vmem:[%s18 + $0x10] sm:$0xf]
  %v312 = vld [vmem:[%s18 + $0x14] sm:$0x1]
  %v313 = vld [vmem:[%s18 + $0x18] sm:$0xf]
  %v314 = vld [vmem:[%s18 + $0x1c] sm:$0x1]
  %v315 = vld [vmem:[%s18 + $0x20] sm:$0xf]
  %v316 = vld [vmem:[%s18 + $0x24] sm:$0x1]
  %v317 = vld [vmem:[%s18 + $0x28] sm:$0xf]
  %v318 = vld [vmem:[%s18 + $0x2c] sm:$0x1]
  %v319 = vld [vmem:[%s18 + $0x30] sm:$0xf]
  %v320 = vld [vmem:[%s18 + $0x34] sm:$0x1]
  %v321 = vld [vmem:[%s18 + $0x38] sm:$0xf]
  %v322 = vld [vmem:[%s18 + $0x3c] sm:$0x1]
  %v323 = vld [vmem:[%s18 + $0x50] sm:$0xf]
  %v324 = vld [vmem:[%s18 + $0x54] sm:$0x1]
  %v325 = vld [vmem:[%s18 + $0x58] sm:$0xf]
  %v326 = vld [vmem:[%s18 + $0x5c] sm:$0x1]
  %v327 = vld [vmem:[%s18 + $0x60] sm:$0xf]
  %v328 = vld [vmem:[%s18 + $0x64] sm:$0x1]
  %v329 = vld [vmem:[%s18 + $0x68] sm:$0xf]
  %v330 = vld [vmem:[%s18 + $0x6c] sm:$0x1]
  %v331 = vld [vmem:[%s18 + $0x70] sm:$0xf]
  %v332 = vld [vmem:[%s18 + $0x74] sm:$0x1]
  %v333 = vld [vmem:[%s18 + $0x78] sm:$0xf]
  %v334 = vld [vmem:[%s18 + $0x7c] sm:$0x1]
  %v335 = vld [vmem:[%s18 + $0x80] sm:$0xf]
  %v336 = vld [vmem:[%s18 + $0x84] sm:$0x1]
  %v337 = vld [vmem:[%s18 + $0x88] sm:$0xf]
  %v338 = vld [vmem:[%s18 + $0x8c] sm:$0x1]
  %v339 = vld [vmem:[%s18 + $0xa0] sm:$0xf]
  %v340 = vld [vmem:[%s18 + $0xa4] sm:$0x1]
  %v341 = vld [vmem:[%s18 + $0xa8] sm:$0xf]
  %v342 = vld [vmem:[%s18 + $0xac] sm:$0x1]
  %v343 = vld [vmem:[%s18 + $0xb0] sm:$0xf]
  %v344 = vld [vmem:[%s18 + $0xb4] sm:$0x1]
  %v345 = vld [vmem:[%s18 + $0xb8] sm:$0xf]
  %v346 = vld [vmem:[%s18 + $0xbc] sm:$0x1]
  %v347 = vld [vmem:[%s18 + $0xc0] sm:$0xf]
  %v348 = vld [vmem:[%s18 + $0xc4] sm:$0x1]
  %v349 = vld [vmem:[%s18 + $0xc8] sm:$0xf]
  %v350 = vld [vmem:[%s18 + $0xcc] sm:$0x1]
  %v351 = vld [vmem:[%s18 + $0xd0] sm:$0xf]
  %v352 = vld [vmem:[%s18 + $0xd4] sm:$0x1]
  %v353 = vld [vmem:[%s18 + $0xd8] sm:$0xf]
  %v354 = vld [vmem:[%s18 + $0xdc] sm:$0x1]
  %v355 = vld [vmem:[%s18 + $0xf0] sm:$0xf]
  %v356 = vld [vmem:[%s18 + $0xf4] sm:$0x1]
  %v357 = vld [vmem:[%s18 + $0xf8] sm:$0xf]
  %v358 = vld [vmem:[%s18 + $0xfc] sm:$0x1]
  %v359 = vld [vmem:[%s18 + $0x100] sm:$0xf]
  %v360 = vld [vmem:[%s18 + $0x104] sm:$0x1]
  %v361 = vld [vmem:[%s18 + $0x108] sm:$0xf]
  %v362 = vld [vmem:[%s18 + $0x10c] sm:$0x1]
  %v363 = vld [vmem:[%s18 + $0x110] sm:$0xf]
  %v364 = vld [vmem:[%s18 + $0x114] sm:$0x1]
  %v365 = vld [vmem:[%s18 + $0x118] sm:$0xf]
  %v366 = vld [vmem:[%s18 + $0x11c] sm:$0x1]
  %v367 = vld [vmem:[%s18 + $0x120] sm:$0xf]
  %v368 = vld [vmem:[%s18 + $0x124] sm:$0x1]
  %v369 = vld [vmem:[%s18 + $0x128] sm:$0xf]
  %v370 = vld [vmem:[%s18 + $0x12c] sm:$0x1]
  %v371 = vld [vmem:[%s18 + $0x140] sm:$0xf]
  %v372 = vld [vmem:[%s18 + $0x144] sm:$0x1]
  %v373 = vld [vmem:[%s18 + $0x148] sm:$0xf]
  %v374 = vld [vmem:[%s18 + $0x14c] sm:$0x1]
  %v375 = vld [vmem:[%s18 + $0x150] sm:$0xf]
  %v376 = vld [vmem:[%s18 + $0x154] sm:$0x1]
  %v377 = vld [vmem:[%s18 + $0x158] sm:$0xf]
  %v378 = vld [vmem:[%s18 + $0x15c] sm:$0x1]
  %v379 = vld [vmem:[%s18 + $0x160] sm:$0xf]
  %v380 = vld [vmem:[%s18 + $0x164] sm:$0x1]
  %v381 = vld [vmem:[%s18 + $0x168] sm:$0xf]
  %v382 = vld [vmem:[%s18 + $0x16c] sm:$0x1]
  %v383 = vld [vmem:[%s18 + $0x170] sm:$0xf]
  %v384 = vld [vmem:[%s18 + $0x174] sm:$0x1]
  %v385 = vld [vmem:[%s18 + $0x178] sm:$0xf]
  %v386 = vld [vmem:[%s18 + $0x17c] sm:$0x1]
  %v387 = vld [vmem:[%s18 + $0x190] sm:$0xf]
  %v388 = vld [vmem:[%s18 + $0x194] sm:$0x1]
  %v389 = vld [vmem:[%s18 + $0x198] sm:$0xf]
  %v390 = vld [vmem:[%s18 + $0x19c] sm:$0x1]
  %v391 = vld [vmem:[%s18 + $0x1a0] sm:$0xf]
  %v392 = vld [vmem:[%s18 + $0x1a4] sm:$0x1]
  %v393 = vld [vmem:[%s18 + $0x1a8] sm:$0xf]
  %v394 = vld [vmem:[%s18 + $0x1ac] sm:$0x1]
  %v395 = vld [vmem:[%s18 + $0x1b0] sm:$0xf]
  %v396 = vld [vmem:[%s18 + $0x1b4] sm:$0x1]
  %v397 = vld [vmem:[%s18 + $0x1b8] sm:$0xf]
  %v398 = vld [vmem:[%s18 + $0x1bc] sm:$0x1]
  %v399 = vld [vmem:[%s18 + $0x1c0] sm:$0xf]
  %v400 = vld [vmem:[%s18 + $0x1c4] sm:$0x1]
  %v401 = vld [vmem:[%s18 + $0x1c8] sm:$0xf]
  %v402 = vld [vmem:[%s18 + $0x1cc] sm:$0x1]
  %v403 = vld [vmem:[%s18 + $0x1e0] sm:$0xf]
  %v404 = vld [vmem:[%s18 + $0x1e4] sm:$0x1]
  %v405 = vld [vmem:[%s18 + $0x1e8] sm:$0xf]
  %v406 = vld [vmem:[%s18 + $0x1ec] sm:$0x1]
  %v407 = vld [vmem:[%s18 + $0x1f0] sm:$0xf]
  %v408 = vld [vmem:[%s18 + $0x1f4] sm:$0x1]
  %v409 = vld [vmem:[%s18 + $0x1f8] sm:$0xf]
  %v410 = vld [vmem:[%s18 + $0x1fc] sm:$0x1]
  %v411 = vld [vmem:[%s18 + $0x200] sm:$0xf]
  %v412 = vld [vmem:[%s18 + $0x204] sm:$0x1]
  %v413 = vld [vmem:[%s18 + $0x208] sm:$0xf]
  %v414 = vld [vmem:[%s18 + $0x20c] sm:$0x1]
  %v415 = vld [vmem:[%s18 + $0x210] sm:$0xf]
  %v416 = vld [vmem:[%s18 + $0x214] sm:$0x1]
  %v417 = vld [vmem:[%s18 + $0x218] sm:$0xf]
  %v418 = vld [vmem:[%s18 + $0x21c] sm:$0x1]
  %v419 = vld [vmem:[%s18 + $0x230] sm:$0xf]
  %v420 = vld [vmem:[%s18 + $0x234] sm:$0x1]
  %v421 = vld [vmem:[%s18 + $0x238] sm:$0xf]
  %v422 = vld [vmem:[%s18 + $0x23c] sm:$0x1]
  %v423 = vld [vmem:[%s18 + $0x240] sm:$0xf]
  %v424 = vld [vmem:[%s18 + $0x244] sm:$0x1]
  %v425 = vld [vmem:[%s18 + $0x248] sm:$0xf]
  %v426 = vld [vmem:[%s18 + $0x24c] sm:$0x1]
  %v427 = vld [vmem:[%s18 + $0x250] sm:$0xf]
  %v428 = vld [vmem:[%s18 + $0x254] sm:$0x1]
  %v429 = vld [vmem:[%s18 + $0x258] sm:$0xf]
  %v430 = vld [vmem:[%s18 + $0x25c] sm:$0x1]
  %v431 = vld [vmem:[%s18 + $0x260] sm:$0xf]
  %v432 = vld [vmem:[%s18 + $0x264] sm:$0x1]
  %v433 = vld [vmem:[%s18 + $0x268] sm:$0xf]
  %v434 = vld [vmem:[%s18 + $0x26c] sm:$0x1]
  %vm435 = vsmask.f32 3328
  %vm436 = vsmask.f32 7440
  %vm437 = vmor %vm435, %vm436
  %v439 = vshrl.u32 %v307, 16
  %v441 = vrot.slane %v439, 4
  %v442 = vshll.u32 %v307, 16
  %v444 = vrot.slane %v442, 5
  %v445 = vor.u32 %v441, %v444
  %v446 = vrot.slane %v445, 4
  %v448 = vshll.u32 %v308, 16
  %v450 = vrot.slane %v448, 5
  %v451 = vsel %vm437, %v446, %v450
  %v453 = vshrl.u32 %v309, 16
  %v455 = vrot.slane %v453, 4
  %v456 = vshll.u32 %v309, 16
  %v458 = vrot.slane %v456, 5
  %v459 = vor.u32 %v455, %v458
  %v460 = vrot.slane %v459, 4
  %v462 = vshll.u32 %v310, 16
  %v464 = vrot.slane %v462, 5
  %v465 = vsel %vm437, %v460, %v464
  %v467 = vshrl.u32 %v311, 16
  %v469 = vrot.slane %v467, 4
  %v470 = vshll.u32 %v311, 16
  %v472 = vrot.slane %v470, 5
  %v473 = vor.u32 %v469, %v472
  %v474 = vrot.slane %v473, 4
  %v476 = vshll.u32 %v312, 16
  %v478 = vrot.slane %v476, 5
  %v479 = vsel %vm437, %v474, %v478
  %v481 = vshrl.u32 %v313, 16
  %v483 = vrot.slane %v481, 4
  %v484 = vshll.u32 %v313, 16
  %v486 = vrot.slane %v484, 5
  %v487 = vor.u32 %v483, %v486
  %v488 = vrot.slane %v487, 4
  %v490 = vshll.u32 %v314, 16
  %v492 = vrot.slane %v490, 5
  %v493 = vsel %vm437, %v488, %v492
  %v495 = vshrl.u32 %v315, 16
  %v497 = vrot.slane %v495, 4
  %v498 = vshll.u32 %v315, 16
  %v500 = vrot.slane %v498, 5
  %v501 = vor.u32 %v497, %v500
  %v502 = vrot.slane %v501, 4
  %v504 = vshll.u32 %v316, 16
  %v506 = vrot.slane %v504, 5
  %v507 = vsel %vm437, %v502, %v506
  %v509 = vshrl.u32 %v317, 16
  %v511 = vrot.slane %v509, 4
  %v512 = vshll.u32 %v317, 16
  %v514 = vrot.slane %v512, 5
  %v515 = vor.u32 %v511, %v514
  %v516 = vrot.slane %v515, 4
  %v518 = vshll.u32 %v318, 16
  %v520 = vrot.slane %v518, 5
  %v521 = vsel %vm437, %v516, %v520
  %v523 = vshrl.u32 %v319, 16
  %v525 = vrot.slane %v523, 4
  %v526 = vshll.u32 %v319, 16
  %v528 = vrot.slane %v526, 5
  %v529 = vor.u32 %v525, %v528
  %v530 = vrot.slane %v529, 4
  %v532 = vshll.u32 %v320, 16
  %v534 = vrot.slane %v532, 5
  %v535 = vsel %vm437, %v530, %v534
  %v537 = vshrl.u32 %v321, 16
  %v539 = vrot.slane %v537, 4
  %v540 = vshll.u32 %v321, 16
  %v542 = vrot.slane %v540, 5
  %v543 = vor.u32 %v539, %v542
  %v544 = vrot.slane %v543, 4
  %v546 = vshll.u32 %v322, 16
  %v548 = vrot.slane %v546, 5
  %v549 = vsel %vm437, %v544, %v548
  %v551 = vshrl.u32 %v323, 16
  %v553 = vrot.slane %v551, 4
  %v554 = vshll.u32 %v323, 16
  %v556 = vrot.slane %v554, 5
  %v557 = vor.u32 %v553, %v556
  %v558 = vrot.slane %v557, 4
  %v560 = vshll.u32 %v324, 16
  %v562 = vrot.slane %v560, 5
  %v563 = vsel %vm437, %v558, %v562
  %v565 = vshrl.u32 %v325, 16
  %v567 = vrot.slane %v565, 4
  %v568 = vshll.u32 %v325, 16
  %v570 = vrot.slane %v568, 5
  %v571 = vor.u32 %v567, %v570
  %v572 = vrot.slane %v571, 4
  %v574 = vshll.u32 %v326, 16
  %v576 = vrot.slane %v574, 5
  %v577 = vsel %vm437, %v572, %v576
  %v579 = vshrl.u32 %v327, 16
  %v581 = vrot.slane %v579, 4
  %v582 = vshll.u32 %v327, 16
  %v584 = vrot.slane %v582, 5
  %v585 = vor.u32 %v581, %v584
  %v586 = vrot.slane %v585, 4
  %v588 = vshll.u32 %v328, 16
  %v590 = vrot.slane %v588, 5
  %v591 = vsel %vm437, %v586, %v590
  %v593 = vshrl.u32 %v329, 16
  %v595 = vrot.slane %v593, 4
  %v596 = vshll.u32 %v329, 16
  %v598 = vrot.slane %v596, 5
  %v599 = vor.u32 %v595, %v598
  %v600 = vrot.slane %v599, 4
  %v602 = vshll.u32 %v330, 16
  %v604 = vrot.slane %v602, 5
  %v605 = vsel %vm437, %v600, %v604
  %v607 = vshrl.u32 %v331, 16
  %v609 = vrot.slane %v607, 4
  %v610 = vshll.u32 %v331, 16
  %v612 = vrot.slane %v610, 5
  %v613 = vor.u32 %v609, %v612
  %v614 = vrot.slane %v613, 4
  %v616 = vshll.u32 %v332, 16
  %v618 = vrot.slane %v616, 5
  %v619 = vsel %vm437, %v614, %v618
  %v621 = vshrl.u32 %v333, 16
  %v623 = vrot.slane %v621, 4
  %v624 = vshll.u32 %v333, 16
  %v626 = vrot.slane %v624, 5
  %v627 = vor.u32 %v623, %v626
  %v628 = vrot.slane %v627, 4
  %v630 = vshll.u32 %v334, 16
  %v632 = vrot.slane %v630, 5
  %v633 = vsel %vm437, %v628, %v632
  %v635 = vshrl.u32 %v335, 16
  %v637 = vrot.slane %v635, 4
  %v638 = vshll.u32 %v335, 16
  %v640 = vrot.slane %v638, 5
  %v641 = vor.u32 %v637, %v640
  %v642 = vrot.slane %v641, 4
  %v644 = vshll.u32 %v336, 16
  %v646 = vrot.slane %v644, 5
  %v647 = vsel %vm437, %v642, %v646
  %v649 = vshrl.u32 %v337, 16
  %v651 = vrot.slane %v649, 4
  %v652 = vshll.u32 %v337, 16
  %v654 = vrot.slane %v652, 5
  %v655 = vor.u32 %v651, %v654
  %v656 = vrot.slane %v655, 4
  %v658 = vshll.u32 %v338, 16
  %v660 = vrot.slane %v658, 5
  %v661 = vsel %vm437, %v656, %v660
  %v663 = vshrl.u32 %v339, 16
  %v665 = vrot.slane %v663, 4
  %v666 = vshll.u32 %v339, 16
  %v668 = vrot.slane %v666, 5
  %v669 = vor.u32 %v665, %v668
  %v670 = vrot.slane %v669, 4
  %v672 = vshll.u32 %v340, 16
  %v674 = vrot.slane %v672, 5
  %v675 = vsel %vm437, %v670, %v674
  %v677 = vshrl.u32 %v341, 16
  %v679 = vrot.slane %v677, 4
  %v680 = vshll.u32 %v341, 16
  %v682 = vrot.slane %v680, 5
  %v683 = vor.u32 %v679, %v682
  %v684 = vrot.slane %v683, 4
  %v686 = vshll.u32 %v342, 16
  %v688 = vrot.slane %v686, 5
  %v689 = vsel %vm437, %v684, %v688
  %v691 = vshrl.u32 %v343, 16
  %v693 = vrot.slane %v691, 4
  %v694 = vshll.u32 %v343, 16
  %v696 = vrot.slane %v694, 5
  %v697 = vor.u32 %v693, %v696
  %v698 = vrot.slane %v697, 4
  %v700 = vshll.u32 %v344, 16
  %v702 = vrot.slane %v700, 5
  %v703 = vsel %vm437, %v698, %v702
  %v705 = vshrl.u32 %v345, 16
  %v707 = vrot.slane %v705, 4
  %v708 = vshll.u32 %v345, 16
  %v710 = vrot.slane %v708, 5
  %v711 = vor.u32 %v707, %v710
  %v712 = vrot.slane %v711, 4
  %v714 = vshll.u32 %v346, 16
  %v716 = vrot.slane %v714, 5
  %v717 = vsel %vm437, %v712, %v716
  %v719 = vshrl.u32 %v347, 16
  %v721 = vrot.slane %v719, 4
  %v722 = vshll.u32 %v347, 16
  %v724 = vrot.slane %v722, 5
  %v725 = vor.u32 %v721, %v724
  %v726 = vrot.slane %v725, 4
  %v728 = vshll.u32 %v348, 16
  %v730 = vrot.slane %v728, 5
  %v731 = vsel %vm437, %v726, %v730
  %v733 = vshrl.u32 %v349, 16
  %v735 = vrot.slane %v733, 4
  %v736 = vshll.u32 %v349, 16
  %v738 = vrot.slane %v736, 5
  %v739 = vor.u32 %v735, %v738
  %v740 = vrot.slane %v739, 4
  %v742 = vshll.u32 %v350, 16
  %v744 = vrot.slane %v742, 5
  %v745 = vsel %vm437, %v740, %v744
  %v747 = vshrl.u32 %v351, 16
  %v749 = vrot.slane %v747, 4
  %v750 = vshll.u32 %v351, 16
  %v752 = vrot.slane %v750, 5
  %v753 = vor.u32 %v749, %v752
  %v754 = vrot.slane %v753, 4
  %v756 = vshll.u32 %v352, 16
  %v758 = vrot.slane %v756, 5
  %v759 = vsel %vm437, %v754, %v758
  %v761 = vshrl.u32 %v353, 16
  %v763 = vrot.slane %v761, 4
  %v764 = vshll.u32 %v353, 16
  %v766 = vrot.slane %v764, 5
  %v767 = vor.u32 %v763, %v766
  %v768 = vrot.slane %v767, 4
  %v770 = vshll.u32 %v354, 16
  %v772 = vrot.slane %v770, 5
  %v773 = vsel %vm437, %v768, %v772
  %v775 = vshrl.u32 %v355, 16
  %v777 = vrot.slane %v775, 4
  %v778 = vshll.u32 %v355, 16
  %v780 = vrot.slane %v778, 5
  %v781 = vor.u32 %v777, %v780
  %v782 = vrot.slane %v781, 4
  %v784 = vshll.u32 %v356, 16
  %v786 = vrot.slane %v784, 5
  %v787 = vsel %vm437, %v782, %v786
  %v789 = vshrl.u32 %v357, 16
  %v791 = vrot.slane %v789, 4
  %v792 = vshll.u32 %v357, 16
  %v794 = vrot.slane %v792, 5
  %v795 = vor.u32 %v791, %v794
  %v796 = vrot.slane %v795, 4
  %v798 = vshll.u32 %v358, 16
  %v800 = vrot.slane %v798, 5
  %v801 = vsel %vm437, %v796, %v800
  %v803 = vshrl.u32 %v359, 16
  %v805 = vrot.slane %v803, 4
  %v806 = vshll.u32 %v359, 16
  %v808 = vrot.slane %v806, 5
  %v809 = vor.u32 %v805, %v808
  %v810 = vrot.slane %v809, 4
  %v812 = vshll.u32 %v360, 16
  %v814 = vrot.slane %v812, 5
  %v815 = vsel %vm437, %v810, %v814
  %v817 = vshrl.u32 %v361, 16
  %v819 = vrot.slane %v817, 4
  %v820 = vshll.u32 %v361, 16
  %v822 = vrot.slane %v820, 5
  %v823 = vor.u32 %v819, %v822
  %v824 = vrot.slane %v823, 4
  %v826 = vshll.u32 %v362, 16
  %v828 = vrot.slane %v826, 5
  %v829 = vsel %vm437, %v824, %v828
  %v831 = vshrl.u32 %v363, 16
  %v833 = vrot.slane %v831, 4
  %v834 = vshll.u32 %v363, 16
  %v836 = vrot.slane %v834, 5
  %v837 = vor.u32 %v833, %v836
  %v838 = vrot.slane %v837, 4
  %v840 = vshll.u32 %v364, 16
  %v842 = vrot.slane %v840, 5
  %v843 = vsel %vm437, %v838, %v842
  %v845 = vshrl.u32 %v365, 16
  %v847 = vrot.slane %v845, 4
  %v848 = vshll.u32 %v365, 16
  %v850 = vrot.slane %v848, 5
  %v851 = vor.u32 %v847, %v850
  %v852 = vrot.slane %v851, 4
  %v854 = vshll.u32 %v366, 16
  %v856 = vrot.slane %v854, 5
  %v857 = vsel %vm437, %v852, %v856
  %v859 = vshrl.u32 %v367, 16
  %v861 = vrot.slane %v859, 4
  %v862 = vshll.u32 %v367, 16
  %v864 = vrot.slane %v862, 5
  %v865 = vor.u32 %v861, %v864
  %v866 = vrot.slane %v865, 4
  %v868 = vshll.u32 %v368, 16
  %v870 = vrot.slane %v868, 5
  %v871 = vsel %vm437, %v866, %v870
  %v873 = vshrl.u32 %v369, 16
  %v875 = vrot.slane %v873, 4
  %v876 = vshll.u32 %v369, 16
  %v878 = vrot.slane %v876, 5
  %v879 = vor.u32 %v875, %v878
  %v880 = vrot.slane %v879, 4
  %v882 = vshll.u32 %v370, 16
  %v884 = vrot.slane %v882, 5
  %v885 = vsel %vm437, %v880, %v884
  %v887 = vshrl.u32 %v371, 16
  %v889 = vrot.slane %v887, 4
  %v890 = vshll.u32 %v371, 16
  %v892 = vrot.slane %v890, 5
  %v893 = vor.u32 %v889, %v892
  %v894 = vrot.slane %v893, 4
  %v896 = vshll.u32 %v372, 16
  %v898 = vrot.slane %v896, 5
  %v899 = vsel %vm437, %v894, %v898
  %v901 = vshrl.u32 %v373, 16
  %v903 = vrot.slane %v901, 4
  %v904 = vshll.u32 %v373, 16
  %v906 = vrot.slane %v904, 5
  %v907 = vor.u32 %v903, %v906
  %v908 = vrot.slane %v907, 4
  %v910 = vshll.u32 %v374, 16
  %v912 = vrot.slane %v910, 5
  %v913 = vsel %vm437, %v908, %v912
  %v915 = vshrl.u32 %v375, 16
  %v917 = vrot.slane %v915, 4
  %v918 = vshll.u32 %v375, 16
  %v920 = vrot.slane %v918, 5
  %v921 = vor.u32 %v917, %v920
  %v922 = vrot.slane %v921, 4
  %v924 = vshll.u32 %v376, 16
  %v926 = vrot.slane %v924, 5
  %v927 = vsel %vm437, %v922, %v926
  %v929 = vshrl.u32 %v377, 16
  %v931 = vrot.slane %v929, 4
  %v932 = vshll.u32 %v377, 16
  %v934 = vrot.slane %v932, 5
  %v935 = vor.u32 %v931, %v934
  %v936 = vrot.slane %v935, 4
  %v938 = vshll.u32 %v378, 16
  %v940 = vrot.slane %v938, 5
  %v941 = vsel %vm437, %v936, %v940
  %v943 = vshrl.u32 %v379, 16
  %v945 = vrot.slane %v943, 4
  %v946 = vshll.u32 %v379, 16
  %v948 = vrot.slane %v946, 5
  %v949 = vor.u32 %v945, %v948
  %v950 = vrot.slane %v949, 4
  %v952 = vshll.u32 %v380, 16
  %v954 = vrot.slane %v952, 5
  %v955 = vsel %vm437, %v950, %v954
  %v957 = vshrl.u32 %v381, 16
  %v959 = vrot.slane %v957, 4
  %v960 = vshll.u32 %v381, 16
  %v962 = vrot.slane %v960, 5
  %v963 = vor.u32 %v959, %v962
  %v964 = vrot.slane %v963, 4
  %v966 = vshll.u32 %v382, 16
  %v968 = vrot.slane %v966, 5
  %v969 = vsel %vm437, %v964, %v968
  %v971 = vshrl.u32 %v383, 16
  %v973 = vrot.slane %v971, 4
  %v974 = vshll.u32 %v383, 16
  %v976 = vrot.slane %v974, 5
  %v977 = vor.u32 %v973, %v976
  %v978 = vrot.slane %v977, 4
  %v980 = vshll.u32 %v384, 16
  %v982 = vrot.slane %v980, 5
  %v983 = vsel %vm437, %v978, %v982
  %v985 = vshrl.u32 %v385, 16
  %v987 = vrot.slane %v985, 4
  %v988 = vshll.u32 %v385, 16
  %v990 = vrot.slane %v988, 5
  %v991 = vor.u32 %v987, %v990
  %v992 = vrot.slane %v991, 4
  %v994 = vshll.u32 %v386, 16
  %v996 = vrot.slane %v994, 5
  %v997 = vsel %vm437, %v992, %v996
  %v999 = vshrl.u32 %v387, 16
  %v1001 = vrot.slane %v999, 4
  %v1002 = vshll.u32 %v387, 16
  %v1004 = vrot.slane %v1002, 5
  %v1005 = vor.u32 %v1001, %v1004
  %v1006 = vrot.slane %v1005, 4
  %v1008 = vshll.u32 %v388, 16
  %v1010 = vrot.slane %v1008, 5
  %v1011 = vsel %vm437, %v1006, %v1010
  %v1013 = vshrl.u32 %v389, 16
  %v1015 = vrot.slane %v1013, 4
  %v1016 = vshll.u32 %v389, 16
  %v1018 = vrot.slane %v1016, 5
  %v1019 = vor.u32 %v1015, %v1018
  %v1020 = vrot.slane %v1019, 4
  %v1022 = vshll.u32 %v390, 16
  %v1024 = vrot.slane %v1022, 5
  %v1025 = vsel %vm437, %v1020, %v1024
  %v1027 = vshrl.u32 %v391, 16
  %v1029 = vrot.slane %v1027, 4
  %v1030 = vshll.u32 %v391, 16
  %v1032 = vrot.slane %v1030, 5
  %v1033 = vor.u32 %v1029, %v1032
  %v1034 = vrot.slane %v1033, 4
  %v1036 = vshll.u32 %v392, 16
  %v1038 = vrot.slane %v1036, 5
  %v1039 = vsel %vm437, %v1034, %v1038
  %v1041 = vshrl.u32 %v393, 16
  %v1043 = vrot.slane %v1041, 4
  %v1044 = vshll.u32 %v393, 16
  %v1046 = vrot.slane %v1044, 5
  %v1047 = vor.u32 %v1043, %v1046
  %v1048 = vrot.slane %v1047, 4
  %v1050 = vshll.u32 %v394, 16
  %v1052 = vrot.slane %v1050, 5
  %v1053 = vsel %vm437, %v1048, %v1052
  %v1055 = vshrl.u32 %v395, 16
  %v1057 = vrot.slane %v1055, 4
  %v1058 = vshll.u32 %v395, 16
  %v1060 = vrot.slane %v1058, 5
  %v1061 = vor.u32 %v1057, %v1060
  %v1062 = vrot.slane %v1061, 4
  %v1064 = vshll.u32 %v396, 16
  %v1066 = vrot.slane %v1064, 5
  %v1067 = vsel %vm437, %v1062, %v1066
  %v1069 = vshrl.u32 %v397, 16
  %v1071 = vrot.slane %v1069, 4
  %v1072 = vshll.u32 %v397, 16
  %v1074 = vrot.slane %v1072, 5
  %v1075 = vor.u32 %v1071, %v1074
  %v1076 = vrot.slane %v1075, 4
  %v1078 = vshll.u32 %v398, 16
  %v1080 = vrot.slane %v1078, 5
  %v1081 = vsel %vm437, %v1076, %v1080
  %v1083 = vshrl.u32 %v399, 16
  %v1085 = vrot.slane %v1083, 4
  %v1086 = vshll.u32 %v399, 16
  %v1088 = vrot.slane %v1086, 5
  %v1089 = vor.u32 %v1085, %v1088
  %v1090 = vrot.slane %v1089, 4
  %v1092 = vshll.u32 %v400, 16
  %v1094 = vrot.slane %v1092, 5
  %v1095 = vsel %vm437, %v1090, %v1094
  %v1097 = vshrl.u32 %v401, 16
  %v1099 = vrot.slane %v1097, 4
  %v1100 = vshll.u32 %v401, 16
  %v1102 = vrot.slane %v1100, 5
  %v1103 = vor.u32 %v1099, %v1102
  %v1104 = vrot.slane %v1103, 4
  %v1106 = vshll.u32 %v402, 16
  %v1108 = vrot.slane %v1106, 5
  %v1109 = vsel %vm437, %v1104, %v1108
  %v1111 = vshrl.u32 %v403, 16
  %v1113 = vrot.slane %v1111, 4
  %v1114 = vshll.u32 %v403, 16
  %v1116 = vrot.slane %v1114, 5
  %v1117 = vor.u32 %v1113, %v1116
  %v1118 = vrot.slane %v1117, 4
  %v1120 = vshll.u32 %v404, 16
  %v1122 = vrot.slane %v1120, 5
  %v1123 = vsel %vm437, %v1118, %v1122
  %v1125 = vshrl.u32 %v405, 16
  %v1127 = vrot.slane %v1125, 4
  %v1128 = vshll.u32 %v405, 16
  %v1130 = vrot.slane %v1128, 5
  %v1131 = vor.u32 %v1127, %v1130
  %v1132 = vrot.slane %v1131, 4
  %v1134 = vshll.u32 %v406, 16
  %v1136 = vrot.slane %v1134, 5
  %v1137 = vsel %vm437, %v1132, %v1136
  %v1139 = vshrl.u32 %v407, 16
  %v1141 = vrot.slane %v1139, 4
  %v1142 = vshll.u32 %v407, 16
  %v1144 = vrot.slane %v1142, 5
  %v1145 = vor.u32 %v1141, %v1144
  %v1146 = vrot.slane %v1145, 4
  %v1148 = vshll.u32 %v408, 16
  %v1150 = vrot.slane %v1148, 5
  %v1151 = vsel %vm437, %v1146, %v1150
  %v1153 = vshrl.u32 %v409, 16
  %v1155 = vrot.slane %v1153, 4
  %v1156 = vshll.u32 %v409, 16
  %v1158 = vrot.slane %v1156, 5
  %v1159 = vor.u32 %v1155, %v1158
  %v1160 = vrot.slane %v1159, 4
  %v1162 = vshll.u32 %v410, 16
  %v1164 = vrot.slane %v1162, 5
  %v1165 = vsel %vm437, %v1160, %v1164
  %v1167 = vshrl.u32 %v411, 16
  %v1169 = vrot.slane %v1167, 4
  %v1170 = vshll.u32 %v411, 16
  %v1172 = vrot.slane %v1170, 5
  %v1173 = vor.u32 %v1169, %v1172
  %v1174 = vrot.slane %v1173, 4
  %v1176 = vshll.u32 %v412, 16
  %v1178 = vrot.slane %v1176, 5
  %v1179 = vsel %vm437, %v1174, %v1178
  %v1181 = vshrl.u32 %v413, 16
  %v1183 = vrot.slane %v1181, 4
  %v1184 = vshll.u32 %v413, 16
  %v1186 = vrot.slane %v1184, 5
  %v1187 = vor.u32 %v1183, %v1186
  %v1188 = vrot.slane %v1187, 4
  %v1190 = vshll.u32 %v414, 16
  %v1192 = vrot.slane %v1190, 5
  %v1193 = vsel %vm437, %v1188, %v1192
  %v1195 = vshrl.u32 %v415, 16
  %v1197 = vrot.slane %v1195, 4
  %v1198 = vshll.u32 %v415, 16
  %v1200 = vrot.slane %v1198, 5
  %v1201 = vor.u32 %v1197, %v1200
  %v1202 = vrot.slane %v1201, 4
  %v1204 = vshll.u32 %v416, 16
  %v1206 = vrot.slane %v1204, 5
  %v1207 = vsel %vm437, %v1202, %v1206
  %v1209 = vshrl.u32 %v417, 16
  %v1211 = vrot.slane %v1209, 4
  %v1212 = vshll.u32 %v417, 16
  %v1214 = vrot.slane %v1212, 5
  %v1215 = vor.u32 %v1211, %v1214
  %v1216 = vrot.slane %v1215, 4
  %v1218 = vshll.u32 %v418, 16
  %v1220 = vrot.slane %v1218, 5
  %v1221 = vsel %vm437, %v1216, %v1220
  %v1223 = vshrl.u32 %v419, 16
  %v1225 = vrot.slane %v1223, 4
  %v1226 = vshll.u32 %v419, 16
  %v1228 = vrot.slane %v1226, 5
  %v1229 = vor.u32 %v1225, %v1228
  %v1230 = vrot.slane %v1229, 4
  %v1232 = vshll.u32 %v420, 16
  %v1234 = vrot.slane %v1232, 5
  %v1235 = vsel %vm437, %v1230, %v1234
  %v1237 = vshrl.u32 %v421, 16
  %v1239 = vrot.slane %v1237, 4
  %v1240 = vshll.u32 %v421, 16
  %v1242 = vrot.slane %v1240, 5
  %v1243 = vor.u32 %v1239, %v1242
  %v1244 = vrot.slane %v1243, 4
  %v1246 = vshll.u32 %v422, 16
  %v1248 = vrot.slane %v1246, 5
  %v1249 = vsel %vm437, %v1244, %v1248
  %v1251 = vshrl.u32 %v423, 16
  %v1253 = vrot.slane %v1251, 4
  %v1254 = vshll.u32 %v423, 16
  %v1256 = vrot.slane %v1254, 5
  %v1257 = vor.u32 %v1253, %v1256
  %v1258 = vrot.slane %v1257, 4
  %v1260 = vshll.u32 %v424, 16
  %v1262 = vrot.slane %v1260, 5
  %v1263 = vsel %vm437, %v1258, %v1262
  %v1265 = vshrl.u32 %v425, 16
  %v1267 = vrot.slane %v1265, 4
  %v1268 = vshll.u32 %v425, 16
  %v1270 = vrot.slane %v1268, 5
  %v1271 = vor.u32 %v1267, %v1270
  %v1272 = vrot.slane %v1271, 4
  %v1274 = vshll.u32 %v426, 16
  %v1276 = vrot.slane %v1274, 5
  %v1277 = vsel %vm437, %v1272, %v1276
  %v1279 = vshrl.u32 %v427, 16
  %v1281 = vrot.slane %v1279, 4
  %v1282 = vshll.u32 %v427, 16
  %v1284 = vrot.slane %v1282, 5
  %v1285 = vor.u32 %v1281, %v1284
  %v1286 = vrot.slane %v1285, 4
  %v1288 = vshll.u32 %v428, 16
  %v1290 = vrot.slane %v1288, 5
  %v1291 = vsel %vm437, %v1286, %v1290
  %v1293 = vshrl.u32 %v429, 16
  %v1295 = vrot.slane %v1293, 4
  %v1296 = vshll.u32 %v429, 16
  %v1298 = vrot.slane %v1296, 5
  %v1299 = vor.u32 %v1295, %v1298
  %v1300 = vrot.slane %v1299, 4
  %v1302 = vshll.u32 %v430, 16
  %v1304 = vrot.slane %v1302, 5
  %v1305 = vsel %vm437, %v1300, %v1304
  %v1307 = vshrl.u32 %v431, 16
  %v1309 = vrot.slane %v1307, 4
  %v1310 = vshll.u32 %v431, 16
  %v1312 = vrot.slane %v1310, 5
  %v1313 = vor.u32 %v1309, %v1312
  %v1314 = vrot.slane %v1313, 4
  %v1316 = vshll.u32 %v432, 16
  %v1318 = vrot.slane %v1316, 5
  %v1319 = vsel %vm437, %v1314, %v1318
  %v1321 = vshrl.u32 %v433, 16
  %v1323 = vrot.slane %v1321, 4
  %v1324 = vshll.u32 %v433, 16
  %v1326 = vrot.slane %v1324, 5
  %v1327 = vor.u32 %v1323, %v1326
  %v1328 = vrot.slane %v1327, 4
  %v1330 = vshll.u32 %v434, 16
  %v1332 = vrot.slane %v1330, 5
  %v1333 = vsel %vm437, %v1328, %v1332
  %v1334 = vunpack.c.l.b16 %v451
  %v1335 = vunpack.c.l.b16 %v465
  %v1336 = vunpack.c.l.b16 %v479
  %v1337 = vunpack.c.l.b16 %v493
  %v1338 = vunpack.c.l.b16 %v507
  %v1339 = vunpack.c.l.b16 %v521
  %v1340 = vunpack.c.l.b16 %v535
  %v1341 = vunpack.c.l.b16 %v549
  %v1342 = vunpack.c.l.b16 %v563
  %v1343 = vunpack.c.l.b16 %v577
  %v1344 = vunpack.c.l.b16 %v591
  %v1345 = vunpack.c.l.b16 %v605
  %v1346 = vunpack.c.l.b16 %v619
  %v1347 = vunpack.c.l.b16 %v633
  %v1348 = vunpack.c.l.b16 %v647
  %v1349 = vunpack.c.l.b16 %v661
  %v1350 = vunpack.c.l.b16 %v675
  %v1351 = vunpack.c.l.b16 %v689
  %v1352 = vunpack.c.l.b16 %v703
  %v1353 = vunpack.c.l.b16 %v717
  %v1354 = vunpack.c.l.b16 %v731
  %v1355 = vunpack.c.l.b16 %v745
  %v1356 = vunpack.c.l.b16 %v759
  %v1357 = vunpack.c.l.b16 %v773
  %v1358 = vunpack.c.l.b16 %v787
  %v1359 = vunpack.c.l.b16 %v801
  %v1360 = vunpack.c.l.b16 %v815
  %v1361 = vunpack.c.l.b16 %v829
  %v1362 = vunpack.c.l.b16 %v843
  %v1363 = vunpack.c.l.b16 %v857
  %v1364 = vunpack.c.l.b16 %v871
  %v1365 = vunpack.c.l.b16 %v885
  %v1366 = vunpack.c.l.b16 %v899
  %v1367 = vunpack.c.l.b16 %v913
  %v1368 = vunpack.c.l.b16 %v927
  %v1369 = vunpack.c.l.b16 %v941
  %v1370 = vunpack.c.l.b16 %v955
  %v1371 = vunpack.c.l.b16 %v969
  %v1372 = vunpack.c.l.b16 %v983
  %v1373 = vunpack.c.l.b16 %v997
  %v1374 = vunpack.c.l.b16 %v1011
  %v1375 = vunpack.c.l.b16 %v1025
  %v1376 = vunpack.c.l.b16 %v1039
  %v1377 = vunpack.c.l.b16 %v1053
  %v1378 = vunpack.c.l.b16 %v1067
  %v1379 = vunpack.c.l.b16 %v1081
  %v1380 = vunpack.c.l.b16 %v1095
  %v1381 = vunpack.c.l.b16 %v1109
  %v1382 = vunpack.c.l.b16 %v1123
  %v1383 = vunpack.c.l.b16 %v1137
  %v1384 = vunpack.c.l.b16 %v1151
  %v1385 = vunpack.c.l.b16 %v1165
  %v1386 = vunpack.c.l.b16 %v1179
  %v1387 = vunpack.c.l.b16 %v1193
  %v1388 = vunpack.c.l.b16 %v1207
  %v1389 = vunpack.c.l.b16 %v1221
  %v1390 = vunpack.c.l.b16 %v1235
  %v1391 = vunpack.c.l.b16 %v1249
  %v1392 = vunpack.c.l.b16 %v1263
  %v1393 = vunpack.c.l.b16 %v1277
  %v1394 = vunpack.c.l.b16 %v1291
  %v1395 = vunpack.c.l.b16 %v1305
  %v1396 = vunpack.c.l.b16 %v1319
  %v1397 = vunpack.c.l.b16 %v1333
  %v1398 = vpack.c.b16 %v1335, %v1334
  %v1399 = vpack.c.b16 %v1337, %v1336
  %v1400 = vpack.c.b16 %v1339, %v1338
  %v1401 = vpack.c.b16 %v1341, %v1340
  %v1402 = vpack.c.b16 %v1343, %v1342
  %v1403 = vpack.c.b16 %v1345, %v1344
  %v1404 = vpack.c.b16 %v1347, %v1346
  %v1405 = vpack.c.b16 %v1349, %v1348
  %v1406 = vpack.c.b16 %v1351, %v1350
  %v1407 = vpack.c.b16 %v1353, %v1352
  %v1408 = vpack.c.b16 %v1355, %v1354
  %v1409 = vpack.c.b16 %v1357, %v1356
  %v1410 = vpack.c.b16 %v1359, %v1358
  %v1411 = vpack.c.b16 %v1361, %v1360
  %v1412 = vpack.c.b16 %v1363, %v1362
  %v1413 = vpack.c.b16 %v1365, %v1364
  %v1414 = vpack.c.b16 %v1367, %v1366
  %v1415 = vpack.c.b16 %v1369, %v1368
  %v1416 = vpack.c.b16 %v1371, %v1370
  %v1417 = vpack.c.b16 %v1373, %v1372
  %v1418 = vpack.c.b16 %v1375, %v1374
  %v1419 = vpack.c.b16 %v1377, %v1376
  %v1420 = vpack.c.b16 %v1379, %v1378
  %v1421 = vpack.c.b16 %v1381, %v1380
  %v1422 = vpack.c.b16 %v1383, %v1382
  %v1423 = vpack.c.b16 %v1385, %v1384
  %v1424 = vpack.c.b16 %v1387, %v1386
  %v1425 = vpack.c.b16 %v1389, %v1388
  %v1426 = vpack.c.b16 %v1391, %v1390
  %v1427 = vpack.c.b16 %v1393, %v1392
  %v1428 = vpack.c.b16 %v1395, %v1394
  %v1429 = vpack.c.b16 %v1397, %v1396
  %1462 = vst [vmem:[#allocation2 + $0x8] sm:$0xff] %v1398
  %1463 = vst [vmem:[#allocation2 + $0x50] sm:$0xff] %v1399
  %1464 = vst [vmem:[#allocation2 + $0x98] sm:$0xff] %v1400
  %1465 = vst [vmem:[#allocation2 + $0xe0] sm:$0xff] %v1401
  %1466 = vst [vmem:[#allocation2 + $0x128] sm:$0xff] %v1402
  %1467 = vst [vmem:[#allocation2 + $0x170] sm:$0xff] %v1403
  %1468 = vst [vmem:[#allocation2 + $0x1b8] sm:$0xff] %v1404
  %1469 = vst [vmem:[#allocation2 + $0x200] sm:$0xff] %v1405
  %1470 = vst [vmem:[#allocation2 + $0x248] sm:$0xff] %v1406
  %1471 = vst [vmem:[#allocation2 + $0x290] sm:$0xff] %v1407
  %1472 = vst [vmem:[#allocation2 + $0x2d8] sm:$0xff] %v1408
  %1473 = vst [vmem:[#allocation2 + $0x320] sm:$0xff] %v1409
  %1474 = vst [vmem:[#allocation2 + $0x368] sm:$0xff] %v1410
  %1475 = vst [vmem:[#allocation2 + $0x3b0] sm:$0xff] %v1411
  %1476 = vst [vmem:[#allocation2 + $0x3f8] sm:$0xff] %v1412
  %1477 = vst [vmem:[#allocation2 + $0x440] sm:$0xff] %v1413
  %1478 = vst [vmem:[#allocation2 + $0x488] sm:$0xff] %v1414
  %1479 = vst [vmem:[#allocation2 + $0x4d0] sm:$0xff] %v1415
  %1480 = vst [vmem:[#allocation2 + $0x518] sm:$0xff] %v1416
  %1481 = vst [vmem:[#allocation2 + $0x560] sm:$0xff] %v1417
  %1482 = vst [vmem:[#allocation2 + $0x5a8] sm:$0xff] %v1418
  %1483 = vst [vmem:[#allocation2 + $0x5f0] sm:$0xff] %v1419
  %1484 = vst [vmem:[#allocation2 + $0x638] sm:$0xff] %v1420
  %1485 = vst [vmem:[#allocation2 + $0x680] sm:$0xff] %v1421
  %1486 = vst [vmem:[#allocation2 + $0x6c8] sm:$0xff] %v1422
  %1487 = vst [vmem:[#allocation2 + $0x710] sm:$0xff] %v1423
  %1488 = vst [vmem:[#allocation2 + $0x758] sm:$0xff] %v1424
  %1489 = vst [vmem:[#allocation2 + $0x7a0] sm:$0xff] %v1425
  %1490 = vst [vmem:[#allocation2 + $0x7e8] sm:$0xff] %v1426
  %1491 = vst [vmem:[#allocation2 + $0x830] sm:$0xff] %v1427
  %1492 = vst [vmem:[#allocation2 + $0x878] sm:$0xff] %v1428
  %1493 = vst [vmem:[#allocation2 + $0x8c0] sm:$0xff] %v1429
  %v1494 = vld [vmem:[%s18] sm:$0xe]
  %v1495 = vld [vmem:[%s18 + $0x4] sm:$0x1]
  %v1496 = vld [vmem:[%s18 + $0x8] sm:$0xe]
  %v1497 = vld [vmem:[%s18 + $0xc] sm:$0x1]
  %v1498 = vld [vmem:[%s18 + $0x10] sm:$0xe]
  %v1499 = vld [vmem:[%s18 + $0x14] sm:$0x1]
  %v1500 = vld [vmem:[%s18 + $0x18] sm:$0xe]
  %v1501 = vld [vmem:[%s18 + $0x1c] sm:$0x1]
  %v1502 = vld [vmem:[%s18 + $0x20] sm:$0xe]
  %v1503 = vld [vmem:[%s18 + $0x24] sm:$0x1]
  %v1504 = vld [vmem:[%s18 + $0x28] sm:$0xe]
  %v1505 = vld [vmem:[%s18 + $0x2c] sm:$0x1]
  %v1506 = vld [vmem:[%s18 + $0x30] sm:$0xe]
  %v1507 = vld [vmem:[%s18 + $0x34] sm:$0x1]
  %v1508 = vld [vmem:[%s18 + $0x38] sm:$0xe]
  %v1509 = vld [vmem:[%s18 + $0x3c] sm:$0x1]
  %v1510 = vld [vmem:[%s18 + $0x50] sm:$0xe]
  %v1511 = vld [vmem:[%s18 + $0x54] sm:$0x1]
  %v1512 = vld [vmem:[%s18 + $0x58] sm:$0xe]
  %v1513 = vld [vmem:[%s18 + $0x5c] sm:$0x1]
  %v1514 = vld [vmem:[%s18 + $0x60] sm:$0xe]
  %v1515 = vld [vmem:[%s18 + $0x64] sm:$0x1]
  %v1516 = vld [vmem:[%s18 + $0x68] sm:$0xe]
  %v1517 = vld [vmem:[%s18 + $0x6c] sm:$0x1]
  %v1518 = vld [vmem:[%s18 + $0x70] sm:$0xe]
  %v1519 = vld [vmem:[%s18 + $0x74] sm:$0x1]
  %v1520 = vld [vmem:[%s18 + $0x78] sm:$0xe]
  %v1521 = vld [vmem:[%s18 + $0x7c] sm:$0x1]
  %v1522 = vld [vmem:[%s18 + $0x80] sm:$0xe]
  %v1523 = vld [vmem:[%s18 + $0x84] sm:$0x1]
  %v1524 = vld [vmem:[%s18 + $0x88] sm:$0xe]
  %v1525 = vld [vmem:[%s18 + $0x8c] sm:$0x1]
  %v1526 = vld [vmem:[%s18 + $0xa0] sm:$0xe]
  %v1527 = vld [vmem:[%s18 + $0xa4] sm:$0x1]
  %v1528 = vld [vmem:[%s18 + $0xa8] sm:$0xe]
  %v1529 = vld [vmem:[%s18 + $0xac] sm:$0x1]
  %v1530 = vld [vmem:[%s18 + $0xb0] sm:$0xe]
  %v1531 = vld [vmem:[%s18 + $0xb4] sm:$0x1]
  %v1532 = vld [vmem:[%s18 + $0xb8] sm:$0xe]
  %v1533 = vld [vmem:[%s18 + $0xbc] sm:$0x1]
  %v1534 = vld [vmem:[%s18 + $0xc0] sm:$0xe]
  %v1535 = vld [vmem:[%s18 + $0xc4] sm:$0x1]
  %v1536 = vld [vmem:[%s18 + $0xc8] sm:$0xe]
  %v1537 = vld [vmem:[%s18 + $0xcc] sm:$0x1]
  %v1538 = vld [vmem:[%s18 + $0xd0] sm:$0xe]
  %v1539 = vld [vmem:[%s18 + $0xd4] sm:$0x1]
  %v1540 = vld [vmem:[%s18 + $0xd8] sm:$0xe]
  %v1541 = vld [vmem:[%s18 + $0xdc] sm:$0x1]
  %v1542 = vld [vmem:[%s18 + $0xf0] sm:$0xe]
  %v1543 = vld [vmem:[%s18 + $0xf4] sm:$0x1]
  %v1544 = vld [vmem:[%s18 + $0xf8] sm:$0xe]
  %v1545 = vld [vmem:[%s18 + $0xfc] sm:$0x1]
  %v1546 = vld [vmem:[%s18 + $0x100] sm:$0xe]
  %v1547 = vld [vmem:[%s18 + $0x104] sm:$0x1]
  %v1548 = vld [vmem:[%s18 + $0x108] sm:$0xe]
  %v1549 = vld [vmem:[%s18 + $0x10c] sm:$0x1]
  %v1550 = vld [vmem:[%s18 + $0x110] sm:$0xe]
  %v1551 = vld [vmem:[%s18 + $0x114] sm:$0x1]
  %v1552 = vld [vmem:[%s18 + $0x118] sm:$0xe]
  %v1553 = vld [vmem:[%s18 + $0x11c] sm:$0x1]
  %v1554 = vld [vmem:[%s18 + $0x120] sm:$0xe]
  %v1555 = vld [vmem:[%s18 + $0x124] sm:$0x1]
  %v1556 = vld [vmem:[%s18 + $0x128] sm:$0xe]
  %v1557 = vld [vmem:[%s18 + $0x12c] sm:$0x1]
  %v1558 = vld [vmem:[%s18 + $0x140] sm:$0xe]
  %v1559 = vld [vmem:[%s18 + $0x144] sm:$0x1]
  %v1560 = vld [vmem:[%s18 + $0x148] sm:$0xe]
  %v1561 = vld [vmem:[%s18 + $0x14c] sm:$0x1]
  %v1562 = vld [vmem:[%s18 + $0x150] sm:$0xe]
  %v1563 = vld [vmem:[%s18 + $0x154] sm:$0x1]
  %v1564 = vld [vmem:[%s18 + $0x158] sm:$0xe]
  %v1565 = vld [vmem:[%s18 + $0x15c] sm:$0x1]
  %v1566 = vld [vmem:[%s18 + $0x160] sm:$0xe]
  %v1567 = vld [vmem:[%s18 + $0x164] sm:$0x1]
  %v1568 = vld [vmem:[%s18 + $0x168] sm:$0xe]
  %v1569 = vld [vmem:[%s18 + $0x16c] sm:$0x1]
  %v1570 = vld [vmem:[%s18 + $0x170] sm:$0xe]
  %v1571 = vld [vmem:[%s18 + $0x174] sm:$0x1]
  %v1572 = vld [vmem:[%s18 + $0x178] sm:$0xe]
  %v1573 = vld [vmem:[%s18 + $0x17c] sm:$0x1]
  %v1574 = vld [vmem:[%s18 + $0x190] sm:$0xe]
  %v1575 = vld [vmem:[%s18 + $0x194] sm:$0x1]
  %v1576 = vld [vmem:[%s18 + $0x198] sm:$0xe]
  %v1577 = vld [vmem:[%s18 + $0x19c] sm:$0x1]
  %v1578 = vld [vmem:[%s18 + $0x1a0] sm:$0xe]
  %v1579 = vld [vmem:[%s18 + $0x1a4] sm:$0x1]
  %v1580 = vld [vmem:[%s18 + $0x1a8] sm:$0xe]
  %v1581 = vld [vmem:[%s18 + $0x1ac] sm:$0x1]
  %v1582 = vld [vmem:[%s18 + $0x1b0] sm:$0xe]
  %v1583 = vld [vmem:[%s18 + $0x1b4] sm:$0x1]
  %v1584 = vld [vmem:[%s18 + $0x1b8] sm:$0xe]
  %v1585 = vld [vmem:[%s18 + $0x1bc] sm:$0x1]
  %v1586 = vld [vmem:[%s18 + $0x1c0] sm:$0xe]
  %v1587 = vld [vmem:[%s18 + $0x1c4] sm:$0x1]
  %v1588 = vld [vmem:[%s18 + $0x1c8] sm:$0xe]
  %v1589 = vld [vmem:[%s18 + $0x1cc] sm:$0x1]
  %v1590 = vld [vmem:[%s18 + $0x1e0] sm:$0xe]
  %v1591 = vld [vmem:[%s18 + $0x1e4] sm:$0x1]
  %v1592 = vld [vmem:[%s18 + $0x1e8] sm:$0xe]
  %v1593 = vld [vmem:[%s18 + $0x1ec] sm:$0x1]
  %v1594 = vld [vmem:[%s18 + $0x1f0] sm:$0xe]
  %v1595 = vld [vmem:[%s18 + $0x1f4] sm:$0x1]
  %v1596 = vld [vmem:[%s18 + $0x1f8] sm:$0xe]
  %v1597 = vld [vmem:[%s18 + $0x1fc] sm:$0x1]
  %v1598 = vld [vmem:[%s18 + $0x200] sm:$0xe]
  %v1599 = vld [vmem:[%s18 + $0x204] sm:$0x1]
  %v1600 = vld [vmem:[%s18 + $0x208] sm:$0xe]
  %v1601 = vld [vmem:[%s18 + $0x20c] sm:$0x1]
  %v1602 = vld [vmem:[%s18 + $0x210] sm:$0xe]
  %v1603 = vld [vmem:[%s18 + $0x214] sm:$0x1]
  %v1604 = vld [vmem:[%s18 + $0x218] sm:$0xe]
  %v1605 = vld [vmem:[%s18 + $0x21c] sm:$0x1]
  %v1606 = vld [vmem:[%s18 + $0x230] sm:$0xe]
  %v1607 = vld [vmem:[%s18 + $0x234] sm:$0x1]
  %v1608 = vld [vmem:[%s18 + $0x238] sm:$0xe]
  %v1609 = vld [vmem:[%s18 + $0x23c] sm:$0x1]
  %v1610 = vld [vmem:[%s18 + $0x240] sm:$0xe]
  %v1611 = vld [vmem:[%s18 + $0x244] sm:$0x1]
  %v1612 = vld [vmem:[%s18 + $0x248] sm:$0xe]
  %v1613 = vld [vmem:[%s18 + $0x24c] sm:$0x1]
  %v1614 = vld [vmem:[%s18 + $0x250] sm:$0xe]
  %v1615 = vld [vmem:[%s18 + $0x254] sm:$0x1]
  %v1616 = vld [vmem:[%s18 + $0x258] sm:$0xe]
  %v1617 = vld [vmem:[%s18 + $0x25c] sm:$0x1]
  %v1618 = vld [vmem:[%s18 + $0x260] sm:$0xe]
  %v1619 = vld [vmem:[%s18 + $0x264] sm:$0x1]
  %v1620 = vld [vmem:[%s18 + $0x268] sm:$0xe]
  %v1621 = vld [vmem:[%s18 + $0x26c] sm:$0x1]
  %vm1750 = vcmask 1042432
  %vm1751 = vcmask 1046532
  %vm1752 = vmor %vm1750, %vm1751
  %v1753 = vrot.slane %v1494, 5
  %v1754 = vrot.slane %v1753, 4
  %v1755 = vrot.slane %v1495, 5
  %v1756 = vsel %vm1752, %v1754, %v1755
  %v1757 = vrot.slane %v1496, 5
  %v1758 = vrot.slane %v1757, 4
  %v1759 = vrot.slane %v1497, 5
  %v1760 = vsel %vm1752, %v1758, %v1759
  %v1761 = vrot.slane %v1498, 5
  %v1762 = vrot.slane %v1761, 4
  %v1763 = vrot.slane %v1499, 5
  %v1764 = vsel %vm1752, %v1762, %v1763
  %v1765 = vrot.slane %v1500, 5
  %v1766 = vrot.slane %v1765, 4
  %v1767 = vrot.slane %v1501, 5
  %v1768 = vsel %vm1752, %v1766, %v1767
  %v1769 = vrot.slane %v1502, 5
  %v1770 = vrot.slane %v1769, 4
  %v1771 = vrot.slane %v1503, 5
  %v1772 = vsel %vm1752, %v1770, %v1771
  %v1773 = vrot.slane %v1504, 5
  %v1774 = vrot.slane %v1773, 4
  %v1775 = vrot.slane %v1505, 5
  %v1776 = vsel %vm1752, %v1774, %v1775
  %v1777 = vrot.slane %v1506, 5
  %v1778 = vrot.slane %v1777, 4
  %v1779 = vrot.slane %v1507, 5
  %v1780 = vsel %vm1752, %v1778, %v1779
  %v1781 = vrot.slane %v1508, 5
  %v1782 = vrot.slane %v1781, 4
  %v1783 = vrot.slane %v1509, 5
  %v1784 = vsel %vm1752, %v1782, %v1783
  %v1785 = vrot.slane %v1510, 5
  %v1786 = vrot.slane %v1785, 4
  %v1787 = vrot.slane %v1511, 5
  %v1788 = vsel %vm1752, %v1786, %v1787
  %v1789 = vrot.slane %v1512, 5
  %v1790 = vrot.slane %v1789, 4
  %v1791 = vrot.slane %v1513, 5
  %v1792 = vsel %vm1752, %v1790, %v1791
  %v1793 = vrot.slane %v1514, 5
  %v1794 = vrot.slane %v1793, 4
  %v1795 = vrot.slane %v1515, 5
  %v1796 = vsel %vm1752, %v1794, %v1795
  %v1797 = vrot.slane %v1516, 5
  %v1798 = vrot.slane %v1797, 4
  %v1799 = vrot.slane %v1517, 5
  %v1800 = vsel %vm1752, %v1798, %v1799
  %v1801 = vrot.slane %v1518, 5
  %v1802 = vrot.slane %v1801, 4
  %v1803 = vrot.slane %v1519, 5
  %v1804 = vsel %vm1752, %v1802, %v1803
  %v1805 = vrot.slane %v1520, 5
  %v1806 = vrot.slane %v1805, 4
  %v1807 = vrot.slane %v1521, 5
  %v1808 = vsel %vm1752, %v1806, %v1807
  %v1809 = vrot.slane %v1522, 5
  %v1810 = vrot.slane %v1809, 4
  %v1811 = vrot.slane %v1523, 5
  %v1812 = vsel %vm1752, %v1810, %v1811
  %v1813 = vrot.slane %v1524, 5
  %v1814 = vrot.slane %v1813, 4
  %v1815 = vrot.slane %v1525, 5
  %v1816 = vsel %vm1752, %v1814, %v1815
  %v1817 = vrot.slane %v1526, 5
  %v1818 = vrot.slane %v1817, 4
  %v1819 = vrot.slane %v1527, 5
  %v1820 = vsel %vm1752, %v1818, %v1819
  %v1821 = vrot.slane %v1528, 5
  %v1822 = vrot.slane %v1821, 4
  %v1823 = vrot.slane %v1529, 5
  %v1824 = vsel %vm1752, %v1822, %v1823
  %v1825 = vrot.slane %v1530, 5
  %v1826 = vrot.slane %v1825, 4
  %v1827 = vrot.slane %v1531, 5
  %v1828 = vsel %vm1752, %v1826, %v1827
  %v1829 = vrot.slane %v1532, 5
  %v1830 = vrot.slane %v1829, 4
  %v1831 = vrot.slane %v1533, 5
  %v1832 = vsel %vm1752, %v1830, %v1831
  %v1833 = vrot.slane %v1534, 5
  %v1834 = vrot.slane %v1833, 4
  %v1835 = vrot.slane %v1535, 5
  %v1836 = vsel %vm1752, %v1834, %v1835
  %v1837 = vrot.slane %v1536, 5
  %v1838 = vrot.slane %v1837, 4
  %v1839 = vrot.slane %v1537, 5
  %v1840 = vsel %vm1752, %v1838, %v1839
  %v1841 = vrot.slane %v1538, 5
  %v1842 = vrot.slane %v1841, 4
  %v1843 = vrot.slane %v1539, 5
  %v1844 = vsel %vm1752, %v1842, %v1843
  %v1845 = vrot.slane %v1540, 5
  %v1846 = vrot.slane %v1845, 4
  %v1847 = vrot.slane %v1541, 5
  %v1848 = vsel %vm1752, %v1846, %v1847
  %v1849 = vrot.slane %v1542, 5
  %v1850 = vrot.slane %v1849, 4
  %v1851 = vrot.slane %v1543, 5
  %v1852 = vsel %vm1752, %v1850, %v1851
  %v1853 = vrot.slane %v1544, 5
  %v1854 = vrot.slane %v1853, 4
  %v1855 = vrot.slane %v1545, 5
  %v1856 = vsel %vm1752, %v1854, %v1855
  %v1857 = vrot.slane %v1546, 5
  %v1858 = vrot.slane %v1857, 4
  %v1859 = vrot.slane %v1547, 5
  %v1860 = vsel %vm1752, %v1858, %v1859
  %v1861 = vrot.slane %v1548, 5
  %v1862 = vrot.slane %v1861, 4
  %v1863 = vrot.slane %v1549, 5
  %v1864 = vsel %vm1752, %v1862, %v1863
  %v1865 = vrot.slane %v1550, 5
  %v1866 = vrot.slane %v1865, 4
  %v1867 = vrot.slane %v1551, 5
  %v1868 = vsel %vm1752, %v1866, %v1867
  %v1869 = vrot.slane %v1552, 5
  %v1870 = vrot.slane %v1869, 4
  %v1871 = vrot.slane %v1553, 5
  %v1872 = vsel %vm1752, %v1870, %v1871
  %v1873 = vrot.slane %v1554, 5
  %v1874 = vrot.slane %v1873, 4
  %v1875 = vrot.slane %v1555, 5
  %v1876 = vsel %vm1752, %v1874, %v1875
  %v1877 = vrot.slane %v1556, 5
  %v1878 = vrot.slane %v1877, 4
  %v1879 = vrot.slane %v1557, 5
  %v1880 = vsel %vm1752, %v1878, %v1879
  %v1881 = vrot.slane %v1558, 5
  %v1882 = vrot.slane %v1881, 4
  %v1883 = vrot.slane %v1559, 5
  %v1884 = vsel %vm1752, %v1882, %v1883
  %v1885 = vrot.slane %v1560, 5
  %v1886 = vrot.slane %v1885, 4
  %v1887 = vrot.slane %v1561, 5
  %v1888 = vsel %vm1752, %v1886, %v1887
  %v1889 = vrot.slane %v1562, 5
  %v1890 = vrot.slane %v1889, 4
  %v1891 = vrot.slane %v1563, 5
  %v1892 = vsel %vm1752, %v1890, %v1891
  %v1893 = vrot.slane %v1564, 5
  %v1894 = vrot.slane %v1893, 4
  %v1895 = vrot.slane %v1565, 5
  %v1896 = vsel %vm1752, %v1894, %v1895
  %v1897 = vrot.slane %v1566, 5
  %v1898 = vrot.slane %v1897, 4
  %v1899 = vrot.slane %v1567, 5
  %v1900 = vsel %vm1752, %v1898, %v1899
  %v1901 = vrot.slane %v1568, 5
  %v1902 = vrot.slane %v1901, 4
  %v1903 = vrot.slane %v1569, 5
  %v1904 = vsel %vm1752, %v1902, %v1903
  %v1905 = vrot.slane %v1570, 5
  %v1906 = vrot.slane %v1905, 4
  %v1907 = vrot.slane %v1571, 5
  %v1908 = vsel %vm1752, %v1906, %v1907
  %v1909 = vrot.slane %v1572, 5
  %v1910 = vrot.slane %v1909, 4
  %v1911 = vrot.slane %v1573, 5
  %v1912 = vsel %vm1752, %v1910, %v1911
  %v1913 = vrot.slane %v1574, 5
  %v1914 = vrot.slane %v1913, 4
  %v1915 = vrot.slane %v1575, 5
  %v1916 = vsel %vm1752, %v1914, %v1915
  %v1917 = vrot.slane %v1576, 5
  %v1918 = vrot.slane %v1917, 4
  %v1919 = vrot.slane %v1577, 5
  %v1920 = vsel %vm1752, %v1918, %v1919
  %v1921 = vrot.slane %v1578, 5
  %v1922 = vrot.slane %v1921, 4
  %v1923 = vrot.slane %v1579, 5
  %v1924 = vsel %vm1752, %v1922, %v1923
  %v1925 = vrot.slane %v1580, 5
  %v1926 = vrot.slane %v1925, 4
  %v1927 = vrot.slane %v1581, 5
  %v1928 = vsel %vm1752, %v1926, %v1927
  %v1929 = vrot.slane %v1582, 5
  %v1930 = vrot.slane %v1929, 4
  %v1931 = vrot.slane %v1583, 5
  %v1932 = vsel %vm1752, %v1930, %v1931
  %v1933 = vrot.slane %v1584, 5
  %v1934 = vrot.slane %v1933, 4
  %v1935 = vrot.slane %v1585, 5
  %v1936 = vsel %vm1752, %v1934, %v1935
  %v1937 = vrot.slane %v1586, 5
  %v1938 = vrot.slane %v1937, 4
  %v1939 = vrot.slane %v1587, 5
  %v1940 = vsel %vm1752, %v1938, %v1939
  %v1941 = vrot.slane %v1588, 5
  %v1942 = vrot.slane %v1941, 4
  %v1943 = vrot.slane %v1589, 5
  %v1944 = vsel %vm1752, %v1942, %v1943
  %v1945 = vrot.slane %v1590, 5
  %v1946 = vrot.slane %v1945, 4
  %v1947 = vrot.slane %v1591, 5
  %v1948 = vsel %vm1752, %v1946, %v1947
  %v1949 = vrot.slane %v1592, 5
  %v1950 = vrot.slane %v1949, 4
  %v1951 = vrot.slane %v1593, 5
  %v1952 = vsel %vm1752, %v1950, %v1951
  %v1953 = vrot.slane %v1594, 5
  %v1954 = vrot.slane %v1953, 4
  %v1955 = vrot.slane %v1595, 5
  %v1956 = vsel %vm1752, %v1954, %v1955
  %v1957 = vrot.slane %v1596, 5
  %v1958 = vrot.slane %v1957, 4
  %v1959 = vrot.slane %v1597, 5
  %v1960 = vsel %vm1752, %v1958, %v1959
  %v1961 = vrot.slane %v1598, 5
  %v1962 = vrot.slane %v1961, 4
  %v1963 = vrot.slane %v1599, 5
  %v1964 = vsel %vm1752, %v1962, %v1963
  %v1965 = vrot.slane %v1600, 5
  %v1966 = vrot.slane %v1965, 4
  %v1967 = vrot.slane %v1601, 5
  %v1968 = vsel %vm1752, %v1966, %v1967
  %v1969 = vrot.slane %v1602, 5
  %v1970 = vrot.slane %v1969, 4
  %v1971 = vrot.slane %v1603, 5
  %v1972 = vsel %vm1752, %v1970, %v1971
  %v1973 = vrot.slane %v1604, 5
  %v1974 = vrot.slane %v1973, 4
  %v1975 = vrot.slane %v1605, 5
  %v1976 = vsel %vm1752, %v1974, %v1975
  %v1977 = vrot.slane %v1606, 5
  %v1978 = vrot.slane %v1977, 4
  %v1979 = vrot.slane %v1607, 5
  %v1980 = vsel %vm1752, %v1978, %v1979
  %v1981 = vrot.slane %v1608, 5
  %v1982 = vrot.slane %v1981, 4
  %v1983 = vrot.slane %v1609, 5
  %v1984 = vsel %vm1752, %v1982, %v1983
  %v1985 = vrot.slane %v1610, 5
  %v1986 = vrot.slane %v1985, 4
  %v1987 = vrot.slane %v1611, 5
  %v1988 = vsel %vm1752, %v1986, %v1987
  %v1989 = vrot.slane %v1612, 5
  %v1990 = vrot.slane %v1989, 4
  %v1991 = vrot.slane %v1613, 5
  %v1992 = vsel %vm1752, %v1990, %v1991
  %v1993 = vrot.slane %v1614, 5
  %v1994 = vrot.slane %v1993, 4
  %v1995 = vrot.slane %v1615, 5
  %v1996 = vsel %vm1752, %v1994, %v1995
  %v1997 = vrot.slane %v1616, 5
  %v1998 = vrot.slane %v1997, 4
  %v1999 = vrot.slane %v1617, 5
  %v2000 = vsel %vm1752, %v1998, %v1999
  %v2001 = vrot.slane %v1618, 5
  %v2002 = vrot.slane %v2001, 4
  %v2003 = vrot.slane %v1619, 5
  %v2004 = vsel %vm1752, %v2002, %v2003
  %v2005 = vrot.slane %v1620, 5
  %v2006 = vrot.slane %v2005, 4
  %v2007 = vrot.slane %v1621, 5
  %v2008 = vsel %vm1752, %v2006, %v2007
  %v2009 = vunpack.c.l.b16 %v1756
  %v2010 = vunpack.c.l.b16 %v1760
  %v2011 = vunpack.c.l.b16 %v1764
  %v2012 = vunpack.c.l.b16 %v1768
  %v2013 = vunpack.c.l.b16 %v1772
  %v2014 = vunpack.c.l.b16 %v1776
  %v2015 = vunpack.c.l.b16 %v1780
  %v2016 = vunpack.c.l.b16 %v1784
  %v2017 = vunpack.c.l.b16 %v1788
  %v2018 = vunpack.c.l.b16 %v1792
  %v2019 = vunpack.c.l.b16 %v1796
  %v2020 = vunpack.c.l.b16 %v1800
  %v2021 = vunpack.c.l.b16 %v1804
  %v2022 = vunpack.c.l.b16 %v1808
  %v2023 = vunpack.c.l.b16 %v1812
  %v2024 = vunpack.c.l.b16 %v1816
  %v2025 = vunpack.c.l.b16 %v1820
  %v2026 = vunpack.c.l.b16 %v1824
  %v2027 = vunpack.c.l.b16 %v1828
  %v2028 = vunpack.c.l.b16 %v1832
  %v2029 = vunpack.c.l.b16 %v1836
  %v2030 = vunpack.c.l.b16 %v1840
  %v2031 = vunpack.c.l.b16 %v1844
  %v2032 = vunpack.c.l.b16 %v1848
  %v2033 = vunpack.c.l.b16 %v1852
  %v2034 = vunpack.c.l.b16 %v1856
  %v2035 = vunpack.c.l.b16 %v1860
  %v2036 = vunpack.c.l.b16 %v1864
  %v2037 = vunpack.c.l.b16 %v1868
  %v2038 = vunpack.c.l.b16 %v1872
  %v2039 = vunpack.c.l.b16 %v1876
  %v2040 = vunpack.c.l.b16 %v1880
  %v2041 = vunpack.c.l.b16 %v1884
  %v2042 = vunpack.c.l.b16 %v1888
  %v2043 = vunpack.c.l.b16 %v1892
  %v2044 = vunpack.c.l.b16 %v1896
  %v2045 = vunpack.c.l.b16 %v1900
  %v2046 = vunpack.c.l.b16 %v1904
  %v2047 = vunpack.c.l.b16 %v1908
  %v2048 = vunpack.c.l.b16 %v1912
  %v2049 = vunpack.c.l.b16 %v1916
  %v2050 = vunpack.c.l.b16 %v1920
  %v2051 = vunpack.c.l.b16 %v1924
  %v2052 = vunpack.c.l.b16 %v1928
  %v2053 = vunpack.c.l.b16 %v1932
  %v2054 = vunpack.c.l.b16 %v1936
  %v2055 = vunpack.c.l.b16 %v1940
  %v2056 = vunpack.c.l.b16 %v1944
  %v2057 = vunpack.c.l.b16 %v1948
  %v2058 = vunpack.c.l.b16 %v1952
  %v2059 = vunpack.c.l.b16 %v1956
  %v2060 = vunpack.c.l.b16 %v1960
  %v2061 = vunpack.c.l.b16 %v1964
  %v2062 = vunpack.c.l.b16 %v1968
  %v2063 = vunpack.c.l.b16 %v1972
  %v2064 = vunpack.c.l.b16 %v1976
  %v2065 = vunpack.c.l.b16 %v1980
  %v2066 = vunpack.c.l.b16 %v1984
  %v2067 = vunpack.c.l.b16 %v1988
  %v2068 = vunpack.c.l.b16 %v1992
  %v2069 = vunpack.c.l.b16 %v1996
  %v2070 = vunpack.c.l.b16 %v2000
  %v2071 = vunpack.c.l.b16 %v2004
  %v2072 = vunpack.c.l.b16 %v2008
  %v2073 = vpack.c.b16 %v2010, %v2009
  %v2074 = vpack.c.b16 %v2012, %v2011
  %v2075 = vpack.c.b16 %v2014, %v2013
  %v2076 = vpack.c.b16 %v2016, %v2015
  %v2077 = vpack.c.b16 %v2018, %v2017
  %v2078 = vpack.c.b16 %v2020, %v2019
  %v2079 = vpack.c.b16 %v2022, %v2021
  %v2080 = vpack.c.b16 %v2024, %v2023
  %v2081 = vpack.c.b16 %v2026, %v2025
  %v2082 = vpack.c.b16 %v2028, %v2027
  %v2083 = vpack.c.b16 %v2030, %v2029
  %v2084 = vpack.c.b16 %v2032, %v2031
  %v2085 = vpack.c.b16 %v2034, %v2033
  %v2086 = vpack.c.b16 %v2036, %v2035
  %v2087 = vpack.c.b16 %v2038, %v2037
  %v2088 = vpack.c.b16 %v2040, %v2039
  %v2089 = vpack.c.b16 %v2042, %v2041
  %v2090 = vpack.c.b16 %v2044, %v2043
  %v2091 = vpack.c.b16 %v2046, %v2045
  %v2092 = vpack.c.b16 %v2048, %v2047
  %v2093 = vpack.c.b16 %v2050, %v2049
  %v2094 = vpack.c.b16 %v2052, %v2051
  %v2095 = vpack.c.b16 %v2054, %v2053
  %v2096 = vpack.c.b16 %v2056, %v2055
  %v2097 = vpack.c.b16 %v2058, %v2057
  %v2098 = vpack.c.b16 %v2060, %v2059
  %v2099 = vpack.c.b16 %v2062, %v2061
  %v2100 = vpack.c.b16 %v2064, %v2063
  %v2101 = vpack.c.b16 %v2066, %v2065
  %v2102 = vpack.c.b16 %v2068, %v2067
  %v2103 = vpack.c.b16 %v2070, %v2069
  %v2104 = vpack.c.b16 %v2072, %v2071
  %2137 = vst [vmem:[#allocation2 + $0x10] sm:$0xff] %v2073
  %2138 = vst [vmem:[#allocation2 + $0x58] sm:$0xff] %v2074
  %2139 = vst [vmem:[#allocation2 + $0xa0] sm:$0xff] %v2075
  %2140 = vst [vmem:[#allocation2 + $0xe8] sm:$0xff] %v2076
  %2141 = vst [vmem:[#allocation2 + $0x130] sm:$0xff] %v2077
  %2142 = vst [vmem:[#allocation2 + $0x178] sm:$0xff] %v2078
  %2143 = vst [vmem:[#allocation2 + $0x1c0] sm:$0xff] %v2079
  %2144 = vst [vmem:[#allocation2 + $0x208] sm:$0xff] %v2080
  %2145 = vst [vmem:[#allocation2 + $0x250] sm:$0xff] %v2081
  %2146 = vst [vmem:[#allocation2 + $0x298] sm:$0xff] %v2082
  %2147 = vst [vmem:[#allocation2 + $0x2e0] sm:$0xff] %v2083
  %2148 = vst [vmem:[#allocation2 + $0x328] sm:$0xff] %v2084
  %2149 = vst [vmem:[#allocation2 + $0x370] sm:$0xff] %v2085
  %2150 = vst [vmem:[#allocation2 + $0x3b8] sm:$0xff] %v2086
  %2151 = vst [vmem:[#allocation2 + $0x400] sm:$0xff] %v2087
  %2152 = vst [vmem:[#allocation2 + $0x448] sm:$0xff] %v2088
  %2153 = vst [vmem:[#allocation2 + $0x490] sm:$0xff] %v2089
  %2154 = vst [vmem:[#allocation2 + $0x4d8] sm:$0xff] %v2090
  %2155 = vst [vmem:[#allocation2 + $0x520] sm:$0xff] %v2091
  %2156 = vst [vmem:[#allocation2 + $0x568] sm:$0xff] %v2092
  %2157 = vst [vmem:[#allocation2 + $0x5b0] sm:$0xff] %v2093
  %2158 = vst [vmem:[#allocation2 + $0x5f8] sm:$0xff] %v2094
  %2159 = vst [vmem:[#allocation2 + $0x640] sm:$0xff] %v2095
  %2160 = vst [vmem:[#allocation2 + $0x688] sm:$0xff] %v2096
  %2161 = vst [vmem:[#allocation2 + $0x6d0] sm:$0xff] %v2097
  %2162 = vst [vmem:[#allocation2 + $0x718] sm:$0xff] %v2098
  %2163 = vst [vmem:[#allocation2 + $0x760] sm:$0xff] %v2099
  %2164 = vst [vmem:[#allocation2 + $0x7a8] sm:$0xff] %v2100
  %2165 = vst [vmem:[#allocation2 + $0x7f0] sm:$0xff] %v2101
  %2166 = vst [vmem:[#allocation2 + $0x838] sm:$0xff] %v2102
  %2167 = vst [vmem:[#allocation2 + $0x880] sm:$0xff] %v2103
  %2168 = vst [vmem:[#allocation2 + $0x8c8] sm:$0xff] %v2104
  %s2169 = sadd.s32 %s15, 1
  %s2170 = smul.u32 %s2169, 2
  %s2171 = smul.addr %s2170, 4
  %s2172 = scalar_lea.vmem %s0, %s2171
  %v2173 = vld [vmem:[%s2172] sm:$0xf]
  %v2174 = vld [vmem:[%s2172 + $0x8] sm:$0xf]
  %v2175 = vld [vmem:[%s2172 + $0x10] sm:$0xf]
  %v2176 = vld [vmem:[%s2172 + $0x18] sm:$0xf]
  %v2177 = vld [vmem:[%s2172 + $0x20] sm:$0xf]
  %v2178 = vld [vmem:[%s2172 + $0x28] sm:$0xf]
  %v2179 = vld [vmem:[%s2172 + $0x30] sm:$0xf]
  %v2180 = vld [vmem:[%s2172 + $0x38] sm:$0xf]
  %v2181 = vld [vmem:[%s2172 + $0x50] sm:$0xf]
  %v2182 = vld [vmem:[%s2172 + $0x58] sm:$0xf]
  %v2183 = vld [vmem:[%s2172 + $0x60] sm:$0xf]
  %v2184 = vld [vmem:[%s2172 + $0x68] sm:$0xf]
  %v2185 = vld [vmem:[%s2172 + $0x70] sm:$0xf]
  %v2186 = vld [vmem:[%s2172 + $0x78] sm:$0xf]
  %v2187 = vld [vmem:[%s2172 + $0x80] sm:$0xf]
  %v2188 = vld [vmem:[%s2172 + $0x88] sm:$0xf]
  %v2189 = vld [vmem:[%s2172 + $0xa0] sm:$0xf]
  %v2190 = vld [vmem:[%s2172 + $0xa8] sm:$0xf]
  %v2191 = vld [vmem:[%s2172 + $0xb0] sm:$0xf]
  %v2192 = vld [vmem:[%s2172 + $0xb8] sm:$0xf]
  %v2193 = vld [vmem:[%s2172 + $0xc0] sm:$0xf]
  %v2194 = vld [vmem:[%s2172 + $0xc8] sm:$0xf]
  %v2195 = vld [vmem:[%s2172 + $0xd0] sm:$0xf]
  %v2196 = vld [vmem:[%s2172 + $0xd8] sm:$0xf]
  %v2197 = vld [vmem:[%s2172 + $0xf0] sm:$0xf]
  %v2198 = vld [vmem:[%s2172 + $0xf8] sm:$0xf]
  %v2199 = vld [vmem:[%s2172 + $0x100] sm:$0xf]
  %v2200 = vld [vmem:[%s2172 + $0x108] sm:$0xf]
  %v2201 = vld [vmem:[%s2172 + $0x110] sm:$0xf]
  %v2202 = vld [vmem:[%s2172 + $0x118] sm:$0xf]
  %v2203 = vld [vmem:[%s2172 + $0x120] sm:$0xf]
  %v2204 = vld [vmem:[%s2172 + $0x128] sm:$0xf]
  %v2205 = vld [vmem:[%s2172 + $0x140] sm:$0xf]
  %v2206 = vld [vmem:[%s2172 + $0x148] sm:$0xf]
  %v2207 = vld [vmem:[%s2172 + $0x150] sm:$0xf]
  %v2208 = vld [vmem:[%s2172 + $0x158] sm:$0xf]
  %v2209 = vld [vmem:[%s2172 + $0x160] sm:$0xf]
  %v2210 = vld [vmem:[%s2172 + $0x168] sm:$0xf]
  %v2211 = vld [vmem:[%s2172 + $0x170] sm:$0xf]
  %v2212 = vld [vmem:[%s2172 + $0x178] sm:$0xf]
  %v2213 = vld [vmem:[%s2172 + $0x190] sm:$0xf]
  %v2214 = vld [vmem:[%s2172 + $0x198] sm:$0xf]
  %v2215 = vld [vmem:[%s2172 + $0x1a0] sm:$0xf]
  %v2216 = vld [vmem:[%s2172 + $0x1a8] sm:$0xf]
  %v2217 = vld [vmem:[%s2172 + $0x1b0] sm:$0xf]
  %v2218 = vld [vmem:[%s2172 + $0x1b8] sm:$0xf]
  %v2219 = vld [vmem:[%s2172 + $0x1c0] sm:$0xf]
  %v2220 = vld [vmem:[%s2172 + $0x1c8] sm:$0xf]
  %v2221 = vld [vmem:[%s2172 + $0x1e0] sm:$0xf]
  %v2222 = vld [vmem:[%s2172 + $0x1e8] sm:$0xf]
  %v2223 = vld [vmem:[%s2172 + $0x1f0] sm:$0xf]
  %v2224 = vld [vmem:[%s2172 + $0x1f8] sm:$0xf]
  %v2225 = vld [vmem:[%s2172 + $0x200] sm:$0xf]
  %v2226 = vld [vmem:[%s2172 + $0x208] sm:$0xf]
  %v2227 = vld [vmem:[%s2172 + $0x210] sm:$0xf]
  %v2228 = vld [vmem:[%s2172 + $0x218] sm:$0xf]
  %v2229 = vld [vmem:[%s2172 + $0x230] sm:$0xf]
  %v2230 = vld [vmem:[%s2172 + $0x238] sm:$0xf]
  %v2231 = vld [vmem:[%s2172 + $0x240] sm:$0xf]
  %v2232 = vld [vmem:[%s2172 + $0x248] sm:$0xf]
  %v2233 = vld [vmem:[%s2172 + $0x250] sm:$0xf]
  %v2234 = vld [vmem:[%s2172 + $0x258] sm:$0xf]
  %v2235 = vld [vmem:[%s2172 + $0x260] sm:$0xf]
  %v2236 = vld [vmem:[%s2172 + $0x268] sm:$0xf]
  %v2301 = vunpack.c.l.b16 %v2173
  %v2302 = vunpack.c.l.b16 %v2174
  %v2303 = vunpack.c.l.b16 %v2175
  %v2304 = vunpack.c.l.b16 %v2176
  %v2305 = vunpack.c.l.b16 %v2177
  %v2306 = vunpack.c.l.b16 %v2178
  %v2307 = vunpack.c.l.b16 %v2179
  %v2308 = vunpack.c.l.b16 %v2180
  %v2309 = vunpack.c.l.b16 %v2181
  %v2310 = vunpack.c.l.b16 %v2182
  %v2311 = vunpack.c.l.b16 %v2183
  %v2312 = vunpack.c.l.b16 %v2184
  %v2313 = vunpack.c.l.b16 %v2185
  %v2314 = vunpack.c.l.b16 %v2186
  %v2315 = vunpack.c.l.b16 %v2187
  %v2316 = vunpack.c.l.b16 %v2188
  %v2317 = vunpack.c.l.b16 %v2189
  %v2318 = vunpack.c.l.b16 %v2190
  %v2319 = vunpack.c.l.b16 %v2191
  %v2320 = vunpack.c.l.b16 %v2192
  %v2321 = vunpack.c.l.b16 %v2193
  %v2322 = vunpack.c.l.b16 %v2194
  %v2323 = vunpack.c.l.b16 %v2195
  %v2324 = vunpack.c.l.b16 %v2196
  %v2325 = vunpack.c.l.b16 %v2197
  %v2326 = vunpack.c.l.b16 %v2198
  %v2327 = vunpack.c.l.b16 %v2199
  %v2328 = vunpack.c.l.b16 %v2200
  %v2329 = vunpack.c.l.b16 %v2201
  %v2330 = vunpack.c.l.b16 %v2202
  %v2331 = vunpack.c.l.b16 %v2203
  %v2332 = vunpack.c.l.b16 %v2204
  %v2333 = vunpack.c.l.b16 %v2205
  %v2334 = vunpack.c.l.b16 %v2206
  %v2335 = vunpack.c.l.b16 %v2207
  %v2336 = vunpack.c.l.b16 %v2208
  %v2337 = vunpack.c.l.b16 %v2209
  %v2338 = vunpack.c.l.b16 %v2210
  %v2339 = vunpack.c.l.b16 %v2211
  %v2340 = vunpack.c.l.b16 %v2212
  %v2341 = vunpack.c.l.b16 %v2213
  %v2342 = vunpack.c.l.b16 %v2214
  %v2343 = vunpack.c.l.b16 %v2215
  %v2344 = vunpack.c.l.b16 %v2216
  %v2345 = vunpack.c.l.b16 %v2217
  %v2346 = vunpack.c.l.b16 %v2218
  %v2347 = vunpack.c.l.b16 %v2219
  %v2348 = vunpack.c.l.b16 %v2220
  %v2349 = vunpack.c.l.b16 %v2221
  %v2350 = vunpack.c.l.b16 %v2222
  %v2351 = vunpack.c.l.b16 %v2223
  %v2352 = vunpack.c.l.b16 %v2224
  %v2353 = vunpack.c.l.b16 %v2225
  %v2354 = vunpack.c.l.b16 %v2226
  %v2355 = vunpack.c.l.b16 %v2227
  %v2356 = vunpack.c.l.b16 %v2228
  %v2357 = vunpack.c.l.b16 %v2229
  %v2358 = vunpack.c.l.b16 %v2230
  %v2359 = vunpack.c.l.b16 %v2231
  %v2360 = vunpack.c.l.b16 %v2232
  %v2361 = vunpack.c.l.b16 %v2233
  %v2362 = vunpack.c.l.b16 %v2234
  %v2363 = vunpack.c.l.b16 %v2235
  %v2364 = vunpack.c.l.b16 %v2236
  %v2365 = vpack.c.b16 %v2302, %v2301
  %v2366 = vpack.c.b16 %v2304, %v2303
  %v2367 = vpack.c.b16 %v2306, %v2305
  %v2368 = vpack.c.b16 %v2308, %v2307
  %v2369 = vpack.c.b16 %v2310, %v2309
  %v2370 = vpack.c.b16 %v2312, %v2311
  %v2371 = vpack.c.b16 %v2314, %v2313
  %v2372 = vpack.c.b16 %v2316, %v2315
  %v2373 = vpack.c.b16 %v2318, %v2317
  %v2374 = vpack.c.b16 %v2320, %v2319
  %v2375 = vpack.c.b16 %v2322, %v2321
  %v2376 = vpack.c.b16 %v2324, %v2323
  %v2377 = vpack.c.b16 %v2326, %v2325
  %v2378 = vpack.c.b16 %v2328, %v2327
  %v2379 = vpack.c.b16 %v2330, %v2329
  %v2380 = vpack.c.b16 %v2332, %v2331
  %v2381 = vpack.c.b16 %v2334, %v2333
  %v2382 = vpack.c.b16 %v2336, %v2335
  %v2383 = vpack.c.b16 %v2338, %v2337
  %v2384 = vpack.c.b16 %v2340, %v2339
  %v2385 = vpack.c.b16 %v2342, %v2341
  %v2386 = vpack.c.b16 %v2344, %v2343
  %v2387 = vpack.c.b16 %v2346, %v2345
  %v2388 = vpack.c.b16 %v2348, %v2347
  %v2389 = vpack.c.b16 %v2350, %v2349
  %v2390 = vpack.c.b16 %v2352, %v2351
  %v2391 = vpack.c.b16 %v2354, %v2353
  %v2392 = vpack.c.b16 %v2356, %v2355
  %v2393 = vpack.c.b16 %v2358, %v2357
  %v2394 = vpack.c.b16 %v2360, %v2359
  %v2395 = vpack.c.b16 %v2362, %v2361
  %v2396 = vpack.c.b16 %v2364, %v2363
  %2429 = vst [vmem:[#allocation2 + $0x18] sm:$0xff] %v2365
  %2430 = vst [vmem:[#allocation2 + $0x60] sm:$0xff] %v2366
  %2431 = vst [vmem:[#allocation2 + $0xa8] sm:$0xff] %v2367
  %2432 = vst [vmem:[#allocation2 + $0xf0] sm:$0xff] %v2368
  %2433 = vst [vmem:[#allocation2 + $0x138] sm:$0xff] %v2369
  %2434 = vst [vmem:[#allocation2 + $0x180] sm:$0xff] %v2370
  %2435 = vst [vmem:[#allocation2 + $0x1c8] sm:$0xff] %v2371
  %2436 = vst [vmem:[#allocation2 + $0x210] sm:$0xff] %v2372
  %2437 = vst [vmem:[#allocation2 + $0x258] sm:$0xff] %v2373
  %2438 = vst [vmem:[#allocation2 + $0x2a0] sm:$0xff] %v2374
  %2439 = vst [vmem:[#allocation2 + $0x2e8] sm:$0xff] %v2375
  %2440 = vst [vmem:[#allocation2 + $0x330] sm:$0xff] %v2376
  %2441 = vst [vmem:[#allocation2 + $0x378] sm:$0xff] %v2377
  %2442 = vst [vmem:[#allocation2 + $0x3c0] sm:$0xff] %v2378
  %2443 = vst [vmem:[#allocation2 + $0x408] sm:$0xff] %v2379
  %2444 = vst [vmem:[#allocation2 + $0x450] sm:$0xff] %v2380
  %2445 = vst [vmem:[#allocation2 + $0x498] sm:$0xff] %v2381
  %2446 = vst [vmem:[#allocation2 + $0x4e0] sm:$0xff] %v2382
  %2447 = vst [vmem:[#allocation2 + $0x528] sm:$0xff] %v2383
  %2448 = vst [vmem:[#allocation2 + $0x570] sm:$0xff] %v2384
  %2449 = vst [vmem:[#allocation2 + $0x5b8] sm:$0xff] %v2385
  %2450 = vst [vmem:[#allocation2 + $0x600] sm:$0xff] %v2386
  %2451 = vst [vmem:[#allocation2 + $0x648] sm:$0xff] %v2387
  %2452 = vst [vmem:[#allocation2 + $0x690] sm:$0xff] %v2388
  %2453 = vst [vmem:[#allocation2 + $0x6d8] sm:$0xff] %v2389
  %2454 = vst [vmem:[#allocation2 + $0x720] sm:$0xff] %v2390
  %2455 = vst [vmem:[#allocation2 + $0x768] sm:$0xff] %v2391
  %2456 = vst [vmem:[#allocation2 + $0x7b0] sm:$0xff] %v2392
  %2457 = vst [vmem:[#allocation2 + $0x7f8] sm:$0xff] %v2393
  %2458 = vst [vmem:[#allocation2 + $0x840] sm:$0xff] %v2394
  %2459 = vst [vmem:[#allocation2 + $0x888] sm:$0xff] %v2395
  %2460 = vst [vmem:[#allocation2 + $0x8d0] sm:$0xff] %v2396
  %v2461 = vld [vmem:[%s2172] sm:$0xf]
  %v2462 = vld [vmem:[%s2172 + $0x4] sm:$0x1]
  %v2463 = vld [vmem:[%s2172 + $0x8] sm:$0xf]
  %v2464 = vld [vmem:[%s2172 + $0xc] sm:$0x1]
  %v2465 = vld [vmem:[%s2172 + $0x10] sm:$0xf]
  %v2466 = vld [vmem:[%s2172 + $0x14] sm:$0x1]
  %v2467 = vld [vmem:[%s2172 + $0x18] sm:$0xf]
  %v2468 = vld [vmem:[%s2172 + $0x1c] sm:$0x1]
  %v2469 = vld [vmem:[%s2172 + $0x20] sm:$0xf]
  %v2470 = vld [vmem:[%s2172 + $0x24] sm:$0x1]
  %v2471 = vld [vmem:[%s2172 + $0x28] sm:$0xf]
  %v2472 = vld [vmem:[%s2172 + $0x2c] sm:$0x1]
  %v2473 = vld [vmem:[%s2172 + $0x30] sm:$0xf]
  %v2474 = vld [vmem:[%s2172 + $0x34] sm:$0x1]
  %v2475 = vld [vmem:[%s2172 + $0x38] sm:$0xf]
  %v2476 = vld [vmem:[%s2172 + $0x3c] sm:$0x1]
  %v2477 = vld [vmem:[%s2172 + $0x50] sm:$0xf]
  %v2478 = vld [vmem:[%s2172 + $0x54] sm:$0x1]
  %v2479 = vld [vmem:[%s2172 + $0x58] sm:$0xf]
  %v2480 = vld [vmem:[%s2172 + $0x5c] sm:$0x1]
  %v2481 = vld [vmem:[%s2172 + $0x60] sm:$0xf]
  %v2482 = vld [vmem:[%s2172 + $0x64] sm:$0x1]
  %v2483 = vld [vmem:[%s2172 + $0x68] sm:$0xf]
  %v2484 = vld [vmem:[%s2172 + $0x6c] sm:$0x1]
  %v2485 = vld [vmem:[%s2172 + $0x70] sm:$0xf]
  %v2486 = vld [vmem:[%s2172 + $0x74] sm:$0x1]
  %v2487 = vld [vmem:[%s2172 + $0x78] sm:$0xf]
  %v2488 = vld [vmem:[%s2172 + $0x7c] sm:$0x1]
  %v2489 = vld [vmem:[%s2172 + $0x80] sm:$0xf]
  %v2490 = vld [vmem:[%s2172 + $0x84] sm:$0x1]
  %v2491 = vld [vmem:[%s2172 + $0x88] sm:$0xf]
  %v2492 = vld [vmem:[%s2172 + $0x8c] sm:$0x1]
  %v2493 = vld [vmem:[%s2172 + $0xa0] sm:$0xf]
  %v2494 = vld [vmem:[%s2172 + $0xa4] sm:$0x1]
  %v2495 = vld [vmem:[%s2172 + $0xa8] sm:$0xf]
  %v2496 = vld [vmem:[%s2172 + $0xac] sm:$0x1]
  %v2497 = vld [vmem:[%s2172 + $0xb0] sm:$0xf]
  %v2498 = vld [vmem:[%s2172 + $0xb4] sm:$0x1]
  %v2499 = vld [vmem:[%s2172 + $0xb8] sm:$0xf]
  %v2500 = vld [vmem:[%s2172 + $0xbc] sm:$0x1]
  %v2501 = vld [vmem:[%s2172 + $0xc0] sm:$0xf]
  %v2502 = vld [vmem:[%s2172 + $0xc4] sm:$0x1]
  %v2503 = vld [vmem:[%s2172 + $0xc8] sm:$0xf]
  %v2504 = vld [vmem:[%s2172 + $0xcc] sm:$0x1]
  %v2505 = vld [vmem:[%s2172 + $0xd0] sm:$0xf]
  %v2506 = vld [vmem:[%s2172 + $0xd4] sm:$0x1]
  %v2507 = vld [vmem:[%s2172 + $0xd8] sm:$0xf]
  %v2508 = vld [vmem:[%s2172 + $0xdc] sm:$0x1]
  %v2509 = vld [vmem:[%s2172 + $0xf0] sm:$0xf]
  %v2510 = vld [vmem:[%s2172 + $0xf4] sm:$0x1]
  %v2511 = vld [vmem:[%s2172 + $0xf8] sm:$0xf]
  %v2512 = vld [vmem:[%s2172 + $0xfc] sm:$0x1]
  %v2513 = vld [vmem:[%s2172 + $0x100] sm:$0xf]
  %v2514 = vld [vmem:[%s2172 + $0x104] sm:$0x1]
  %v2515 = vld [vmem:[%s2172 + $0x108] sm:$0xf]
  %v2516 = vld [vmem:[%s2172 + $0x10c] sm:$0x1]
  %v2517 = vld [vmem:[%s2172 + $0x110] sm:$0xf]
  %v2518 = vld [vmem:[%s2172 + $0x114] sm:$0x1]
  %v2519 = vld [vmem:[%s2172 + $0x118] sm:$0xf]
  %v2520 = vld [vmem:[%s2172 + $0x11c] sm:$0x1]
  %v2521 = vld [vmem:[%s2172 + $0x120] sm:$0xf]
  %v2522 = vld [vmem:[%s2172 + $0x124] sm:$0x1]
  %v2523 = vld [vmem:[%s2172 + $0x128] sm:$0xf]
  %v2524 = vld [vmem:[%s2172 + $0x12c] sm:$0x1]
  %v2525 = vld [vmem:[%s2172 + $0x140] sm:$0xf]
  %v2526 = vld [vmem:[%s2172 + $0x144] sm:$0x1]
  %v2527 = vld [vmem:[%s2172 + $0x148] sm:$0xf]
  %v2528 = vld [vmem:[%s2172 + $0x14c] sm:$0x1]
  %v2529 = vld [vmem:[%s2172 + $0x150] sm:$0xf]
  %v2530 = vld [vmem:[%s2172 + $0x154] sm:$0x1]
  %v2531 = vld [vmem:[%s2172 + $0x158] sm:$0xf]
  %v2532 = vld [vmem:[%s2172 + $0x15c] sm:$0x1]
  %v2533 = vld [vmem:[%s2172 + $0x160] sm:$0xf]
  %v2534 = vld [vmem:[%s2172 + $0x164] sm:$0x1]
  %v2535 = vld [vmem:[%s2172 + $0x168] sm:$0xf]
  %v2536 = vld [vmem:[%s2172 + $0x16c] sm:$0x1]
  %v2537 = vld [vmem:[%s2172 + $0x170] sm:$0xf]
  %v2538 = vld [vmem:[%s2172 + $0x174] sm:$0x1]
  %v2539 = vld [vmem:[%s2172 + $0x178] sm:$0xf]
  %v2540 = vld [vmem:[%s2172 + $0x17c] sm:$0x1]
  %v2541 = vld [vmem:[%s2172 + $0x190] sm:$0xf]
  %v2542 = vld [vmem:[%s2172 + $0x194] sm:$0x1]
  %v2543 = vld [vmem:[%s2172 + $0x198] sm:$0xf]
  %v2544 = vld [vmem:[%s2172 + $0x19c] sm:$0x1]
  %v2545 = vld [vmem:[%s2172 + $0x1a0] sm:$0xf]
  %v2546 = vld [vmem:[%s2172 + $0x1a4] sm:$0x1]
  %v2547 = vld [vmem:[%s2172 + $0x1a8] sm:$0xf]
  %v2548 = vld [vmem:[%s2172 + $0x1ac] sm:$0x1]
  %v2549 = vld [vmem:[%s2172 + $0x1b0] sm:$0xf]
  %v2550 = vld [vmem:[%s2172 + $0x1b4] sm:$0x1]
  %v2551 = vld [vmem:[%s2172 + $0x1b8] sm:$0xf]
  %v2552 = vld [vmem:[%s2172 + $0x1bc] sm:$0x1]
  %v2553 = vld [vmem:[%s2172 + $0x1c0] sm:$0xf]
  %v2554 = vld [vmem:[%s2172 + $0x1c4] sm:$0x1]
  %v2555 = vld [vmem:[%s2172 + $0x1c8] sm:$0xf]
  %v2556 = vld [vmem:[%s2172 + $0x1cc] sm:$0x1]
  %v2557 = vld [vmem:[%s2172 + $0x1e0] sm:$0xf]
  %v2558 = vld [vmem:[%s2172 + $0x1e4] sm:$0x1]
  %v2559 = vld [vmem:[%s2172 + $0x1e8] sm:$0xf]
  %v2560 = vld [vmem:[%s2172 + $0x1ec] sm:$0x1]
  %v2561 = vld [vmem:[%s2172 + $0x1f0] sm:$0xf]
  %v2562 = vld [vmem:[%s2172 + $0x1f4] sm:$0x1]
  %v2563 = vld [vmem:[%s2172 + $0x1f8] sm:$0xf]
  %v2564 = vld [vmem:[%s2172 + $0x1fc] sm:$0x1]
  %v2565 = vld [vmem:[%s2172 + $0x200] sm:$0xf]
  %v2566 = vld [vmem:[%s2172 + $0x204] sm:$0x1]
  %v2567 = vld [vmem:[%s2172 + $0x208] sm:$0xf]
  %v2568 = vld [vmem:[%s2172 + $0x20c] sm:$0x1]
  %v2569 = vld [vmem:[%s2172 + $0x210] sm:$0xf]
  %v2570 = vld [vmem:[%s2172 + $0x214] sm:$0x1]
  %v2571 = vld [vmem:[%s2172 + $0x218] sm:$0xf]
  %v2572 = vld [vmem:[%s2172 + $0x21c] sm:$0x1]
  %v2573 = vld [vmem:[%s2172 + $0x230] sm:$0xf]
  %v2574 = vld [vmem:[%s2172 + $0x234] sm:$0x1]
  %v2575 = vld [vmem:[%s2172 + $0x238] sm:$0xf]
  %v2576 = vld [vmem:[%s2172 + $0x23c] sm:$0x1]
  %v2577 = vld [vmem:[%s2172 + $0x240] sm:$0xf]
  %v2578 = vld [vmem:[%s2172 + $0x244] sm:$0x1]
  %v2579 = vld [vmem:[%s2172 + $0x248] sm:$0xf]
  %v2580 = vld [vmem:[%s2172 + $0x24c] sm:$0x1]
  %v2581 = vld [vmem:[%s2172 + $0x250] sm:$0xf]
  %v2582 = vld [vmem:[%s2172 + $0x254] sm:$0x1]
  %v2583 = vld [vmem:[%s2172 + $0x258] sm:$0xf]
  %v2584 = vld [vmem:[%s2172 + $0x25c] sm:$0x1]
  %v2585 = vld [vmem:[%s2172 + $0x260] sm:$0xf]
  %v2586 = vld [vmem:[%s2172 + $0x264] sm:$0x1]
  %v2587 = vld [vmem:[%s2172 + $0x268] sm:$0xf]
  %v2588 = vld [vmem:[%s2172 + $0x26c] sm:$0x1]
  %v2590 = vshrl.u32 %v2461, 16
  %v2592 = vrot.slane %v2590, 4
  %v2593 = vshll.u32 %v2461, 16
  %v2595 = vrot.slane %v2593, 5
  %v2596 = vor.u32 %v2592, %v2595
  %v2597 = vrot.slane %v2596, 4
  %v2599 = vshll.u32 %v2462, 16
  %v2601 = vrot.slane %v2599, 5
  %v2602 = vsel %vm437, %v2597, %v2601
  %v2604 = vshrl.u32 %v2463, 16
  %v2606 = vrot.slane %v2604, 4
  %v2607 = vshll.u32 %v2463, 16
  %v2609 = vrot.slane %v2607, 5
  %v2610 = vor.u32 %v2606, %v2609
  %v2611 = vrot.slane %v2610, 4
  %v2613 = vshll.u32 %v2464, 16
  %v2615 = vrot.slane %v2613, 5
  %v2616 = vsel %vm437, %v2611, %v2615
  %v2618 = vshrl.u32 %v2465, 16
  %v2620 = vrot.slane %v2618, 4
  %v2621 = vshll.u32 %v2465, 16
  %v2623 = vrot.slane %v2621, 5
  %v2624 = vor.u32 %v2620, %v2623
  %v2625 = vrot.slane %v2624, 4
  %v2627 = vshll.u32 %v2466, 16
  %v2629 = vrot.slane %v2627, 5
  %v2630 = vsel %vm437, %v2625, %v2629
  %v2632 = vshrl.u32 %v2467, 16
  %v2634 = vrot.slane %v2632, 4
  %v2635 = vshll.u32 %v2467, 16
  %v2637 = vrot.slane %v2635, 5
  %v2638 = vor.u32 %v2634, %v2637
  %v2639 = vrot.slane %v2638, 4
  %v2641 = vshll.u32 %v2468, 16
  %v2643 = vrot.slane %v2641, 5
  %v2644 = vsel %vm437, %v2639, %v2643
  %v2646 = vshrl.u32 %v2469, 16
  %v2648 = vrot.slane %v2646, 4
  %v2649 = vshll.u32 %v2469, 16
  %v2651 = vrot.slane %v2649, 5
  %v2652 = vor.u32 %v2648, %v2651
  %v2653 = vrot.slane %v2652, 4
  %v2655 = vshll.u32 %v2470, 16
  %v2657 = vrot.slane %v2655, 5
  %v2658 = vsel %vm437, %v2653, %v2657
  %v2660 = vshrl.u32 %v2471, 16
  %v2662 = vrot.slane %v2660, 4
  %v2663 = vshll.u32 %v2471, 16
  %v2665 = vrot.slane %v2663, 5
  %v2666 = vor.u32 %v2662, %v2665
  %v2667 = vrot.slane %v2666, 4
  %v2669 = vshll.u32 %v2472, 16
  %v2671 = vrot.slane %v2669, 5
  %v2672 = vsel %vm437, %v2667, %v2671
  %v2674 = vshrl.u32 %v2473, 16
  %v2676 = vrot.slane %v2674, 4
  %v2677 = vshll.u32 %v2473, 16
  %v2679 = vrot.slane %v2677, 5
  %v2680 = vor.u32 %v2676, %v2679
  %v2681 = vrot.slane %v2680, 4
  %v2683 = vshll.u32 %v2474, 16
  %v2685 = vrot.slane %v2683, 5
  %v2686 = vsel %vm437, %v2681, %v2685
  %v2688 = vshrl.u32 %v2475, 16
  %v2690 = vrot.slane %v2688, 4
  %v2691 = vshll.u32 %v2475, 16
  %v2693 = vrot.slane %v2691, 5
  %v2694 = vor.u32 %v2690, %v2693
  %v2695 = vrot.slane %v2694, 4
  %v2697 = vshll.u32 %v2476, 16
  %v2699 = vrot.slane %v2697, 5
  %v2700 = vsel %vm437, %v2695, %v2699
  %v2702 = vshrl.u32 %v2477, 16
  %v2704 = vrot.slane %v2702, 4
  %v2705 = vshll.u32 %v2477, 16
  %v2707 = vrot.slane %v2705, 5
  %v2708 = vor.u32 %v2704, %v2707
  %v2709 = vrot.slane %v2708, 4
  %v2711 = vshll.u32 %v2478, 16
  %v2713 = vrot.slane %v2711, 5
  %v2714 = vsel %vm437, %v2709, %v2713
  %v2716 = vshrl.u32 %v2479, 16
  %v2718 = vrot.slane %v2716, 4
  %v2719 = vshll.u32 %v2479, 16
  %v2721 = vrot.slane %v2719, 5
  %v2722 = vor.u32 %v2718, %v2721
  %v2723 = vrot.slane %v2722, 4
  %v2725 = vshll.u32 %v2480, 16
  %v2727 = vrot.slane %v2725, 5
  %v2728 = vsel %vm437, %v2723, %v2727
  %v2730 = vshrl.u32 %v2481, 16
  %v2732 = vrot.slane %v2730, 4
  %v2733 = vshll.u32 %v2481, 16
  %v2735 = vrot.slane %v2733, 5
  %v2736 = vor.u32 %v2732, %v2735
  %v2737 = vrot.slane %v2736, 4
  %v2739 = vshll.u32 %v2482, 16
  %v2741 = vrot.slane %v2739, 5
  %v2742 = vsel %vm437, %v2737, %v2741
  %v2744 = vshrl.u32 %v2483, 16
  %v2746 = vrot.slane %v2744, 4
  %v2747 = vshll.u32 %v2483, 16
  %v2749 = vrot.slane %v2747, 5
  %v2750 = vor.u32 %v2746, %v2749
  %v2751 = vrot.slane %v2750, 4
  %v2753 = vshll.u32 %v2484, 16
  %v2755 = vrot.slane %v2753, 5
  %v2756 = vsel %vm437, %v2751, %v2755
  %v2758 = vshrl.u32 %v2485, 16
  %v2760 = vrot.slane %v2758, 4
  %v2761 = vshll.u32 %v2485, 16
  %v2763 = vrot.slane %v2761, 5
  %v2764 = vor.u32 %v2760, %v2763
  %v2765 = vrot.slane %v2764, 4
  %v2767 = vshll.u32 %v2486, 16
  %v2769 = vrot.slane %v2767, 5
  %v2770 = vsel %vm437, %v2765, %v2769
  %v2772 = vshrl.u32 %v2487, 16
  %v2774 = vrot.slane %v2772, 4
  %v2775 = vshll.u32 %v2487, 16
  %v2777 = vrot.slane %v2775, 5
  %v2778 = vor.u32 %v2774, %v2777
  %v2779 = vrot.slane %v2778, 4
  %v2781 = vshll.u32 %v2488, 16
  %v2783 = vrot.slane %v2781, 5
  %v2784 = vsel %vm437, %v2779, %v2783
  %v2786 = vshrl.u32 %v2489, 16
  %v2788 = vrot.slane %v2786, 4
  %v2789 = vshll.u32 %v2489, 16
  %v2791 = vrot.slane %v2789, 5
  %v2792 = vor.u32 %v2788, %v2791
  %v2793 = vrot.slane %v2792, 4
  %v2795 = vshll.u32 %v2490, 16
  %v2797 = vrot.slane %v2795, 5
  %v2798 = vsel %vm437, %v2793, %v2797
  %v2800 = vshrl.u32 %v2491, 16
  %v2802 = vrot.slane %v2800, 4
  %v2803 = vshll.u32 %v2491, 16
  %v2805 = vrot.slane %v2803, 5
  %v2806 = vor.u32 %v2802, %v2805
  %v2807 = vrot.slane %v2806, 4
  %v2809 = vshll.u32 %v2492, 16
  %v2811 = vrot.slane %v2809, 5
  %v2812 = vsel %vm437, %v2807, %v2811
  %v2814 = vshrl.u32 %v2493, 16
  %v2816 = vrot.slane %v2814, 4
  %v2817 = vshll.u32 %v2493, 16
  %v2819 = vrot.slane %v2817, 5
  %v2820 = vor.u32 %v2816, %v2819
  %v2821 = vrot.slane %v2820, 4
  %v2823 = vshll.u32 %v2494, 16
  %v2825 = vrot.slane %v2823, 5
  %v2826 = vsel %vm437, %v2821, %v2825
  %v2828 = vshrl.u32 %v2495, 16
  %v2830 = vrot.slane %v2828, 4
  %v2831 = vshll.u32 %v2495, 16
  %v2833 = vrot.slane %v2831, 5
  %v2834 = vor.u32 %v2830, %v2833
  %v2835 = vrot.slane %v2834, 4
  %v2837 = vshll.u32 %v2496, 16
  %v2839 = vrot.slane %v2837, 5
  %v2840 = vsel %vm437, %v2835, %v2839
  %v2842 = vshrl.u32 %v2497, 16
  %v2844 = vrot.slane %v2842, 4
  %v2845 = vshll.u32 %v2497, 16
  %v2847 = vrot.slane %v2845, 5
  %v2848 = vor.u32 %v2844, %v2847
  %v2849 = vrot.slane %v2848, 4
  %v2851 = vshll.u32 %v2498, 16
  %v2853 = vrot.slane %v2851, 5
  %v2854 = vsel %vm437, %v2849, %v2853
  %v2856 = vshrl.u32 %v2499, 16
  %v2858 = vrot.slane %v2856, 4
  %v2859 = vshll.u32 %v2499, 16
  %v2861 = vrot.slane %v2859, 5
  %v2862 = vor.u32 %v2858, %v2861
  %v2863 = vrot.slane %v2862, 4
  %v2865 = vshll.u32 %v2500, 16
  %v2867 = vrot.slane %v2865, 5
  %v2868 = vsel %vm437, %v2863, %v2867
  %v2870 = vshrl.u32 %v2501, 16
  %v2872 = vrot.slane %v2870, 4
  %v2873 = vshll.u32 %v2501, 16
  %v2875 = vrot.slane %v2873, 5
  %v2876 = vor.u32 %v2872, %v2875
  %v2877 = vrot.slane %v2876, 4
  %v2879 = vshll.u32 %v2502, 16
  %v2881 = vrot.slane %v2879, 5
  %v2882 = vsel %vm437, %v2877, %v2881
  %v2884 = vshrl.u32 %v2503, 16
  %v2886 = vrot.slane %v2884, 4
  %v2887 = vshll.u32 %v2503, 16
  %v2889 = vrot.slane %v2887, 5
  %v2890 = vor.u32 %v2886, %v2889
  %v2891 = vrot.slane %v2890, 4
  %v2893 = vshll.u32 %v2504, 16
  %v2895 = vrot.slane %v2893, 5
  %v2896 = vsel %vm437, %v2891, %v2895
  %v2898 = vshrl.u32 %v2505, 16
  %v2900 = vrot.slane %v2898, 4
  %v2901 = vshll.u32 %v2505, 16
  %v2903 = vrot.slane %v2901, 5
  %v2904 = vor.u32 %v2900, %v2903
  %v2905 = vrot.slane %v2904, 4
  %v2907 = vshll.u32 %v2506, 16
  %v2909 = vrot.slane %v2907, 5
  %v2910 = vsel %vm437, %v2905, %v2909
  %v2912 = vshrl.u32 %v2507, 16
  %v2914 = vrot.slane %v2912, 4
  %v2915 = vshll.u32 %v2507, 16
  %v2917 = vrot.slane %v2915, 5
  %v2918 = vor.u32 %v2914, %v2917
  %v2919 = vrot.slane %v2918, 4
  %v2921 = vshll.u32 %v2508, 16
  %v2923 = vrot.slane %v2921, 5
  %v2924 = vsel %vm437, %v2919, %v2923
  %v2926 = vshrl.u32 %v2509, 16
  %v2928 = vrot.slane %v2926, 4
  %v2929 = vshll.u32 %v2509, 16
  %v2931 = vrot.slane %v2929, 5
  %v2932 = vor.u32 %v2928, %v2931
  %v2933 = vrot.slane %v2932, 4
  %v2935 = vshll.u32 %v2510, 16
  %v2937 = vrot.slane %v2935, 5
  %v2938 = vsel %vm437, %v2933, %v2937
  %v2940 = vshrl.u32 %v2511, 16
  %v2942 = vrot.slane %v2940, 4
  %v2943 = vshll.u32 %v2511, 16
  %v2945 = vrot.slane %v2943, 5
  %v2946 = vor.u32 %v2942, %v2945
  %v2947 = vrot.slane %v2946, 4
  %v2949 = vshll.u32 %v2512, 16
  %v2951 = vrot.slane %v2949, 5
  %v2952 = vsel %vm437, %v2947, %v2951
  %v2954 = vshrl.u32 %v2513, 16
  %v2956 = vrot.slane %v2954, 4
  %v2957 = vshll.u32 %v2513, 16
  %v2959 = vrot.slane %v2957, 5
  %v2960 = vor.u32 %v2956, %v2959
  %v2961 = vrot.slane %v2960, 4
  %v2963 = vshll.u32 %v2514, 16
  %v2965 = vrot.slane %v2963, 5
  %v2966 = vsel %vm437, %v2961, %v2965
  %v2968 = vshrl.u32 %v2515, 16
  %v2970 = vrot.slane %v2968, 4
  %v2971 = vshll.u32 %v2515, 16
  %v2973 = vrot.slane %v2971, 5
  %v2974 = vor.u32 %v2970, %v2973
  %v2975 = vrot.slane %v2974, 4
  %v2977 = vshll.u32 %v2516, 16
  %v2979 = vrot.slane %v2977, 5
  %v2980 = vsel %vm437, %v2975, %v2979
  %v2982 = vshrl.u32 %v2517, 16
  %v2984 = vrot.slane %v2982, 4
  %v2985 = vshll.u32 %v2517, 16
  %v2987 = vrot.slane %v2985, 5
  %v2988 = vor.u32 %v2984, %v2987
  %v2989 = vrot.slane %v2988, 4
  %v2991 = vshll.u32 %v2518, 16
  %v2993 = vrot.slane %v2991, 5
  %v2994 = vsel %vm437, %v2989, %v2993
  %v2996 = vshrl.u32 %v2519, 16
  %v2998 = vrot.slane %v2996, 4
  %v2999 = vshll.u32 %v2519, 16
  %v3001 = vrot.slane %v2999, 5
  %v3002 = vor.u32 %v2998, %v3001
  %v3003 = vrot.slane %v3002, 4
  %v3005 = vshll.u32 %v2520, 16
  %v3007 = vrot.slane %v3005, 5
  %v3008 = vsel %vm437, %v3003, %v3007
  %v3010 = vshrl.u32 %v2521, 16
  %v3012 = vrot.slane %v3010, 4
  %v3013 = vshll.u32 %v2521, 16
  %v3015 = vrot.slane %v3013, 5
  %v3016 = vor.u32 %v3012, %v3015
  %v3017 = vrot.slane %v3016, 4
  %v3019 = vshll.u32 %v2522, 16
  %v3021 = vrot.slane %v3019, 5
  %v3022 = vsel %vm437, %v3017, %v3021
  %v3024 = vshrl.u32 %v2523, 16
  %v3026 = vrot.slane %v3024, 4
  %v3027 = vshll.u32 %v2523, 16
  %v3029 = vrot.slane %v3027, 5
  %v3030 = vor.u32 %v3026, %v3029
  %v3031 = vrot.slane %v3030, 4
  %v3033 = vshll.u32 %v2524, 16
  %v3035 = vrot.slane %v3033, 5
  %v3036 = vsel %vm437, %v3031, %v3035
  %v3038 = vshrl.u32 %v2525, 16
  %v3040 = vrot.slane %v3038, 4
  %v3041 = vshll.u32 %v2525, 16
  %v3043 = vrot.slane %v3041, 5
  %v3044 = vor.u32 %v3040, %v3043
  %v3045 = vrot.slane %v3044, 4
  %v3047 = vshll.u32 %v2526, 16
  %v3049 = vrot.slane %v3047, 5
  %v3050 = vsel %vm437, %v3045, %v3049
  %v3052 = vshrl.u32 %v2527, 16
  %v3054 = vrot.slane %v3052, 4
  %v3055 = vshll.u32 %v2527, 16
  %v3057 = vrot.slane %v3055, 5
  %v3058 = vor.u32 %v3054, %v3057
  %v3059 = vrot.slane %v3058, 4
  %v3061 = vshll.u32 %v2528, 16
  %v3063 = vrot.slane %v3061, 5
  %v3064 = vsel %vm437, %v3059, %v3063
  %v3066 = vshrl.u32 %v2529, 16
  %v3068 = vrot.slane %v3066, 4
  %v3069 = vshll.u32 %v2529, 16
  %v3071 = vrot.slane %v3069, 5
  %v3072 = vor.u32 %v3068, %v3071
  %v3073 = vrot.slane %v3072, 4
  %v3075 = vshll.u32 %v2530, 16
  %v3077 = vrot.slane %v3075, 5
  %v3078 = vsel %vm437, %v3073, %v3077
  %v3080 = vshrl.u32 %v2531, 16
  %v3082 = vrot.slane %v3080, 4
  %v3083 = vshll.u32 %v2531, 16
  %v3085 = vrot.slane %v3083, 5
  %v3086 = vor.u32 %v3082, %v3085
  %v3087 = vrot.slane %v3086, 4
  %v3089 = vshll.u32 %v2532, 16
  %v3091 = vrot.slane %v3089, 5
  %v3092 = vsel %vm437, %v3087, %v3091
  %v3094 = vshrl.u32 %v2533, 16
  %v3096 = vrot.slane %v3094, 4
  %v3097 = vshll.u32 %v2533, 16
  %v3099 = vrot.slane %v3097, 5
  %v3100 = vor.u32 %v3096, %v3099
  %v3101 = vrot.slane %v3100, 4
  %v3103 = vshll.u32 %v2534, 16
  %v3105 = vrot.slane %v3103, 5
  %v3106 = vsel %vm437, %v3101, %v3105
  %v3108 = vshrl.u32 %v2535, 16
  %v3110 = vrot.slane %v3108, 4
  %v3111 = vshll.u32 %v2535, 16
  %v3113 = vrot.slane %v3111, 5
  %v3114 = vor.u32 %v3110, %v3113
  %v3115 = vrot.slane %v3114, 4
  %v3117 = vshll.u32 %v2536, 16
  %v3119 = vrot.slane %v3117, 5
  %v3120 = vsel %vm437, %v3115, %v3119
  %v3122 = vshrl.u32 %v2537, 16
  %v3124 = vrot.slane %v3122, 4
  %v3125 = vshll.u32 %v2537, 16
  %v3127 = vrot.slane %v3125, 5
  %v3128 = vor.u32 %v3124, %v3127
  %v3129 = vrot.slane %v3128, 4
  %v3131 = vshll.u32 %v2538, 16
  %v3133 = vrot.slane %v3131, 5
  %v3134 = vsel %vm437, %v3129, %v3133
  %v3136 = vshrl.u32 %v2539, 16
  %v3138 = vrot.slane %v3136, 4
  %v3139 = vshll.u32 %v2539, 16
  %v3141 = vrot.slane %v3139, 5
  %v3142 = vor.u32 %v3138, %v3141
  %v3143 = vrot.slane %v3142, 4
  %v3145 = vshll.u32 %v2540, 16
  %v3147 = vrot.slane %v3145, 5
  %v3148 = vsel %vm437, %v3143, %v3147
  %v3150 = vshrl.u32 %v2541, 16
  %v3152 = vrot.slane %v3150, 4
  %v3153 = vshll.u32 %v2541, 16
  %v3155 = vrot.slane %v3153, 5
  %v3156 = vor.u32 %v3152, %v3155
  %v3157 = vrot.slane %v3156, 4
  %v3159 = vshll.u32 %v2542, 16
  %v3161 = vrot.slane %v3159, 5
  %v3162 = vsel %vm437, %v3157, %v3161
  %v3164 = vshrl.u32 %v2543, 16
  %v3166 = vrot.slane %v3164, 4
  %v3167 = vshll.u32 %v2543, 16
  %v3169 = vrot.slane %v3167, 5
  %v3170 = vor.u32 %v3166, %v3169
  %v3171 = vrot.slane %v3170, 4
  %v3173 = vshll.u32 %v2544, 16
  %v3175 = vrot.slane %v3173, 5
  %v3176 = vsel %vm437, %v3171, %v3175
  %v3178 = vshrl.u32 %v2545, 16
  %v3180 = vrot.slane %v3178, 4
  %v3181 = vshll.u32 %v2545, 16
  %v3183 = vrot.slane %v3181, 5
  %v3184 = vor.u32 %v3180, %v3183
  %v3185 = vrot.slane %v3184, 4
  %v3187 = vshll.u32 %v2546, 16
  %v3189 = vrot.slane %v3187, 5
  %v3190 = vsel %vm437, %v3185, %v3189
  %v3192 = vshrl.u32 %v2547, 16
  %v3194 = vrot.slane %v3192, 4
  %v3195 = vshll.u32 %v2547, 16
  %v3197 = vrot.slane %v3195, 5
  %v3198 = vor.u32 %v3194, %v3197
  %v3199 = vrot.slane %v3198, 4
  %v3201 = vshll.u32 %v2548, 16
  %v3203 = vrot.slane %v3201, 5
  %v3204 = vsel %vm437, %v3199, %v3203
  %v3206 = vshrl.u32 %v2549, 16
  %v3208 = vrot.slane %v3206, 4
  %v3209 = vshll.u32 %v2549, 16
  %v3211 = vrot.slane %v3209, 5
  %v3212 = vor.u32 %v3208, %v3211
  %v3213 = vrot.slane %v3212, 4
  %v3215 = vshll.u32 %v2550, 16
  %v3217 = vrot.slane %v3215, 5
  %v3218 = vsel %vm437, %v3213, %v3217
  %v3220 = vshrl.u32 %v2551, 16
  %v3222 = vrot.slane %v3220, 4
  %v3223 = vshll.u32 %v2551, 16
  %v3225 = vrot.slane %v3223, 5
  %v3226 = vor.u32 %v3222, %v3225
  %v3227 = vrot.slane %v3226, 4
  %v3229 = vshll.u32 %v2552, 16
  %v3231 = vrot.slane %v3229, 5
  %v3232 = vsel %vm437, %v3227, %v3231
  %v3234 = vshrl.u32 %v2553, 16
  %v3236 = vrot.slane %v3234, 4
  %v3237 = vshll.u32 %v2553, 16
  %v3239 = vrot.slane %v3237, 5
  %v3240 = vor.u32 %v3236, %v3239
  %v3241 = vrot.slane %v3240, 4
  %v3243 = vshll.u32 %v2554, 16
  %v3245 = vrot.slane %v3243, 5
  %v3246 = vsel %vm437, %v3241, %v3245
  %v3248 = vshrl.u32 %v2555, 16
  %v3250 = vrot.slane %v3248, 4
  %v3251 = vshll.u32 %v2555, 16
  %v3253 = vrot.slane %v3251, 5
  %v3254 = vor.u32 %v3250, %v3253
  %v3255 = vrot.slane %v3254, 4
  %v3257 = vshll.u32 %v2556, 16
  %v3259 = vrot.slane %v3257, 5
  %v3260 = vsel %vm437, %v3255, %v3259
  %v3262 = vshrl.u32 %v2557, 16
  %v3264 = vrot.slane %v3262, 4
  %v3265 = vshll.u32 %v2557, 16
  %v3267 = vrot.slane %v3265, 5
  %v3268 = vor.u32 %v3264, %v3267
  %v3269 = vrot.slane %v3268, 4
  %v3271 = vshll.u32 %v2558, 16
  %v3273 = vrot.slane %v3271, 5
  %v3274 = vsel %vm437, %v3269, %v3273
  %v3276 = vshrl.u32 %v2559, 16
  %v3278 = vrot.slane %v3276, 4
  %v3279 = vshll.u32 %v2559, 16
  %v3281 = vrot.slane %v3279, 5
  %v3282 = vor.u32 %v3278, %v3281
  %v3283 = vrot.slane %v3282, 4
  %v3285 = vshll.u32 %v2560, 16
  %v3287 = vrot.slane %v3285, 5
  %v3288 = vsel %vm437, %v3283, %v3287
  %v3290 = vshrl.u32 %v2561, 16
  %v3292 = vrot.slane %v3290, 4
  %v3293 = vshll.u32 %v2561, 16
  %v3295 = vrot.slane %v3293, 5
  %v3296 = vor.u32 %v3292, %v3295
  %v3297 = vrot.slane %v3296, 4
  %v3299 = vshll.u32 %v2562, 16
  %v3301 = vrot.slane %v3299, 5
  %v3302 = vsel %vm437, %v3297, %v3301
  %v3304 = vshrl.u32 %v2563, 16
  %v3306 = vrot.slane %v3304, 4
  %v3307 = vshll.u32 %v2563, 16
  %v3309 = vrot.slane %v3307, 5
  %v3310 = vor.u32 %v3306, %v3309
  %v3311 = vrot.slane %v3310, 4
  %v3313 = vshll.u32 %v2564, 16
  %v3315 = vrot.slane %v3313, 5
  %v3316 = vsel %vm437, %v3311, %v3315
  %v3318 = vshrl.u32 %v2565, 16
  %v3320 = vrot.slane %v3318, 4
  %v3321 = vshll.u32 %v2565, 16
  %v3323 = vrot.slane %v3321, 5
  %v3324 = vor.u32 %v3320, %v3323
  %v3325 = vrot.slane %v3324, 4
  %v3327 = vshll.u32 %v2566, 16
  %v3329 = vrot.slane %v3327, 5
  %v3330 = vsel %vm437, %v3325, %v3329
  %v3332 = vshrl.u32 %v2567, 16
  %v3334 = vrot.slane %v3332, 4
  %v3335 = vshll.u32 %v2567, 16
  %v3337 = vrot.slane %v3335, 5
  %v3338 = vor.u32 %v3334, %v3337
  %v3339 = vrot.slane %v3338, 4
  %v3341 = vshll.u32 %v2568, 16
  %v3343 = vrot.slane %v3341, 5
  %v3344 = vsel %vm437, %v3339, %v3343
  %v3346 = vshrl.u32 %v2569, 16
  %v3348 = vrot.slane %v3346, 4
  %v3349 = vshll.u32 %v2569, 16
  %v3351 = vrot.slane %v3349, 5
  %v3352 = vor.u32 %v3348, %v3351
  %v3353 = vrot.slane %v3352, 4
  %v3355 = vshll.u32 %v2570, 16
  %v3357 = vrot.slane %v3355, 5
  %v3358 = vsel %vm437, %v3353, %v3357
  %v3360 = vshrl.u32 %v2571, 16
  %v3362 = vrot.slane %v3360, 4
  %v3363 = vshll.u32 %v2571, 16
  %v3365 = vrot.slane %v3363, 5
  %v3366 = vor.u32 %v3362, %v3365
  %v3367 = vrot.slane %v3366, 4
  %v3369 = vshll.u32 %v2572, 16
  %v3371 = vrot.slane %v3369, 5
  %v3372 = vsel %vm437, %v3367, %v3371
  %v3374 = vshrl.u32 %v2573, 16
  %v3376 = vrot.slane %v3374, 4
  %v3377 = vshll.u32 %v2573, 16
  %v3379 = vrot.slane %v3377, 5
  %v3380 = vor.u32 %v3376, %v3379
  %v3381 = vrot.slane %v3380, 4
  %v3383 = vshll.u32 %v2574, 16
  %v3385 = vrot.slane %v3383, 5
  %v3386 = vsel %vm437, %v3381, %v3385
  %v3388 = vshrl.u32 %v2575, 16
  %v3390 = vrot.slane %v3388, 4
  %v3391 = vshll.u32 %v2575, 16
  %v3393 = vrot.slane %v3391, 5
  %v3394 = vor.u32 %v3390, %v3393
  %v3395 = vrot.slane %v3394, 4
  %v3397 = vshll.u32 %v2576, 16
  %v3399 = vrot.slane %v3397, 5
  %v3400 = vsel %vm437, %v3395, %v3399
  %v3402 = vshrl.u32 %v2577, 16
  %v3404 = vrot.slane %v3402, 4
  %v3405 = vshll.u32 %v2577, 16
  %v3407 = vrot.slane %v3405, 5
  %v3408 = vor.u32 %v3404, %v3407
  %v3409 = vrot.slane %v3408, 4
  %v3411 = vshll.u32 %v2578, 16
  %v3413 = vrot.slane %v3411, 5
  %v3414 = vsel %vm437, %v3409, %v3413
  %v3416 = vshrl.u32 %v2579, 16
  %v3418 = vrot.slane %v3416, 4
  %v3419 = vshll.u32 %v2579, 16
  %v3421 = vrot.slane %v3419, 5
  %v3422 = vor.u32 %v3418, %v3421
  %v3423 = vrot.slane %v3422, 4
  %v3425 = vshll.u32 %v2580, 16
  %v3427 = vrot.slane %v3425, 5
  %v3428 = vsel %vm437, %v3423, %v3427
  %v3430 = vshrl.u32 %v2581, 16
  %v3432 = vrot.slane %v3430, 4
  %v3433 = vshll.u32 %v2581, 16
  %v3435 = vrot.slane %v3433, 5
  %v3436 = vor.u32 %v3432, %v3435
  %v3437 = vrot.slane %v3436, 4
  %v3439 = vshll.u32 %v2582, 16
  %v3441 = vrot.slane %v3439, 5
  %v3442 = vsel %vm437, %v3437, %v3441
  %v3444 = vshrl.u32 %v2583, 16
  %v3446 = vrot.slane %v3444, 4
  %v3447 = vshll.u32 %v2583, 16
  %v3449 = vrot.slane %v3447, 5
  %v3450 = vor.u32 %v3446, %v3449
  %v3451 = vrot.slane %v3450, 4
  %v3453 = vshll.u32 %v2584, 16
  %v3455 = vrot.slane %v3453, 5
  %v3456 = vsel %vm437, %v3451, %v3455
  %v3458 = vshrl.u32 %v2585, 16
  %v3460 = vrot.slane %v3458, 4
  %v3461 = vshll.u32 %v2585, 16
  %v3463 = vrot.slane %v3461, 5
  %v3464 = vor.u32 %v3460, %v3463
  %v3465 = vrot.slane %v3464, 4
  %v3467 = vshll.u32 %v2586, 16
  %v3469 = vrot.slane %v3467, 5
  %v3470 = vsel %vm437, %v3465, %v3469
  %v3472 = vshrl.u32 %v2587, 16
  %v3474 = vrot.slane %v3472, 4
  %v3475 = vshll.u32 %v2587, 16
  %v3477 = vrot.slane %v3475, 5
  %v3478 = vor.u32 %v3474, %v3477
  %v3479 = vrot.slane %v3478, 4
  %v3481 = vshll.u32 %v2588, 16
  %v3483 = vrot.slane %v3481, 5
  %v3484 = vsel %vm437, %v3479, %v3483
  %v3485 = vunpack.c.l.b16 %v2602
  %v3486 = vunpack.c.l.b16 %v2616
  %v3487 = vunpack.c.l.b16 %v2630
  %v3488 = vunpack.c.l.b16 %v2644
  %v3489 = vunpack.c.l.b16 %v2658
  %v3490 = vunpack.c.l.b16 %v2672
  %v3491 = vunpack.c.l.b16 %v2686
  %v3492 = vunpack.c.l.b16 %v2700
  %v3493 = vunpack.c.l.b16 %v2714
  %v3494 = vunpack.c.l.b16 %v2728
  %v3495 = vunpack.c.l.b16 %v2742
  %v3496 = vunpack.c.l.b16 %v2756
  %v3497 = vunpack.c.l.b16 %v2770
  %v3498 = vunpack.c.l.b16 %v2784
  %v3499 = vunpack.c.l.b16 %v2798
  %v3500 = vunpack.c.l.b16 %v2812
  %v3501 = vunpack.c.l.b16 %v2826
  %v3502 = vunpack.c.l.b16 %v2840
  %v3503 = vunpack.c.l.b16 %v2854
  %v3504 = vunpack.c.l.b16 %v2868
  %v3505 = vunpack.c.l.b16 %v2882
  %v3506 = vunpack.c.l.b16 %v2896
  %v3507 = vunpack.c.l.b16 %v2910
  %v3508 = vunpack.c.l.b16 %v2924
  %v3509 = vunpack.c.l.b16 %v2938
  %v3510 = vunpack.c.l.b16 %v2952
  %v3511 = vunpack.c.l.b16 %v2966
  %v3512 = vunpack.c.l.b16 %v2980
  %v3513 = vunpack.c.l.b16 %v2994
  %v3514 = vunpack.c.l.b16 %v3008
  %v3515 = vunpack.c.l.b16 %v3022
  %v3516 = vunpack.c.l.b16 %v3036
  %v3517 = vunpack.c.l.b16 %v3050
  %v3518 = vunpack.c.l.b16 %v3064
  %v3519 = vunpack.c.l.b16 %v3078
  %v3520 = vunpack.c.l.b16 %v3092
  %v3521 = vunpack.c.l.b16 %v3106
  %v3522 = vunpack.c.l.b16 %v3120
  %v3523 = vunpack.c.l.b16 %v3134
  %v3524 = vunpack.c.l.b16 %v3148
  %v3525 = vunpack.c.l.b16 %v3162
  %v3526 = vunpack.c.l.b16 %v3176
  %v3527 = vunpack.c.l.b16 %v3190
  %v3528 = vunpack.c.l.b16 %v3204
  %v3529 = vunpack.c.l.b16 %v3218
  %v3530 = vunpack.c.l.b16 %v3232
  %v3531 = vunpack.c.l.b16 %v3246
  %v3532 = vunpack.c.l.b16 %v3260
  %v3533 = vunpack.c.l.b16 %v3274
  %v3534 = vunpack.c.l.b16 %v3288
  %v3535 = vunpack.c.l.b16 %v3302
  %v3536 = vunpack.c.l.b16 %v3316
  %v3537 = vunpack.c.l.b16 %v3330
  %v3538 = vunpack.c.l.b16 %v3344
  %v3539 = vunpack.c.l.b16 %v3358
  %v3540 = vunpack.c.l.b16 %v3372
  %v3541 = vunpack.c.l.b16 %v3386
  %v3542 = vunpack.c.l.b16 %v3400
  %v3543 = vunpack.c.l.b16 %v3414
  %v3544 = vunpack.c.l.b16 %v3428
  %v3545 = vunpack.c.l.b16 %v3442
  %v3546 = vunpack.c.l.b16 %v3456
  %v3547 = vunpack.c.l.b16 %v3470
  %v3548 = vunpack.c.l.b16 %v3484
  %v3549 = vpack.c.b16 %v3486, %v3485
  %v3550 = vpack.c.b16 %v3488, %v3487
  %v3551 = vpack.c.b16 %v3490, %v3489
  %v3552 = vpack.c.b16 %v3492, %v3491
  %v3553 = vpack.c.b16 %v3494, %v3493
  %v3554 = vpack.c.b16 %v3496, %v3495
  %v3555 = vpack.c.b16 %v3498, %v3497
  %v3556 = vpack.c.b16 %v3500, %v3499
  %v3557 = vpack.c.b16 %v3502, %v3501
  %v3558 = vpack.c.b16 %v3504, %v3503
  %v3559 = vpack.c.b16 %v3506, %v3505
  %v3560 = vpack.c.b16 %v3508, %v3507
  %v3561 = vpack.c.b16 %v3510, %v3509
  %v3562 = vpack.c.b16 %v3512, %v3511
  %v3563 = vpack.c.b16 %v3514, %v3513
  %v3564 = vpack.c.b16 %v3516, %v3515
  %v3565 = vpack.c.b16 %v3518, %v3517
  %v3566 = vpack.c.b16 %v3520, %v3519
  %v3567 = vpack.c.b16 %v3522, %v3521
  %v3568 = vpack.c.b16 %v3524, %v3523
  %v3569 = vpack.c.b16 %v3526, %v3525
  %v3570 = vpack.c.b16 %v3528, %v3527
  %v3571 = vpack.c.b16 %v3530, %v3529
  %v3572 = vpack.c.b16 %v3532, %v3531
  %v3573 = vpack.c.b16 %v3534, %v3533
  %v3574 = vpack.c.b16 %v3536, %v3535
  %v3575 = vpack.c.b16 %v3538, %v3537
  %v3576 = vpack.c.b16 %v3540, %v3539
  %v3577 = vpack.c.b16 %v3542, %v3541
  %v3578 = vpack.c.b16 %v3544, %v3543
  %v3579 = vpack.c.b16 %v3546, %v3545
  %v3580 = vpack.c.b16 %v3548, %v3547
  %3613 = vst [vmem:[#allocation2 + $0x20] sm:$0xff] %v3549
  %3614 = vst [vmem:[#allocation2 + $0x68] sm:$0xff] %v3550
  %3615 = vst [vmem:[#allocation2 + $0xb0] sm:$0xff] %v3551
  %3616 = vst [vmem:[#allocation2 + $0xf8] sm:$0xff] %v3552
  %3617 = vst [vmem:[#allocation2 + $0x140] sm:$0xff] %v3553
  %3618 = vst [vmem:[#allocation2 + $0x188] sm:$0xff] %v3554
  %3619 = vst [vmem:[#allocation2 + $0x1d0] sm:$0xff] %v3555
  %3620 = vst [vmem:[#allocation2 + $0x218] sm:$0xff] %v3556
  %3621 = vst [vmem:[#allocation2 + $0x260] sm:$0xff] %v3557
  %3622 = vst [vmem:[#allocation2 + $0x2a8] sm:$0xff] %v3558
  %3623 = vst [vmem:[#allocation2 + $0x2f0] sm:$0xff] %v3559
  %3624 = vst [vmem:[#allocation2 + $0x338] sm:$0xff] %v3560
  %3625 = vst [vmem:[#allocation2 + $0x380] sm:$0xff] %v3561
  %3626 = vst [vmem:[#allocation2 + $0x3c8] sm:$0xff] %v3562
  %3627 = vst [vmem:[#allocation2 + $0x410] sm:$0xff] %v3563
  %3628 = vst [vmem:[#allocation2 + $0x458] sm:$0xff] %v3564
  %3629 = vst [vmem:[#allocation2 + $0x4a0] sm:$0xff] %v3565
  %3630 = vst [vmem:[#allocation2 + $0x4e8] sm:$0xff] %v3566
  %3631 = vst [vmem:[#allocation2 + $0x530] sm:$0xff] %v3567
  %3632 = vst [vmem:[#allocation2 + $0x578] sm:$0xff] %v3568
  %3633 = vst [vmem:[#allocation2 + $0x5c0] sm:$0xff] %v3569
  %3634 = vst [vmem:[#allocation2 + $0x608] sm:$0xff] %v3570
  %3635 = vst [vmem:[#allocation2 + $0x650] sm:$0xff] %v3571
  %3636 = vst [vmem:[#allocation2 + $0x698] sm:$0xff] %v3572
  %3637 = vst [vmem:[#allocation2 + $0x6e0] sm:$0xff] %v3573
  %3638 = vst [vmem:[#allocation2 + $0x728] sm:$0xff] %v3574
  %3639 = vst [vmem:[#allocation2 + $0x770] sm:$0xff] %v3575
  %3640 = vst [vmem:[#allocation2 + $0x7b8] sm:$0xff] %v3576
  %3641 = vst [vmem:[#allocation2 + $0x800] sm:$0xff] %v3577
  %3642 = vst [vmem:[#allocation2 + $0x848] sm:$0xff] %v3578
  %3643 = vst [vmem:[#allocation2 + $0x890] sm:$0xff] %v3579
  %3644 = vst [vmem:[#allocation2 + $0x8d8] sm:$0xff] %v3580
  %v3645 = vld [vmem:[%s2172] sm:$0xe]
  %v3646 = vld [vmem:[%s2172 + $0x4] sm:$0x1]
  %v3647 = vld [vmem:[%s2172 + $0x8] sm:$0xe]
  %v3648 = vld [vmem:[%s2172 + $0xc] sm:$0x1]
  %v3649 = vld [vmem:[%s2172 + $0x10] sm:$0xe]
  %v3650 = vld [vmem:[%s2172 + $0x14] sm:$0x1]
  %v3651 = vld [vmem:[%s2172 + $0x18] sm:$0xe]
  %v3652 = vld [vmem:[%s2172 + $0x1c] sm:$0x1]
  %v3653 = vld [vmem:[%s2172 + $0x20] sm:$0xe]
  %v3654 = vld [vmem:[%s2172 + $0x24] sm:$0x1]
  %v3655 = vld [vmem:[%s2172 + $0x28] sm:$0xe]
  %v3656 = vld [vmem:[%s2172 + $0x2c] sm:$0x1]
  %v3657 = vld [vmem:[%s2172 + $0x30] sm:$0xe]
  %v3658 = vld [vmem:[%s2172 + $0x34] sm:$0x1]
  %v3659 = vld [vmem:[%s2172 + $0x38] sm:$0xe]
  %v3660 = vld [vmem:[%s2172 + $0x3c] sm:$0x1]
  %v3661 = vld [vmem:[%s2172 + $0x50] sm:$0xe]
  %v3662 = vld [vmem:[%s2172 + $0x54] sm:$0x1]
  %v3663 = vld [vmem:[%s2172 + $0x58] sm:$0xe]
  %v3664 = vld [vmem:[%s2172 + $0x5c] sm:$0x1]
  %v3665 = vld [vmem:[%s2172 + $0x60] sm:$0xe]
  %v3666 = vld [vmem:[%s2172 + $0x64] sm:$0x1]
  %v3667 = vld [vmem:[%s2172 + $0x68] sm:$0xe]
  %v3668 = vld [vmem:[%s2172 + $0x6c] sm:$0x1]
  %v3669 = vld [vmem:[%s2172 + $0x70] sm:$0xe]
  %v3670 = vld [vmem:[%s2172 + $0x74] sm:$0x1]
  %v3671 = vld [vmem:[%s2172 + $0x78] sm:$0xe]
  %v3672 = vld [vmem:[%s2172 + $0x7c] sm:$0x1]
  %v3673 = vld [vmem:[%s2172 + $0x80] sm:$0xe]
  %v3674 = vld [vmem:[%s2172 + $0x84] sm:$0x1]
  %v3675 = vld [vmem:[%s2172 + $0x88] sm:$0xe]
  %v3676 = vld [vmem:[%s2172 + $0x8c] sm:$0x1]
  %v3677 = vld [vmem:[%s2172 + $0xa0] sm:$0xe]
  %v3678 = vld [vmem:[%s2172 + $0xa4] sm:$0x1]
  %v3679 = vld [vmem:[%s2172 + $0xa8] sm:$0xe]
  %v3680 = vld [vmem:[%s2172 + $0xac] sm:$0x1]
  %v3681 = vld [vmem:[%s2172 + $0xb0] sm:$0xe]
  %v3682 = vld [vmem:[%s2172 + $0xb4] sm:$0x1]
  %v3683 = vld [vmem:[%s2172 + $0xb8] sm:$0xe]
  %v3684 = vld [vmem:[%s2172 + $0xbc] sm:$0x1]
  %v3685 = vld [vmem:[%s2172 + $0xc0] sm:$0xe]
  %v3686 = vld [vmem:[%s2172 + $0xc4] sm:$0x1]
  %v3687 = vld [vmem:[%s2172 + $0xc8] sm:$0xe]
  %v3688 = vld [vmem:[%s2172 + $0xcc] sm:$0x1]
  %v3689 = vld [vmem:[%s2172 + $0xd0] sm:$0xe]
  %v3690 = vld [vmem:[%s2172 + $0xd4] sm:$0x1]
  %v3691 = vld [vmem:[%s2172 + $0xd8] sm:$0xe]
  %v3692 = vld [vmem:[%s2172 + $0xdc] sm:$0x1]
  %v3693 = vld [vmem:[%s2172 + $0xf0] sm:$0xe]
  %v3694 = vld [vmem:[%s2172 + $0xf4] sm:$0x1]
  %v3695 = vld [vmem:[%s2172 + $0xf8] sm:$0xe]
  %v3696 = vld [vmem:[%s2172 + $0xfc] sm:$0x1]
  %v3697 = vld [vmem:[%s2172 + $0x100] sm:$0xe]
  %v3698 = vld [vmem:[%s2172 + $0x104] sm:$0x1]
  %v3699 = vld [vmem:[%s2172 + $0x108] sm:$0xe]
  %v3700 = vld [vmem:[%s2172 + $0x10c] sm:$0x1]
  %v3701 = vld [vmem:[%s2172 + $0x110] sm:$0xe]
  %v3702 = vld [vmem:[%s2172 + $0x114] sm:$0x1]
  %v3703 = vld [vmem:[%s2172 + $0x118] sm:$0xe]
  %v3704 = vld [vmem:[%s2172 + $0x11c] sm:$0x1]
  %v3705 = vld [vmem:[%s2172 + $0x120] sm:$0xe]
  %v3706 = vld [vmem:[%s2172 + $0x124] sm:$0x1]
  %v3707 = vld [vmem:[%s2172 + $0x128] sm:$0xe]
  %v3708 = vld [vmem:[%s2172 + $0x12c] sm:$0x1]
  %v3709 = vld [vmem:[%s2172 + $0x140] sm:$0xe]
  %v3710 = vld [vmem:[%s2172 + $0x144] sm:$0x1]
  %v3711 = vld [vmem:[%s2172 + $0x148] sm:$0xe]
  %v3712 = vld [vmem:[%s2172 + $0x14c] sm:$0x1]
  %v3713 = vld [vmem:[%s2172 + $0x150] sm:$0xe]
  %v3714 = vld [vmem:[%s2172 + $0x154] sm:$0x1]
  %v3715 = vld [vmem:[%s2172 + $0x158] sm:$0xe]
  %v3716 = vld [vmem:[%s2172 + $0x15c] sm:$0x1]
  %v3717 = vld [vmem:[%s2172 + $0x160] sm:$0xe]
  %v3718 = vld [vmem:[%s2172 + $0x164] sm:$0x1]
  %v3719 = vld [vmem:[%s2172 + $0x168] sm:$0xe]
  %v3720 = vld [vmem:[%s2172 + $0x16c] sm:$0x1]
  %v3721 = vld [vmem:[%s2172 + $0x170] sm:$0xe]
  %v3722 = vld [vmem:[%s2172 + $0x174] sm:$0x1]
  %v3723 = vld [vmem:[%s2172 + $0x178] sm:$0xe]
  %v3724 = vld [vmem:[%s2172 + $0x17c] sm:$0x1]
  %v3725 = vld [vmem:[%s2172 + $0x190] sm:$0xe]
  %v3726 = vld [vmem:[%s2172 + $0x194] sm:$0x1]
  %v3727 = vld [vmem:[%s2172 + $0x198] sm:$0xe]
  %v3728 = vld [vmem:[%s2172 + $0x19c] sm:$0x1]
  %v3729 = vld [vmem:[%s2172 + $0x1a0] sm:$0xe]
  %v3730 = vld [vmem:[%s2172 + $0x1a4] sm:$0x1]
  %v3731 = vld [vmem:[%s2172 + $0x1a8] sm:$0xe]
  %v3732 = vld [vmem:[%s2172 + $0x1ac] sm:$0x1]
  %v3733 = vld [vmem:[%s2172 + $0x1b0] sm:$0xe]
  %v3734 = vld [vmem:[%s2172 + $0x1b4] sm:$0x1]
  %v3735 = vld [vmem:[%s2172 + $0x1b8] sm:$0xe]
  %v3736 = vld [vmem:[%s2172 + $0x1bc] sm:$0x1]
  %v3737 = vld [vmem:[%s2172 + $0x1c0] sm:$0xe]
  %v3738 = vld [vmem:[%s2172 + $0x1c4] sm:$0x1]
  %v3739 = vld [vmem:[%s2172 + $0x1c8] sm:$0xe]
  %v3740 = vld [vmem:[%s2172 + $0x1cc] sm:$0x1]
  %v3741 = vld [vmem:[%s2172 + $0x1e0] sm:$0xe]
  %v3742 = vld [vmem:[%s2172 + $0x1e4] sm:$0x1]
  %v3743 = vld [vmem:[%s2172 + $0x1e8] sm:$0xe]
  %v3744 = vld [vmem:[%s2172 + $0x1ec] sm:$0x1]
  %v3745 = vld [vmem:[%s2172 + $0x1f0] sm:$0xe]
  %v3746 = vld [vmem:[%s2172 + $0x1f4] sm:$0x1]
  %v3747 = vld [vmem:[%s2172 + $0x1f8] sm:$0xe]
  %v3748 = vld [vmem:[%s2172 + $0x1fc] sm:$0x1]
  %v3749 = vld [vmem:[%s2172 + $0x200] sm:$0xe]
  %v3750 = vld [vmem:[%s2172 + $0x204] sm:$0x1]
  %v3751 = vld [vmem:[%s2172 + $0x208] sm:$0xe]
  %v3752 = vld [vmem:[%s2172 + $0x20c] sm:$0x1]
  %v3753 = vld [vmem:[%s2172 + $0x210] sm:$0xe]
  %v3754 = vld [vmem:[%s2172 + $0x214] sm:$0x1]
  %v3755 = vld [vmem:[%s2172 + $0x218] sm:$0xe]
  %v3756 = vld [vmem:[%s2172 + $0x21c] sm:$0x1]
  %v3757 = vld [vmem:[%s2172 + $0x230] sm:$0xe]
  %v3758 = vld [vmem:[%s2172 + $0x234] sm:$0x1]
  %v3759 = vld [vmem:[%s2172 + $0x238] sm:$0xe]
  %v3760 = vld [vmem:[%s2172 + $0x23c] sm:$0x1]
  %v3761 = vld [vmem:[%s2172 + $0x240] sm:$0xe]
  %v3762 = vld [vmem:[%s2172 + $0x244] sm:$0x1]
  %v3763 = vld [vmem:[%s2172 + $0x248] sm:$0xe]
  %v3764 = vld [vmem:[%s2172 + $0x24c] sm:$0x1]
  %v3765 = vld [vmem:[%s2172 + $0x250] sm:$0xe]
  %v3766 = vld [vmem:[%s2172 + $0x254] sm:$0x1]
  %v3767 = vld [vmem:[%s2172 + $0x258] sm:$0xe]
  %v3768 = vld [vmem:[%s2172 + $0x25c] sm:$0x1]
  %v3769 = vld [vmem:[%s2172 + $0x260] sm:$0xe]
  %v3770 = vld [vmem:[%s2172 + $0x264] sm:$0x1]
  %v3771 = vld [vmem:[%s2172 + $0x268] sm:$0xe]
  %v3772 = vld [vmem:[%s2172 + $0x26c] sm:$0x1]
  %v3901 = vrot.slane %v3645, 5
  %v3902 = vrot.slane %v3901, 4
  %v3903 = vrot.slane %v3646, 5
  %v3904 = vsel %vm1752, %v3902, %v3903
  %v3905 = vrot.slane %v3647, 5
  %v3906 = vrot.slane %v3905, 4
  %v3907 = vrot.slane %v3648, 5
  %v3908 = vsel %vm1752, %v3906, %v3907
  %v3909 = vrot.slane %v3649, 5
  %v3910 = vrot.slane %v3909, 4
  %v3911 = vrot.slane %v3650, 5
  %v3912 = vsel %vm1752, %v3910, %v3911
  %v3913 = vrot.slane %v3651, 5
  %v3914 = vrot.slane %v3913, 4
  %v3915 = vrot.slane %v3652, 5
  %v3916 = vsel %vm1752, %v3914, %v3915
  %v3917 = vrot.slane %v3653, 5
  %v3918 = vrot.slane %v3917, 4
  %v3919 = vrot.slane %v3654, 5
  %v3920 = vsel %vm1752, %v3918, %v3919
  %v3921 = vrot.slane %v3655, 5
  %v3922 = vrot.slane %v3921, 4
  %v3923 = vrot.slane %v3656, 5
  %v3924 = vsel %vm1752, %v3922, %v3923
  %v3925 = vrot.slane %v3657, 5
  %v3926 = vrot.slane %v3925, 4
  %v3927 = vrot.slane %v3658, 5
  %v3928 = vsel %vm1752, %v3926, %v3927
  %v3929 = vrot.slane %v3659, 5
  %v3930 = vrot.slane %v3929, 4
  %v3931 = vrot.slane %v3660, 5
  %v3932 = vsel %vm1752, %v3930, %v3931
  %v3933 = vrot.slane %v3661, 5
  %v3934 = vrot.slane %v3933, 4
  %v3935 = vrot.slane %v3662, 5
  %v3936 = vsel %vm1752, %v3934, %v3935
  %v3937 = vrot.slane %v3663, 5
  %v3938 = vrot.slane %v3937, 4
  %v3939 = vrot.slane %v3664, 5
  %v3940 = vsel %vm1752, %v3938, %v3939
  %v3941 = vrot.slane %v3665, 5
  %v3942 = vrot.slane %v3941, 4
  %v3943 = vrot.slane %v3666, 5
  %v3944 = vsel %vm1752, %v3942, %v3943
  %v3945 = vrot.slane %v3667, 5
  %v3946 = vrot.slane %v3945, 4
  %v3947 = vrot.slane %v3668, 5
  %v3948 = vsel %vm1752, %v3946, %v3947
  %v3949 = vrot.slane %v3669, 5
  %v3950 = vrot.slane %v3949, 4
  %v3951 = vrot.slane %v3670, 5
  %v3952 = vsel %vm1752, %v3950, %v3951
  %v3953 = vrot.slane %v3671, 5
  %v3954 = vrot.slane %v3953, 4
  %v3955 = vrot.slane %v3672, 5
  %v3956 = vsel %vm1752, %v3954, %v3955
  %v3957 = vrot.slane %v3673, 5
  %v3958 = vrot.slane %v3957, 4
  %v3959 = vrot.slane %v3674, 5
  %v3960 = vsel %vm1752, %v3958, %v3959
  %v3961 = vrot.slane %v3675, 5
  %v3962 = vrot.slane %v3961, 4
  %v3963 = vrot.slane %v3676, 5
  %v3964 = vsel %vm1752, %v3962, %v3963
  %v3965 = vrot.slane %v3677, 5
  %v3966 = vrot.slane %v3965, 4
  %v3967 = vrot.slane %v3678, 5
  %v3968 = vsel %vm1752, %v3966, %v3967
  %v3969 = vrot.slane %v3679, 5
  %v3970 = vrot.slane %v3969, 4
  %v3971 = vrot.slane %v3680, 5
  %v3972 = vsel %vm1752, %v3970, %v3971
  %v3973 = vrot.slane %v3681, 5
  %v3974 = vrot.slane %v3973, 4
  %v3975 = vrot.slane %v3682, 5
  %v3976 = vsel %vm1752, %v3974, %v3975
  %v3977 = vrot.slane %v3683, 5
  %v3978 = vrot.slane %v3977, 4
  %v3979 = vrot.slane %v3684, 5
  %v3980 = vsel %vm1752, %v3978, %v3979
  %v3981 = vrot.slane %v3685, 5
  %v3982 = vrot.slane %v3981, 4
  %v3983 = vrot.slane %v3686, 5
  %v3984 = vsel %vm1752, %v3982, %v3983
  %v3985 = vrot.slane %v3687, 5
  %v3986 = vrot.slane %v3985, 4
  %v3987 = vrot.slane %v3688, 5
  %v3988 = vsel %vm1752, %v3986, %v3987
  %v3989 = vrot.slane %v3689, 5
  %v3990 = vrot.slane %v3989, 4
  %v3991 = vrot.slane %v3690, 5
  %v3992 = vsel %vm1752, %v3990, %v3991
  %v3993 = vrot.slane %v3691, 5
  %v3994 = vrot.slane %v3993, 4
  %v3995 = vrot.slane %v3692, 5
  %v3996 = vsel %vm1752, %v3994, %v3995
  %v3997 = vrot.slane %v3693, 5
  %v3998 = vrot.slane %v3997, 4
  %v3999 = vrot.slane %v3694, 5
  %v4000 = vsel %vm1752, %v3998, %v3999
  %v4001 = vrot.slane %v3695, 5
  %v4002 = vrot.slane %v4001, 4
  %v4003 = vrot.slane %v3696, 5
  %v4004 = vsel %vm1752, %v4002, %v4003
  %v4005 = vrot.slane %v3697, 5
  %v4006 = vrot.slane %v4005, 4
  %v4007 = vrot.slane %v3698, 5
  %v4008 = vsel %vm1752, %v4006, %v4007
  %v4009 = vrot.slane %v3699, 5
  %v4010 = vrot.slane %v4009, 4
  %v4011 = vrot.slane %v3700, 5
  %v4012 = vsel %vm1752, %v4010, %v4011
  %v4013 = vrot.slane %v3701, 5
  %v4014 = vrot.slane %v4013, 4
  %v4015 = vrot.slane %v3702, 5
  %v4016 = vsel %vm1752, %v4014, %v4015
  %v4017 = vrot.slane %v3703, 5
  %v4018 = vrot.slane %v4017, 4
  %v4019 = vrot.slane %v3704, 5
  %v4020 = vsel %vm1752, %v4018, %v4019
  %v4021 = vrot.slane %v3705, 5
  %v4022 = vrot.slane %v4021, 4
  %v4023 = vrot.slane %v3706, 5
  %v4024 = vsel %vm1752, %v4022, %v4023
  %v4025 = vrot.slane %v3707, 5
  %v4026 = vrot.slane %v4025, 4
  %v4027 = vrot.slane %v3708, 5
  %v4028 = vsel %vm1752, %v4026, %v4027
  %v4029 = vrot.slane %v3709, 5
  %v4030 = vrot.slane %v4029, 4
  %v4031 = vrot.slane %v3710, 5
  %v4032 = vsel %vm1752, %v4030, %v4031
  %v4033 = vrot.slane %v3711, 5
  %v4034 = vrot.slane %v4033, 4
  %v4035 = vrot.slane %v3712, 5
  %v4036 = vsel %vm1752, %v4034, %v4035
  %v4037 = vrot.slane %v3713, 5
  %v4038 = vrot.slane %v4037, 4
  %v4039 = vrot.slane %v3714, 5
  %v4040 = vsel %vm1752, %v4038, %v4039
  %v4041 = vrot.slane %v3715, 5
  %v4042 = vrot.slane %v4041, 4
  %v4043 = vrot.slane %v3716, 5
  %v4044 = vsel %vm1752, %v4042, %v4043
  %v4045 = vrot.slane %v3717, 5
  %v4046 = vrot.slane %v4045, 4
  %v4047 = vrot.slane %v3718, 5
  %v4048 = vsel %vm1752, %v4046, %v4047
  %v4049 = vrot.slane %v3719, 5
  %v4050 = vrot.slane %v4049, 4
  %v4051 = vrot.slane %v3720, 5
  %v4052 = vsel %vm1752, %v4050, %v4051
  %v4053 = vrot.slane %v3721, 5
  %v4054 = vrot.slane %v4053, 4
  %v4055 = vrot.slane %v3722, 5
  %v4056 = vsel %vm1752, %v4054, %v4055
  %v4057 = vrot.slane %v3723, 5
  %v4058 = vrot.slane %v4057, 4
  %v4059 = vrot.slane %v3724, 5
  %v4060 = vsel %vm1752, %v4058, %v4059
  %v4061 = vrot.slane %v3725, 5
  %v4062 = vrot.slane %v4061, 4
  %v4063 = vrot.slane %v3726, 5
  %v4064 = vsel %vm1752, %v4062, %v4063
  %v4065 = vrot.slane %v3727, 5
  %v4066 = vrot.slane %v4065, 4
  %v4067 = vrot.slane %v3728, 5
  %v4068 = vsel %vm1752, %v4066, %v4067
  %v4069 = vrot.slane %v3729, 5
  %v4070 = vrot.slane %v4069, 4
  %v4071 = vrot.slane %v3730, 5
  %v4072 = vsel %vm1752, %v4070, %v4071
  %v4073 = vrot.slane %v3731, 5
  %v4074 = vrot.slane %v4073, 4
  %v4075 = vrot.slane %v3732, 5
  %v4076 = vsel %vm1752, %v4074, %v4075
  %v4077 = vrot.slane %v3733, 5
  %v4078 = vrot.slane %v4077, 4
  %v4079 = vrot.slane %v3734, 5
  %v4080 = vsel %vm1752, %v4078, %v4079
  %v4081 = vrot.slane %v3735, 5
  %v4082 = vrot.slane %v4081, 4
  %v4083 = vrot.slane %v3736, 5
  %v4084 = vsel %vm1752, %v4082, %v4083
  %v4085 = vrot.slane %v3737, 5
  %v4086 = vrot.slane %v4085, 4
  %v4087 = vrot.slane %v3738, 5
  %v4088 = vsel %vm1752, %v4086, %v4087
  %v4089 = vrot.slane %v3739, 5
  %v4090 = vrot.slane %v4089, 4
  %v4091 = vrot.slane %v3740, 5
  %v4092 = vsel %vm1752, %v4090, %v4091
  %v4093 = vrot.slane %v3741, 5
  %v4094 = vrot.slane %v4093, 4
  %v4095 = vrot.slane %v3742, 5
  %v4096 = vsel %vm1752, %v4094, %v4095
  %v4097 = vrot.slane %v3743, 5
  %v4098 = vrot.slane %v4097, 4
  %v4099 = vrot.slane %v3744, 5
  %v4100 = vsel %vm1752, %v4098, %v4099
  %v4101 = vrot.slane %v3745, 5
  %v4102 = vrot.slane %v4101, 4
  %v4103 = vrot.slane %v3746, 5
  %v4104 = vsel %vm1752, %v4102, %v4103
  %v4105 = vrot.slane %v3747, 5
  %v4106 = vrot.slane %v4105, 4
  %v4107 = vrot.slane %v3748, 5
  %v4108 = vsel %vm1752, %v4106, %v4107
  %v4109 = vrot.slane %v3749, 5
  %v4110 = vrot.slane %v4109, 4
  %v4111 = vrot.slane %v3750, 5
  %v4112 = vsel %vm1752, %v4110, %v4111
  %v4113 = vrot.slane %v3751, 5
  %v4114 = vrot.slane %v4113, 4
  %v4115 = vrot.slane %v3752, 5
  %v4116 = vsel %vm1752, %v4114, %v4115
  %v4117 = vrot.slane %v3753, 5
  %v4118 = vrot.slane %v4117, 4
  %v4119 = vrot.slane %v3754, 5
  %v4120 = vsel %vm1752, %v4118, %v4119
  %v4121 = vrot.slane %v3755, 5
  %v4122 = vrot.slane %v4121, 4
  %v4123 = vrot.slane %v3756, 5
  %v4124 = vsel %vm1752, %v4122, %v4123
  %v4125 = vrot.slane %v3757, 5
  %v4126 = vrot.slane %v4125, 4
  %v4127 = vrot.slane %v3758, 5
  %v4128 = vsel %vm1752, %v4126, %v4127
  %v4129 = vrot.slane %v3759, 5
  %v4130 = vrot.slane %v4129, 4
  %v4131 = vrot.slane %v3760, 5
  %v4132 = vsel %vm1752, %v4130, %v4131
  %v4133 = vrot.slane %v3761, 5
  %v4134 = vrot.slane %v4133, 4
  %v4135 = vrot.slane %v3762, 5
  %v4136 = vsel %vm1752, %v4134, %v4135
  %v4137 = vrot.slane %v3763, 5
  %v4138 = vrot.slane %v4137, 4
  %v4139 = vrot.slane %v3764, 5
  %v4140 = vsel %vm1752, %v4138, %v4139
  %v4141 = vrot.slane %v3765, 5
  %v4142 = vrot.slane %v4141, 4
  %v4143 = vrot.slane %v3766, 5
  %v4144 = vsel %vm1752, %v4142, %v4143
  %v4145 = vrot.slane %v3767, 5
  %v4146 = vrot.slane %v4145, 4
  %v4147 = vrot.slane %v3768, 5
  %v4148 = vsel %vm1752, %v4146, %v4147
  %v4149 = vrot.slane %v3769, 5
  %v4150 = vrot.slane %v4149, 4
  %v4151 = vrot.slane %v3770, 5
  %v4152 = vsel %vm1752, %v4150, %v4151
  %v4153 = vrot.slane %v3771, 5
  %v4154 = vrot.slane %v4153, 4
  %v4155 = vrot.slane %v3772, 5
  %v4156 = vsel %vm1752, %v4154, %v4155
  %v4157 = vunpack.c.l.b16 %v3904
  %v4158 = vunpack.c.l.b16 %v3908
  %v4159 = vunpack.c.l.b16 %v3912
  %v4160 = vunpack.c.l.b16 %v3916
  %v4161 = vunpack.c.l.b16 %v3920
  %v4162 = vunpack.c.l.b16 %v3924
  %v4163 = vunpack.c.l.b16 %v3928
  %v4164 = vunpack.c.l.b16 %v3932
  %v4165 = vunpack.c.l.b16 %v3936
  %v4166 = vunpack.c.l.b16 %v3940
  %v4167 = vunpack.c.l.b16 %v3944
  %v4168 = vunpack.c.l.b16 %v3948
  %v4169 = vunpack.c.l.b16 %v3952
  %v4170 = vunpack.c.l.b16 %v3956
  %v4171 = vunpack.c.l.b16 %v3960
  %v4172 = vunpack.c.l.b16 %v3964
  %v4173 = vunpack.c.l.b16 %v3968
  %v4174 = vunpack.c.l.b16 %v3972
  %v4175 = vunpack.c.l.b16 %v3976
  %v4176 = vunpack.c.l.b16 %v3980
  %v4177 = vunpack.c.l.b16 %v3984
  %v4178 = vunpack.c.l.b16 %v3988
  %v4179 = vunpack.c.l.b16 %v3992
  %v4180 = vunpack.c.l.b16 %v3996
  %v4181 = vunpack.c.l.b16 %v4000
  %v4182 = vunpack.c.l.b16 %v4004
  %v4183 = vunpack.c.l.b16 %v4008
  %v4184 = vunpack.c.l.b16 %v4012
  %v4185 = vunpack.c.l.b16 %v4016
  %v4186 = vunpack.c.l.b16 %v4020
  %v4187 = vunpack.c.l.b16 %v4024
  %v4188 = vunpack.c.l.b16 %v4028
  %v4189 = vunpack.c.l.b16 %v4032
  %v4190 = vunpack.c.l.b16 %v4036
  %v4191 = vunpack.c.l.b16 %v4040
  %v4192 = vunpack.c.l.b16 %v4044
  %v4193 = vunpack.c.l.b16 %v4048
  %v4194 = vunpack.c.l.b16 %v4052
  %v4195 = vunpack.c.l.b16 %v4056
  %v4196 = vunpack.c.l.b16 %v4060
  %v4197 = vunpack.c.l.b16 %v4064
  %v4198 = vunpack.c.l.b16 %v4068
  %v4199 = vunpack.c.l.b16 %v4072
  %v4200 = vunpack.c.l.b16 %v4076
  %v4201 = vunpack.c.l.b16 %v4080
  %v4202 = vunpack.c.l.b16 %v4084
  %v4203 = vunpack.c.l.b16 %v4088
  %v4204 = vunpack.c.l.b16 %v4092
  %v4205 = vunpack.c.l.b16 %v4096
  %v4206 = vunpack.c.l.b16 %v4100
  %v4207 = vunpack.c.l.b16 %v4104
  %v4208 = vunpack.c.l.b16 %v4108
  %v4209 = vunpack.c.l.b16 %v4112
  %v4210 = vunpack.c.l.b16 %v4116
  %v4211 = vunpack.c.l.b16 %v4120
  %v4212 = vunpack.c.l.b16 %v4124
  %v4213 = vunpack.c.l.b16 %v4128
  %v4214 = vunpack.c.l.b16 %v4132
  %v4215 = vunpack.c.l.b16 %v4136
  %v4216 = vunpack.c.l.b16 %v4140
  %v4217 = vunpack.c.l.b16 %v4144
  %v4218 = vunpack.c.l.b16 %v4148
  %v4219 = vunpack.c.l.b16 %v4152
  %v4220 = vunpack.c.l.b16 %v4156
  %v4221 = vpack.c.b16 %v4158, %v4157
  %v4222 = vpack.c.b16 %v4160, %v4159
  %v4223 = vpack.c.b16 %v4162, %v4161
  %v4224 = vpack.c.b16 %v4164, %v4163
  %v4225 = vpack.c.b16 %v4166, %v4165
  %v4226 = vpack.c.b16 %v4168, %v4167
  %v4227 = vpack.c.b16 %v4170, %v4169
  %v4228 = vpack.c.b16 %v4172, %v4171
  %v4229 = vpack.c.b16 %v4174, %v4173
  %v4230 = vpack.c.b16 %v4176, %v4175
  %v4231 = vpack.c.b16 %v4178, %v4177
  %v4232 = vpack.c.b16 %v4180, %v4179
  %v4233 = vpack.c.b16 %v4182, %v4181
  %v4234 = vpack.c.b16 %v4184, %v4183
  %v4235 = vpack.c.b16 %v4186, %v4185
  %v4236 = vpack.c.b16 %v4188, %v4187
  %v4237 = vpack.c.b16 %v4190, %v4189
  %v4238 = vpack.c.b16 %v4192, %v4191
  %v4239 = vpack.c.b16 %v4194, %v4193
  %v4240 = vpack.c.b16 %v4196, %v4195
  %v4241 = vpack.c.b16 %v4198, %v4197
  %v4242 = vpack.c.b16 %v4200, %v4199
  %v4243 = vpack.c.b16 %v4202, %v4201
  %v4244 = vpack.c.b16 %v4204, %v4203
  %v4245 = vpack.c.b16 %v4206, %v4205
  %v4246 = vpack.c.b16 %v4208, %v4207
  %v4247 = vpack.c.b16 %v4210, %v4209
  %v4248 = vpack.c.b16 %v4212, %v4211
  %v4249 = vpack.c.b16 %v4214, %v4213
  %v4250 = vpack.c.b16 %v4216, %v4215
  %v4251 = vpack.c.b16 %v4218, %v4217
  %v4252 = vpack.c.b16 %v4220, %v4219
  %4285 = vst [vmem:[#allocation2 + $0x28] sm:$0xff] %v4221
  %4286 = vst [vmem:[#allocation2 + $0x70] sm:$0xff] %v4222
  %4287 = vst [vmem:[#allocation2 + $0xb8] sm:$0xff] %v4223
  %4288 = vst [vmem:[#allocation2 + $0x100] sm:$0xff] %v4224
  %4289 = vst [vmem:[#allocation2 + $0x148] sm:$0xff] %v4225
  %4290 = vst [vmem:[#allocation2 + $0x190] sm:$0xff] %v4226
  %4291 = vst [vmem:[#allocation2 + $0x1d8] sm:$0xff] %v4227
  %4292 = vst [vmem:[#allocation2 + $0x220] sm:$0xff] %v4228
  %4293 = vst [vmem:[#allocation2 + $0x268] sm:$0xff] %v4229
  %4294 = vst [vmem:[#allocation2 + $0x2b0] sm:$0xff] %v4230
  %4295 = vst [vmem:[#allocation2 + $0x2f8] sm:$0xff] %v4231
  %4296 = vst [vmem:[#allocation2 + $0x340] sm:$0xff] %v4232
  %4297 = vst [vmem:[#allocation2 + $0x388] sm:$0xff] %v4233
  %4298 = vst [vmem:[#allocation2 + $0x3d0] sm:$0xff] %v4234
  %4299 = vst [vmem:[#allocation2 + $0x418] sm:$0xff] %v4235
  %4300 = vst [vmem:[#allocation2 + $0x460] sm:$0xff] %v4236
  %4301 = vst [vmem:[#allocation2 + $0x4a8] sm:$0xff] %v4237
  %4302 = vst [vmem:[#allocation2 + $0x4f0] sm:$0xff] %v4238
  %4303 = vst [vmem:[#allocation2 + $0x538] sm:$0xff] %v4239
  %4304 = vst [vmem:[#allocation2 + $0x580] sm:$0xff] %v4240
  %4305 = vst [vmem:[#allocation2 + $0x5c8] sm:$0xff] %v4241
  %4306 = vst [vmem:[#allocation2 + $0x610] sm:$0xff] %v4242
  %4307 = vst [vmem:[#allocation2 + $0x658] sm:$0xff] %v4243
  %4308 = vst [vmem:[#allocation2 + $0x6a0] sm:$0xff] %v4244
  %4309 = vst [vmem:[#allocation2 + $0x6e8] sm:$0xff] %v4245
  %4310 = vst [vmem:[#allocation2 + $0x730] sm:$0xff] %v4246
  %4311 = vst [vmem:[#allocation2 + $0x778] sm:$0xff] %v4247
  %4312 = vst [vmem:[#allocation2 + $0x7c0] sm:$0xff] %v4248
  %4313 = vst [vmem:[#allocation2 + $0x808] sm:$0xff] %v4249
  %4314 = vst [vmem:[#allocation2 + $0x850] sm:$0xff] %v4250
  %4315 = vst [vmem:[#allocation2 + $0x898] sm:$0xff] %v4251
  %4316 = vst [vmem:[#allocation2 + $0x8e0] sm:$0xff] %v4252
  %s4317 = sadd.s32 %s15, 2
  %s4318 = smul.u32 %s4317, 2
  %s4319 = smul.addr %s4318, 4
  %s4320 = scalar_lea.vmem %s0, %s4319
  %v4321 = vld [vmem:[%s4320] sm:$0xf]
  %v4322 = vld [vmem:[%s4320 + $0x8] sm:$0xf]
  %v4323 = vld [vmem:[%s4320 + $0x10] sm:$0xf]
  %v4324 = vld [vmem:[%s4320 + $0x18] sm:$0xf]
  %v4325 = vld [vmem:[%s4320 + $0x20] sm:$0xf]
  %v4326 = vld [vmem:[%s4320 + $0x28] sm:$0xf]
  %v4327 = vld [vmem:[%s4320 + $0x30] sm:$0xf]
  %v4328 = vld [vmem:[%s4320 + $0x38] sm:$0xf]
  %v4329 = vld [vmem:[%s4320 + $0x50] sm:$0xf]
  %v4330 = vld [vmem:[%s4320 + $0x58] sm:$0xf]
  %v4331 = vld [vmem:[%s4320 + $0x60] sm:$0xf]
  %v4332 = vld [vmem:[%s4320 + $0x68] sm:$0xf]
  %v4333 = vld [vmem:[%s4320 + $0x70] sm:$0xf]
  %v4334 = vld [vmem:[%s4320 + $0x78] sm:$0xf]
  %v4335 = vld [vmem:[%s4320 + $0x80] sm:$0xf]
  %v4336 = vld [vmem:[%s4320 + $0x88] sm:$0xf]
  %v4337 = vld [vmem:[%s4320 + $0xa0] sm:$0xf]
  %v4338 = vld [vmem:[%s4320 + $0xa8] sm:$0xf]
  %v4339 = vld [vmem:[%s4320 + $0xb0] sm:$0xf]
  %v4340 = vld [vmem:[%s4320 + $0xb8] sm:$0xf]
  %v4341 = vld [vmem:[%s4320 + $0xc0] sm:$0xf]
  %v4342 = vld [vmem:[%s4320 + $0xc8] sm:$0xf]
  %v4343 = vld [vmem:[%s4320 + $0xd0] sm:$0xf]
  %v4344 = vld [vmem:[%s4320 + $0xd8] sm:$0xf]
  %v4345 = vld [vmem:[%s4320 + $0xf0] sm:$0xf]
  %v4346 = vld [vmem:[%s4320 + $0xf8] sm:$0xf]
  %v4347 = vld [vmem:[%s4320 + $0x100] sm:$0xf]
  %v4348 = vld [vmem:[%s4320 + $0x108] sm:$0xf]
  %v4349 = vld [vmem:[%s4320 + $0x110] sm:$0xf]
  %v4350 = vld [vmem:[%s4320 + $0x118] sm:$0xf]
  %v4351 = vld [vmem:[%s4320 + $0x120] sm:$0xf]
  %v4352 = vld [vmem:[%s4320 + $0x128] sm:$0xf]
  %v4353 = vld [vmem:[%s4320 + $0x140] sm:$0xf]
  %v4354 = vld [vmem:[%s4320 + $0x148] sm:$0xf]
  %v4355 = vld [vmem:[%s4320 + $0x150] sm:$0xf]
  %v4356 = vld [vmem:[%s4320 + $0x158] sm:$0xf]
  %v4357 = vld [vmem:[%s4320 + $0x160] sm:$0xf]
  %v4358 = vld [vmem:[%s4320 + $0x168] sm:$0xf]
  %v4359 = vld [vmem:[%s4320 + $0x170] sm:$0xf]
  %v4360 = vld [vmem:[%s4320 + $0x178] sm:$0xf]
  %v4361 = vld [vmem:[%s4320 + $0x190] sm:$0xf]
  %v4362 = vld [vmem:[%s4320 + $0x198] sm:$0xf]
  %v4363 = vld [vmem:[%s4320 + $0x1a0] sm:$0xf]
  %v4364 = vld [vmem:[%s4320 + $0x1a8] sm:$0xf]
  %v4365 = vld [vmem:[%s4320 + $0x1b0] sm:$0xf]
  %v4366 = vld [vmem:[%s4320 + $0x1b8] sm:$0xf]
  %v4367 = vld [vmem:[%s4320 + $0x1c0] sm:$0xf]
  %v4368 = vld [vmem:[%s4320 + $0x1c8] sm:$0xf]
  %v4369 = vld [vmem:[%s4320 + $0x1e0] sm:$0xf]
  %v4370 = vld [vmem:[%s4320 + $0x1e8] sm:$0xf]
  %v4371 = vld [vmem:[%s4320 + $0x1f0] sm:$0xf]
  %v4372 = vld [vmem:[%s4320 + $0x1f8] sm:$0xf]
  %v4373 = vld [vmem:[%s4320 + $0x200] sm:$0xf]
  %v4374 = vld [vmem:[%s4320 + $0x208] sm:$0xf]
  %v4375 = vld [vmem:[%s4320 + $0x210] sm:$0xf]
  %v4376 = vld [vmem:[%s4320 + $0x218] sm:$0xf]
  %v4377 = vld [vmem:[%s4320 + $0x230] sm:$0xf]
  %v4378 = vld [vmem:[%s4320 + $0x238] sm:$0xf]
  %v4379 = vld [vmem:[%s4320 + $0x240] sm:$0xf]
  %v4380 = vld [vmem:[%s4320 + $0x248] sm:$0xf]
  %v4381 = vld [vmem:[%s4320 + $0x250] sm:$0xf]
  %v4382 = vld [vmem:[%s4320 + $0x258] sm:$0xf]
  %v4383 = vld [vmem:[%s4320 + $0x260] sm:$0xf]
  %v4384 = vld [vmem:[%s4320 + $0x268] sm:$0xf]
  %v4449 = vunpack.c.l.b16 %v4321
  %v4450 = vunpack.c.l.b16 %v4322
  %v4451 = vunpack.c.l.b16 %v4323
  %v4452 = vunpack.c.l.b16 %v4324
  %v4453 = vunpack.c.l.b16 %v4325
  %v4454 = vunpack.c.l.b16 %v4326
  %v4455 = vunpack.c.l.b16 %v4327
  %v4456 = vunpack.c.l.b16 %v4328
  %v4457 = vunpack.c.l.b16 %v4329
  %v4458 = vunpack.c.l.b16 %v4330
  %v4459 = vunpack.c.l.b16 %v4331
  %v4460 = vunpack.c.l.b16 %v4332
  %v4461 = vunpack.c.l.b16 %v4333
  %v4462 = vunpack.c.l.b16 %v4334
  %v4463 = vunpack.c.l.b16 %v4335
  %v4464 = vunpack.c.l.b16 %v4336
  %v4465 = vunpack.c.l.b16 %v4337
  %v4466 = vunpack.c.l.b16 %v4338
  %v4467 = vunpack.c.l.b16 %v4339
  %v4468 = vunpack.c.l.b16 %v4340
  %v4469 = vunpack.c.l.b16 %v4341
  %v4470 = vunpack.c.l.b16 %v4342
  %v4471 = vunpack.c.l.b16 %v4343
  %v4472 = vunpack.c.l.b16 %v4344
  %v4473 = vunpack.c.l.b16 %v4345
  %v4474 = vunpack.c.l.b16 %v4346
  %v4475 = vunpack.c.l.b16 %v4347
  %v4476 = vunpack.c.l.b16 %v4348
  %v4477 = vunpack.c.l.b16 %v4349
  %v4478 = vunpack.c.l.b16 %v4350
  %v4479 = vunpack.c.l.b16 %v4351
  %v4480 = vunpack.c.l.b16 %v4352
  %v4481 = vunpack.c.l.b16 %v4353
  %v4482 = vunpack.c.l.b16 %v4354
  %v4483 = vunpack.c.l.b16 %v4355
  %v4484 = vunpack.c.l.b16 %v4356
  %v4485 = vunpack.c.l.b16 %v4357
  %v4486 = vunpack.c.l.b16 %v4358
  %v4487 = vunpack.c.l.b16 %v4359
  %v4488 = vunpack.c.l.b16 %v4360
  %v4489 = vunpack.c.l.b16 %v4361
  %v4490 = vunpack.c.l.b16 %v4362
  %v4491 = vunpack.c.l.b16 %v4363
  %v4492 = vunpack.c.l.b16 %v4364
  %v4493 = vunpack.c.l.b16 %v4365
  %v4494 = vunpack.c.l.b16 %v4366
  %v4495 = vunpack.c.l.b16 %v4367
  %v4496 = vunpack.c.l.b16 %v4368
  %v4497 = vunpack.c.l.b16 %v4369
  %v4498 = vunpack.c.l.b16 %v4370
  %v4499 = vunpack.c.l.b16 %v4371
  %v4500 = vunpack.c.l.b16 %v4372
  %v4501 = vunpack.c.l.b16 %v4373
  %v4502 = vunpack.c.l.b16 %v4374
  %v4503 = vunpack.c.l.b16 %v4375
  %v4504 = vunpack.c.l.b16 %v4376
  %v4505 = vunpack.c.l.b16 %v4377
  %v4506 = vunpack.c.l.b16 %v4378
  %v4507 = vunpack.c.l.b16 %v4379
  %v4508 = vunpack.c.l.b16 %v4380
  %v4509 = vunpack.c.l.b16 %v4381
  %v4510 = vunpack.c.l.b16 %v4382
  %v4511 = vunpack.c.l.b16 %v4383
  %v4512 = vunpack.c.l.b16 %v4384
  %v4513 = vpack.c.b16 %v4450, %v4449
  %v4514 = vpack.c.b16 %v4452, %v4451
  %v4515 = vpack.c.b16 %v4454, %v4453
  %v4516 = vpack.c.b16 %v4456, %v4455
  %v4517 = vpack.c.b16 %v4458, %v4457
  %v4518 = vpack.c.b16 %v4460, %v4459
  %v4519 = vpack.c.b16 %v4462, %v4461
  %v4520 = vpack.c.b16 %v4464, %v4463
  %v4521 = vpack.c.b16 %v4466, %v4465
  %v4522 = vpack.c.b16 %v4468, %v4467
  %v4523 = vpack.c.b16 %v4470, %v4469
  %v4524 = vpack.c.b16 %v4472, %v4471
  %v4525 = vpack.c.b16 %v4474, %v4473
  %v4526 = vpack.c.b16 %v4476, %v4475
  %v4527 = vpack.c.b16 %v4478, %v4477
  %v4528 = vpack.c.b16 %v4480, %v4479
  %v4529 = vpack.c.b16 %v4482, %v4481
  %v4530 = vpack.c.b16 %v4484, %v4483
  %v4531 = vpack.c.b16 %v4486, %v4485
  %v4532 = vpack.c.b16 %v4488, %v4487
  %v4533 = vpack.c.b16 %v4490, %v4489
  %v4534 = vpack.c.b16 %v4492, %v4491
  %v4535 = vpack.c.b16 %v4494, %v4493
  %v4536 = vpack.c.b16 %v4496, %v4495
  %v4537 = vpack.c.b16 %v4498, %v4497
  %v4538 = vpack.c.b16 %v4500, %v4499
  %v4539 = vpack.c.b16 %v4502, %v4501
  %v4540 = vpack.c.b16 %v4504, %v4503
  %v4541 = vpack.c.b16 %v4506, %v4505
  %v4542 = vpack.c.b16 %v4508, %v4507
  %v4543 = vpack.c.b16 %v4510, %v4509
  %v4544 = vpack.c.b16 %v4512, %v4511
  %4577 = vst [vmem:[#allocation2 + $0x30] sm:$0xff] %v4513
  %4578 = vst [vmem:[#allocation2 + $0x78] sm:$0xff] %v4514
  %4579 = vst [vmem:[#allocation2 + $0xc0] sm:$0xff] %v4515
  %4580 = vst [vmem:[#allocation2 + $0x108] sm:$0xff] %v4516
  %4581 = vst [vmem:[#allocation2 + $0x150] sm:$0xff] %v4517
  %4582 = vst [vmem:[#allocation2 + $0x198] sm:$0xff] %v4518
  %4583 = vst [vmem:[#allocation2 + $0x1e0] sm:$0xff] %v4519
  %4584 = vst [vmem:[#allocation2 + $0x228] sm:$0xff] %v4520
  %4585 = vst [vmem:[#allocation2 + $0x270] sm:$0xff] %v4521
  %4586 = vst [vmem:[#allocation2 + $0x2b8] sm:$0xff] %v4522
  %4587 = vst [vmem:[#allocation2 + $0x300] sm:$0xff] %v4523
  %4588 = vst [vmem:[#allocation2 + $0x348] sm:$0xff] %v4524
  %4589 = vst [vmem:[#allocation2 + $0x390] sm:$0xff] %v4525
  %4590 = vst [vmem:[#allocation2 + $0x3d8] sm:$0xff] %v4526
  %4591 = vst [vmem:[#allocation2 + $0x420] sm:$0xff] %v4527
  %4592 = vst [vmem:[#allocation2 + $0x468] sm:$0xff] %v4528
  %4593 = vst [vmem:[#allocation2 + $0x4b0] sm:$0xff] %v4529
  %4594 = vst [vmem:[#allocation2 + $0x4f8] sm:$0xff] %v4530
  %4595 = vst [vmem:[#allocation2 + $0x540] sm:$0xff] %v4531
  %4596 = vst [vmem:[#allocation2 + $0x588] sm:$0xff] %v4532
  %4597 = vst [vmem:[#allocation2 + $0x5d0] sm:$0xff] %v4533
  %4598 = vst [vmem:[#allocation2 + $0x618] sm:$0xff] %v4534
  %4599 = vst [vmem:[#allocation2 + $0x660] sm:$0xff] %v4535
  %4600 = vst [vmem:[#allocation2 + $0x6a8] sm:$0xff] %v4536
  %4601 = vst [vmem:[#allocation2 + $0x6f0] sm:$0xff] %v4537
  %4602 = vst [vmem:[#allocation2 + $0x738] sm:$0xff] %v4538
  %4603 = vst [vmem:[#allocation2 + $0x780] sm:$0xff] %v4539
  %4604 = vst [vmem:[#allocation2 + $0x7c8] sm:$0xff] %v4540
  %4605 = vst [vmem:[#allocation2 + $0x810] sm:$0xff] %v4541
  %4606 = vst [vmem:[#allocation2 + $0x858] sm:$0xff] %v4542
  %4607 = vst [vmem:[#allocation2 + $0x8a0] sm:$0xff] %v4543
  %4608 = vst [vmem:[#allocation2 + $0x8e8] sm:$0xff] %v4544
  %v4609 = vld [vmem:[%s4320] sm:$0xf]
  %v4610 = vld [vmem:[%s4320 + $0x4] sm:$0x1]
  %v4611 = vld [vmem:[%s4320 + $0x8] sm:$0xf]
  %v4612 = vld [vmem:[%s4320 + $0xc] sm:$0x1]
  %v4613 = vld [vmem:[%s4320 + $0x10] sm:$0xf]
  %v4614 = vld [vmem:[%s4320 + $0x14] sm:$0x1]
  %v4615 = vld [vmem:[%s4320 + $0x18] sm:$0xf]
  %v4616 = vld [vmem:[%s4320 + $0x1c] sm:$0x1]
  %v4617 = vld [vmem:[%s4320 + $0x20] sm:$0xf]
  %v4618 = vld [vmem:[%s4320 + $0x24] sm:$0x1]
  %v4619 = vld [vmem:[%s4320 + $0x28] sm:$0xf]
  %v4620 = vld [vmem:[%s4320 + $0x2c] sm:$0x1]
  %v4621 = vld [vmem:[%s4320 + $0x30] sm:$0xf]
  %v4622 = vld [vmem:[%s4320 + $0x34] sm:$0x1]
  %v4623 = vld [vmem:[%s4320 + $0x38] sm:$0xf]
  %v4624 = vld [vmem:[%s4320 + $0x3c] sm:$0x1]
  %v4625 = vld [vmem:[%s4320 + $0x50] sm:$0xf]
  %v4626 = vld [vmem:[%s4320 + $0x54] sm:$0x1]
  %v4627 = vld [vmem:[%s4320 + $0x58] sm:$0xf]
  %v4628 = vld [vmem:[%s4320 + $0x5c] sm:$0x1]
  %v4629 = vld [vmem:[%s4320 + $0x60] sm:$0xf]
  %v4630 = vld [vmem:[%s4320 + $0x64] sm:$0x1]
  %v4631 = vld [vmem:[%s4320 + $0x68] sm:$0xf]
  %v4632 = vld [vmem:[%s4320 + $0x6c] sm:$0x1]
  %v4633 = vld [vmem:[%s4320 + $0x70] sm:$0xf]
  %v4634 = vld [vmem:[%s4320 + $0x74] sm:$0x1]
  %v4635 = vld [vmem:[%s4320 + $0x78] sm:$0xf]
  %v4636 = vld [vmem:[%s4320 + $0x7c] sm:$0x1]
  %v4637 = vld [vmem:[%s4320 + $0x80] sm:$0xf]
  %v4638 = vld [vmem:[%s4320 + $0x84] sm:$0x1]
  %v4639 = vld [vmem:[%s4320 + $0x88] sm:$0xf]
  %v4640 = vld [vmem:[%s4320 + $0x8c] sm:$0x1]
  %v4641 = vld [vmem:[%s4320 + $0xa0] sm:$0xf]
  %v4642 = vld [vmem:[%s4320 + $0xa4] sm:$0x1]
  %v4643 = vld [vmem:[%s4320 + $0xa8] sm:$0xf]
  %v4644 = vld [vmem:[%s4320 + $0xac] sm:$0x1]
  %v4645 = vld [vmem:[%s4320 + $0xb0] sm:$0xf]
  %v4646 = vld [vmem:[%s4320 + $0xb4] sm:$0x1]
  %v4647 = vld [vmem:[%s4320 + $0xb8] sm:$0xf]
  %v4648 = vld [vmem:[%s4320 + $0xbc] sm:$0x1]
  %v4649 = vld [vmem:[%s4320 + $0xc0] sm:$0xf]
  %v4650 = vld [vmem:[%s4320 + $0xc4] sm:$0x1]
  %v4651 = vld [vmem:[%s4320 + $0xc8] sm:$0xf]
  %v4652 = vld [vmem:[%s4320 + $0xcc] sm:$0x1]
  %v4653 = vld [vmem:[%s4320 + $0xd0] sm:$0xf]
  %v4654 = vld [vmem:[%s4320 + $0xd4] sm:$0x1]
  %v4655 = vld [vmem:[%s4320 + $0xd8] sm:$0xf]
  %v4656 = vld [vmem:[%s4320 + $0xdc] sm:$0x1]
  %v4657 = vld [vmem:[%s4320 + $0xf0] sm:$0xf]
  %v4658 = vld [vmem:[%s4320 + $0xf4] sm:$0x1]
  %v4659 = vld [vmem:[%s4320 + $0xf8] sm:$0xf]
  %v4660 = vld [vmem:[%s4320 + $0xfc] sm:$0x1]
  %v4661 = vld [vmem:[%s4320 + $0x100] sm:$0xf]
  %v4662 = vld [vmem:[%s4320 + $0x104] sm:$0x1]
  %v4663 = vld [vmem:[%s4320 + $0x108] sm:$0xf]
  %v4664 = vld [vmem:[%s4320 + $0x10c] sm:$0x1]
  %v4665 = vld [vmem:[%s4320 + $0x110] sm:$0xf]
  %v4666 = vld [vmem:[%s4320 + $0x114] sm:$0x1]
  %v4667 = vld [vmem:[%s4320 + $0x118] sm:$0xf]
  %v4668 = vld [vmem:[%s4320 + $0x11c] sm:$0x1]
  %v4669 = vld [vmem:[%s4320 + $0x120] sm:$0xf]
  %v4670 = vld [vmem:[%s4320 + $0x124] sm:$0x1]
  %v4671 = vld [vmem:[%s4320 + $0x128] sm:$0xf]
  %v4672 = vld [vmem:[%s4320 + $0x12c] sm:$0x1]
  %v4673 = vld [vmem:[%s4320 + $0x140] sm:$0xf]
  %v4674 = vld [vmem:[%s4320 + $0x144] sm:$0x1]
  %v4675 = vld [vmem:[%s4320 + $0x148] sm:$0xf]
  %v4676 = vld [vmem:[%s4320 + $0x14c] sm:$0x1]
  %v4677 = vld [vmem:[%s4320 + $0x150] sm:$0xf]
  %v4678 = vld [vmem:[%s4320 + $0x154] sm:$0x1]
  %v4679 = vld [vmem:[%s4320 + $0x158] sm:$0xf]
  %v4680 = vld [vmem:[%s4320 + $0x15c] sm:$0x1]
  %v4681 = vld [vmem:[%s4320 + $0x160] sm:$0xf]
  %v4682 = vld [vmem:[%s4320 + $0x164] sm:$0x1]
  %v4683 = vld [vmem:[%s4320 + $0x168] sm:$0xf]
  %v4684 = vld [vmem:[%s4320 + $0x16c] sm:$0x1]
  %v4685 = vld [vmem:[%s4320 + $0x170] sm:$0xf]
  %v4686 = vld [vmem:[%s4320 + $0x174] sm:$0x1]
  %v4687 = vld [vmem:[%s4320 + $0x178] sm:$0xf]
  %v4688 = vld [vmem:[%s4320 + $0x17c] sm:$0x1]
  %v4689 = vld [vmem:[%s4320 + $0x190] sm:$0xf]
  %v4690 = vld [vmem:[%s4320 + $0x194] sm:$0x1]
  %v4691 = vld [vmem:[%s4320 + $0x198] sm:$0xf]
  %v4692 = vld [vmem:[%s4320 + $0x19c] sm:$0x1]
  %v4693 = vld [vmem:[%s4320 + $0x1a0] sm:$0xf]
  %v4694 = vld [vmem:[%s4320 + $0x1a4] sm:$0x1]
  %v4695 = vld [vmem:[%s4320 + $0x1a8] sm:$0xf]
  %v4696 = vld [vmem:[%s4320 + $0x1ac] sm:$0x1]
  %v4697 = vld [vmem:[%s4320 + $0x1b0] sm:$0xf]
  %v4698 = vld [vmem:[%s4320 + $0x1b4] sm:$0x1]
  %v4699 = vld [vmem:[%s4320 + $0x1b8] sm:$0xf]
  %v4700 = vld [vmem:[%s4320 + $0x1bc] sm:$0x1]
  %v4701 = vld [vmem:[%s4320 + $0x1c0] sm:$0xf]
  %v4702 = vld [vmem:[%s4320 + $0x1c4] sm:$0x1]
  %v4703 = vld [vmem:[%s4320 + $0x1c8] sm:$0xf]
  %v4704 = vld [vmem:[%s4320 + $0x1cc] sm:$0x1]
  %v4705 = vld [vmem:[%s4320 + $0x1e0] sm:$0xf]
  %v4706 = vld [vmem:[%s4320 + $0x1e4] sm:$0x1]
  %v4707 = vld [vmem:[%s4320 + $0x1e8] sm:$0xf]
  %v4708 = vld [vmem:[%s4320 + $0x1ec] sm:$0x1]
  %v4709 = vld [vmem:[%s4320 + $0x1f0] sm:$0xf]
  %v4710 = vld [vmem:[%s4320 + $0x1f4] sm:$0x1]
  %v4711 = vld [vmem:[%s4320 + $0x1f8] sm:$0xf]
  %v4712 = vld [vmem:[%s4320 + $0x1fc] sm:$0x1]
  %v4713 = vld [vmem:[%s4320 + $0x200] sm:$0xf]
  %v4714 = vld [vmem:[%s4320 + $0x204] sm:$0x1]
  %v4715 = vld [vmem:[%s4320 + $0x208] sm:$0xf]
  %v4716 = vld [vmem:[%s4320 + $0x20c] sm:$0x1]
  %v4717 = vld [vmem:[%s4320 + $0x210] sm:$0xf]
  %v4718 = vld [vmem:[%s4320 + $0x214] sm:$0x1]
  %v4719 = vld [vmem:[%s4320 + $0x218] sm:$0xf]
  %v4720 = vld [vmem:[%s4320 + $0x21c] sm:$0x1]
  %v4721 = vld [vmem:[%s4320 + $0x230] sm:$0xf]
  %v4722 = vld [vmem:[%s4320 + $0x234] sm:$0x1]
  %v4723 = vld [vmem:[%s4320 + $0x238] sm:$0xf]
  %v4724 = vld [vmem:[%s4320 + $0x23c] sm:$0x1]
  %v4725 = vld [vmem:[%s4320 + $0x240] sm:$0xf]
  %v4726 = vld [vmem:[%s4320 + $0x244] sm:$0x1]
  %v4727 = vld [vmem:[%s4320 + $0x248] sm:$0xf]
  %v4728 = vld [vmem:[%s4320 + $0x24c] sm:$0x1]
  %v4729 = vld [vmem:[%s4320 + $0x250] sm:$0xf]
  %v4730 = vld [vmem:[%s4320 + $0x254] sm:$0x1]
  %v4731 = vld [vmem:[%s4320 + $0x258] sm:$0xf]
  %v4732 = vld [vmem:[%s4320 + $0x25c] sm:$0x1]
  %v4733 = vld [vmem:[%s4320 + $0x260] sm:$0xf]
  %v4734 = vld [vmem:[%s4320 + $0x264] sm:$0x1]
  %v4735 = vld [vmem:[%s4320 + $0x268] sm:$0xf]
  %v4736 = vld [vmem:[%s4320 + $0x26c] sm:$0x1]
  %v4738 = vshrl.u32 %v4609, 16
  %v4740 = vrot.slane %v4738, 4
  %v4741 = vshll.u32 %v4609, 16
  %v4743 = vrot.slane %v4741, 5
  %v4744 = vor.u32 %v4740, %v4743
  %v4745 = vrot.slane %v4744, 4
  %v4747 = vshll.u32 %v4610, 16
  %v4749 = vrot.slane %v4747, 5
  %v4750 = vsel %vm437, %v4745, %v4749
  %v4752 = vshrl.u32 %v4611, 16
  %v4754 = vrot.slane %v4752, 4
  %v4755 = vshll.u32 %v4611, 16
  %v4757 = vrot.slane %v4755, 5
  %v4758 = vor.u32 %v4754, %v4757
  %v4759 = vrot.slane %v4758, 4
  %v4761 = vshll.u32 %v4612, 16
  %v4763 = vrot.slane %v4761, 5
  %v4764 = vsel %vm437, %v4759, %v4763
  %v4766 = vshrl.u32 %v4613, 16
  %v4768 = vrot.slane %v4766, 4
  %v4769 = vshll.u32 %v4613, 16
  %v4771 = vrot.slane %v4769, 5
  %v4772 = vor.u32 %v4768, %v4771
  %v4773 = vrot.slane %v4772, 4
  %v4775 = vshll.u32 %v4614, 16
  %v4777 = vrot.slane %v4775, 5
  %v4778 = vsel %vm437, %v4773, %v4777
  %v4780 = vshrl.u32 %v4615, 16
  %v4782 = vrot.slane %v4780, 4
  %v4783 = vshll.u32 %v4615, 16
  %v4785 = vrot.slane %v4783, 5
  %v4786 = vor.u32 %v4782, %v4785
  %v4787 = vrot.slane %v4786, 4
  %v4789 = vshll.u32 %v4616, 16
  %v4791 = vrot.slane %v4789, 5
  %v4792 = vsel %vm437, %v4787, %v4791
  %v4794 = vshrl.u32 %v4617, 16
  %v4796 = vrot.slane %v4794, 4
  %v4797 = vshll.u32 %v4617, 16
  %v4799 = vrot.slane %v4797, 5
  %v4800 = vor.u32 %v4796, %v4799
  %v4801 = vrot.slane %v4800, 4
  %v4803 = vshll.u32 %v4618, 16
  %v4805 = vrot.slane %v4803, 5
  %v4806 = vsel %vm437, %v4801, %v4805
  %v4808 = vshrl.u32 %v4619, 16
  %v4810 = vrot.slane %v4808, 4
  %v4811 = vshll.u32 %v4619, 16
  %v4813 = vrot.slane %v4811, 5
  %v4814 = vor.u32 %v4810, %v4813
  %v4815 = vrot.slane %v4814, 4
  %v4817 = vshll.u32 %v4620, 16
  %v4819 = vrot.slane %v4817, 5
  %v4820 = vsel %vm437, %v4815, %v4819
  %v4822 = vshrl.u32 %v4621, 16
  %v4824 = vrot.slane %v4822, 4
  %v4825 = vshll.u32 %v4621, 16
  %v4827 = vrot.slane %v4825, 5
  %v4828 = vor.u32 %v4824, %v4827
  %v4829 = vrot.slane %v4828, 4
  %v4831 = vshll.u32 %v4622, 16
  %v4833 = vrot.slane %v4831, 5
  %v4834 = vsel %vm437, %v4829, %v4833
  %v4836 = vshrl.u32 %v4623, 16
  %v4838 = vrot.slane %v4836, 4
  %v4839 = vshll.u32 %v4623, 16
  %v4841 = vrot.slane %v4839, 5
  %v4842 = vor.u32 %v4838, %v4841
  %v4843 = vrot.slane %v4842, 4
  %v4845 = vshll.u32 %v4624, 16
  %v4847 = vrot.slane %v4845, 5
  %v4848 = vsel %vm437, %v4843, %v4847
  %v4850 = vshrl.u32 %v4625, 16
  %v4852 = vrot.slane %v4850, 4
  %v4853 = vshll.u32 %v4625, 16
  %v4855 = vrot.slane %v4853, 5
  %v4856 = vor.u32 %v4852, %v4855
  %v4857 = vrot.slane %v4856, 4
  %v4859 = vshll.u32 %v4626, 16
  %v4861 = vrot.slane %v4859, 5
  %v4862 = vsel %vm437, %v4857, %v4861
  %v4864 = vshrl.u32 %v4627, 16
  %v4866 = vrot.slane %v4864, 4
  %v4867 = vshll.u32 %v4627, 16
  %v4869 = vrot.slane %v4867, 5
  %v4870 = vor.u32 %v4866, %v4869
  %v4871 = vrot.slane %v4870, 4
  %v4873 = vshll.u32 %v4628, 16
  %v4875 = vrot.slane %v4873, 5
  %v4876 = vsel %vm437, %v4871, %v4875
  %v4878 = vshrl.u32 %v4629, 16
  %v4880 = vrot.slane %v4878, 4
  %v4881 = vshll.u32 %v4629, 16
  %v4883 = vrot.slane %v4881, 5
  %v4884 = vor.u32 %v4880, %v4883
  %v4885 = vrot.slane %v4884, 4
  %v4887 = vshll.u32 %v4630, 16
  %v4889 = vrot.slane %v4887, 5
  %v4890 = vsel %vm437, %v4885, %v4889
  %v4892 = vshrl.u32 %v4631, 16
  %v4894 = vrot.slane %v4892, 4
  %v4895 = vshll.u32 %v4631, 16
  %v4897 = vrot.slane %v4895, 5
  %v4898 = vor.u32 %v4894, %v4897
  %v4899 = vrot.slane %v4898, 4
  %v4901 = vshll.u32 %v4632, 16
  %v4903 = vrot.slane %v4901, 5
  %v4904 = vsel %vm437, %v4899, %v4903
  %v4906 = vshrl.u32 %v4633, 16
  %v4908 = vrot.slane %v4906, 4
  %v4909 = vshll.u32 %v4633, 16
  %v4911 = vrot.slane %v4909, 5
  %v4912 = vor.u32 %v4908, %v4911
  %v4913 = vrot.slane %v4912, 4
  %v4915 = vshll.u32 %v4634, 16
  %v4917 = vrot.slane %v4915, 5
  %v4918 = vsel %vm437, %v4913, %v4917
  %v4920 = vshrl.u32 %v4635, 16
  %v4922 = vrot.slane %v4920, 4
  %v4923 = vshll.u32 %v4635, 16
  %v4925 = vrot.slane %v4923, 5
  %v4926 = vor.u32 %v4922, %v4925
  %v4927 = vrot.slane %v4926, 4
  %v4929 = vshll.u32 %v4636, 16
  %v4931 = vrot.slane %v4929, 5
  %v4932 = vsel %vm437, %v4927, %v4931
  %v4934 = vshrl.u32 %v4637, 16
  %v4936 = vrot.slane %v4934, 4
  %v4937 = vshll.u32 %v4637, 16
  %v4939 = vrot.slane %v4937, 5
  %v4940 = vor.u32 %v4936, %v4939
  %v4941 = vrot.slane %v4940, 4
  %v4943 = vshll.u32 %v4638, 16
  %v4945 = vrot.slane %v4943, 5
  %v4946 = vsel %vm437, %v4941, %v4945
  %v4948 = vshrl.u32 %v4639, 16
  %v4950 = vrot.slane %v4948, 4
  %v4951 = vshll.u32 %v4639, 16
  %v4953 = vrot.slane %v4951, 5
  %v4954 = vor.u32 %v4950, %v4953
  %v4955 = vrot.slane %v4954, 4
  %v4957 = vshll.u32 %v4640, 16
  %v4959 = vrot.slane %v4957, 5
  %v4960 = vsel %vm437, %v4955, %v4959
  %v4962 = vshrl.u32 %v4641, 16
  %v4964 = vrot.slane %v4962, 4
  %v4965 = vshll.u32 %v4641, 16
  %v4967 = vrot.slane %v4965, 5
  %v4968 = vor.u32 %v4964, %v4967
  %v4969 = vrot.slane %v4968, 4
  %v4971 = vshll.u32 %v4642, 16
  %v4973 = vrot.slane %v4971, 5
  %v4974 = vsel %vm437, %v4969, %v4973
  %v4976 = vshrl.u32 %v4643, 16
  %v4978 = vrot.slane %v4976, 4
  %v4979 = vshll.u32 %v4643, 16
  %v4981 = vrot.slane %v4979, 5
  %v4982 = vor.u32 %v4978, %v4981
  %v4983 = vrot.slane %v4982, 4
  %v4985 = vshll.u32 %v4644, 16
  %v4987 = vrot.slane %v4985, 5
  %v4988 = vsel %vm437, %v4983, %v4987
  %v4990 = vshrl.u32 %v4645, 16
  %v4992 = vrot.slane %v4990, 4
  %v4993 = vshll.u32 %v4645, 16
  %v4995 = vrot.slane %v4993, 5
  %v4996 = vor.u32 %v4992, %v4995
  %v4997 = vrot.slane %v4996, 4
  %v4999 = vshll.u32 %v4646, 16
  %v5001 = vrot.slane %v4999, 5
  %v5002 = vsel %vm437, %v4997, %v5001
  %v5004 = vshrl.u32 %v4647, 16
  %v5006 = vrot.slane %v5004, 4
  %v5007 = vshll.u32 %v4647, 16
  %v5009 = vrot.slane %v5007, 5
  %v5010 = vor.u32 %v5006, %v5009
  %v5011 = vrot.slane %v5010, 4
  %v5013 = vshll.u32 %v4648, 16
  %v5015 = vrot.slane %v5013, 5
  %v5016 = vsel %vm437, %v5011, %v5015
  %v5018 = vshrl.u32 %v4649, 16
  %v5020 = vrot.slane %v5018, 4
  %v5021 = vshll.u32 %v4649, 16
  %v5023 = vrot.slane %v5021, 5
  %v5024 = vor.u32 %v5020, %v5023
  %v5025 = vrot.slane %v5024, 4
  %v5027 = vshll.u32 %v4650, 16
  %v5029 = vrot.slane %v5027, 5
  %v5030 = vsel %vm437, %v5025, %v5029
  %v5032 = vshrl.u32 %v4651, 16
  %v5034 = vrot.slane %v5032, 4
  %v5035 = vshll.u32 %v4651, 16
  %v5037 = vrot.slane %v5035, 5
  %v5038 = vor.u32 %v5034, %v5037
  %v5039 = vrot.slane %v5038, 4
  %v5041 = vshll.u32 %v4652, 16
  %v5043 = vrot.slane %v5041, 5
  %v5044 = vsel %vm437, %v5039, %v5043
  %v5046 = vshrl.u32 %v4653, 16
  %v5048 = vrot.slane %v5046, 4
  %v5049 = vshll.u32 %v4653, 16
  %v5051 = vrot.slane %v5049, 5
  %v5052 = vor.u32 %v5048, %v5051
  %v5053 = vrot.slane %v5052, 4
  %v5055 = vshll.u32 %v4654, 16
  %v5057 = vrot.slane %v5055, 5
  %v5058 = vsel %vm437, %v5053, %v5057
  %v5060 = vshrl.u32 %v4655, 16
  %v5062 = vrot.slane %v5060, 4
  %v5063 = vshll.u32 %v4655, 16
  %v5065 = vrot.slane %v5063, 5
  %v5066 = vor.u32 %v5062, %v5065
  %v5067 = vrot.slane %v5066, 4
  %v5069 = vshll.u32 %v4656, 16
  %v5071 = vrot.slane %v5069, 5
  %v5072 = vsel %vm437, %v5067, %v5071
  %v5074 = vshrl.u32 %v4657, 16
  %v5076 = vrot.slane %v5074, 4
  %v5077 = vshll.u32 %v4657, 16
  %v5079 = vrot.slane %v5077, 5
  %v5080 = vor.u32 %v5076, %v5079
  %v5081 = vrot.slane %v5080, 4
  %v5083 = vshll.u32 %v4658, 16
  %v5085 = vrot.slane %v5083, 5
  %v5086 = vsel %vm437, %v5081, %v5085
  %v5088 = vshrl.u32 %v4659, 16
  %v5090 = vrot.slane %v5088, 4
  %v5091 = vshll.u32 %v4659, 16
  %v5093 = vrot.slane %v5091, 5
  %v5094 = vor.u32 %v5090, %v5093
  %v5095 = vrot.slane %v5094, 4
  %v5097 = vshll.u32 %v4660, 16
  %v5099 = vrot.slane %v5097, 5
  %v5100 = vsel %vm437, %v5095, %v5099
  %v5102 = vshrl.u32 %v4661, 16
  %v5104 = vrot.slane %v5102, 4
  %v5105 = vshll.u32 %v4661, 16
  %v5107 = vrot.slane %v5105, 5
  %v5108 = vor.u32 %v5104, %v5107
  %v5109 = vrot.slane %v5108, 4
  %v5111 = vshll.u32 %v4662, 16
  %v5113 = vrot.slane %v5111, 5
  %v5114 = vsel %vm437, %v5109, %v5113
  %v5116 = vshrl.u32 %v4663, 16
  %v5118 = vrot.slane %v5116, 4
  %v5119 = vshll.u32 %v4663, 16
  %v5121 = vrot.slane %v5119, 5
  %v5122 = vor.u32 %v5118, %v5121
  %v5123 = vrot.slane %v5122, 4
  %v5125 = vshll.u32 %v4664, 16
  %v5127 = vrot.slane %v5125, 5
  %v5128 = vsel %vm437, %v5123, %v5127
  %v5130 = vshrl.u32 %v4665, 16
  %v5132 = vrot.slane %v5130, 4
  %v5133 = vshll.u32 %v4665, 16
  %v5135 = vrot.slane %v5133, 5
  %v5136 = vor.u32 %v5132, %v5135
  %v5137 = vrot.slane %v5136, 4
  %v5139 = vshll.u32 %v4666, 16
  %v5141 = vrot.slane %v5139, 5
  %v5142 = vsel %vm437, %v5137, %v5141
  %v5144 = vshrl.u32 %v4667, 16
  %v5146 = vrot.slane %v5144, 4
  %v5147 = vshll.u32 %v4667, 16
  %v5149 = vrot.slane %v5147, 5
  %v5150 = vor.u32 %v5146, %v5149
  %v5151 = vrot.slane %v5150, 4
  %v5153 = vshll.u32 %v4668, 16
  %v5155 = vrot.slane %v5153, 5
  %v5156 = vsel %vm437, %v5151, %v5155
  %v5158 = vshrl.u32 %v4669, 16
  %v5160 = vrot.slane %v5158, 4
  %v5161 = vshll.u32 %v4669, 16
  %v5163 = vrot.slane %v5161, 5
  %v5164 = vor.u32 %v5160, %v5163
  %v5165 = vrot.slane %v5164, 4
  %v5167 = vshll.u32 %v4670, 16
  %v5169 = vrot.slane %v5167, 5
  %v5170 = vsel %vm437, %v5165, %v5169
  %v5172 = vshrl.u32 %v4671, 16
  %v5174 = vrot.slane %v5172, 4
  %v5175 = vshll.u32 %v4671, 16
  %v5177 = vrot.slane %v5175, 5
  %v5178 = vor.u32 %v5174, %v5177
  %v5179 = vrot.slane %v5178, 4
  %v5181 = vshll.u32 %v4672, 16
  %v5183 = vrot.slane %v5181, 5
  %v5184 = vsel %vm437, %v5179, %v5183
  %v5186 = vshrl.u32 %v4673, 16
  %v5188 = vrot.slane %v5186, 4
  %v5189 = vshll.u32 %v4673, 16
  %v5191 = vrot.slane %v5189, 5
  %v5192 = vor.u32 %v5188, %v5191
  %v5193 = vrot.slane %v5192, 4
  %v5195 = vshll.u32 %v4674, 16
  %v5197 = vrot.slane %v5195, 5
  %v5198 = vsel %vm437, %v5193, %v5197
  %v5200 = vshrl.u32 %v4675, 16
  %v5202 = vrot.slane %v5200, 4
  %v5203 = vshll.u32 %v4675, 16
  %v5205 = vrot.slane %v5203, 5
  %v5206 = vor.u32 %v5202, %v5205
  %v5207 = vrot.slane %v5206, 4
  %v5209 = vshll.u32 %v4676, 16
  %v5211 = vrot.slane %v5209, 5
  %v5212 = vsel %vm437, %v5207, %v5211
  %v5214 = vshrl.u32 %v4677, 16
  %v5216 = vrot.slane %v5214, 4
  %v5217 = vshll.u32 %v4677, 16
  %v5219 = vrot.slane %v5217, 5
  %v5220 = vor.u32 %v5216, %v5219
  %v5221 = vrot.slane %v5220, 4
  %v5223 = vshll.u32 %v4678, 16
  %v5225 = vrot.slane %v5223, 5
  %v5226 = vsel %vm437, %v5221, %v5225
  %v5228 = vshrl.u32 %v4679, 16
  %v5230 = vrot.slane %v5228, 4
  %v5231 = vshll.u32 %v4679, 16
  %v5233 = vrot.slane %v5231, 5
  %v5234 = vor.u32 %v5230, %v5233
  %v5235 = vrot.slane %v5234, 4
  %v5237 = vshll.u32 %v4680, 16
  %v5239 = vrot.slane %v5237, 5
  %v5240 = vsel %vm437, %v5235, %v5239
  %v5242 = vshrl.u32 %v4681, 16
  %v5244 = vrot.slane %v5242, 4
  %v5245 = vshll.u32 %v4681, 16
  %v5247 = vrot.slane %v5245, 5
  %v5248 = vor.u32 %v5244, %v5247
  %v5249 = vrot.slane %v5248, 4
  %v5251 = vshll.u32 %v4682, 16
  %v5253 = vrot.slane %v5251, 5
  %v5254 = vsel %vm437, %v5249, %v5253
  %v5256 = vshrl.u32 %v4683, 16
  %v5258 = vrot.slane %v5256, 4
  %v5259 = vshll.u32 %v4683, 16
  %v5261 = vrot.slane %v5259, 5
  %v5262 = vor.u32 %v5258, %v5261
  %v5263 = vrot.slane %v5262, 4
  %v5265 = vshll.u32 %v4684, 16
  %v5267 = vrot.slane %v5265, 5
  %v5268 = vsel %vm437, %v5263, %v5267
  %v5270 = vshrl.u32 %v4685, 16
  %v5272 = vrot.slane %v5270, 4
  %v5273 = vshll.u32 %v4685, 16
  %v5275 = vrot.slane %v5273, 5
  %v5276 = vor.u32 %v5272, %v5275
  %v5277 = vrot.slane %v5276, 4
  %v5279 = vshll.u32 %v4686, 16
  %v5281 = vrot.slane %v5279, 5
  %v5282 = vsel %vm437, %v5277, %v5281
  %v5284 = vshrl.u32 %v4687, 16
  %v5286 = vrot.slane %v5284, 4
  %v5287 = vshll.u32 %v4687, 16
  %v5289 = vrot.slane %v5287, 5
  %v5290 = vor.u32 %v5286, %v5289
  %v5291 = vrot.slane %v5290, 4
  %v5293 = vshll.u32 %v4688, 16
  %v5295 = vrot.slane %v5293, 5
  %v5296 = vsel %vm437, %v5291, %v5295
  %v5298 = vshrl.u32 %v4689, 16
  %v5300 = vrot.slane %v5298, 4
  %v5301 = vshll.u32 %v4689, 16
  %v5303 = vrot.slane %v5301, 5
  %v5304 = vor.u32 %v5300, %v5303
  %v5305 = vrot.slane %v5304, 4
  %v5307 = vshll.u32 %v4690, 16
  %v5309 = vrot.slane %v5307, 5
  %v5310 = vsel %vm437, %v5305, %v5309
  %v5312 = vshrl.u32 %v4691, 16
  %v5314 = vrot.slane %v5312, 4
  %v5315 = vshll.u32 %v4691, 16
  %v5317 = vrot.slane %v5315, 5
  %v5318 = vor.u32 %v5314, %v5317
  %v5319 = vrot.slane %v5318, 4
  %v5321 = vshll.u32 %v4692, 16
  %v5323 = vrot.slane %v5321, 5
  %v5324 = vsel %vm437, %v5319, %v5323
  %v5326 = vshrl.u32 %v4693, 16
  %v5328 = vrot.slane %v5326, 4
  %v5329 = vshll.u32 %v4693, 16
  %v5331 = vrot.slane %v5329, 5
  %v5332 = vor.u32 %v5328, %v5331
  %v5333 = vrot.slane %v5332, 4
  %v5335 = vshll.u32 %v4694, 16
  %v5337 = vrot.slane %v5335, 5
  %v5338 = vsel %vm437, %v5333, %v5337
  %v5340 = vshrl.u32 %v4695, 16
  %v5342 = vrot.slane %v5340, 4
  %v5343 = vshll.u32 %v4695, 16
  %v5345 = vrot.slane %v5343, 5
  %v5346 = vor.u32 %v5342, %v5345
  %v5347 = vrot.slane %v5346, 4
  %v5349 = vshll.u32 %v4696, 16
  %v5351 = vrot.slane %v5349, 5
  %v5352 = vsel %vm437, %v5347, %v5351
  %v5354 = vshrl.u32 %v4697, 16
  %v5356 = vrot.slane %v5354, 4
  %v5357 = vshll.u32 %v4697, 16
  %v5359 = vrot.slane %v5357, 5
  %v5360 = vor.u32 %v5356, %v5359
  %v5361 = vrot.slane %v5360, 4
  %v5363 = vshll.u32 %v4698, 16
  %v5365 = vrot.slane %v5363, 5
  %v5366 = vsel %vm437, %v5361, %v5365
  %v5368 = vshrl.u32 %v4699, 16
  %v5370 = vrot.slane %v5368, 4
  %v5371 = vshll.u32 %v4699, 16
  %v5373 = vrot.slane %v5371, 5
  %v5374 = vor.u32 %v5370, %v5373
  %v5375 = vrot.slane %v5374, 4
  %v5377 = vshll.u32 %v4700, 16
  %v5379 = vrot.slane %v5377, 5
  %v5380 = vsel %vm437, %v5375, %v5379
  %v5382 = vshrl.u32 %v4701, 16
  %v5384 = vrot.slane %v5382, 4
  %v5385 = vshll.u32 %v4701, 16
  %v5387 = vrot.slane %v5385, 5
  %v5388 = vor.u32 %v5384, %v5387
  %v5389 = vrot.slane %v5388, 4
  %v5391 = vshll.u32 %v4702, 16
  %v5393 = vrot.slane %v5391, 5
  %v5394 = vsel %vm437, %v5389, %v5393
  %v5396 = vshrl.u32 %v4703, 16
  %v5398 = vrot.slane %v5396, 4
  %v5399 = vshll.u32 %v4703, 16
  %v5401 = vrot.slane %v5399, 5
  %v5402 = vor.u32 %v5398, %v5401
  %v5403 = vrot.slane %v5402, 4
  %v5405 = vshll.u32 %v4704, 16
  %v5407 = vrot.slane %v5405, 5
  %v5408 = vsel %vm437, %v5403, %v5407
  %v5410 = vshrl.u32 %v4705, 16
  %v5412 = vrot.slane %v5410, 4
  %v5413 = vshll.u32 %v4705, 16
  %v5415 = vrot.slane %v5413, 5
  %v5416 = vor.u32 %v5412, %v5415
  %v5417 = vrot.slane %v5416, 4
  %v5419 = vshll.u32 %v4706, 16
  %v5421 = vrot.slane %v5419, 5
  %v5422 = vsel %vm437, %v5417, %v5421
  %v5424 = vshrl.u32 %v4707, 16
  %v5426 = vrot.slane %v5424, 4
  %v5427 = vshll.u32 %v4707, 16
  %v5429 = vrot.slane %v5427, 5
  %v5430 = vor.u32 %v5426, %v5429
  %v5431 = vrot.slane %v5430, 4
  %v5433 = vshll.u32 %v4708, 16
  %v5435 = vrot.slane %v5433, 5
  %v5436 = vsel %vm437, %v5431, %v5435
  %v5438 = vshrl.u32 %v4709, 16
  %v5440 = vrot.slane %v5438, 4
  %v5441 = vshll.u32 %v4709, 16
  %v5443 = vrot.slane %v5441, 5
  %v5444 = vor.u32 %v5440, %v5443
  %v5445 = vrot.slane %v5444, 4
  %v5447 = vshll.u32 %v4710, 16
  %v5449 = vrot.slane %v5447, 5
  %v5450 = vsel %vm437, %v5445, %v5449
  %v5452 = vshrl.u32 %v4711, 16
  %v5454 = vrot.slane %v5452, 4
  %v5455 = vshll.u32 %v4711, 16
  %v5457 = vrot.slane %v5455, 5
  %v5458 = vor.u32 %v5454, %v5457
  %v5459 = vrot.slane %v5458, 4
  %v5461 = vshll.u32 %v4712, 16
  %v5463 = vrot.slane %v5461, 5
  %v5464 = vsel %vm437, %v5459, %v5463
  %v5466 = vshrl.u32 %v4713, 16
  %v5468 = vrot.slane %v5466, 4
  %v5469 = vshll.u32 %v4713, 16
  %v5471 = vrot.slane %v5469, 5
  %v5472 = vor.u32 %v5468, %v5471
  %v5473 = vrot.slane %v5472, 4
  %v5475 = vshll.u32 %v4714, 16
  %v5477 = vrot.slane %v5475, 5
  %v5478 = vsel %vm437, %v5473, %v5477
  %v5480 = vshrl.u32 %v4715, 16
  %v5482 = vrot.slane %v5480, 4
  %v5483 = vshll.u32 %v4715, 16
  %v5485 = vrot.slane %v5483, 5
  %v5486 = vor.u32 %v5482, %v5485
  %v5487 = vrot.slane %v5486, 4
  %v5489 = vshll.u32 %v4716, 16
  %v5491 = vrot.slane %v5489, 5
  %v5492 = vsel %vm437, %v5487, %v5491
  %v5494 = vshrl.u32 %v4717, 16
  %v5496 = vrot.slane %v5494, 4
  %v5497 = vshll.u32 %v4717, 16
  %v5499 = vrot.slane %v5497, 5
  %v5500 = vor.u32 %v5496, %v5499
  %v5501 = vrot.slane %v5500, 4
  %v5503 = vshll.u32 %v4718, 16
  %v5505 = vrot.slane %v5503, 5
  %v5506 = vsel %vm437, %v5501, %v5505
  %v5508 = vshrl.u32 %v4719, 16
  %v5510 = vrot.slane %v5508, 4
  %v5511 = vshll.u32 %v4719, 16
  %v5513 = vrot.slane %v5511, 5
  %v5514 = vor.u32 %v5510, %v5513
  %v5515 = vrot.slane %v5514, 4
  %v5517 = vshll.u32 %v4720, 16
  %v5519 = vrot.slane %v5517, 5
  %v5520 = vsel %vm437, %v5515, %v5519
  %v5522 = vshrl.u32 %v4721, 16
  %v5524 = vrot.slane %v5522, 4
  %v5525 = vshll.u32 %v4721, 16
  %v5527 = vrot.slane %v5525, 5
  %v5528 = vor.u32 %v5524, %v5527
  %v5529 = vrot.slane %v5528, 4
  %v5531 = vshll.u32 %v4722, 16
  %v5533 = vrot.slane %v5531, 5
  %v5534 = vsel %vm437, %v5529, %v5533
  %v5536 = vshrl.u32 %v4723, 16
  %v5538 = vrot.slane %v5536, 4
  %v5539 = vshll.u32 %v4723, 16
  %v5541 = vrot.slane %v5539, 5
  %v5542 = vor.u32 %v5538, %v5541
  %v5543 = vrot.slane %v5542, 4
  %v5545 = vshll.u32 %v4724, 16
  %v5547 = vrot.slane %v5545, 5
  %v5548 = vsel %vm437, %v5543, %v5547
  %v5550 = vshrl.u32 %v4725, 16
  %v5552 = vrot.slane %v5550, 4
  %v5553 = vshll.u32 %v4725, 16
  %v5555 = vrot.slane %v5553, 5
  %v5556 = vor.u32 %v5552, %v5555
  %v5557 = vrot.slane %v5556, 4
  %v5559 = vshll.u32 %v4726, 16
  %v5561 = vrot.slane %v5559, 5
  %v5562 = vsel %vm437, %v5557, %v5561
  %v5564 = vshrl.u32 %v4727, 16
  %v5566 = vrot.slane %v5564, 4
  %v5567 = vshll.u32 %v4727, 16
  %v5569 = vrot.slane %v5567, 5
  %v5570 = vor.u32 %v5566, %v5569
  %v5571 = vrot.slane %v5570, 4
  %v5573 = vshll.u32 %v4728, 16
  %v5575 = vrot.slane %v5573, 5
  %v5576 = vsel %vm437, %v5571, %v5575
  %v5578 = vshrl.u32 %v4729, 16
  %v5580 = vrot.slane %v5578, 4
  %v5581 = vshll.u32 %v4729, 16
  %v5583 = vrot.slane %v5581, 5
  %v5584 = vor.u32 %v5580, %v5583
  %v5585 = vrot.slane %v5584, 4
  %v5587 = vshll.u32 %v4730, 16
  %v5589 = vrot.slane %v5587, 5
  %v5590 = vsel %vm437, %v5585, %v5589
  %v5592 = vshrl.u32 %v4731, 16
  %v5594 = vrot.slane %v5592, 4
  %v5595 = vshll.u32 %v4731, 16
  %v5597 = vrot.slane %v5595, 5
  %v5598 = vor.u32 %v5594, %v5597
  %v5599 = vrot.slane %v5598, 4
  %v5601 = vshll.u32 %v4732, 16
  %v5603 = vrot.slane %v5601, 5
  %v5604 = vsel %vm437, %v5599, %v5603
  %v5606 = vshrl.u32 %v4733, 16
  %v5608 = vrot.slane %v5606, 4
  %v5609 = vshll.u32 %v4733, 16
  %v5611 = vrot.slane %v5609, 5
  %v5612 = vor.u32 %v5608, %v5611
  %v5613 = vrot.slane %v5612, 4
  %v5615 = vshll.u32 %v4734, 16
  %v5617 = vrot.slane %v5615, 5
  %v5618 = vsel %vm437, %v5613, %v5617
  %v5620 = vshrl.u32 %v4735, 16
  %v5622 = vrot.slane %v5620, 4
  %v5623 = vshll.u32 %v4735, 16
  %v5625 = vrot.slane %v5623, 5
  %v5626 = vor.u32 %v5622, %v5625
  %v5627 = vrot.slane %v5626, 4
  %v5629 = vshll.u32 %v4736, 16
  %v5631 = vrot.slane %v5629, 5
  %v5632 = vsel %vm437, %v5627, %v5631
  %v5633 = vunpack.c.l.b16 %v4750
  %v5634 = vunpack.c.l.b16 %v4764
  %v5635 = vunpack.c.l.b16 %v4778
  %v5636 = vunpack.c.l.b16 %v4792
  %v5637 = vunpack.c.l.b16 %v4806
  %v5638 = vunpack.c.l.b16 %v4820
  %v5639 = vunpack.c.l.b16 %v4834
  %v5640 = vunpack.c.l.b16 %v4848
  %v5641 = vunpack.c.l.b16 %v4862
  %v5642 = vunpack.c.l.b16 %v4876
  %v5643 = vunpack.c.l.b16 %v4890
  %v5644 = vunpack.c.l.b16 %v4904
  %v5645 = vunpack.c.l.b16 %v4918
  %v5646 = vunpack.c.l.b16 %v4932
  %v5647 = vunpack.c.l.b16 %v4946
  %v5648 = vunpack.c.l.b16 %v4960
  %v5649 = vunpack.c.l.b16 %v4974
  %v5650 = vunpack.c.l.b16 %v4988
  %v5651 = vunpack.c.l.b16 %v5002
  %v5652 = vunpack.c.l.b16 %v5016
  %v5653 = vunpack.c.l.b16 %v5030
  %v5654 = vunpack.c.l.b16 %v5044
  %v5655 = vunpack.c.l.b16 %v5058
  %v5656 = vunpack.c.l.b16 %v5072
  %v5657 = vunpack.c.l.b16 %v5086
  %v5658 = vunpack.c.l.b16 %v5100
  %v5659 = vunpack.c.l.b16 %v5114
  %v5660 = vunpack.c.l.b16 %v5128
  %v5661 = vunpack.c.l.b16 %v5142
  %v5662 = vunpack.c.l.b16 %v5156
  %v5663 = vunpack.c.l.b16 %v5170
  %v5664 = vunpack.c.l.b16 %v5184
  %v5665 = vunpack.c.l.b16 %v5198
  %v5666 = vunpack.c.l.b16 %v5212
  %v5667 = vunpack.c.l.b16 %v5226
  %v5668 = vunpack.c.l.b16 %v5240
  %v5669 = vunpack.c.l.b16 %v5254
  %v5670 = vunpack.c.l.b16 %v5268
  %v5671 = vunpack.c.l.b16 %v5282
  %v5672 = vunpack.c.l.b16 %v5296
  %v5673 = vunpack.c.l.b16 %v5310
  %v5674 = vunpack.c.l.b16 %v5324
  %v5675 = vunpack.c.l.b16 %v5338
  %v5676 = vunpack.c.l.b16 %v5352
  %v5677 = vunpack.c.l.b16 %v5366
  %v5678 = vunpack.c.l.b16 %v5380
  %v5679 = vunpack.c.l.b16 %v5394
  %v5680 = vunpack.c.l.b16 %v5408
  %v5681 = vunpack.c.l.b16 %v5422
  %v5682 = vunpack.c.l.b16 %v5436
  %v5683 = vunpack.c.l.b16 %v5450
  %v5684 = vunpack.c.l.b16 %v5464
  %v5685 = vunpack.c.l.b16 %v5478
  %v5686 = vunpack.c.l.b16 %v5492
  %v5687 = vunpack.c.l.b16 %v5506
  %v5688 = vunpack.c.l.b16 %v5520
  %v5689 = vunpack.c.l.b16 %v5534
  %v5690 = vunpack.c.l.b16 %v5548
  %v5691 = vunpack.c.l.b16 %v5562
  %v5692 = vunpack.c.l.b16 %v5576
  %v5693 = vunpack.c.l.b16 %v5590
  %v5694 = vunpack.c.l.b16 %v5604
  %v5695 = vunpack.c.l.b16 %v5618
  %v5696 = vunpack.c.l.b16 %v5632
  %v5697 = vpack.c.b16 %v5634, %v5633
  %v5698 = vpack.c.b16 %v5636, %v5635
  %v5699 = vpack.c.b16 %v5638, %v5637
  %v5700 = vpack.c.b16 %v5640, %v5639
  %v5701 = vpack.c.b16 %v5642, %v5641
  %v5702 = vpack.c.b16 %v5644, %v5643
  %v5703 = vpack.c.b16 %v5646, %v5645
  %v5704 = vpack.c.b16 %v5648, %v5647
  %v5705 = vpack.c.b16 %v5650, %v5649
  %v5706 = vpack.c.b16 %v5652, %v5651
  %v5707 = vpack.c.b16 %v5654, %v5653
  %v5708 = vpack.c.b16 %v5656, %v5655
  %v5709 = vpack.c.b16 %v5658, %v5657
  %v5710 = vpack.c.b16 %v5660, %v5659
  %v5711 = vpack.c.b16 %v5662, %v5661
  %v5712 = vpack.c.b16 %v5664, %v5663
  %v5713 = vpack.c.b16 %v5666, %v5665
  %v5714 = vpack.c.b16 %v5668, %v5667
  %v5715 = vpack.c.b16 %v5670, %v5669
  %v5716 = vpack.c.b16 %v5672, %v5671
  %v5717 = vpack.c.b16 %v5674, %v5673
  %v5718 = vpack.c.b16 %v5676, %v5675
  %v5719 = vpack.c.b16 %v5678, %v5677
  %v5720 = vpack.c.b16 %v5680, %v5679
  %v5721 = vpack.c.b16 %v5682, %v5681
  %v5722 = vpack.c.b16 %v5684, %v5683
  %v5723 = vpack.c.b16 %v5686, %v5685
  %v5724 = vpack.c.b16 %v5688, %v5687
  %v5725 = vpack.c.b16 %v5690, %v5689
  %v5726 = vpack.c.b16 %v5692, %v5691
  %v5727 = vpack.c.b16 %v5694, %v5693
  %v5728 = vpack.c.b16 %v5696, %v5695
  %5761 = vst [vmem:[#allocation2 + $0x38] sm:$0xff] %v5697
  %5762 = vst [vmem:[#allocation2 + $0x80] sm:$0xff] %v5698
  %5763 = vst [vmem:[#allocation2 + $0xc8] sm:$0xff] %v5699
  %5764 = vst [vmem:[#allocation2 + $0x110] sm:$0xff] %v5700
  %5765 = vst [vmem:[#allocation2 + $0x158] sm:$0xff] %v5701
  %5766 = vst [vmem:[#allocation2 + $0x1a0] sm:$0xff] %v5702
  %5767 = vst [vmem:[#allocation2 + $0x1e8] sm:$0xff] %v5703
  %5768 = vst [vmem:[#allocation2 + $0x230] sm:$0xff] %v5704
  %5769 = vst [vmem:[#allocation2 + $0x278] sm:$0xff] %v5705
  %5770 = vst [vmem:[#allocation2 + $0x2c0] sm:$0xff] %v5706
  %5771 = vst [vmem:[#allocation2 + $0x308] sm:$0xff] %v5707
  %5772 = vst [vmem:[#allocation2 + $0x350] sm:$0xff] %v5708
  %5773 = vst [vmem:[#allocation2 + $0x398] sm:$0xff] %v5709
  %5774 = vst [vmem:[#allocation2 + $0x3e0] sm:$0xff] %v5710
  %5775 = vst [vmem:[#allocation2 + $0x428] sm:$0xff] %v5711
  %5776 = vst [vmem:[#allocation2 + $0x470] sm:$0xff] %v5712
  %5777 = vst [vmem:[#allocation2 + $0x4b8] sm:$0xff] %v5713
  %5778 = vst [vmem:[#allocation2 + $0x500] sm:$0xff] %v5714
  %5779 = vst [vmem:[#allocation2 + $0x548] sm:$0xff] %v5715
  %5780 = vst [vmem:[#allocation2 + $0x590] sm:$0xff] %v5716
  %5781 = vst [vmem:[#allocation2 + $0x5d8] sm:$0xff] %v5717
  %5782 = vst [vmem:[#allocation2 + $0x620] sm:$0xff] %v5718
  %5783 = vst [vmem:[#allocation2 + $0x668] sm:$0xff] %v5719
  %5784 = vst [vmem:[#allocation2 + $0x6b0] sm:$0xff] %v5720
  %5785 = vst [vmem:[#allocation2 + $0x6f8] sm:$0xff] %v5721
  %5786 = vst [vmem:[#allocation2 + $0x740] sm:$0xff] %v5722
  %5787 = vst [vmem:[#allocation2 + $0x788] sm:$0xff] %v5723
  %5788 = vst [vmem:[#allocation2 + $0x7d0] sm:$0xff] %v5724
  %5789 = vst [vmem:[#allocation2 + $0x818] sm:$0xff] %v5725
  %5790 = vst [vmem:[#allocation2 + $0x860] sm:$0xff] %v5726
  %5791 = vst [vmem:[#allocation2 + $0x8a8] sm:$0xff] %v5727
  %5792 = vst [vmem:[#allocation2 + $0x8f0] sm:$0xff] %v5728
  %v5793 = vld [vmem:[%s4320] sm:$0xe]
  %v5794 = vld [vmem:[%s4320 + $0x4] sm:$0x1]
  %v5795 = vld [vmem:[%s4320 + $0x8] sm:$0xe]
  %v5796 = vld [vmem:[%s4320 + $0xc] sm:$0x1]
  %v5797 = vld [vmem:[%s4320 + $0x10] sm:$0xe]
  %v5798 = vld [vmem:[%s4320 + $0x14] sm:$0x1]
  %v5799 = vld [vmem:[%s4320 + $0x18] sm:$0xe]
  %v5800 = vld [vmem:[%s4320 + $0x1c] sm:$0x1]
  %v5801 = vld [vmem:[%s4320 + $0x20] sm:$0xe]
  %v5802 = vld [vmem:[%s4320 + $0x24] sm:$0x1]
  %v5803 = vld [vmem:[%s4320 + $0x28] sm:$0xe]
  %v5804 = vld [vmem:[%s4320 + $0x2c] sm:$0x1]
  %v5805 = vld [vmem:[%s4320 + $0x30] sm:$0xe]
  %v5806 = vld [vmem:[%s4320 + $0x34] sm:$0x1]
  %v5807 = vld [vmem:[%s4320 + $0x38] sm:$0xe]
  %v5808 = vld [vmem:[%s4320 + $0x3c] sm:$0x1]
  %v5809 = vld [vmem:[%s4320 + $0x50] sm:$0xe]
  %v5810 = vld [vmem:[%s4320 + $0x54] sm:$0x1]
  %v5811 = vld [vmem:[%s4320 + $0x58] sm:$0xe]
  %v5812 = vld [vmem:[%s4320 + $0x5c] sm:$0x1]
  %v5813 = vld [vmem:[%s4320 + $0x60] sm:$0xe]
  %v5814 = vld [vmem:[%s4320 + $0x64] sm:$0x1]
  %v5815 = vld [vmem:[%s4320 + $0x68] sm:$0xe]
  %v5816 = vld [vmem:[%s4320 + $0x6c] sm:$0x1]
  %v5817 = vld [vmem:[%s4320 + $0x70] sm:$0xe]
  %v5818 = vld [vmem:[%s4320 + $0x74] sm:$0x1]
  %v5819 = vld [vmem:[%s4320 + $0x78] sm:$0xe]
  %v5820 = vld [vmem:[%s4320 + $0x7c] sm:$0x1]
  %v5821 = vld [vmem:[%s4320 + $0x80] sm:$0xe]
  %v5822 = vld [vmem:[%s4320 + $0x84] sm:$0x1]
  %v5823 = vld [vmem:[%s4320 + $0x88] sm:$0xe]
  %v5824 = vld [vmem:[%s4320 + $0x8c] sm:$0x1]
  %v5825 = vld [vmem:[%s4320 + $0xa0] sm:$0xe]
  %v5826 = vld [vmem:[%s4320 + $0xa4] sm:$0x1]
  %v5827 = vld [vmem:[%s4320 + $0xa8] sm:$0xe]
  %v5828 = vld [vmem:[%s4320 + $0xac] sm:$0x1]
  %v5829 = vld [vmem:[%s4320 + $0xb0] sm:$0xe]
  %v5830 = vld [vmem:[%s4320 + $0xb4] sm:$0x1]
  %v5831 = vld [vmem:[%s4320 + $0xb8] sm:$0xe]
  %v5832 = vld [vmem:[%s4320 + $0xbc] sm:$0x1]
  %v5833 = vld [vmem:[%s4320 + $0xc0] sm:$0xe]
  %v5834 = vld [vmem:[%s4320 + $0xc4] sm:$0x1]
  %v5835 = vld [vmem:[%s4320 + $0xc8] sm:$0xe]
  %v5836 = vld [vmem:[%s4320 + $0xcc] sm:$0x1]
  %v5837 = vld [vmem:[%s4320 + $0xd0] sm:$0xe]
  %v5838 = vld [vmem:[%s4320 + $0xd4] sm:$0x1]
  %v5839 = vld [vmem:[%s4320 + $0xd8] sm:$0xe]
  %v5840 = vld [vmem:[%s4320 + $0xdc] sm:$0x1]
  %v5841 = vld [vmem:[%s4320 + $0xf0] sm:$0xe]
  %v5842 = vld [vmem:[%s4320 + $0xf4] sm:$0x1]
  %v5843 = vld [vmem:[%s4320 + $0xf8] sm:$0xe]
  %v5844 = vld [vmem:[%s4320 + $0xfc] sm:$0x1]
  %v5845 = vld [vmem:[%s4320 + $0x100] sm:$0xe]
  %v5846 = vld [vmem:[%s4320 + $0x104] sm:$0x1]
  %v5847 = vld [vmem:[%s4320 + $0x108] sm:$0xe]
  %v5848 = vld [vmem:[%s4320 + $0x10c] sm:$0x1]
  %v5849 = vld [vmem:[%s4320 + $0x110] sm:$0xe]
  %v5850 = vld [vmem:[%s4320 + $0x114] sm:$0x1]
  %v5851 = vld [vmem:[%s4320 + $0x118] sm:$0xe]
  %v5852 = vld [vmem:[%s4320 + $0x11c] sm:$0x1]
  %v5853 = vld [vmem:[%s4320 + $0x120] sm:$0xe]
  %v5854 = vld [vmem:[%s4320 + $0x124] sm:$0x1]
  %v5855 = vld [vmem:[%s4320 + $0x128] sm:$0xe]
  %v5856 = vld [vmem:[%s4320 + $0x12c] sm:$0x1]
  %v5857 = vld [vmem:[%s4320 + $0x140] sm:$0xe]
  %v5858 = vld [vmem:[%s4320 + $0x144] sm:$0x1]
  %v5859 = vld [vmem:[%s4320 + $0x148] sm:$0xe]
  %v5860 = vld [vmem:[%s4320 + $0x14c] sm:$0x1]
  %v5861 = vld [vmem:[%s4320 + $0x150] sm:$0xe]
  %v5862 = vld [vmem:[%s4320 + $0x154] sm:$0x1]
  %v5863 = vld [vmem:[%s4320 + $0x158] sm:$0xe]
  %v5864 = vld [vmem:[%s4320 + $0x15c] sm:$0x1]
  %v5865 = vld [vmem:[%s4320 + $0x160] sm:$0xe]
  %v5866 = vld [vmem:[%s4320 + $0x164] sm:$0x1]
  %v5867 = vld [vmem:[%s4320 + $0x168] sm:$0xe]
  %v5868 = vld [vmem:[%s4320 + $0x16c] sm:$0x1]
  %v5869 = vld [vmem:[%s4320 + $0x170] sm:$0xe]
  %v5870 = vld [vmem:[%s4320 + $0x174] sm:$0x1]
  %v5871 = vld [vmem:[%s4320 + $0x178] sm:$0xe]
  %v5872 = vld [vmem:[%s4320 + $0x17c] sm:$0x1]
  %v5873 = vld [vmem:[%s4320 + $0x190] sm:$0xe]
  %v5874 = vld [vmem:[%s4320 + $0x194] sm:$0x1]
  %v5875 = vld [vmem:[%s4320 + $0x198] sm:$0xe]
  %v5876 = vld [vmem:[%s4320 + $0x19c] sm:$0x1]
  %v5877 = vld [vmem:[%s4320 + $0x1a0] sm:$0xe]
  %v5878 = vld [vmem:[%s4320 + $0x1a4] sm:$0x1]
  %v5879 = vld [vmem:[%s4320 + $0x1a8] sm:$0xe]
  %v5880 = vld [vmem:[%s4320 + $0x1ac] sm:$0x1]
  %v5881 = vld [vmem:[%s4320 + $0x1b0] sm:$0xe]
  %v5882 = vld [vmem:[%s4320 + $0x1b4] sm:$0x1]
  %v5883 = vld [vmem:[%s4320 + $0x1b8] sm:$0xe]
  %v5884 = vld [vmem:[%s4320 + $0x1bc] sm:$0x1]
  %v5885 = vld [vmem:[%s4320 + $0x1c0] sm:$0xe]
  %v5886 = vld [vmem:[%s4320 + $0x1c4] sm:$0x1]
  %v5887 = vld [vmem:[%s4320 + $0x1c8] sm:$0xe]
  %v5888 = vld [vmem:[%s4320 + $0x1cc] sm:$0x1]
  %v5889 = vld [vmem:[%s4320 + $0x1e0] sm:$0xe]
  %v5890 = vld [vmem:[%s4320 + $0x1e4] sm:$0x1]
  %v5891 = vld [vmem:[%s4320 + $0x1e8] sm:$0xe]
  %v5892 = vld [vmem:[%s4320 + $0x1ec] sm:$0x1]
  %v5893 = vld [vmem:[%s4320 + $0x1f0] sm:$0xe]
  %v5894 = vld [vmem:[%s4320 + $0x1f4] sm:$0x1]
  %v5895 = vld [vmem:[%s4320 + $0x1f8] sm:$0xe]
  %v5896 = vld [vmem:[%s4320 + $0x1fc] sm:$0x1]
  %v5897 = vld [vmem:[%s4320 + $0x200] sm:$0xe]
  %v5898 = vld [vmem:[%s4320 + $0x204] sm:$0x1]
  %v5899 = vld [vmem:[%s4320 + $0x208] sm:$0xe]
  %v5900 = vld [vmem:[%s4320 + $0x20c] sm:$0x1]
  %v5901 = vld [vmem:[%s4320 + $0x210] sm:$0xe]
  %v5902 = vld [vmem:[%s4320 + $0x214] sm:$0x1]
  %v5903 = vld [vmem:[%s4320 + $0x218] sm:$0xe]
  %v5904 = vld [vmem:[%s4320 + $0x21c] sm:$0x1]
  %v5905 = vld [vmem:[%s4320 + $0x230] sm:$0xe]
  %v5906 = vld [vmem:[%s4320 + $0x234] sm:$0x1]
  %v5907 = vld [vmem:[%s4320 + $0x238] sm:$0xe]
  %v5908 = vld [vmem:[%s4320 + $0x23c] sm:$0x1]
  %v5909 = vld [vmem:[%s4320 + $0x240] sm:$0xe]
  %v5910 = vld [vmem:[%s4320 + $0x244] sm:$0x1]
  %v5911 = vld [vmem:[%s4320 + $0x248] sm:$0xe]
  %v5912 = vld [vmem:[%s4320 + $0x24c] sm:$0x1]
  %v5913 = vld [vmem:[%s4320 + $0x250] sm:$0xe]
  %v5914 = vld [vmem:[%s4320 + $0x254] sm:$0x1]
  %v5915 = vld [vmem:[%s4320 + $0x258] sm:$0xe]
  %v5916 = vld [vmem:[%s4320 + $0x25c] sm:$0x1]
  %v5917 = vld [vmem:[%s4320 + $0x260] sm:$0xe]
  %v5918 = vld [vmem:[%s4320 + $0x264] sm:$0x1]
  %v5919 = vld [vmem:[%s4320 + $0x268] sm:$0xe]
  %v5920 = vld [vmem:[%s4320 + $0x26c] sm:$0x1]
  %v6049 = vrot.slane %v5793, 5
  %v6050 = vrot.slane %v6049, 4
  %v6051 = vrot.slane %v5794, 5
  %v6052 = vsel %vm1752, %v6050, %v6051
  %v6053 = vrot.slane %v5795, 5
  %v6054 = vrot.slane %v6053, 4
  %v6055 = vrot.slane %v5796, 5
  %v6056 = vsel %vm1752, %v6054, %v6055
  %v6057 = vrot.slane %v5797, 5
  %v6058 = vrot.slane %v6057, 4
  %v6059 = vrot.slane %v5798, 5
  %v6060 = vsel %vm1752, %v6058, %v6059
  %v6061 = vrot.slane %v5799, 5
  %v6062 = vrot.slane %v6061, 4
  %v6063 = vrot.slane %v5800, 5
  %v6064 = vsel %vm1752, %v6062, %v6063
  %v6065 = vrot.slane %v5801, 5
  %v6066 = vrot.slane %v6065, 4
  %v6067 = vrot.slane %v5802, 5
  %v6068 = vsel %vm1752, %v6066, %v6067
  %v6069 = vrot.slane %v5803, 5
  %v6070 = vrot.slane %v6069, 4
  %v6071 = vrot.slane %v5804, 5
  %v6072 = vsel %vm1752, %v6070, %v6071
  %v6073 = vrot.slane %v5805, 5
  %v6074 = vrot.slane %v6073, 4
  %v6075 = vrot.slane %v5806, 5
  %v6076 = vsel %vm1752, %v6074, %v6075
  %v6077 = vrot.slane %v5807, 5
  %v6078 = vrot.slane %v6077, 4
  %v6079 = vrot.slane %v5808, 5
  %v6080 = vsel %vm1752, %v6078, %v6079
  %v6081 = vrot.slane %v5809, 5
  %v6082 = vrot.slane %v6081, 4
  %v6083 = vrot.slane %v5810, 5
  %v6084 = vsel %vm1752, %v6082, %v6083
  %v6085 = vrot.slane %v5811, 5
  %v6086 = vrot.slane %v6085, 4
  %v6087 = vrot.slane %v5812, 5
  %v6088 = vsel %vm1752, %v6086, %v6087
  %v6089 = vrot.slane %v5813, 5
  %v6090 = vrot.slane %v6089, 4
  %v6091 = vrot.slane %v5814, 5
  %v6092 = vsel %vm1752, %v6090, %v6091
  %v6093 = vrot.slane %v5815, 5
  %v6094 = vrot.slane %v6093, 4
  %v6095 = vrot.slane %v5816, 5
  %v6096 = vsel %vm1752, %v6094, %v6095
  %v6097 = vrot.slane %v5817, 5
  %v6098 = vrot.slane %v6097, 4
  %v6099 = vrot.slane %v5818, 5
  %v6100 = vsel %vm1752, %v6098, %v6099
  %v6101 = vrot.slane %v5819, 5
  %v6102 = vrot.slane %v6101, 4
  %v6103 = vrot.slane %v5820, 5
  %v6104 = vsel %vm1752, %v6102, %v6103
  %v6105 = vrot.slane %v5821, 5
  %v6106 = vrot.slane %v6105, 4
  %v6107 = vrot.slane %v5822, 5
  %v6108 = vsel %vm1752, %v6106, %v6107
  %v6109 = vrot.slane %v5823, 5
  %v6110 = vrot.slane %v6109, 4
  %v6111 = vrot.slane %v5824, 5
  %v6112 = vsel %vm1752, %v6110, %v6111
  %v6113 = vrot.slane %v5825, 5
  %v6114 = vrot.slane %v6113, 4
  %v6115 = vrot.slane %v5826, 5
  %v6116 = vsel %vm1752, %v6114, %v6115
  %v6117 = vrot.slane %v5827, 5
  %v6118 = vrot.slane %v6117, 4
  %v6119 = vrot.slane %v5828, 5
  %v6120 = vsel %vm1752, %v6118, %v6119
  %v6121 = vrot.slane %v5829, 5
  %v6122 = vrot.slane %v6121, 4
  %v6123 = vrot.slane %v5830, 5
  %v6124 = vsel %vm1752, %v6122, %v6123
  %v6125 = vrot.slane %v5831, 5
  %v6126 = vrot.slane %v6125, 4
  %v6127 = vrot.slane %v5832, 5
  %v6128 = vsel %vm1752, %v6126, %v6127
  %v6129 = vrot.slane %v5833, 5
  %v6130 = vrot.slane %v6129, 4
  %v6131 = vrot.slane %v5834, 5
  %v6132 = vsel %vm1752, %v6130, %v6131
  %v6133 = vrot.slane %v5835, 5
  %v6134 = vrot.slane %v6133, 4
  %v6135 = vrot.slane %v5836, 5
  %v6136 = vsel %vm1752, %v6134, %v6135
  %v6137 = vrot.slane %v5837, 5
  %v6138 = vrot.slane %v6137, 4
  %v6139 = vrot.slane %v5838, 5
  %v6140 = vsel %vm1752, %v6138, %v6139
  %v6141 = vrot.slane %v5839, 5
  %v6142 = vrot.slane %v6141, 4
  %v6143 = vrot.slane %v5840, 5
  %v6144 = vsel %vm1752, %v6142, %v6143
  %v6145 = vrot.slane %v5841, 5
  %v6146 = vrot.slane %v6145, 4
  %v6147 = vrot.slane %v5842, 5
  %v6148 = vsel %vm1752, %v6146, %v6147
  %v6149 = vrot.slane %v5843, 5
  %v6150 = vrot.slane %v6149, 4
  %v6151 = vrot.slane %v5844, 5
  %v6152 = vsel %vm1752, %v6150, %v6151
  %v6153 = vrot.slane %v5845, 5
  %v6154 = vrot.slane %v6153, 4
  %v6155 = vrot.slane %v5846, 5
  %v6156 = vsel %vm1752, %v6154, %v6155
  %v6157 = vrot.slane %v5847, 5
  %v6158 = vrot.slane %v6157, 4
  %v6159 = vrot.slane %v5848, 5
  %v6160 = vsel %vm1752, %v6158, %v6159
  %v6161 = vrot.slane %v5849, 5
  %v6162 = vrot.slane %v6161, 4
  %v6163 = vrot.slane %v5850, 5
  %v6164 = vsel %vm1752, %v6162, %v6163
  %v6165 = vrot.slane %v5851, 5
  %v6166 = vrot.slane %v6165, 4
  %v6167 = vrot.slane %v5852, 5
  %v6168 = vsel %vm1752, %v6166, %v6167
  %v6169 = vrot.slane %v5853, 5
  %v6170 = vrot.slane %v6169, 4
  %v6171 = vrot.slane %v5854, 5
  %v6172 = vsel %vm1752, %v6170, %v6171
  %v6173 = vrot.slane %v5855, 5
  %v6174 = vrot.slane %v6173, 4
  %v6175 = vrot.slane %v5856, 5
  %v6176 = vsel %vm1752, %v6174, %v6175
  %v6177 = vrot.slane %v5857, 5
  %v6178 = vrot.slane %v6177, 4
  %v6179 = vrot.slane %v5858, 5
  %v6180 = vsel %vm1752, %v6178, %v6179
  %v6181 = vrot.slane %v5859, 5
  %v6182 = vrot.slane %v6181, 4
  %v6183 = vrot.slane %v5860, 5
  %v6184 = vsel %vm1752, %v6182, %v6183
  %v6185 = vrot.slane %v5861, 5
  %v6186 = vrot.slane %v6185, 4
  %v6187 = vrot.slane %v5862, 5
  %v6188 = vsel %vm1752, %v6186, %v6187
  %v6189 = vrot.slane %v5863, 5
  %v6190 = vrot.slane %v6189, 4
  %v6191 = vrot.slane %v5864, 5
  %v6192 = vsel %vm1752, %v6190, %v6191
  %v6193 = vrot.slane %v5865, 5
  %v6194 = vrot.slane %v6193, 4
  %v6195 = vrot.slane %v5866, 5
  %v6196 = vsel %vm1752, %v6194, %v6195
  %v6197 = vrot.slane %v5867, 5
  %v6198 = vrot.slane %v6197, 4
  %v6199 = vrot.slane %v5868, 5
  %v6200 = vsel %vm1752, %v6198, %v6199
  %v6201 = vrot.slane %v5869, 5
  %v6202 = vrot.slane %v6201, 4
  %v6203 = vrot.slane %v5870, 5
  %v6204 = vsel %vm1752, %v6202, %v6203
  %v6205 = vrot.slane %v5871, 5
  %v6206 = vrot.slane %v6205, 4
  %v6207 = vrot.slane %v5872, 5
  %v6208 = vsel %vm1752, %v6206, %v6207
  %v6209 = vrot.slane %v5873, 5
  %v6210 = vrot.slane %v6209, 4
  %v6211 = vrot.slane %v5874, 5
  %v6212 = vsel %vm1752, %v6210, %v6211
  %v6213 = vrot.slane %v5875, 5
  %v6214 = vrot.slane %v6213, 4
  %v6215 = vrot.slane %v5876, 5
  %v6216 = vsel %vm1752, %v6214, %v6215
  %v6217 = vrot.slane %v5877, 5
  %v6218 = vrot.slane %v6217, 4
  %v6219 = vrot.slane %v5878, 5
  %v6220 = vsel %vm1752, %v6218, %v6219
  %v6221 = vrot.slane %v5879, 5
  %v6222 = vrot.slane %v6221, 4
  %v6223 = vrot.slane %v5880, 5
  %v6224 = vsel %vm1752, %v6222, %v6223
  %v6225 = vrot.slane %v5881, 5
  %v6226 = vrot.slane %v6225, 4
  %v6227 = vrot.slane %v5882, 5
  %v6228 = vsel %vm1752, %v6226, %v6227
  %v6229 = vrot.slane %v5883, 5
  %v6230 = vrot.slane %v6229, 4
  %v6231 = vrot.slane %v5884, 5
  %v6232 = vsel %vm1752, %v6230, %v6231
  %v6233 = vrot.slane %v5885, 5
  %v6234 = vrot.slane %v6233, 4
  %v6235 = vrot.slane %v5886, 5
  %v6236 = vsel %vm1752, %v6234, %v6235
  %v6237 = vrot.slane %v5887, 5
  %v6238 = vrot.slane %v6237, 4
  %v6239 = vrot.slane %v5888, 5
  %v6240 = vsel %vm1752, %v6238, %v6239
  %v6241 = vrot.slane %v5889, 5
  %v6242 = vrot.slane %v6241, 4
  %v6243 = vrot.slane %v5890, 5
  %v6244 = vsel %vm1752, %v6242, %v6243
  %v6245 = vrot.slane %v5891, 5
  %v6246 = vrot.slane %v6245, 4
  %v6247 = vrot.slane %v5892, 5
  %v6248 = vsel %vm1752, %v6246, %v6247
  %v6249 = vrot.slane %v5893, 5
  %v6250 = vrot.slane %v6249, 4
  %v6251 = vrot.slane %v5894, 5
  %v6252 = vsel %vm1752, %v6250, %v6251
  %v6253 = vrot.slane %v5895, 5
  %v6254 = vrot.slane %v6253, 4
  %v6255 = vrot.slane %v5896, 5
  %v6256 = vsel %vm1752, %v6254, %v6255
  %v6257 = vrot.slane %v5897, 5
  %v6258 = vrot.slane %v6257, 4
  %v6259 = vrot.slane %v5898, 5
  %v6260 = vsel %vm1752, %v6258, %v6259
  %v6261 = vrot.slane %v5899, 5
  %v6262 = vrot.slane %v6261, 4
  %v6263 = vrot.slane %v5900, 5
  %v6264 = vsel %vm1752, %v6262, %v6263
  %v6265 = vrot.slane %v5901, 5
  %v6266 = vrot.slane %v6265, 4
  %v6267 = vrot.slane %v5902, 5
  %v6268 = vsel %vm1752, %v6266, %v6267
  %v6269 = vrot.slane %v5903, 5
  %v6270 = vrot.slane %v6269, 4
  %v6271 = vrot.slane %v5904, 5
  %v6272 = vsel %vm1752, %v6270, %v6271
  %v6273 = vrot.slane %v5905, 5
  %v6274 = vrot.slane %v6273, 4
  %v6275 = vrot.slane %v5906, 5
  %v6276 = vsel %vm1752, %v6274, %v6275
  %v6277 = vrot.slane %v5907, 5
  %v6278 = vrot.slane %v6277, 4
  %v6279 = vrot.slane %v5908, 5
  %v6280 = vsel %vm1752, %v6278, %v6279
  %v6281 = vrot.slane %v5909, 5
  %v6282 = vrot.slane %v6281, 4
  %v6283 = vrot.slane %v5910, 5
  %v6284 = vsel %vm1752, %v6282, %v6283
  %v6285 = vrot.slane %v5911, 5
  %v6286 = vrot.slane %v6285, 4
  %v6287 = vrot.slane %v5912, 5
  %v6288 = vsel %vm1752, %v6286, %v6287
  %v6289 = vrot.slane %v5913, 5
  %v6290 = vrot.slane %v6289, 4
  %v6291 = vrot.slane %v5914, 5
  %v6292 = vsel %vm1752, %v6290, %v6291
  %v6293 = vrot.slane %v5915, 5
  %v6294 = vrot.slane %v6293, 4
  %v6295 = vrot.slane %v5916, 5
  %v6296 = vsel %vm1752, %v6294, %v6295
  %v6297 = vrot.slane %v5917, 5
  %v6298 = vrot.slane %v6297, 4
  %v6299 = vrot.slane %v5918, 5
  %v6300 = vsel %vm1752, %v6298, %v6299
  %v6301 = vrot.slane %v5919, 5
  %v6302 = vrot.slane %v6301, 4
  %v6303 = vrot.slane %v5920, 5
  %v6304 = vsel %vm1752, %v6302, %v6303
  %v6305 = vunpack.c.l.b16 %v6052
  %v6306 = vunpack.c.l.b16 %v6056
  %v6307 = vunpack.c.l.b16 %v6060
  %v6308 = vunpack.c.l.b16 %v6064
  %v6309 = vunpack.c.l.b16 %v6068
  %v6310 = vunpack.c.l.b16 %v6072
  %v6311 = vunpack.c.l.b16 %v6076
  %v6312 = vunpack.c.l.b16 %v6080
  %v6313 = vunpack.c.l.b16 %v6084
  %v6314 = vunpack.c.l.b16 %v6088
  %v6315 = vunpack.c.l.b16 %v6092
  %v6316 = vunpack.c.l.b16 %v6096
  %v6317 = vunpack.c.l.b16 %v6100
  %v6318 = vunpack.c.l.b16 %v6104
  %v6319 = vunpack.c.l.b16 %v6108
  %v6320 = vunpack.c.l.b16 %v6112
  %v6321 = vunpack.c.l.b16 %v6116
  %v6322 = vunpack.c.l.b16 %v6120
  %v6323 = vunpack.c.l.b16 %v6124
  %v6324 = vunpack.c.l.b16 %v6128
  %v6325 = vunpack.c.l.b16 %v6132
  %v6326 = vunpack.c.l.b16 %v6136
  %v6327 = vunpack.c.l.b16 %v6140
  %v6328 = vunpack.c.l.b16 %v6144
  %v6329 = vunpack.c.l.b16 %v6148
  %v6330 = vunpack.c.l.b16 %v6152
  %v6331 = vunpack.c.l.b16 %v6156
  %v6332 = vunpack.c.l.b16 %v6160
  %v6333 = vunpack.c.l.b16 %v6164
  %v6334 = vunpack.c.l.b16 %v6168
  %v6335 = vunpack.c.l.b16 %v6172
  %v6336 = vunpack.c.l.b16 %v6176
  %v6337 = vunpack.c.l.b16 %v6180
  %v6338 = vunpack.c.l.b16 %v6184
  %v6339 = vunpack.c.l.b16 %v6188
  %v6340 = vunpack.c.l.b16 %v6192
  %v6341 = vunpack.c.l.b16 %v6196
  %v6342 = vunpack.c.l.b16 %v6200
  %v6343 = vunpack.c.l.b16 %v6204
  %v6344 = vunpack.c.l.b16 %v6208
  %v6345 = vunpack.c.l.b16 %v6212
  %v6346 = vunpack.c.l.b16 %v6216
  %v6347 = vunpack.c.l.b16 %v6220
  %v6348 = vunpack.c.l.b16 %v6224
  %v6349 = vunpack.c.l.b16 %v6228
  %v6350 = vunpack.c.l.b16 %v6232
  %v6351 = vunpack.c.l.b16 %v6236
  %v6352 = vunpack.c.l.b16 %v6240
  %v6353 = vunpack.c.l.b16 %v6244
  %v6354 = vunpack.c.l.b16 %v6248
  %v6355 = vunpack.c.l.b16 %v6252
  %v6356 = vunpack.c.l.b16 %v6256
  %v6357 = vunpack.c.l.b16 %v6260
  %v6358 = vunpack.c.l.b16 %v6264
  %v6359 = vunpack.c.l.b16 %v6268
  %v6360 = vunpack.c.l.b16 %v6272
  %v6361 = vunpack.c.l.b16 %v6276
  %v6362 = vunpack.c.l.b16 %v6280
  %v6363 = vunpack.c.l.b16 %v6284
  %v6364 = vunpack.c.l.b16 %v6288
  %v6365 = vunpack.c.l.b16 %v6292
  %v6366 = vunpack.c.l.b16 %v6296
  %v6367 = vunpack.c.l.b16 %v6300
  %v6368 = vunpack.c.l.b16 %v6304
  %v6369 = vpack.c.b16 %v6306, %v6305
  %v6370 = vpack.c.b16 %v6308, %v6307
  %v6371 = vpack.c.b16 %v6310, %v6309
  %v6372 = vpack.c.b16 %v6312, %v6311
  %v6373 = vpack.c.b16 %v6314, %v6313
  %v6374 = vpack.c.b16 %v6316, %v6315
  %v6375 = vpack.c.b16 %v6318, %v6317
  %v6376 = vpack.c.b16 %v6320, %v6319
  %v6377 = vpack.c.b16 %v6322, %v6321
  %v6378 = vpack.c.b16 %v6324, %v6323
  %v6379 = vpack.c.b16 %v6326, %v6325
  %v6380 = vpack.c.b16 %v6328, %v6327
  %v6381 = vpack.c.b16 %v6330, %v6329
  %v6382 = vpack.c.b16 %v6332, %v6331
  %v6383 = vpack.c.b16 %v6334, %v6333
  %v6384 = vpack.c.b16 %v6336, %v6335
  %v6385 = vpack.c.b16 %v6338, %v6337
  %v6386 = vpack.c.b16 %v6340, %v6339
  %v6387 = vpack.c.b16 %v6342, %v6341
  %v6388 = vpack.c.b16 %v6344, %v6343
  %v6389 = vpack.c.b16 %v6346, %v6345
  %v6390 = vpack.c.b16 %v6348, %v6347
  %v6391 = vpack.c.b16 %v6350, %v6349
  %v6392 = vpack.c.b16 %v6352, %v6351
  %v6393 = vpack.c.b16 %v6354, %v6353
  %v6394 = vpack.c.b16 %v6356, %v6355
  %v6395 = vpack.c.b16 %v6358, %v6357
  %v6396 = vpack.c.b16 %v6360, %v6359
  %v6397 = vpack.c.b16 %v6362, %v6361
  %v6398 = vpack.c.b16 %v6364, %v6363
  %v6399 = vpack.c.b16 %v6366, %v6365
  %v6400 = vpack.c.b16 %v6368, %v6367
  %6433 = vst [vmem:[#allocation2 + $0x40] sm:$0xff] %v6369
  %6434 = vst [vmem:[#allocation2 + $0x88] sm:$0xff] %v6370
  %6435 = vst [vmem:[#allocation2 + $0xd0] sm:$0xff] %v6371
  %6436 = vst [vmem:[#allocation2 + $0x118] sm:$0xff] %v6372
  %6437 = vst [vmem:[#allocation2 + $0x160] sm:$0xff] %v6373
  %6438 = vst [vmem:[#allocation2 + $0x1a8] sm:$0xff] %v6374
  %6439 = vst [vmem:[#allocation2 + $0x1f0] sm:$0xff] %v6375
  %6440 = vst [vmem:[#allocation2 + $0x238] sm:$0xff] %v6376
  %6441 = vst [vmem:[#allocation2 + $0x280] sm:$0xff] %v6377
  %6442 = vst [vmem:[#allocation2 + $0x2c8] sm:$0xff] %v6378
  %6443 = vst [vmem:[#allocation2 + $0x310] sm:$0xff] %v6379
  %6444 = vst [vmem:[#allocation2 + $0x358] sm:$0xff] %v6380
  %6445 = vst [vmem:[#allocation2 + $0x3a0] sm:$0xff] %v6381
  %6446 = vst [vmem:[#allocation2 + $0x3e8] sm:$0xff] %v6382
  %6447 = vst [vmem:[#allocation2 + $0x430] sm:$0xff] %v6383
  %6448 = vst [vmem:[#allocation2 + $0x478] sm:$0xff] %v6384
  %6449 = vst [vmem:[#allocation2 + $0x4c0] sm:$0xff] %v6385
  %6450 = vst [vmem:[#allocation2 + $0x508] sm:$0xff] %v6386
  %6451 = vst [vmem:[#allocation2 + $0x550] sm:$0xff] %v6387
  %6452 = vst [vmem:[#allocation2 + $0x598] sm:$0xff] %v6388
  %6453 = vst [vmem:[#allocation2 + $0x5e0] sm:$0xff] %v6389
  %6454 = vst [vmem:[#allocation2 + $0x628] sm:$0xff] %v6390
  %6455 = vst [vmem:[#allocation2 + $0x670] sm:$0xff] %v6391
  %6456 = vst [vmem:[#allocation2 + $0x6b8] sm:$0xff] %v6392
  %6457 = vst [vmem:[#allocation2 + $0x700] sm:$0xff] %v6393
  %6458 = vst [vmem:[#allocation2 + $0x748] sm:$0xff] %v6394
  %6459 = vst [vmem:[#allocation2 + $0x790] sm:$0xff] %v6395
  %6460 = vst [vmem:[#allocation2 + $0x7d8] sm:$0xff] %v6396
  %6461 = vst [vmem:[#allocation2 + $0x820] sm:$0xff] %v6397
  %6462 = vst [vmem:[#allocation2 + $0x868] sm:$0xff] %v6398
  %6463 = vst [vmem:[#allocation2 + $0x8b0] sm:$0xff] %v6399
  %6464 = vst [vmem:[#allocation2 + $0x8f8] sm:$0xff] %v6400
  %v6465 = vld [vmem:[#allocation2] sm:$0xff]
  %v6466 = vld [vmem:[#allocation2 + $0x8] sm:$0xff]
  %v6467 = vld [vmem:[#allocation2 + $0x10] sm:$0xff]
  %v6468 = vld [vmem:[#allocation2 + $0x18] sm:$0xff]
  %v6469 = vld [vmem:[#allocation2 + $0x20] sm:$0xff]
  %v6470 = vld [vmem:[#allocation2 + $0x28] sm:$0xff]
  %v6471 = vld [vmem:[#allocation2 + $0x30] sm:$0xff]
  %v6472 = vld [vmem:[#allocation2 + $0x38] sm:$0xff]
  %v6473 = vld [vmem:[#allocation2 + $0x40] sm:$0xff]
  %v6474 = vld [vmem:[#allocation2 + $0x48] sm:$0xff]
  %v6475 = vld [vmem:[#allocation2 + $0x50] sm:$0xff]
  %v6476 = vld [vmem:[#allocation2 + $0x58] sm:$0xff]
  %v6477 = vld [vmem:[#allocation2 + $0x60] sm:$0xff]
  %v6478 = vld [vmem:[#allocation2 + $0x68] sm:$0xff]
  %v6479 = vld [vmem:[#allocation2 + $0x70] sm:$0xff]
  %v6480 = vld [vmem:[#allocation2 + $0x78] sm:$0xff]
  %v6481 = vld [vmem:[#allocation2 + $0x80] sm:$0xff]
  %v6482 = vld [vmem:[#allocation2 + $0x88] sm:$0xff]
  %v6483 = vld [vmem:[#allocation2 + $0x90] sm:$0xff]
  %v6484 = vld [vmem:[#allocation2 + $0x98] sm:$0xff]
  %v6485 = vld [vmem:[#allocation2 + $0xa0] sm:$0xff]
  %v6486 = vld [vmem:[#allocation2 + $0xa8] sm:$0xff]
  %v6487 = vld [vmem:[#allocation2 + $0xb0] sm:$0xff]
  %v6488 = vld [vmem:[#allocation2 + $0xb8] sm:$0xff]
  %v6489 = vld [vmem:[#allocation2 + $0xc0] sm:$0xff]
  %v6490 = vld [vmem:[#allocation2 + $0xc8] sm:$0xff]
  %v6491 = vld [vmem:[#allocation2 + $0xd0] sm:$0xff]
  %v6492 = vld [vmem:[#allocation2 + $0xd8] sm:$0xff]
  %v6493 = vld [vmem:[#allocation2 + $0xe0] sm:$0xff]
  %v6494 = vld [vmem:[#allocation2 + $0xe8] sm:$0xff]
  %v6495 = vld [vmem:[#allocation2 + $0xf0] sm:$0xff]
  %v6496 = vld [vmem:[#allocation2 + $0xf8] sm:$0xff]
  %v6497 = vld [vmem:[#allocation2 + $0x100] sm:$0xff]
  %v6498 = vld [vmem:[#allocation2 + $0x108] sm:$0xff]
  %v6499 = vld [vmem:[#allocation2 + $0x110] sm:$0xff]
  %v6500 = vld [vmem:[#allocation2 + $0x118] sm:$0xff]
  %v6501 = vld [vmem:[#allocation2 + $0x120] sm:$0xff]
  %v6502 = vld [vmem:[#allocation2 + $0x128] sm:$0xff]
  %v6503 = vld [vmem:[#allocation2 + $0x130] sm:$0xff]
  %v6504 = vld [vmem:[#allocation2 + $0x138] sm:$0xff]
  %v6505 = vld [vmem:[#allocation2 + $0x140] sm:$0xff]
  %v6506 = vld [vmem:[#allocation2 + $0x148] sm:$0xff]
  %v6507 = vld [vmem:[#allocation2 + $0x150] sm:$0xff]
  %v6508 = vld [vmem:[#allocation2 + $0x158] sm:$0xff]
  %v6509 = vld [vmem:[#allocation2 + $0x160] sm:$0xff]
  %v6510 = vld [vmem:[#allocation2 + $0x168] sm:$0xff]
  %v6511 = vld [vmem:[#allocation2 + $0x170] sm:$0xff]
  %v6512 = vld [vmem:[#allocation2 + $0x178] sm:$0xff]
  %v6513 = vld [vmem:[#allocation2 + $0x180] sm:$0xff]
  %v6514 = vld [vmem:[#allocation2 + $0x188] sm:$0xff]
  %v6515 = vld [vmem:[#allocation2 + $0x190] sm:$0xff]
  %v6516 = vld [vmem:[#allocation2 + $0x198] sm:$0xff]
  %v6517 = vld [vmem:[#allocation2 + $0x1a0] sm:$0xff]
  %v6518 = vld [vmem:[#allocation2 + $0x1a8] sm:$0xff]
  %v6519 = vld [vmem:[#allocation2 + $0x1b0] sm:$0xff]
  %v6520 = vld [vmem:[#allocation2 + $0x1b8] sm:$0xff]
  %v6521 = vld [vmem:[#allocation2 + $0x1c0] sm:$0xff]
  %v6522 = vld [vmem:[#allocation2 + $0x1c8] sm:$0xff]
  %v6523 = vld [vmem:[#allocation2 + $0x1d0] sm:$0xff]
  %v6524 = vld [vmem:[#allocation2 + $0x1d8] sm:$0xff]
  %v6525 = vld [vmem:[#allocation2 + $0x1e0] sm:$0xff]
  %v6526 = vld [vmem:[#allocation2 + $0x1e8] sm:$0xff]
  %v6527 = vld [vmem:[#allocation2 + $0x1f0] sm:$0xff]
  %v6528 = vld [vmem:[#allocation2 + $0x1f8] sm:$0xff]
  %v6529 = vld [vmem:[#allocation2 + $0x200] sm:$0xff]
  %v6530 = vld [vmem:[#allocation2 + $0x208] sm:$0xff]
  %v6531 = vld [vmem:[#allocation2 + $0x210] sm:$0xff]
  %v6532 = vld [vmem:[#allocation2 + $0x218] sm:$0xff]
  %v6533 = vld [vmem:[#allocation2 + $0x220] sm:$0xff]
  %v6534 = vld [vmem:[#allocation2 + $0x228] sm:$0xff]
  %v6535 = vld [vmem:[#allocation2 + $0x230] sm:$0xff]
  %v6536 = vld [vmem:[#allocation2 + $0x238] sm:$0xff]
  %v6537 = vld [vmem:[#allocation2 + $0x240] sm:$0xff]
  %v6538 = vld [vmem:[#allocation2 + $0x248] sm:$0xff]
  %v6539 = vld [vmem:[#allocation2 + $0x250] sm:$0xff]
  %v6540 = vld [vmem:[#allocation2 + $0x258] sm:$0xff]
  %v6541 = vld [vmem:[#allocation2 + $0x260] sm:$0xff]
  %v6542 = vld [vmem:[#allocation2 + $0x268] sm:$0xff]
  %v6543 = vld [vmem:[#allocation2 + $0x270] sm:$0xff]
  %v6544 = vld [vmem:[#allocation2 + $0x278] sm:$0xff]
  %v6545 = vld [vmem:[#allocation2 + $0x280] sm:$0xff]
  %v6546 = vld [vmem:[#allocation2 + $0x288] sm:$0xff]
  %v6547 = vld [vmem:[#allocation2 + $0x290] sm:$0xff]
  %v6548 = vld [vmem:[#allocation2 + $0x298] sm:$0xff]
  %v6549 = vld [vmem:[#allocation2 + $0x2a0] sm:$0xff]
  %v6550 = vld [vmem:[#allocation2 + $0x2a8] sm:$0xff]
  %v6551 = vld [vmem:[#allocation2 + $0x2b0] sm:$0xff]
  %v6552 = vld [vmem:[#allocation2 + $0x2b8] sm:$0xff]
  %v6553 = vld [vmem:[#allocation2 + $0x2c0] sm:$0xff]
  %v6554 = vld [vmem:[#allocation2 + $0x2c8] sm:$0xff]
  %v6555 = vld [vmem:[#allocation2 + $0x2d0] sm:$0xff]
  %v6556 = vld [vmem:[#allocation2 + $0x2d8] sm:$0xff]
  %v6557 = vld [vmem:[#allocation2 + $0x2e0] sm:$0xff]
  %v6558 = vld [vmem:[#allocation2 + $0x2e8] sm:$0xff]
  %v6559 = vld [vmem:[#allocation2 + $0x2f0] sm:$0xff]
  %v6560 = vld [vmem:[#allocation2 + $0x2f8] sm:$0xff]
  %v6561 = vld [vmem:[#allocation2 + $0x300] sm:$0xff]
  %v6562 = vld [vmem:[#allocation2 + $0x308] sm:$0xff]
  %v6563 = vld [vmem:[#allocation2 + $0x310] sm:$0xff]
  %v6564 = vld [vmem:[#allocation2 + $0x318] sm:$0xff]
  %v6565 = vld [vmem:[#allocation2 + $0x320] sm:$0xff]
  %v6566 = vld [vmem:[#allocation2 + $0x328] sm:$0xff]
  %v6567 = vld [vmem:[#allocation2 + $0x330] sm:$0xff]
  %v6568 = vld [vmem:[#allocation2 + $0x338] sm:$0xff]
  %v6569 = vld [vmem:[#allocation2 + $0x340] sm:$0xff]
  %v6570 = vld [vmem:[#allocation2 + $0x348] sm:$0xff]
  %v6571 = vld [vmem:[#allocation2 + $0x350] sm:$0xff]
  %v6572 = vld [vmem:[#allocation2 + $0x358] sm:$0xff]
  %v6573 = vld [vmem:[#allocation2 + $0x360] sm:$0xff]
  %v6574 = vld [vmem:[#allocation2 + $0x368] sm:$0xff]
  %v6575 = vld [vmem:[#allocation2 + $0x370] sm:$0xff]
  %v6576 = vld [vmem:[#allocation2 + $0x378] sm:$0xff]
  %v6577 = vld [vmem:[#allocation2 + $0x380] sm:$0xff]
  %v6578 = vld [vmem:[#allocation2 + $0x388] sm:$0xff]
  %v6579 = vld [vmem:[#allocation2 + $0x390] sm:$0xff]
  %v6580 = vld [vmem:[#allocation2 + $0x398] sm:$0xff]
  %v6581 = vld [vmem:[#allocation2 + $0x3a0] sm:$0xff]
  %v6582 = vld [vmem:[#allocation2 + $0x3a8] sm:$0xff]
  %v6583 = vld [vmem:[#allocation2 + $0x3b0] sm:$0xff]
  %v6584 = vld [vmem:[#allocation2 + $0x3b8] sm:$0xff]
  %v6585 = vld [vmem:[#allocation2 + $0x3c0] sm:$0xff]
  %v6586 = vld [vmem:[#allocation2 + $0x3c8] sm:$0xff]
  %v6587 = vld [vmem:[#allocation2 + $0x3d0] sm:$0xff]
  %v6588 = vld [vmem:[#allocation2 + $0x3d8] sm:$0xff]
  %v6589 = vld [vmem:[#allocation2 + $0x3e0] sm:$0xff]
  %v6590 = vld [vmem:[#allocation2 + $0x3e8] sm:$0xff]
  %v6591 = vld [vmem:[#allocation2 + $0x3f0] sm:$0xff]
  %v6592 = vld [vmem:[#allocation2 + $0x3f8] sm:$0xff]
  %v6593 = vld [vmem:[#allocation2 + $0x400] sm:$0xff]
  %v6594 = vld [vmem:[#allocation2 + $0x408] sm:$0xff]
  %v6595 = vld [vmem:[#allocation2 + $0x410] sm:$0xff]
  %v6596 = vld [vmem:[#allocation2 + $0x418] sm:$0xff]
  %v6597 = vld [vmem:[#allocation2 + $0x420] sm:$0xff]
  %v6598 = vld [vmem:[#allocation2 + $0x428] sm:$0xff]
  %v6599 = vld [vmem:[#allocation2 + $0x430] sm:$0xff]
  %v6600 = vld [vmem:[#allocation2 + $0x438] sm:$0xff]
  %v6601 = vld [vmem:[#allocation2 + $0x440] sm:$0xff]
  %v6602 = vld [vmem:[#allocation2 + $0x448] sm:$0xff]
  %v6603 = vld [vmem:[#allocation2 + $0x450] sm:$0xff]
  %v6604 = vld [vmem:[#allocation2 + $0x458] sm:$0xff]
  %v6605 = vld [vmem:[#allocation2 + $0x460] sm:$0xff]
  %v6606 = vld [vmem:[#allocation2 + $0x468] sm:$0xff]
  %v6607 = vld [vmem:[#allocation2 + $0x470] sm:$0xff]
  %v6608 = vld [vmem:[#allocation2 + $0x478] sm:$0xff]
  %v6609 = vld [vmem:[#allocation2 + $0x480] sm:$0xff]
  %v6610 = vld [vmem:[#allocation2 + $0x488] sm:$0xff]
  %v6611 = vld [vmem:[#allocation2 + $0x490] sm:$0xff]
  %v6612 = vld [vmem:[#allocation2 + $0x498] sm:$0xff]
  %v6613 = vld [vmem:[#allocation2 + $0x4a0] sm:$0xff]
  %v6614 = vld [vmem:[#allocation2 + $0x4a8] sm:$0xff]
  %v6615 = vld [vmem:[#allocation2 + $0x4b0] sm:$0xff]
  %v6616 = vld [vmem:[#allocation2 + $0x4b8] sm:$0xff]
  %v6617 = vld [vmem:[#allocation2 + $0x4c0] sm:$0xff]
  %v6618 = vld [vmem:[#allocation2 + $0x4c8] sm:$0xff]
  %v6619 = vld [vmem:[#allocation2 + $0x4d0] sm:$0xff]
  %v6620 = vld [vmem:[#allocation2 + $0x4d8] sm:$0xff]
  %v6621 = vld [vmem:[#allocation2 + $0x4e0] sm:$0xff]
  %v6622 = vld [vmem:[#allocation2 + $0x4e8] sm:$0xff]
  %v6623 = vld [vmem:[#allocation2 + $0x4f0] sm:$0xff]
  %v6624 = vld [vmem:[#allocation2 + $0x4f8] sm:$0xff]
  %v6625 = vld [vmem:[#allocation2 + $0x500] sm:$0xff]
  %v6626 = vld [vmem:[#allocation2 + $0x508] sm:$0xff]
  %v6627 = vld [vmem:[#allocation2 + $0x510] sm:$0xff]
  %v6628 = vld [vmem:[#allocation2 + $0x518] sm:$0xff]
  %v6629 = vld [vmem:[#allocation2 + $0x520] sm:$0xff]
  %v6630 = vld [vmem:[#allocation2 + $0x528] sm:$0xff]
  %v6631 = vld [vmem:[#allocation2 + $0x530] sm:$0xff]
  %v6632 = vld [vmem:[#allocation2 + $0x538] sm:$0xff]
  %v6633 = vld [vmem:[#allocation2 + $0x540] sm:$0xff]
  %v6634 = vld [vmem:[#allocation2 + $0x548] sm:$0xff]
  %v6635 = vld [vmem:[#allocation2 + $0x550] sm:$0xff]
  %v6636 = vld [vmem:[#allocation2 + $0x558] sm:$0xff]
  %v6637 = vld [vmem:[#allocation2 + $0x560] sm:$0xff]
  %v6638 = vld [vmem:[#allocation2 + $0x568] sm:$0xff]
  %v6639 = vld [vmem:[#allocation2 + $0x570] sm:$0xff]
  %v6640 = vld [vmem:[#allocation2 + $0x578] sm:$0xff]
  %v6641 = vld [vmem:[#allocation2 + $0x580] sm:$0xff]
  %v6642 = vld [vmem:[#allocation2 + $0x588] sm:$0xff]
  %v6643 = vld [vmem:[#allocation2 + $0x590] sm:$0xff]
  %v6644 = vld [vmem:[#allocation2 + $0x598] sm:$0xff]
  %v6645 = vld [vmem:[#allocation2 + $0x5a0] sm:$0xff]
  %v6646 = vld [vmem:[#allocation2 + $0x5a8] sm:$0xff]
  %v6647 = vld [vmem:[#allocation2 + $0x5b0] sm:$0xff]
  %v6648 = vld [vmem:[#allocation2 + $0x5b8] sm:$0xff]
  %v6649 = vld [vmem:[#allocation2 + $0x5c0] sm:$0xff]
  %v6650 = vld [vmem:[#allocation2 + $0x5c8] sm:$0xff]
  %v6651 = vld [vmem:[#allocation2 + $0x5d0] sm:$0xff]
  %v6652 = vld [vmem:[#allocation2 + $0x5d8] sm:$0xff]
  %v6653 = vld [vmem:[#allocation2 + $0x5e0] sm:$0xff]
  %v6654 = vld [vmem:[#allocation2 + $0x5e8] sm:$0xff]
  %v6655 = vld [vmem:[#allocation2 + $0x5f0] sm:$0xff]
  %v6656 = vld [vmem:[#allocation2 + $0x5f8] sm:$0xff]
  %v6657 = vld [vmem:[#allocation2 + $0x600] sm:$0xff]
  %v6658 = vld [vmem:[#allocation2 + $0x608] sm:$0xff]
  %v6659 = vld [vmem:[#allocation2 + $0x610] sm:$0xff]
  %v6660 = vld [vmem:[#allocation2 + $0x618] sm:$0xff]
  %v6661 = vld [vmem:[#allocation2 + $0x620] sm:$0xff]
  %v6662 = vld [vmem:[#allocation2 + $0x628] sm:$0xff]
  %v6663 = vld [vmem:[#allocation2 + $0x630] sm:$0xff]
  %v6664 = vld [vmem:[#allocation2 + $0x638] sm:$0xff]
  %v6665 = vld [vmem:[#allocation2 + $0x640] sm:$0xff]
  %v6666 = vld [vmem:[#allocation2 + $0x648] sm:$0xff]
  %v6667 = vld [vmem:[#allocation2 + $0x650] sm:$0xff]
  %v6668 = vld [vmem:[#allocation2 + $0x658] sm:$0xff]
  %v6669 = vld [vmem:[#allocation2 + $0x660] sm:$0xff]
  %v6670 = vld [vmem:[#allocation2 + $0x668] sm:$0xff]
  %v6671 = vld [vmem:[#allocation2 + $0x670] sm:$0xff]
  %v6672 = vld [vmem:[#allocation2 + $0x678] sm:$0xff]
  %v6673 = vld [vmem:[#allocation2 + $0x680] sm:$0xff]
  %v6674 = vld [vmem:[#allocation2 + $0x688] sm:$0xff]
  %v6675 = vld [vmem:[#allocation2 + $0x690] sm:$0xff]
  %v6676 = vld [vmem:[#allocation2 + $0x698] sm:$0xff]
  %v6677 = vld [vmem:[#allocation2 + $0x6a0] sm:$0xff]
  %v6678 = vld [vmem:[#allocation2 + $0x6a8] sm:$0xff]
  %v6679 = vld [vmem:[#allocation2 + $0x6b0] sm:$0xff]
  %v6680 = vld [vmem:[#allocation2 + $0x6b8] sm:$0xff]
  %v6681 = vld [vmem:[#allocation2 + $0x6c0] sm:$0xff]
  %v6682 = vld [vmem:[#allocation2 + $0x6c8] sm:$0xff]
  %v6683 = vld [vmem:[#allocation2 + $0x6d0] sm:$0xff]
  %v6684 = vld [vmem:[#allocation2 + $0x6d8] sm:$0xff]
  %v6685 = vld [vmem:[#allocation2 + $0x6e0] sm:$0xff]
  %v6686 = vld [vmem:[#allocation2 + $0x6e8] sm:$0xff]
  %v6687 = vld [vmem:[#allocation2 + $0x6f0] sm:$0xff]
  %v6688 = vld [vmem:[#allocation2 + $0x6f8] sm:$0xff]
  %v6689 = vld [vmem:[#allocation2 + $0x700] sm:$0xff]
  %v6690 = vld [vmem:[#allocation2 + $0x708] sm:$0xff]
  %v6691 = vld [vmem:[#allocation2 + $0x710] sm:$0xff]
  %v6692 = vld [vmem:[#allocation2 + $0x718] sm:$0xff]
  %v6693 = vld [vmem:[#allocation2 + $0x720] sm:$0xff]
  %v6694 = vld [vmem:[#allocation2 + $0x728] sm:$0xff]
  %v6695 = vld [vmem:[#allocation2 + $0x730] sm:$0xff]
  %v6696 = vld [vmem:[#allocation2 + $0x738] sm:$0xff]
  %v6697 = vld [vmem:[#allocation2 + $0x740] sm:$0xff]
  %v6698 = vld [vmem:[#allocation2 + $0x748] sm:$0xff]
  %v6699 = vld [vmem:[#allocation2 + $0x750] sm:$0xff]
  %v6700 = vld [vmem:[#allocation2 + $0x758] sm:$0xff]
  %v6701 = vld [vmem:[#allocation2 + $0x760] sm:$0xff]
  %v6702 = vld [vmem:[#allocation2 + $0x768] sm:$0xff]
  %v6703 = vld [vmem:[#allocation2 + $0x770] sm:$0xff]
  %v6704 = vld [vmem:[#allocation2 + $0x778] sm:$0xff]
  %v6705 = vld [vmem:[#allocation2 + $0x780] sm:$0xff]
  %v6706 = vld [vmem:[#allocation2 + $0x788] sm:$0xff]
  %v6707 = vld [vmem:[#allocation2 + $0x790] sm:$0xff]
  %v6708 = vld [vmem:[#allocation2 + $0x798] sm:$0xff]
  %v6709 = vld [vmem:[#allocation2 + $0x7a0] sm:$0xff]
  %v6710 = vld [vmem:[#allocation2 + $0x7a8] sm:$0xff]
  %v6711 = vld [vmem:[#allocation2 + $0x7b0] sm:$0xff]
  %v6712 = vld [vmem:[#allocation2 + $0x7b8] sm:$0xff]
  %v6713 = vld [vmem:[#allocation2 + $0x7c0] sm:$0xff]
  %v6714 = vld [vmem:[#allocation2 + $0x7c8] sm:$0xff]
  %v6715 = vld [vmem:[#allocation2 + $0x7d0] sm:$0xff]
  %v6716 = vld [vmem:[#allocation2 + $0x7d8] sm:$0xff]
  %v6717 = vld [vmem:[#allocation2 + $0x7e0] sm:$0xff]
  %v6718 = vld [vmem:[#allocation2 + $0x7e8] sm:$0xff]
  %v6719 = vld [vmem:[#allocation2 + $0x7f0] sm:$0xff]
  %v6720 = vld [vmem:[#allocation2 + $0x7f8] sm:$0xff]
  %v6721 = vld [vmem:[#allocation2 + $0x800] sm:$0xff]
  %v6722 = vld [vmem:[#allocation2 + $0x808] sm:$0xff]
  %v6723 = vld [vmem:[#allocation2 + $0x810] sm:$0xff]
  %v6724 = vld [vmem:[#allocation2 + $0x818] sm:$0xff]
  %v6725 = vld [vmem:[#allocation2 + $0x820] sm:$0xff]
  %v6726 = vld [vmem:[#allocation2 + $0x828] sm:$0xff]
  %v6727 = vld [vmem:[#allocation2 + $0x830] sm:$0xff]
  %v6728 = vld [vmem:[#allocation2 + $0x838] sm:$0xff]
  %v6729 = vld [vmem:[#allocation2 + $0x840] sm:$0xff]
  %v6730 = vld [vmem:[#allocation2 + $0x848] sm:$0xff]
  %v6731 = vld [vmem:[#allocation2 + $0x850] sm:$0xff]
  %v6732 = vld [vmem:[#allocation2 + $0x858] sm:$0xff]
  %v6733 = vld [vmem:[#allocation2 + $0x860] sm:$0xff]
  %v6734 = vld [vmem:[#allocation2 + $0x868] sm:$0xff]
  %v6735 = vld [vmem:[#allocation2 + $0x870] sm:$0xff]
  %v6736 = vld [vmem:[#allocation2 + $0x878] sm:$0xff]
  %v6737 = vld [vmem:[#allocation2 + $0x880] sm:$0xff]
  %v6738 = vld [vmem:[#allocation2 + $0x888] sm:$0xff]
  %v6739 = vld [vmem:[#allocation2 + $0x890] sm:$0xff]
  %v6740 = vld [vmem:[#allocation2 + $0x898] sm:$0xff]
  %v6741 = vld [vmem:[#allocation2 + $0x8a0] sm:$0xff]
  %v6742 = vld [vmem:[#allocation2 + $0x8a8] sm:$0xff]
  %v6743 = vld [vmem:[#allocation2 + $0x8b0] sm:$0xff]
  %v6744 = vld [vmem:[#allocation2 + $0x8b8] sm:$0xff]
  %v6745 = vld [vmem:[#allocation2 + $0x8c0] sm:$0xff]
  %v6746 = vld [vmem:[#allocation2 + $0x8c8] sm:$0xff]
  %v6747 = vld [vmem:[#allocation2 + $0x8d0] sm:$0xff]
  %v6748 = vld [vmem:[#allocation2 + $0x8d8] sm:$0xff]
  %v6749 = vld [vmem:[#allocation2 + $0x8e0] sm:$0xff]
  %v6750 = vld [vmem:[#allocation2 + $0x8e8] sm:$0xff]
  %v6751 = vld [vmem:[#allocation2 + $0x8f0] sm:$0xff]
  %v6752 = vld [vmem:[#allocation2 + $0x8f8] sm:$0xff]
  %v6753 = vld [vmem:[%s1] sm:$0xf]
  %v6754 = vld [vmem:[%s1 + $0x4] sm:$0xf]
  %v6755 = vld [vmem:[%s1 + $0x8] sm:$0xf]
  %v6756 = vld [vmem:[%s1 + $0xc] sm:$0xf]
  %v6757 = vld [vmem:[%s1 + $0x10] sm:$0xf]
  %v6758 = vld [vmem:[%s1 + $0x14] sm:$0xf]
  %v6759 = vld [vmem:[%s1 + $0x18] sm:$0xf]
  %v6760 = vld [vmem:[%s1 + $0x1c] sm:$0xf]
  %v6761 = vld [vmem:[%s1 + $0x20] sm:$0xf]
  %v6762 = vld [vmem:[%s1 + $0x24] sm:$0xf]
  %v6763 = vld [vmem:[%s1 + $0x28] sm:$0xf]
  %v6764 = vld [vmem:[%s1 + $0x2c] sm:$0xf]
  %v6765 = vld [vmem:[%s1 + $0x30] sm:$0xf]
  %v6766 = vld [vmem:[%s1 + $0x34] sm:$0xf]
  %v6767 = vld [vmem:[%s1 + $0x38] sm:$0xf]
  %v6768 = vld [vmem:[%s1 + $0x3c] sm:$0xf]
  %v6769 = vld [vmem:[%s1 + $0x40] sm:$0xf]
  %v6770 = vld [vmem:[%s1 + $0x44] sm:$0xf]
  %v6771 = vld [vmem:[%s1 + $0x48] sm:$0xf]
  %v6772 = vld [vmem:[%s1 + $0x4c] sm:$0xf]
  %v6773 = vld [vmem:[%s1 + $0x50] sm:$0xf]
  %v6774 = vld [vmem:[%s1 + $0x54] sm:$0xf]
  %v6775 = vld [vmem:[%s1 + $0x58] sm:$0xf]
  %v6776 = vld [vmem:[%s1 + $0x5c] sm:$0xf]
  %v6777 = vld [vmem:[%s1 + $0x60] sm:$0xf]
  %v6778 = vld [vmem:[%s1 + $0x64] sm:$0xf]
  %v6779 = vld [vmem:[%s1 + $0x68] sm:$0xf]
  %v6780 = vld [vmem:[%s1 + $0x6c] sm:$0xf]
  %v6781 = vld [vmem:[%s1 + $0x70] sm:$0xf]
  %v6782 = vld [vmem:[%s1 + $0x74] sm:$0xf]
  %v6783 = vld [vmem:[%s1 + $0x78] sm:$0xf]
  %v6784 = vld [vmem:[%s1 + $0x7c] sm:$0xf]
  %v6785 = vld [vmem:[%s1 + $0x80] sm:$0xf]
  %v6786 = vld [vmem:[%s1 + $0x84] sm:$0xf]
  %v6787 = vld [vmem:[%s1 + $0x88] sm:$0xf]
  %v6788 = vld [vmem:[%s1 + $0x8c] sm:$0xf]
  %v6789 = vld [vmem:[%s1 + $0x90] sm:$0xf]
  %v6790 = vld [vmem:[%s1 + $0x94] sm:$0xf]
  %v6791 = vld [vmem:[%s1 + $0x98] sm:$0xf]
  %v6792 = vld [vmem:[%s1 + $0x9c] sm:$0xf]
  %v6793 = vld [vmem:[%s1 + $0xa0] sm:$0xf]
  %v6794 = vld [vmem:[%s1 + $0xa4] sm:$0xf]
  %v6795 = vld [vmem:[%s1 + $0xa8] sm:$0xf]
  %v6796 = vld [vmem:[%s1 + $0xac] sm:$0xf]
  %v6797 = vld [vmem:[%s1 + $0xb0] sm:$0xf]
  %v6798 = vld [vmem:[%s1 + $0xb4] sm:$0xf]
  %v6799 = vld [vmem:[%s1 + $0xb8] sm:$0xf]
  %v6800 = vld [vmem:[%s1 + $0xbc] sm:$0xf]
  %v6801 = vld [vmem:[%s1 + $0xc0] sm:$0xf]
  %v6802 = vld [vmem:[%s1 + $0xc4] sm:$0xf]
  %v6803 = vld [vmem:[%s1 + $0xc8] sm:$0xf]
  %v6804 = vld [vmem:[%s1 + $0xcc] sm:$0xf]
  %v6805 = vld [vmem:[%s1 + $0xd0] sm:$0xf]
  %v6806 = vld [vmem:[%s1 + $0xd4] sm:$0xf]
  %v6807 = vld [vmem:[%s1 + $0xd8] sm:$0xf]
  %v6808 = vld [vmem:[%s1 + $0xdc] sm:$0xf]
  %v6809 = vld [vmem:[%s1 + $0xe0] sm:$0xf]
  %v6810 = vld [vmem:[%s1 + $0xe4] sm:$0xf]
  %v6811 = vld [vmem:[%s1 + $0xe8] sm:$0xf]
  %v6812 = vld [vmem:[%s1 + $0xec] sm:$0xf]
  %v6813 = vld [vmem:[%s1 + $0xf0] sm:$0xf]
  %v6814 = vld [vmem:[%s1 + $0xf4] sm:$0xf]
  %v6815 = vld [vmem:[%s1 + $0xf8] sm:$0xf]
  %v6816 = vld [vmem:[%s1 + $0xfc] sm:$0xf]
  %v6817 = vld [vmem:[%s1 + $0x100] sm:$0xf]
  %v6818 = vld [vmem:[%s1 + $0x104] sm:$0xf]
  %v6819 = vld [vmem:[%s1 + $0x108] sm:$0xf]
  %v6820 = vld [vmem:[%s1 + $0x10c] sm:$0xf]
  %v6821 = vld [vmem:[%s1 + $0x110] sm:$0xf]
  %v6822 = vld [vmem:[%s1 + $0x114] sm:$0xf]
  %v6823 = vld [vmem:[%s1 + $0x118] sm:$0xf]
  %v6824 = vld [vmem:[%s1 + $0x11c] sm:$0xf]
  %v6825 = vld [vmem:[%s1 + $0x120] sm:$0xf]
  %v6826 = vld [vmem:[%s1 + $0x124] sm:$0xf]
  %v6827 = vld [vmem:[%s1 + $0x128] sm:$0xf]
  %v6828 = vld [vmem:[%s1 + $0x12c] sm:$0xf]
  %v6829 = vld [vmem:[%s1 + $0x130] sm:$0xf]
  %v6830 = vld [vmem:[%s1 + $0x134] sm:$0xf]
  %v6831 = vld [vmem:[%s1 + $0x138] sm:$0xf]
  %v6832 = vld [vmem:[%s1 + $0x13c] sm:$0xf]
  %v6833 = vld [vmem:[%s1 + $0x140] sm:$0xf]
  %v6834 = vld [vmem:[%s1 + $0x144] sm:$0xf]
  %v6835 = vld [vmem:[%s1 + $0x148] sm:$0xf]
  %v6836 = vld [vmem:[%s1 + $0x14c] sm:$0xf]
  %v6837 = vld [vmem:[%s1 + $0x150] sm:$0xf]
  %v6838 = vld [vmem:[%s1 + $0x154] sm:$0xf]
  %v6839 = vld [vmem:[%s1 + $0x158] sm:$0xf]
  %v6840 = vld [vmem:[%s1 + $0x15c] sm:$0xf]
  %v6841 = vld [vmem:[%s1 + $0x160] sm:$0xf]
  %v6842 = vld [vmem:[%s1 + $0x164] sm:$0xf]
  %v6843 = vld [vmem:[%s1 + $0x168] sm:$0xf]
  %v6844 = vld [vmem:[%s1 + $0x16c] sm:$0xf]
  %v6845 = vld [vmem:[%s1 + $0x170] sm:$0xf]
  %v6846 = vld [vmem:[%s1 + $0x174] sm:$0xf]
  %v6847 = vld [vmem:[%s1 + $0x178] sm:$0xf]
  %v6848 = vld [vmem:[%s1 + $0x17c] sm:$0xf]
  %v6849 = vld [vmem:[%s1 + $0x180] sm:$0xf]
  %v6850 = vld [vmem:[%s1 + $0x184] sm:$0xf]
  %v6851 = vld [vmem:[%s1 + $0x188] sm:$0xf]
  %v6852 = vld [vmem:[%s1 + $0x18c] sm:$0xf]
  %v6853 = vld [vmem:[%s1 + $0x190] sm:$0xf]
  %v6854 = vld [vmem:[%s1 + $0x194] sm:$0xf]
  %v6855 = vld [vmem:[%s1 + $0x198] sm:$0xf]
  %v6856 = vld [vmem:[%s1 + $0x19c] sm:$0xf]
  %v6857 = vld [vmem:[%s1 + $0x1a0] sm:$0xf]
  %v6858 = vld [vmem:[%s1 + $0x1a4] sm:$0xf]
  %v6859 = vld [vmem:[%s1 + $0x1a8] sm:$0xf]
  %v6860 = vld [vmem:[%s1 + $0x1ac] sm:$0xf]
  %v6861 = vld [vmem:[%s1 + $0x1b0] sm:$0xf]
  %v6862 = vld [vmem:[%s1 + $0x1b4] sm:$0xf]
  %v6863 = vld [vmem:[%s1 + $0x1b8] sm:$0xf]
  %v6864 = vld [vmem:[%s1 + $0x1bc] sm:$0xf]
  %v6865 = vld [vmem:[%s1 + $0x1c0] sm:$0xf]
  %v6866 = vld [vmem:[%s1 + $0x1c4] sm:$0xf]
  %v6867 = vld [vmem:[%s1 + $0x1c8] sm:$0xf]
  %v6868 = vld [vmem:[%s1 + $0x1cc] sm:$0xf]
  %v6869 = vld [vmem:[%s1 + $0x1d0] sm:$0xf]
  %v6870 = vld [vmem:[%s1 + $0x1d4] sm:$0xf]
  %v6871 = vld [vmem:[%s1 + $0x1d8] sm:$0xf]
  %v6872 = vld [vmem:[%s1 + $0x1dc] sm:$0xf]
  %v6873 = vld [vmem:[%s1 + $0x1e0] sm:$0xf]
  %v6874 = vld [vmem:[%s1 + $0x1e4] sm:$0xf]
  %v6875 = vld [vmem:[%s1 + $0x1e8] sm:$0xf]
  %v6876 = vld [vmem:[%s1 + $0x1ec] sm:$0xf]
  %v6877 = vld [vmem:[%s1 + $0x1f0] sm:$0xf]
  %v6878 = vld [vmem:[%s1 + $0x1f4] sm:$0xf]
  %v6879 = vld [vmem:[%s1 + $0x1f8] sm:$0xf]
  %v6880 = vld [vmem:[%s1 + $0x1fc] sm:$0xf]
  %v6881 = vld [vmem:[%s1 + $0x200] sm:$0xf]
  %v6882 = vld [vmem:[%s1 + $0x204] sm:$0xf]
  %v6883 = vld [vmem:[%s1 + $0x208] sm:$0xf]
  %v6884 = vld [vmem:[%s1 + $0x20c] sm:$0xf]
  %v6885 = vld [vmem:[%s1 + $0x210] sm:$0xf]
  %v6886 = vld [vmem:[%s1 + $0x214] sm:$0xf]
  %v6887 = vld [vmem:[%s1 + $0x218] sm:$0xf]
  %v6888 = vld [vmem:[%s1 + $0x21c] sm:$0xf]
  %v6889 = vld [vmem:[%s1 + $0x220] sm:$0xf]
  %v6890 = vld [vmem:[%s1 + $0x224] sm:$0xf]
  %v6891 = vld [vmem:[%s1 + $0x228] sm:$0xf]
  %v6892 = vld [vmem:[%s1 + $0x22c] sm:$0xf]
  %v6893 = vld [vmem:[%s1 + $0x230] sm:$0xf]
  %v6894 = vld [vmem:[%s1 + $0x234] sm:$0xf]
  %v6895 = vld [vmem:[%s1 + $0x238] sm:$0xf]
  %v6896 = vld [vmem:[%s1 + $0x23c] sm:$0xf]
  %v7041 = vunpack.c.l.b16 %v6753
  %v7042 = vunpack.c.l.b16 %v6754
  %v7043 = vunpack.c.l.b16 %v6755
  %v7044 = vunpack.c.l.b16 %v6756
  %v7045 = vunpack.c.l.b16 %v6757
  %v7046 = vunpack.c.l.b16 %v6758
  %v7047 = vunpack.c.l.b16 %v6759
  %v7048 = vunpack.c.l.b16 %v6760
  %v7049 = vunpack.c.l.b16 %v6761
  %v7050 = vunpack.c.l.b16 %v6762
  %v7051 = vunpack.c.l.b16 %v6763
  %v7052 = vunpack.c.l.b16 %v6764
  %v7053 = vunpack.c.l.b16 %v6765
  %v7054 = vunpack.c.l.b16 %v6766
  %v7055 = vunpack.c.l.b16 %v6767
  %v7056 = vunpack.c.l.b16 %v6768
  %v7057 = vunpack.c.l.b16 %v6769
  %v7058 = vunpack.c.l.b16 %v6770
  %v7059 = vunpack.c.l.b16 %v6771
  %v7060 = vunpack.c.l.b16 %v6772
  %v7061 = vunpack.c.l.b16 %v6773
  %v7062 = vunpack.c.l.b16 %v6774
  %v7063 = vunpack.c.l.b16 %v6775
  %v7064 = vunpack.c.l.b16 %v6776
  %v7065 = vunpack.c.l.b16 %v6777
  %v7066 = vunpack.c.l.b16 %v6778
  %v7067 = vunpack.c.l.b16 %v6779
  %v7068 = vunpack.c.l.b16 %v6780
  %v7069 = vunpack.c.l.b16 %v6781
  %v7070 = vunpack.c.l.b16 %v6782
  %v7071 = vunpack.c.l.b16 %v6783
  %v7072 = vunpack.c.l.b16 %v6784
  %v7073 = vunpack.c.l.b16 %v6785
  %v7074 = vunpack.c.l.b16 %v6786
  %v7075 = vunpack.c.l.b16 %v6787
  %v7076 = vunpack.c.l.b16 %v6788
  %v7077 = vunpack.c.l.b16 %v6789
  %v7078 = vunpack.c.l.b16 %v6790
  %v7079 = vunpack.c.l.b16 %v6791
  %v7080 = vunpack.c.l.b16 %v6792
  %v7081 = vunpack.c.l.b16 %v6793
  %v7082 = vunpack.c.l.b16 %v6794
  %v7083 = vunpack.c.l.b16 %v6795
  %v7084 = vunpack.c.l.b16 %v6796
  %v7085 = vunpack.c.l.b16 %v6797
  %v7086 = vunpack.c.l.b16 %v6798
  %v7087 = vunpack.c.l.b16 %v6799
  %v7088 = vunpack.c.l.b16 %v6800
  %v7089 = vunpack.c.l.b16 %v6801
  %v7090 = vunpack.c.l.b16 %v6802
  %v7091 = vunpack.c.l.b16 %v6803
  %v7092 = vunpack.c.l.b16 %v6804
  %v7093 = vunpack.c.l.b16 %v6805
  %v7094 = vunpack.c.l.b16 %v6806
  %v7095 = vunpack.c.l.b16 %v6807
  %v7096 = vunpack.c.l.b16 %v6808
  %v7097 = vunpack.c.l.b16 %v6809
  %v7098 = vunpack.c.l.b16 %v6810
  %v7099 = vunpack.c.l.b16 %v6811
  %v7100 = vunpack.c.l.b16 %v6812
  %v7101 = vunpack.c.l.b16 %v6813
  %v7102 = vunpack.c.l.b16 %v6814
  %v7103 = vunpack.c.l.b16 %v6815
  %v7104 = vunpack.c.l.b16 %v6816
  %v7105 = vunpack.c.l.b16 %v6817
  %v7106 = vunpack.c.l.b16 %v6818
  %v7107 = vunpack.c.l.b16 %v6819
  %v7108 = vunpack.c.l.b16 %v6820
  %v7109 = vunpack.c.l.b16 %v6821
  %v7110 = vunpack.c.l.b16 %v6822
  %v7111 = vunpack.c.l.b16 %v6823
  %v7112 = vunpack.c.l.b16 %v6824
  %v7113 = vunpack.c.l.b16 %v6825
  %v7114 = vunpack.c.l.b16 %v6826
  %v7115 = vunpack.c.l.b16 %v6827
  %v7116 = vunpack.c.l.b16 %v6828
  %v7117 = vunpack.c.l.b16 %v6829
  %v7118 = vunpack.c.l.b16 %v6830
  %v7119 = vunpack.c.l.b16 %v6831
  %v7120 = vunpack.c.l.b16 %v6832
  %v7121 = vunpack.c.l.b16 %v6833
  %v7122 = vunpack.c.l.b16 %v6834
  %v7123 = vunpack.c.l.b16 %v6835
  %v7124 = vunpack.c.l.b16 %v6836
  %v7125 = vunpack.c.l.b16 %v6837
  %v7126 = vunpack.c.l.b16 %v6838
  %v7127 = vunpack.c.l.b16 %v6839
  %v7128 = vunpack.c.l.b16 %v6840
  %v7129 = vunpack.c.l.b16 %v6841
  %v7130 = vunpack.c.l.b16 %v6842
  %v7131 = vunpack.c.l.b16 %v6843
  %v7132 = vunpack.c.l.b16 %v6844
  %v7133 = vunpack.c.l.b16 %v6845
  %v7134 = vunpack.c.l.b16 %v6846
  %v7135 = vunpack.c.l.b16 %v6847
  %v7136 = vunpack.c.l.b16 %v6848
  %v7137 = vunpack.c.l.b16 %v6849
  %v7138 = vunpack.c.l.b16 %v6850
  %v7139 = vunpack.c.l.b16 %v6851
  %v7140 = vunpack.c.l.b16 %v6852
  %v7141 = vunpack.c.l.b16 %v6853
  %v7142 = vunpack.c.l.b16 %v6854
  %v7143 = vunpack.c.l.b16 %v6855
  %v7144 = vunpack.c.l.b16 %v6856
  %v7145 = vunpack.c.l.b16 %v6857
  %v7146 = vunpack.c.l.b16 %v6858
  %v7147 = vunpack.c.l.b16 %v6859
  %v7148 = vunpack.c.l.b16 %v6860
  %v7149 = vunpack.c.l.b16 %v6861
  %v7150 = vunpack.c.l.b16 %v6862
  %v7151 = vunpack.c.l.b16 %v6863
  %v7152 = vunpack.c.l.b16 %v6864
  %v7153 = vunpack.c.l.b16 %v6865
  %v7154 = vunpack.c.l.b16 %v6866
  %v7155 = vunpack.c.l.b16 %v6867
  %v7156 = vunpack.c.l.b16 %v6868
  %v7157 = vunpack.c.l.b16 %v6869
  %v7158 = vunpack.c.l.b16 %v6870
  %v7159 = vunpack.c.l.b16 %v6871
  %v7160 = vunpack.c.l.b16 %v6872
  %v7161 = vunpack.c.l.b16 %v6873
  %v7162 = vunpack.c.l.b16 %v6874
  %v7163 = vunpack.c.l.b16 %v6875
  %v7164 = vunpack.c.l.b16 %v6876
  %v7165 = vunpack.c.l.b16 %v6877
  %v7166 = vunpack.c.l.b16 %v6878
  %v7167 = vunpack.c.l.b16 %v6879
  %v7168 = vunpack.c.l.b16 %v6880
  %v7169 = vunpack.c.l.b16 %v6881
  %v7170 = vunpack.c.l.b16 %v6882
  %v7171 = vunpack.c.l.b16 %v6883
  %v7172 = vunpack.c.l.b16 %v6884
  %v7173 = vunpack.c.l.b16 %v6885
  %v7174 = vunpack.c.l.b16 %v6886
  %v7175 = vunpack.c.l.b16 %v6887
  %v7176 = vunpack.c.l.b16 %v6888
  %v7177 = vunpack.c.l.b16 %v6889
  %v7178 = vunpack.c.l.b16 %v6890
  %v7179 = vunpack.c.l.b16 %v6891
  %v7180 = vunpack.c.l.b16 %v6892
  %v7181 = vunpack.c.l.b16 %v6893
  %v7182 = vunpack.c.l.b16 %v6894
  %v7183 = vunpack.c.l.b16 %v6895
  %v7184 = vunpack.c.l.b16 %v6896
  %v7185 = vpack.c.b16 %v7042, %v7041
  %v7186 = vpack.c.b16 %v7044, %v7043
  %v7187 = vpack.c.b16 %v7046, %v7045
  %v7188 = vpack.c.b16 %v7048, %v7047
  %v7189 = vpack.c.b16 %v7050, %v7049
  %v7190 = vpack.c.b16 %v7052, %v7051
  %v7191 = vpack.c.b16 %v7054, %v7053
  %v7192 = vpack.c.b16 %v7056, %v7055
  %v7193 = vpack.c.b16 %v7058, %v7057
  %v7194 = vpack.c.b16 %v7060, %v7059
  %v7195 = vpack.c.b16 %v7062, %v7061
  %v7196 = vpack.c.b16 %v7064, %v7063
  %v7197 = vpack.c.b16 %v7066, %v7065
  %v7198 = vpack.c.b16 %v7068, %v7067
  %v7199 = vpack.c.b16 %v7070, %v7069
  %v7200 = vpack.c.b16 %v7072, %v7071
  %v7201 = vpack.c.b16 %v7074, %v7073
  %v7202 = vpack.c.b16 %v7076, %v7075
  %v7203 = vpack.c.b16 %v7078, %v7077
  %v7204 = vpack.c.b16 %v7080, %v7079
  %v7205 = vpack.c.b16 %v7082, %v7081
  %v7206 = vpack.c.b16 %v7084, %v7083
  %v7207 = vpack.c.b16 %v7086, %v7085
  %v7208 = vpack.c.b16 %v7088, %v7087
  %v7209 = vpack.c.b16 %v7090, %v7089
  %v7210 = vpack.c.b16 %v7092, %v7091
  %v7211 = vpack.c.b16 %v7094, %v7093
  %v7212 = vpack.c.b16 %v7096, %v7095
  %v7213 = vpack.c.b16 %v7098, %v7097
  %v7214 = vpack.c.b16 %v7100, %v7099
  %v7215 = vpack.c.b16 %v7102, %v7101
  %v7216 = vpack.c.b16 %v7104, %v7103
  %v7217 = vpack.c.b16 %v7106, %v7105
  %v7218 = vpack.c.b16 %v7108, %v7107
  %v7219 = vpack.c.b16 %v7110, %v7109
  %v7220 = vpack.c.b16 %v7112, %v7111
  %v7221 = vpack.c.b16 %v7114, %v7113
  %v7222 = vpack.c.b16 %v7116, %v7115
  %v7223 = vpack.c.b16 %v7118, %v7117
  %v7224 = vpack.c.b16 %v7120, %v7119
  %v7225 = vpack.c.b16 %v7122, %v7121
  %v7226 = vpack.c.b16 %v7124, %v7123
  %v7227 = vpack.c.b16 %v7126, %v7125
  %v7228 = vpack.c.b16 %v7128, %v7127
  %v7229 = vpack.c.b16 %v7130, %v7129
  %v7230 = vpack.c.b16 %v7132, %v7131
  %v7231 = vpack.c.b16 %v7134, %v7133
  %v7232 = vpack.c.b16 %v7136, %v7135
  %v7233 = vpack.c.b16 %v7138, %v7137
  %v7234 = vpack.c.b16 %v7140, %v7139
  %v7235 = vpack.c.b16 %v7142, %v7141
  %v7236 = vpack.c.b16 %v7144, %v7143
  %v7237 = vpack.c.b16 %v7146, %v7145
  %v7238 = vpack.c.b16 %v7148, %v7147
  %v7239 = vpack.c.b16 %v7150, %v7149
  %v7240 = vpack.c.b16 %v7152, %v7151
  %v7241 = vpack.c.b16 %v7154, %v7153
  %v7242 = vpack.c.b16 %v7156, %v7155
  %v7243 = vpack.c.b16 %v7158, %v7157
  %v7244 = vpack.c.b16 %v7160, %v7159
  %v7245 = vpack.c.b16 %v7162, %v7161
  %v7246 = vpack.c.b16 %v7164, %v7163
  %v7247 = vpack.c.b16 %v7166, %v7165
  %v7248 = vpack.c.b16 %v7168, %v7167
  %v7249 = vpack.c.b16 %v7170, %v7169
  %v7250 = vpack.c.b16 %v7172, %v7171
  %v7251 = vpack.c.b16 %v7174, %v7173
  %v7252 = vpack.c.b16 %v7176, %v7175
  %v7253 = vpack.c.b16 %v7178, %v7177
  %v7254 = vpack.c.b16 %v7180, %v7179
  %v7255 = vpack.c.b16 %v7182, %v7181
  %v7256 = vpack.c.b16 %v7184, %v7183
  %7329 = vmatprep.subr.bf16.mxu0 0
  %7330 = vmatpush1.bf16.msra.mxu0 %v7185
  %7331 = vmatprep.subr.bf16.mxu0 0
  %7332 = vmatpush1.bf16.msra.mxu0 %v7186
  %7333 = vmatprep.subr.bf16.mxu0 0
  %7334 = vmatpush1.bf16.msra.mxu0 %v7187
  %7335 = vmatprep.subr.bf16.mxu0 0
  %7336 = vmatpush1.bf16.msra.mxu0 %v7188
  %7337 = vmatprep.subr.bf16.mxu0 0
  %7338 = vmatpush1.bf16.msra.mxu0 %v7189
  %7339 = vmatprep.subr.bf16.mxu0 0
  %7340 = vmatpush1.bf16.msra.mxu0 %v7190
  %7341 = vmatprep.subr.bf16.mxu0 0
  %7342 = vmatpush1.bf16.msra.mxu0 %v7191
  %7343 = vmatprep.subr.bf16.mxu0 0
  %7344 = vmatpush1.bf16.msra.mxu0 %v7192
  %7345 = vmatprep.subr.bf16.mxu0 0
  %7346 = vmatpush1.bf16.msra.mxu0 %v7193
  %7347 = vmatprep.subr.bf16.mxu0 0
  %7348 = vmatpush1.bf16.msra.mxu0 %v7194
  %7349 = vmatprep.subr.bf16.mxu0 0
  %7350 = vmatpush1.bf16.msra.mxu0 %v7195
  %7351 = vmatprep.subr.bf16.mxu0 0
  %7352 = vmatpush1.bf16.msra.mxu0 %v7196
  %7353 = vmatprep.subr.bf16.mxu0 0
  %7354 = vmatpush1.bf16.msra.mxu0 %v7197
  %7355 = vmatprep.subr.bf16.mxu0 0
  %7356 = vmatpush1.bf16.msra.mxu0 %v7198
  %7357 = vmatprep.subr.bf16.mxu0 0
  %7358 = vmatpush1.bf16.msra.mxu0 %v7199
  %7359 = vmatprep.subr.bf16.mxu0 0
  %7360 = vmatpush1.bf16.msra.mxu0 %v7200
  %7361 = vmatprep.mubr.bf16.mxu0 %v6466
  %7362 = vmatmul.mubr.bf16.gmra.mrb[0].mxu0 %v6465
  %v7363 = vpop.f32.mrb[0].mxu0
  %v7364 = vadd.f32 0.0, %v7363
  %v7365 = vpop.f32.mrb[0].mxu0
  %v7366 = vpop.f32.mrb[0].mxu0
  %v7367 = vadd.f32 0.0, %v7366
  %v7368 = vpop.f32.mrb[0].mxu0
  %7369 = vmatprep.mubr.bf16.mxu0 %v6475
  %7370 = vmatmul.mubr.bf16.gmra.mrb[0].mxu0 %v6474
  %v7371 = vpop.f32.mrb[0].mxu0
  %v7372 = vadd.f32 0.0, %v7371
  %v7373 = vpop.f32.mrb[0].mxu0
  %v7374 = vpop.f32.mrb[0].mxu0
  %v7375 = vadd.f32 0.0, %v7374
  %v7376 = vpop.f32.mrb[0].mxu0
  %7377 = vmatprep.mubr.bf16.mxu0 %v6484
  %7378 = vmatmul.mubr.bf16.gmra.mrb[0].mxu0 %v6483
  %v7379 = vpop.f32.mrb[0].mxu0
  %v7380 = vadd.f32 0.0, %v7379
  %v7381 = vpop.f32.mrb[0].mxu0
  %v7382 = vpop.f32.mrb[0].mxu0
  %v7383 = vadd.f32 0.0, %v7382
  %v7384 = vpop.f32.mrb[0].mxu0
  %7385 = vmatprep.mubr.bf16.mxu0 %v6493
  %7386 = vmatmul.mubr.bf16.gmra.mrb[0].mxu0 %v6492
  %v7387 = vpop.f32.mrb[0].mxu0
  %v7388 = vadd.f32 0.0, %v7387
  %v7389 = vpop.f32.mrb[0].mxu0
  %v7390 = vpop.f32.mrb[0].mxu0
  %v7391 = vadd.f32 0.0, %v7390
  %v7392 = vpop.f32.mrb[0].mxu0
  %7393 = vmatprep.mubr.bf16.mxu0 %v6502
  %7394 = vmatmul.mubr.bf16.gmra.mrb[0].mxu0 %v6501
  %v7395 = vpop.f32.mrb[0].mxu0
  %v7396 = vadd.f32 0.0, %v7395
  %v7397 = vpop.f32.mrb[0].mxu0
  %v7398 = vpop.f32.mrb[0].mxu0
  %v7399 = vadd.f32 0.0, %v7398
  %v7400 = vpop.f32.mrb[0].mxu0
  %7401 = vmatprep.mubr.bf16.mxu0 %v6511
  %7402 = vmatmul.mubr.bf16.gmra.mrb[0].mxu0 %v6510
  %v7403 = vpop.f32.mrb[0].mxu0
  %v7404 = vadd.f32 0.0, %v7403
  %v7405 = vpop.f32.mrb[0].mxu0
  %v7406 = vpop.f32.mrb[0].mxu0
  %v7407 = vadd.f32 0.0, %v7406
  %v7408 = vpop.f32.mrb[0].mxu0
  %7409 = vmatprep.mubr.bf16.mxu0 %v6520
  %7410 = vmatmul.mubr.bf16.gmra.mrb[0].mxu0 %v6519
  %v7411 = vpop.f32.mrb[0].mxu0
  %v7412 = vadd.f32 0.0, %v7411
  %v7413 = vpop.f32.mrb[0].mxu0
  %v7414 = vpop.f32.mrb[0].mxu0
  %v7415 = vadd.f32 0.0, %v7414
  %v7416 = vpop.f32.mrb[0].mxu0
  %7417 = vmatprep.mubr.bf16.mxu0 %v6529
  %7418 = vmatmul.mubr.bf16.gmra.mrb[0].mxu0 %v6528
  %v7419 = vpop.f32.mrb[0].mxu0
  %v7420 = vadd.f32 0.0, %v7419
  %v7421 = vpop.f32.mrb[0].mxu0
  %v7422 = vpop.f32.mrb[0].mxu0
  %v7423 = vadd.f32 0.0, %v7422
  %v7424 = vpop.f32.mrb[0].mxu0
  %7425 = vmatprep.mubr.bf16.mxu0 %v6538
  %7426 = vmatmul.mubr.bf16.gmra.mrb[0].mxu0 %v6537
  %v7427 = vpop.f32.mrb[0].mxu0
  %v7428 = vadd.f32 0.0, %v7427
  %v7429 = vpop.f32.mrb[0].mxu0
  %v7430 = vpop.f32.mrb[0].mxu0
  %v7431 = vadd.f32 0.0, %v7430
  %v7432 = vpop.f32.mrb[0].mxu0
  %7433 = vmatprep.mubr.bf16.mxu0 %v6547
  %7434 = vmatmul.mubr.bf16.gmra.mrb[0].mxu0 %v6546
  %v7435 = vpop.f32.mrb[0].mxu0
  %v7436 = vadd.f32 0.0, %v7435
  %v7437 = vpop.f32.mrb[0].mxu0
  %v7438 = vpop.f32.mrb[0].mxu0
  %v7439 = vadd.f32 0.0, %v7438
  %v7440 = vpop.f32.mrb[0].mxu0
  %7441 = vmatprep.mubr.bf16.mxu0 %v6556
  %7442 = vmatmul.mubr.bf16.gmra.mrb[0].mxu0 %v6555
  %v7443 = vpop.f32.mrb[0].mxu0
  %v7444 = vadd.f32 0.0, %v7443
  %v7445 = vpop.f32.mrb[0].mxu0
  %v7446 = vpop.f32.mrb[0].mxu0
  %v7447 = vadd.f32 0.0, %v7446
  %v7448 = vpop.f32.mrb[0].mxu0
  %7449 = vmatprep.mubr.bf16.mxu0 %v6565
  %7450 = vmatmul.mubr.bf16.gmra.mrb[0].mxu0 %v6564
  %v7451 = vpop.f32.mrb[0].mxu0
  %v7452 = vadd.f32 0.0, %v7451
  %v7453 = vpop.f32.mrb[0].mxu0
  %v7454 = vpop.f32.mrb[0].mxu0
  %v7455 = vadd.f32 0.0, %v7454
  %v7456 = vpop.f32.mrb[0].mxu0
  %7457 = vmatprep.mubr.bf16.mxu0 %v6574
  %7458 = vmatmul.mubr.bf16.gmra.mrb[0].mxu0 %v6573
  %v7459 = vpop.f32.mrb[0].mxu0
  %v7460 = vadd.f32 0.0, %v7459
  %v7461 = vpop.f32.mrb[0].mxu0
  %v7462 = vpop.f32.mrb[0].mxu0
  %v7463 = vadd.f32 0.0, %v7462
  %v7464 = vpop.f32.mrb[0].mxu0
  %7465 = vmatprep.mubr.bf16.mxu0 %v6583
  %7466 = vmatmul.mubr.bf16.gmra.mrb[0].mxu0 %v6582
  %v7467 = vpop.f32.mrb[0].mxu0
  %v7468 = vadd.f32 0.0, %v7467
  %v7469 = vpop.f32.mrb[0].mxu0
  %v7470 = vpop.f32.mrb[0].mxu0
  %v7471 = vadd.f32 0.0, %v7470
  %v7472 = vpop.f32.mrb[0].mxu0
  %7473 = vmatprep.mubr.bf16.mxu0 %v6592
  %7474 = vmatmul.mubr.bf16.gmra.mrb[0].mxu0 %v6591
  %v7475 = vpop.f32.mrb[0].mxu0
  %v7476 = vadd.f32 0.0, %v7475
  %v7477 = vpop.f32.mrb[0].mxu0
  %v7478 = vpop.f32.mrb[0].mxu0
  %v7479 = vadd.f32 0.0, %v7478
  %v7480 = vpop.f32.mrb[0].mxu0
  %7481 = vmatprep.mubr.bf16.mxu0 %v6601
  %7482 = vmatmul.mubr.bf16.gmra.mrb[0].mxu0 %v6600
  %v7483 = vpop.f32.mrb[0].mxu0
  %v7484 = vadd.f32 0.0, %v7483
  %v7485 = vpop.f32.mrb[0].mxu0
  %v7486 = vpop.f32.mrb[0].mxu0
  %v7487 = vadd.f32 0.0, %v7486
  %v7488 = vpop.f32.mrb[0].mxu0
  %7489 = vmatprep.mubr.bf16.mxu0 %v6610
  %7490 = vmatmul.mubr.bf16.gmra.mrb[0].mxu0 %v6609
  %v7491 = vpop.f32.mrb[0].mxu0
  %v7492 = vadd.f32 0.0, %v7491
  %v7493 = vpop.f32.mrb[0].mxu0
  %v7494 = vpop.f32.mrb[0].mxu0
  %v7495 = vadd.f32 0.0, %v7494
  %v7496 = vpop.f32.mrb[0].mxu0
  %7497 = vmatprep.mubr.bf16.mxu0 %v6619
  %7498 = vmatmul.mubr.bf16.gmra.mrb[0].mxu0 %v6618
  %v7499 = vpop.f32.mrb[0].mxu0
  %v7500 = vadd.f32 0.0, %v7499
  %v7501 = vpop.f32.mrb[0].mxu0
  %v7502 = vpop.f32.mrb[0].mxu0
  %v7503 = vadd.f32 0.0, %v7502
  %v7504 = vpop.f32.mrb[0].mxu0
  %7505 = vmatprep.mubr.bf16.mxu0 %v6628
  %7506 = vmatmul.mubr.bf16.gmra.mrb[0].mxu0 %v6627
  %v7507 = vpop.f32.mrb[0].mxu0
  %v7508 = vadd.f32 0.0, %v7507
  %v7509 = vpop.f32.mrb[0].mxu0
  %v7510 = vpop.f32.mrb[0].mxu0
  %v7511 = vadd.f32 0.0, %v7510
  %v7512 = vpop.f32.mrb[0].mxu0
  %7513 = vmatprep.mubr.bf16.mxu0 %v6637
  %7514 = vmatmul.mubr.bf16.gmra.mrb[0].mxu0 %v6636
  %v7515 = vpop.f32.mrb[0].mxu0
  %v7516 = vadd.f32 0.0, %v7515
  %v7517 = vpop.f32.mrb[0].mxu0
  %v7518 = vpop.f32.mrb[0].mxu0
  %v7519 = vadd.f32 0.0, %v7518
  %v7520 = vpop.f32.mrb[0].mxu0
  %7521 = vmatprep.mubr.bf16.mxu0 %v6646
  %7522 = vmatmul.mubr.bf16.gmra.mrb[0].mxu0 %v6645
  %v7523 = vpop.f32.mrb[0].mxu0
  %v7524 = vadd.f32 0.0, %v7523
  %v7525 = vpop.f32.mrb[0].mxu0
  %v7526 = vpop.f32.mrb[0].mxu0
  %v7527 = vadd.f32 0.0, %v7526
  %v7528 = vpop.f32.mrb[0].mxu0
  %7529 = vmatprep.mubr.bf16.mxu0 %v6655
  %7530 = vmatmul.mubr.bf16.gmra.mrb[0].mxu0 %v6654
  %v7531 = vpop.f32.mrb[0].mxu0
  %v7532 = vadd.f32 0.0, %v7531
  %v7533 = vpop.f32.mrb[0].mxu0
  %v7534 = vpop.f32.mrb[0].mxu0
  %v7535 = vadd.f32 0.0, %v7534
  %v7536 = vpop.f32.mrb[0].mxu0
  %7537 = vmatprep.mubr.bf16.mxu0 %v6664
  %7538 = vmatmul.mubr.bf16.gmra.mrb[0].mxu0 %v6663
  %v7539 = vpop.f32.mrb[0].mxu0
  %v7540 = vadd.f32 0.0, %v7539
  %v7541 = vpop.f32.mrb[0].mxu0
  %v7542 = vpop.f32.mrb[0].mxu0
  %v7543 = vadd.f32 0.0, %v7542
  %v7544 = vpop.f32.mrb[0].mxu0
  %7545 = vmatprep.mubr.bf16.mxu0 %v6673
  %7546 = vmatmul.mubr.bf16.gmra.mrb[0].mxu0 %v6672
  %v7547 = vpop.f32.mrb[0].mxu0
  %v7548 = vadd.f32 0.0, %v7547
  %v7549 = vpop.f32.mrb[0].mxu0
  %v7550 = vpop.f32.mrb[0].mxu0
  %v7551 = vadd.f32 0.0, %v7550
  %v7552 = vpop.f32.mrb[0].mxu0
  %7553 = vmatprep.mubr.bf16.mxu0 %v6682
  %7554 = vmatmul.mubr.bf16.gmra.mrb[0].mxu0 %v6681
  %v7555 = vpop.f32.mrb[0].mxu0
  %v7556 = vadd.f32 0.0, %v7555
  %v7557 = vpop.f32.mrb[0].mxu0
  %v7558 = vpop.f32.mrb[0].mxu0
  %v7559 = vadd.f32 0.0, %v7558
  %v7560 = vpop.f32.mrb[0].mxu0
  %7561 = vmatprep.mubr.bf16.mxu0 %v6691
  %7562 = vmatmul.mubr.bf16.gmra.mrb[0].mxu0 %v6690
  %v7563 = vpop.f32.mrb[0].mxu0
  %v7564 = vadd.f32 0.0, %v7563
  %v7565 = vpop.f32.mrb[0].mxu0
  %v7566 = vpop.f32.mrb[0].mxu0
  %v7567 = vadd.f32 0.0, %v7566
  %v7568 = vpop.f32.mrb[0].mxu0
  %7569 = vmatprep.mubr.bf16.mxu0 %v6700
  %7570 = vmatmul.mubr.bf16.gmra.mrb[0].mxu0 %v6699
  %v7571 = vpop.f32.mrb[0].mxu0
  %v7572 = vadd.f32 0.0, %v7571
  %v7573 = vpop.f32.mrb[0].mxu0
  %v7574 = vpop.f32.mrb[0].mxu0
  %v7575 = vadd.f32 0.0, %v7574
  %v7576 = vpop.f32.mrb[0].mxu0
  %7577 = vmatprep.mubr.bf16.mxu0 %v6709
  %7578 = vmatmul.mubr.bf16.gmra.mrb[0].mxu0 %v6708
  %v7579 = vpop.f32.mrb[0].mxu0
  %v7580 = vadd.f32 0.0, %v7579
  %v7581 = vpop.f32.mrb[0].mxu0
  %v7582 = vpop.f32.mrb[0].mxu0
  %v7583 = vadd.f32 0.0, %v7582
  %v7584 = vpop.f32.mrb[0].mxu0
  %7585 = vmatprep.mubr.bf16.mxu0 %v6718
  %7586 = vmatmul.mubr.bf16.gmra.mrb[0].mxu0 %v6717
  %v7587 = vpop.f32.mrb[0].mxu0
  %v7588 = vadd.f32 0.0, %v7587
  %v7589 = vpop.f32.mrb[0].mxu0
  %v7590 = vpop.f32.mrb[0].mxu0
  %v7591 = vadd.f32 0.0, %v7590
  %v7592 = vpop.f32.mrb[0].mxu0
  %7593 = vmatprep.mubr.bf16.mxu0 %v6727
  %7594 = vmatmul.mubr.bf16.gmra.mrb[0].mxu0 %v6726
  %v7595 = vpop.f32.mrb[0].mxu0
  %v7596 = vadd.f32 0.0, %v7595
  %v7597 = vpop.f32.mrb[0].mxu0
  %v7598 = vpop.f32.mrb[0].mxu0
  %v7599 = vadd.f32 0.0, %v7598
  %v7600 = vpop.f32.mrb[0].mxu0
  %7601 = vmatprep.mubr.bf16.mxu0 %v6736
  %7602 = vmatmul.mubr.bf16.gmra.mrb[0].mxu0 %v6735
  %v7603 = vpop.f32.mrb[0].mxu0
  %v7604 = vadd.f32 0.0, %v7603
  %v7605 = vpop.f32.mrb[0].mxu0
  %v7606 = vpop.f32.mrb[0].mxu0
  %v7607 = vadd.f32 0.0, %v7606
  %v7608 = vpop.f32.mrb[0].mxu0
  %7609 = vmatprep.mubr.bf16.mxu0 %v6745
  %7610 = vmatmul.mubr.bf16.gmra.mrb[0].mxu0 %v6744
  %v7611 = vpop.f32.mrb[0].mxu0
  %v7612 = vadd.f32 0.0, %v7611
  %v7613 = vpop.f32.mrb[0].mxu0
  %v7614 = vpop.f32.mrb[0].mxu0
  %v7615 = vadd.f32 0.0, %v7614
  %v7616 = vpop.f32.mrb[0].mxu0
  %7617 = vdwg.mxu0
  %7618 = vmatprep.subr.bf16.mxu0 0
  %7619 = vmatpush1.bf16.msra.mxu0 %v7201
  %7620 = vmatprep.subr.bf16.mxu0 0
  %7621 = vmatpush1.bf16.msra.mxu0 %v7202
  %7622 = vmatprep.subr.bf16.mxu0 0
  %7623 = vmatpush1.bf16.msra.mxu0 %v7203
  %7624 = vmatprep.subr.bf16.mxu0 0
  %7625 = vmatpush1.bf16.msra.mxu0 %v7204
  %7626 = vmatprep.subr.bf16.mxu0 0
  %7627 = vmatpush1.bf16.msra.mxu0 %v7205
  %7628 = vmatprep.subr.bf16.mxu0 0
  %7629 = vmatpush1.bf16.msra.mxu0 %v7206
  %7630 = vmatprep.subr.bf16.mxu0 0
  %7631 = vmatpush1.bf16.msra.mxu0 %v7207
  %7632 = vmatprep.subr.bf16.mxu0 0
  %7633 = vmatpush1.bf16.msra.mxu0 %v7208
  %7634 = vmatprep.subr.bf16.mxu0 0
  %7635 = vmatpush1.bf16.msra.mxu0 %v7209
  %7636 = vmatprep.subr.bf16.mxu0 0
  %7637 = vmatpush1.bf16.msra.mxu0 %v7210
  %7638 = vmatprep.subr.bf16.mxu0 0
  %7639 = vmatpush1.bf16.msra.mxu0 %v7211
  %7640 = vmatprep.subr.bf16.mxu0 0
  %7641 = vmatpush1.bf16.msra.mxu0 %v7212
  %7642 = vmatprep.subr.bf16.mxu0 0
  %7643 = vmatpush1.bf16.msra.mxu0 %v7213
  %7644 = vmatprep.subr.bf16.mxu0 0
  %7645 = vmatpush1.bf16.msra.mxu0 %v7214
  %7646 = vmatprep.subr.bf16.mxu0 0
  %7647 = vmatpush1.bf16.msra.mxu0 %v7215
  %7648 = vmatprep.subr.bf16.mxu0 0
  %7649 = vmatpush1.bf16.msra.mxu0 %v7216
  %7650 = vmatprep.mubr.bf16.mxu0 %v6468
  %7651 = vmatmul.mubr.bf16.gmra.mrb[0].mxu0 %v6467
  %v7652 = vpop.f32.mrb[0].mxu0
  %v7653 = vadd.f32 %v7364, %v7652
  %v7654 = vpop.f32.mrb[0].mxu0
  %v7655 = vpop.f32.mrb[0].mxu0
  %v7656 = vadd.f32 %v7367, %v7655
  %v7657 = vpop.f32.mrb[0].mxu0
  %7658 = vmatprep.mubr.bf16.mxu0 %v6477
  %7659 = vmatmul.mubr.bf16.gmra.mrb[0].mxu0 %v6476
  %v7660 = vpop.f32.mrb[0].mxu0
  %v7661 = vadd.f32 %v7372, %v7660
  %v7662 = vpop.f32.mrb[0].mxu0
  %v7663 = vpop.f32.mrb[0].mxu0
  %v7664 = vadd.f32 %v7375, %v7663
  %v7665 = vpop.f32.mrb[0].mxu0
  %7666 = vmatprep.mubr.bf16.mxu0 %v6486
  %7667 = vmatmul.mubr.bf16.gmra.mrb[0].mxu0 %v6485
  %v7668 = vpop.f32.mrb[0].mxu0
  %v7669 = vadd.f32 %v7380, %v7668
  %v7670 = vpop.f32.mrb[0].mxu0
  %v7671 = vpop.f32.mrb[0].mxu0
  %v7672 = vadd.f32 %v7383, %v7671
  %v7673 = vpop.f32.mrb[0].mxu0
  %7674 = vmatprep.mubr.bf16.mxu0 %v6495
  %7675 = vmatmul.mubr.bf16.gmra.mrb[0].mxu0 %v6494
  %v7676 = vpop.f32.mrb[0].mxu0
  %v7677 = vadd.f32 %v7388, %v7676
  %v7678 = vpop.f32.mrb[0].mxu0
  %v7679 = vpop.f32.mrb[0].mxu0
  %v7680 = vadd.f32 %v7391, %v7679
  %v7681 = vpop.f32.mrb[0].mxu0
  %7682 = vmatprep.mubr.bf16.mxu0 %v6504
  %7683 = vmatmul.mubr.bf16.gmra.mrb[0].mxu0 %v6503
  %v7684 = vpop.f32.mrb[0].mxu0
  %v7685 = vadd.f32 %v7396, %v7684
  %v7686 = vpop.f32.mrb[0].mxu0
  %v7687 = vpop.f32.mrb[0].mxu0
  %v7688 = vadd.f32 %v7399, %v7687
  %v7689 = vpop.f32.mrb[0].mxu0
  %7690 = vmatprep.mubr.bf16.mxu0 %v6513
  %7691 = vmatmul.mubr.bf16.gmra.mrb[0].mxu0 %v6512
  %v7692 = vpop.f32.mrb[0].mxu0
  %v7693 = vadd.f32 %v7404, %v7692
  %v7694 = vpop.f32.mrb[0].mxu0
  %v7695 = vpop.f32.mrb[0].mxu0
  %v7696 = vadd.f32 %v7407, %v7695
  %v7697 = vpop.f32.mrb[0].mxu0
  %7698 = vmatprep.mubr.bf16.mxu0 %v6522
  %7699 = vmatmul.mubr.bf16.gmra.mrb[0].mxu0 %v6521
  %v7700 = vpop.f32.mrb[0].mxu0
  %v7701 = vadd.f32 %v7412, %v7700
  %v7702 = vpop.f32.mrb[0].mxu0
  %v7703 = vpop.f32.mrb[0].mxu0
  %v7704 = vadd.f32 %v7415, %v7703
  %v7705 = vpop.f32.mrb[0].mxu0
  %7706 = vmatprep.mubr.bf16.mxu0 %v6531
  %7707 = vmatmul.mubr.bf16.gmra.mrb[0].mxu0 %v6530
  %v7708 = vpop.f32.mrb[0].mxu0
  %v7709 = vadd.f32 %v7420, %v7708
  %v7710 = vpop.f32.mrb[0].mxu0
  %v7711 = vpop.f32.mrb[0].mxu0
  %v7712 = vadd.f32 %v7423, %v7711
  %v7713 = vpop.f32.mrb[0].mxu0
  %7714 = vmatprep.mubr.bf16.mxu0 %v6540
  %7715 = vmatmul.mubr.bf16.gmra.mrb[0].mxu0 %v6539
  %v7716 = vpop.f32.mrb[0].mxu0
  %v7717 = vadd.f32 %v7428, %v7716
  %v7718 = vpop.f32.mrb[0].mxu0
  %v7719 = vpop.f32.mrb[0].mxu0
  %v7720 = vadd.f32 %v7431, %v7719
  %v7721 = vpop.f32.mrb[0].mxu0
  %7722 = vmatprep.mubr.bf16.mxu0 %v6549
  %7723 = vmatmul.mubr.bf16.gmra.mrb[0].mxu0 %v6548
  %v7724 = vpop.f32.mrb[0].mxu0
  %v7725 = vadd.f32 %v7436, %v7724
  %v7726 = vpop.f32.mrb[0].mxu0
  %v7727 = vpop.f32.mrb[0].mxu0
  %v7728 = vadd.f32 %v7439, %v7727
  %v7729 = vpop.f32.mrb[0].mxu0
  %7730 = vmatprep.mubr.bf16.mxu0 %v6558
  %7731 = vmatmul.mubr.bf16.gmra.mrb[0].mxu0 %v6557
  %v7732 = vpop.f32.mrb[0].mxu0
  %v7733 = vadd.f32 %v7444, %v7732
  %v7734 = vpop.f32.mrb[0].mxu0
  %v7735 = vpop.f32.mrb[0].mxu0
  %v7736 = vadd.f32 %v7447, %v7735
  %v7737 = vpop.f32.mrb[0].mxu0
  %7738 = vmatprep.mubr.bf16.mxu0 %v6567
  %7739 = vmatmul.mubr.bf16.gmra.mrb[0].mxu0 %v6566
  %v7740 = vpop.f32.mrb[0].mxu0
  %v7741 = vadd.f32 %v7452, %v7740
  %v7742 = vpop.f32.mrb[0].mxu0
  %v7743 = vpop.f32.mrb[0].mxu0
  %v7744 = vadd.f32 %v7455, %v7743
  %v7745 = vpop.f32.mrb[0].mxu0
  %7746 = vmatprep.mubr.bf16.mxu0 %v6576
  %7747 = vmatmul.mubr.bf16.gmra.mrb[0].mxu0 %v6575
  %v7748 = vpop.f32.mrb[0].mxu0
  %v7749 = vadd.f32 %v7460, %v7748
  %v7750 = vpop.f32.mrb[0].mxu0
  %v7751 = vpop.f32.mrb[0].mxu0
  %v7752 = vadd.f32 %v7463, %v7751
  %v7753 = vpop.f32.mrb[0].mxu0
  %7754 = vmatprep.mubr.bf16.mxu0 %v6585
  %7755 = vmatmul.mubr.bf16.gmra.mrb[0].mxu0 %v6584
  %v7756 = vpop.f32.mrb[0].mxu0
  %v7757 = vadd.f32 %v7468, %v7756
  %v7758 = vpop.f32.mrb[0].mxu0
  %v7759 = vpop.f32.mrb[0].mxu0
  %v7760 = vadd.f32 %v7471, %v7759
  %v7761 = vpop.f32.mrb[0].mxu0
  %7762 = vmatprep.mubr.bf16.mxu0 %v6594
  %7763 = vmatmul.mubr.bf16.gmra.mrb[0].mxu0 %v6593
  %v7764 = vpop.f32.mrb[0].mxu0
  %v7765 = vadd.f32 %v7476, %v7764
  %v7766 = vpop.f32.mrb[0].mxu0
  %v7767 = vpop.f32.mrb[0].mxu0
  %v7768 = vadd.f32 %v7479, %v7767
  %v7769 = vpop.f32.mrb[0].mxu0
  %7770 = vmatprep.mubr.bf16.mxu0 %v6603
  %7771 = vmatmul.mubr.bf16.gmra.mrb[0].mxu0 %v6602
  %v7772 = vpop.f32.mrb[0].mxu0
  %v7773 = vadd.f32 %v7484, %v7772
  %v7774 = vpop.f32.mrb[0].mxu0
  %v7775 = vpop.f32.mrb[0].mxu0
  %v7776 = vadd.f32 %v7487, %v7775
  %v7777 = vpop.f32.mrb[0].mxu0
  %7778 = vmatprep.mubr.bf16.mxu0 %v6612
  %7779 = vmatmul.mubr.bf16.gmra.mrb[0].mxu0 %v6611
  %v7780 = vpop.f32.mrb[0].mxu0
  %v7781 = vadd.f32 %v7492, %v7780
  %v7782 = vpop.f32.mrb[0].mxu0
  %v7783 = vpop.f32.mrb[0].mxu0
  %v7784 = vadd.f32 %v7495, %v7783
  %v7785 = vpop.f32.mrb[0].mxu0
  %7786 = vmatprep.mubr.bf16.mxu0 %v6621
  %7787 = vmatmul.mubr.bf16.gmra.mrb[0].mxu0 %v6620
  %v7788 = vpop.f32.mrb[0].mxu0
  %v7789 = vadd.f32 %v7500, %v7788
  %v7790 = vpop.f32.mrb[0].mxu0
  %v7791 = vpop.f32.mrb[0].mxu0
  %v7792 = vadd.f32 %v7503, %v7791
  %v7793 = vpop.f32.mrb[0].mxu0
  %7794 = vmatprep.mubr.bf16.mxu0 %v6630
  %7795 = vmatmul.mubr.bf16.gmra.mrb[0].mxu0 %v6629
  %v7796 = vpop.f32.mrb[0].mxu0
  %v7797 = vadd.f32 %v7508, %v7796
  %v7798 = vpop.f32.mrb[0].mxu0
  %v7799 = vpop.f32.mrb[0].mxu0
  %v7800 = vadd.f32 %v7511, %v7799
  %v7801 = vpop.f32.mrb[0].mxu0
  %7802 = vmatprep.mubr.bf16.mxu0 %v6639
  %7803 = vmatmul.mubr.bf16.gmra.mrb[0].mxu0 %v6638
  %v7804 = vpop.f32.mrb[0].mxu0
  %v7805 = vadd.f32 %v7516, %v7804
  %v7806 = vpop.f32.mrb[0].mxu0
  %v7807 = vpop.f32.mrb[0].mxu0
  %v7808 = vadd.f32 %v7519, %v7807
  %v7809 = vpop.f32.mrb[0].mxu0
  %7810 = vmatprep.mubr.bf16.mxu0 %v6648
  %7811 = vmatmul.mubr.bf16.gmra.mrb[0].mxu0 %v6647
  %v7812 = vpop.f32.mrb[0].mxu0
  %v7813 = vadd.f32 %v7524, %v7812
  %v7814 = vpop.f32.mrb[0].mxu0
  %v7815 = vpop.f32.mrb[0].mxu0
  %v7816 = vadd.f32 %v7527, %v7815
  %v7817 = vpop.f32.mrb[0].mxu0
  %7818 = vmatprep.mubr.bf16.mxu0 %v6657
  %7819 = vmatmul.mubr.bf16.gmra.mrb[0].mxu0 %v6656
  %v7820 = vpop.f32.mrb[0].mxu0
  %v7821 = vadd.f32 %v7532, %v7820
  %v7822 = vpop.f32.mrb[0].mxu0
  %v7823 = vpop.f32.mrb[0].mxu0
  %v7824 = vadd.f32 %v7535, %v7823
  %v7825 = vpop.f32.mrb[0].mxu0
  %7826 = vmatprep.mubr.bf16.mxu0 %v6666
  %7827 = vmatmul.mubr.bf16.gmra.mrb[0].mxu0 %v6665
  %v7828 = vpop.f32.mrb[0].mxu0
  %v7829 = vadd.f32 %v7540, %v7828
  %v7830 = vpop.f32.mrb[0].mxu0
  %v7831 = vpop.f32.mrb[0].mxu0
  %v7832 = vadd.f32 %v7543, %v7831
  %v7833 = vpop.f32.mrb[0].mxu0
  %7834 = vmatprep.mubr.bf16.mxu0 %v6675
  %7835 = vmatmul.mubr.bf16.gmra.mrb[0].mxu0 %v6674
  %v7836 = vpop.f32.mrb[0].mxu0
  %v7837 = vadd.f32 %v7548, %v7836
  %v7838 = vpop.f32.mrb[0].mxu0
  %v7839 = vpop.f32.mrb[0].mxu0
  %v7840 = vadd.f32 %v7551, %v7839
  %v7841 = vpop.f32.mrb[0].mxu0
  %7842 = vmatprep.mubr.bf16.mxu0 %v6684
  %7843 = vmatmul.mubr.bf16.gmra.mrb[0].mxu0 %v6683
  %v7844 = vpop.f32.mrb[0].mxu0
  %v7845 = vadd.f32 %v7556, %v7844
  %v7846 = vpop.f32.mrb[0].mxu0
  %v7847 = vpop.f32.mrb[0].mxu0
  %v7848 = vadd.f32 %v7559, %v7847
  %v7849 = vpop.f32.mrb[0].mxu0
  %7850 = vmatprep.mubr.bf16.mxu0 %v6693
  %7851 = vmatmul.mubr.bf16.gmra.mrb[0].mxu0 %v6692
  %v7852 = vpop.f32.mrb[0].mxu0
  %v7853 = vadd.f32 %v7564, %v7852
  %v7854 = vpop.f32.mrb[0].mxu0
  %v7855 = vpop.f32.mrb[0].mxu0
  %v7856 = vadd.f32 %v7567, %v7855
  %v7857 = vpop.f32.mrb[0].mxu0
  %7858 = vmatprep.mubr.bf16.mxu0 %v6702
  %7859 = vmatmul.mubr.bf16.gmra.mrb[0].mxu0 %v6701
  %v7860 = vpop.f32.mrb[0].mxu0
  %v7861 = vadd.f32 %v7572, %v7860
  %v7862 = vpop.f32.mrb[0].mxu0
  %v7863 = vpop.f32.mrb[0].mxu0
  %v7864 = vadd.f32 %v7575, %v7863
  %v7865 = vpop.f32.mrb[0].mxu0
  %7866 = vmatprep.mubr.bf16.mxu0 %v6711
  %7867 = vmatmul.mubr.bf16.gmra.mrb[0].mxu0 %v6710
  %v7868 = vpop.f32.mrb[0].mxu0
  %v7869 = vadd.f32 %v7580, %v7868
  %v7870 = vpop.f32.mrb[0].mxu0
  %v7871 = vpop.f32.mrb[0].mxu0
  %v7872 = vadd.f32 %v7583, %v7871
  %v7873 = vpop.f32.mrb[0].mxu0
  %7874 = vmatprep.mubr.bf16.mxu0 %v6720
  %7875 = vmatmul.mubr.bf16.gmra.mrb[0].mxu0 %v6719
  %v7876 = vpop.f32.mrb[0].mxu0
  %v7877 = vadd.f32 %v7588, %v7876
  %v7878 = vpop.f32.mrb[0].mxu0
  %v7879 = vpop.f32.mrb[0].mxu0
  %v7880 = vadd.f32 %v7591, %v7879
  %v7881 = vpop.f32.mrb[0].mxu0
  %7882 = vmatprep.mubr.bf16.mxu0 %v6729
  %7883 = vmatmul.mubr.bf16.gmra.mrb[0].mxu0 %v6728
  %v7884 = vpop.f32.mrb[0].mxu0
  %v7885 = vadd.f32 %v7596, %v7884
  %v7886 = vpop.f32.mrb[0].mxu0
  %v7887 = vpop.f32.mrb[0].mxu0
  %v7888 = vadd.f32 %v7599, %v7887
  %v7889 = vpop.f32.mrb[0].mxu0
  %7890 = vmatprep.mubr.bf16.mxu0 %v6738
  %7891 = vmatmul.mubr.bf16.gmra.mrb[0].mxu0 %v6737
  %v7892 = vpop.f32.mrb[0].mxu0
  %v7893 = vadd.f32 %v7604, %v7892
  %v7894 = vpop.f32.mrb[0].mxu0
  %v7895 = vpop.f32.mrb[0].mxu0
  %v7896 = vadd.f32 %v7607, %v7895
  %v7897 = vpop.f32.mrb[0].mxu0
  %7898 = vmatprep.mubr.bf16.mxu0 %v6747
  %7899 = vmatmul.mubr.bf16.gmra.mrb[0].mxu0 %v6746
  %v7900 = vpop.f32.mrb[0].mxu0
  %v7901 = vadd.f32 %v7612, %v7900
  %v7902 = vpop.f32.mrb[0].mxu0
  %v7903 = vpop.f32.mrb[0].mxu0
  %v7904 = vadd.f32 %v7615, %v7903
  %v7905 = vpop.f32.mrb[0].mxu0
  %7906 = vdwg.mxu0
  %7907 = vmatprep.subr.bf16.mxu0 0
  %7908 = vmatpush1.bf16.msra.mxu0 %v7217
  %7909 = vmatprep.subr.bf16.mxu0 0
  %7910 = vmatpush1.bf16.msra.mxu0 %v7218
  %7911 = vmatprep.subr.bf16.mxu0 0
  %7912 = vmatpush1.bf16.msra.mxu0 %v7219
  %7913 = vmatprep.subr.bf16.mxu0 0
  %7914 = vmatpush1.bf16.msra.mxu0 %v7220
  %7915 = vmatprep.subr.bf16.mxu0 0
  %7916 = vmatpush1.bf16.msra.mxu0 %v7221
  %7917 = vmatprep.subr.bf16.mxu0 0
  %7918 = vmatpush1.bf16.msra.mxu0 %v7222
  %7919 = vmatprep.subr.bf16.mxu0 0
  %7920 = vmatpush1.bf16.msra.mxu0 %v7223
  %7921 = vmatprep.subr.bf16.mxu0 0
  %7922 = vmatpush1.bf16.msra.mxu0 %v7224
  %7923 = vmatprep.subr.bf16.mxu0 0
  %7924 = vmatpush1.bf16.msra.mxu0 %v7225
  %7925 = vmatprep.subr.bf16.mxu0 0
  %7926 = vmatpush1.bf16.msra.mxu0 %v7226
  %7927 = vmatprep.subr.bf16.mxu0 0
  %7928 = vmatpush1.bf16.msra.mxu0 %v7227
  %7929 = vmatprep.subr.bf16.mxu0 0
  %7930 = vmatpush1.bf16.msra.mxu0 %v7228
  %7931 = vmatprep.subr.bf16.mxu0 0
  %7932 = vmatpush1.bf16.msra.mxu0 %v7229
  %7933 = vmatprep.subr.bf16.mxu0 0
  %7934 = vmatpush1.bf16.msra.mxu0 %v7230
  %7935 = vmatprep.subr.bf16.mxu0 0
  %7936 = vmatpush1.bf16.msra.mxu0 %v7231
  %7937 = vmatprep.subr.bf16.mxu0 0
  %7938 = vmatpush1.bf16.msra.mxu0 %v7232
  %7939 = vmatprep.mubr.bf16.mxu0 %v6470
  %7940 = vmatmul.mubr.bf16.gmra.mrb[0].mxu0 %v6469
  %v7941 = vpop.f32.mrb[0].mxu0
  %v7942 = vadd.f32 %v7653, %v7941
  %v7943 = vpop.f32.mrb[0].mxu0
  %v7944 = vpop.f32.mrb[0].mxu0
  %v7945 = vadd.f32 %v7656, %v7944
  %v7946 = vpop.f32.mrb[0].mxu0
  %7947 = vmatprep.mubr.bf16.mxu0 %v6479
  %7948 = vmatmul.mubr.bf16.gmra.mrb[0].mxu0 %v6478
  %v7949 = vpop.f32.mrb[0].mxu0
  %v7950 = vadd.f32 %v7661, %v7949
  %v7951 = vpop.f32.mrb[0].mxu0
  %v7952 = vpop.f32.mrb[0].mxu0
  %v7953 = vadd.f32 %v7664, %v7952
  %v7954 = vpop.f32.mrb[0].mxu0
  %7955 = vmatprep.mubr.bf16.mxu0 %v6488
  %7956 = vmatmul.mubr.bf16.gmra.mrb[0].mxu0 %v6487
  %v7957 = vpop.f32.mrb[0].mxu0
  %v7958 = vadd.f32 %v7669, %v7957
  %v7959 = vpop.f32.mrb[0].mxu0
  %v7960 = vpop.f32.mrb[0].mxu0
  %v7961 = vadd.f32 %v7672, %v7960
  %v7962 = vpop.f32.mrb[0].mxu0
  %7963 = vmatprep.mubr.bf16.mxu0 %v6497
  %7964 = vmatmul.mubr.bf16.gmra.mrb[0].mxu0 %v6496
  %v7965 = vpop.f32.mrb[0].mxu0
  %v7966 = vadd.f32 %v7677, %v7965
  %v7967 = vpop.f32.mrb[0].mxu0
  %v7968 = vpop.f32.mrb[0].mxu0
  %v7969 = vadd.f32 %v7680, %v7968
  %v7970 = vpop.f32.mrb[0].mxu0
  %7971 = vmatprep.mubr.bf16.mxu0 %v6506
  %7972 = vmatmul.mubr.bf16.gmra.mrb[0].mxu0 %v6505
  %v7973 = vpop.f32.mrb[0].mxu0
  %v7974 = vadd.f32 %v7685, %v7973
  %v7975 = vpop.f32.mrb[0].mxu0
  %v7976 = vpop.f32.mrb[0].mxu0
  %v7977 = vadd.f32 %v7688, %v7976
  %v7978 = vpop.f32.mrb[0].mxu0
  %7979 = vmatprep.mubr.bf16.mxu0 %v6515
  %7980 = vmatmul.mubr.bf16.gmra.mrb[0].mxu0 %v6514
  %v7981 = vpop.f32.mrb[0].mxu0
  %v7982 = vadd.f32 %v7693, %v7981
  %v7983 = vpop.f32.mrb[0].mxu0
  %v7984 = vpop.f32.mrb[0].mxu0
  %v7985 = vadd.f32 %v7696, %v7984
  %v7986 = vpop.f32.mrb[0].mxu0
  %7987 = vmatprep.mubr.bf16.mxu0 %v6524
  %7988 = vmatmul.mubr.bf16.gmra.mrb[0].mxu0 %v6523
  %v7989 = vpop.f32.mrb[0].mxu0
  %v7990 = vadd.f32 %v7701, %v7989
  %v7991 = vpop.f32.mrb[0].mxu0
  %v7992 = vpop.f32.mrb[0].mxu0
  %v7993 = vadd.f32 %v7704, %v7992
  %v7994 = vpop.f32.mrb[0].mxu0
  %7995 = vmatprep.mubr.bf16.mxu0 %v6533
  %7996 = vmatmul.mubr.bf16.gmra.mrb[0].mxu0 %v6532
  %v7997 = vpop.f32.mrb[0].mxu0
  %v7998 = vadd.f32 %v7709, %v7997
  %v7999 = vpop.f32.mrb[0].mxu0
  %v8000 = vpop.f32.mrb[0].mxu0
  %v8001 = vadd.f32 %v7712, %v8000
  %v8002 = vpop.f32.mrb[0].mxu0
  %8003 = vmatprep.mubr.bf16.mxu0 %v6542
  %8004 = vmatmul.mubr.bf16.gmra.mrb[0].mxu0 %v6541
  %v8005 = vpop.f32.mrb[0].mxu0
  %v8006 = vadd.f32 %v7717, %v8005
  %v8007 = vpop.f32.mrb[0].mxu0
  %v8008 = vpop.f32.mrb[0].mxu0
  %v8009 = vadd.f32 %v7720, %v8008
  %v8010 = vpop.f32.mrb[0].mxu0
  %8011 = vmatprep.mubr.bf16.mxu0 %v6551
  %8012 = vmatmul.mubr.bf16.gmra.mrb[0].mxu0 %v6550
  %v8013 = vpop.f32.mrb[0].mxu0
  %v8014 = vadd.f32 %v7725, %v8013
  %v8015 = vpop.f32.mrb[0].mxu0
  %v8016 = vpop.f32.mrb[0].mxu0
  %v8017 = vadd.f32 %v7728, %v8016
  %v8018 = vpop.f32.mrb[0].mxu0
  %8019 = vmatprep.mubr.bf16.mxu0 %v6560
  %8020 = vmatmul.mubr.bf16.gmra.mrb[0].mxu0 %v6559
  %v8021 = vpop.f32.mrb[0].mxu0
  %v8022 = vadd.f32 %v7733, %v8021
  %v8023 = vpop.f32.mrb[0].mxu0
  %v8024 = vpop.f32.mrb[0].mxu0
  %v8025 = vadd.f32 %v7736, %v8024
  %v8026 = vpop.f32.mrb[0].mxu0
  %8027 = vmatprep.mubr.bf16.mxu0 %v6569
  %8028 = vmatmul.mubr.bf16.gmra.mrb[0].mxu0 %v6568
  %v8029 = vpop.f32.mrb[0].mxu0
  %v8030 = vadd.f32 %v7741, %v8029
  %v8031 = vpop.f32.mrb[0].mxu0
  %v8032 = vpop.f32.mrb[0].mxu0
  %v8033 = vadd.f32 %v7744, %v8032
  %v8034 = vpop.f32.mrb[0].mxu0
  %8035 = vmatprep.mubr.bf16.mxu0 %v6578
  %8036 = vmatmul.mubr.bf16.gmra.mrb[0].mxu0 %v6577
  %v8037 = vpop.f32.mrb[0].mxu0
  %v8038 = vadd.f32 %v7749, %v8037
  %v8039 = vpop.f32.mrb[0].mxu0
  %v8040 = vpop.f32.mrb[0].mxu0
  %v8041 = vadd.f32 %v7752, %v8040
  %v8042 = vpop.f32.mrb[0].mxu0
  %8043 = vmatprep.mubr.bf16.mxu0 %v6587
  %8044 = vmatmul.mubr.bf16.gmra.mrb[0].mxu0 %v6586
  %v8045 = vpop.f32.mrb[0].mxu0
  %v8046 = vadd.f32 %v7757, %v8045
  %v8047 = vpop.f32.mrb[0].mxu0
  %v8048 = vpop.f32.mrb[0].mxu0
  %v8049 = vadd.f32 %v7760, %v8048
  %v8050 = vpop.f32.mrb[0].mxu0
  %8051 = vmatprep.mubr.bf16.mxu0 %v6596
  %8052 = vmatmul.mubr.bf16.gmra.mrb[0].mxu0 %v6595
  %v8053 = vpop.f32.mrb[0].mxu0
  %v8054 = vadd.f32 %v7765, %v8053
  %v8055 = vpop.f32.mrb[0].mxu0
  %v8056 = vpop.f32.mrb[0].mxu0
  %v8057 = vadd.f32 %v7768, %v8056
  %v8058 = vpop.f32.mrb[0].mxu0
  %8059 = vmatprep.mubr.bf16.mxu0 %v6605
  %8060 = vmatmul.mubr.bf16.gmra.mrb[0].mxu0 %v6604
  %v8061 = vpop.f32.mrb[0].mxu0
  %v8062 = vadd.f32 %v7773, %v8061
  %v8063 = vpop.f32.mrb[0].mxu0
  %v8064 = vpop.f32.mrb[0].mxu0
  %v8065 = vadd.f32 %v7776, %v8064
  %v8066 = vpop.f32.mrb[0].mxu0
  %8067 = vmatprep.mubr.bf16.mxu0 %v6614
  %8068 = vmatmul.mubr.bf16.gmra.mrb[0].mxu0 %v6613
  %v8069 = vpop.f32.mrb[0].mxu0
  %v8070 = vadd.f32 %v7781, %v8069
  %v8071 = vpop.f32.mrb[0].mxu0
  %v8072 = vpop.f32.mrb[0].mxu0
  %v8073 = vadd.f32 %v7784, %v8072
  %v8074 = vpop.f32.mrb[0].mxu0
  %8075 = vmatprep.mubr.bf16.mxu0 %v6623
  %8076 = vmatmul.mubr.bf16.gmra.mrb[0].mxu0 %v6622
  %v8077 = vpop.f32.mrb[0].mxu0
  %v8078 = vadd.f32 %v7789, %v8077
  %v8079 = vpop.f32.mrb[0].mxu0
  %v8080 = vpop.f32.mrb[0].mxu0
  %v8081 = vadd.f32 %v7792, %v8080
  %v8082 = vpop.f32.mrb[0].mxu0
  %8083 = vmatprep.mubr.bf16.mxu0 %v6632
  %8084 = vmatmul.mubr.bf16.gmra.mrb[0].mxu0 %v6631
  %v8085 = vpop.f32.mrb[0].mxu0
  %v8086 = vadd.f32 %v7797, %v8085
  %v8087 = vpop.f32.mrb[0].mxu0
  %v8088 = vpop.f32.mrb[0].mxu0
  %v8089 = vadd.f32 %v7800, %v8088
  %v8090 = vpop.f32.mrb[0].mxu0
  %8091 = vmatprep.mubr.bf16.mxu0 %v6641
  %8092 = vmatmul.mubr.bf16.gmra.mrb[0].mxu0 %v6640
  %v8093 = vpop.f32.mrb[0].mxu0
  %v8094 = vadd.f32 %v7805, %v8093
  %v8095 = vpop.f32.mrb[0].mxu0
  %v8096 = vpop.f32.mrb[0].mxu0
  %v8097 = vadd.f32 %v7808, %v8096
  %v8098 = vpop.f32.mrb[0].mxu0
  %8099 = vmatprep.mubr.bf16.mxu0 %v6650
  %8100 = vmatmul.mubr.bf16.gmra.mrb[0].mxu0 %v6649
  %v8101 = vpop.f32.mrb[0].mxu0
  %v8102 = vadd.f32 %v7813, %v8101
  %v8103 = vpop.f32.mrb[0].mxu0
  %v8104 = vpop.f32.mrb[0].mxu0
  %v8105 = vadd.f32 %v7816, %v8104
  %v8106 = vpop.f32.mrb[0].mxu0
  %8107 = vmatprep.mubr.bf16.mxu0 %v6659
  %8108 = vmatmul.mubr.bf16.gmra.mrb[0].mxu0 %v6658
  %v8109 = vpop.f32.mrb[0].mxu0
  %v8110 = vadd.f32 %v7821, %v8109
  %v8111 = vpop.f32.mrb[0].mxu0
  %v8112 = vpop.f32.mrb[0].mxu0
  %v8113 = vadd.f32 %v7824, %v8112
  %v8114 = vpop.f32.mrb[0].mxu0
  %8115 = vmatprep.mubr.bf16.mxu0 %v6668
  %8116 = vmatmul.mubr.bf16.gmra.mrb[0].mxu0 %v6667
  %v8117 = vpop.f32.mrb[0].mxu0
  %v8118 = vadd.f32 %v7829, %v8117
  %v8119 = vpop.f32.mrb[0].mxu0
  %v8120 = vpop.f32.mrb[0].mxu0
  %v8121 = vadd.f32 %v7832, %v8120
  %v8122 = vpop.f32.mrb[0].mxu0
  %8123 = vmatprep.mubr.bf16.mxu0 %v6677
  %8124 = vmatmul.mubr.bf16.gmra.mrb[0].mxu0 %v6676
  %v8125 = vpop.f32.mrb[0].mxu0
  %v8126 = vadd.f32 %v7837, %v8125
  %v8127 = vpop.f32.mrb[0].mxu0
  %v8128 = vpop.f32.mrb[0].mxu0
  %v8129 = vadd.f32 %v7840, %v8128
  %v8130 = vpop.f32.mrb[0].mxu0
  %8131 = vmatprep.mubr.bf16.mxu0 %v6686
  %8132 = vmatmul.mubr.bf16.gmra.mrb[0].mxu0 %v6685
  %v8133 = vpop.f32.mrb[0].mxu0
  %v8134 = vadd.f32 %v7845, %v8133
  %v8135 = vpop.f32.mrb[0].mxu0
  %v8136 = vpop.f32.mrb[0].mxu0
  %v8137 = vadd.f32 %v7848, %v8136
  %v8138 = vpop.f32.mrb[0].mxu0
  %8139 = vmatprep.mubr.bf16.mxu0 %v6695
  %8140 = vmatmul.mubr.bf16.gmra.mrb[0].mxu0 %v6694
  %v8141 = vpop.f32.mrb[0].mxu0
  %v8142 = vadd.f32 %v7853, %v8141
  %v8143 = vpop.f32.mrb[0].mxu0
  %v8144 = vpop.f32.mrb[0].mxu0
  %v8145 = vadd.f32 %v7856, %v8144
  %v8146 = vpop.f32.mrb[0].mxu0
  %8147 = vmatprep.mubr.bf16.mxu0 %v6704
  %8148 = vmatmul.mubr.bf16.gmra.mrb[0].mxu0 %v6703
  %v8149 = vpop.f32.mrb[0].mxu0
  %v8150 = vadd.f32 %v7861, %v8149
  %v8151 = vpop.f32.mrb[0].mxu0
  %v8152 = vpop.f32.mrb[0].mxu0
  %v8153 = vadd.f32 %v7864, %v8152
  %v8154 = vpop.f32.mrb[0].mxu0
  %8155 = vmatprep.mubr.bf16.mxu0 %v6713
  %8156 = vmatmul.mubr.bf16.gmra.mrb[0].mxu0 %v6712
  %v8157 = vpop.f32.mrb[0].mxu0
  %v8158 = vadd.f32 %v7869, %v8157
  %v8159 = vpop.f32.mrb[0].mxu0
  %v8160 = vpop.f32.mrb[0].mxu0
  %v8161 = vadd.f32 %v7872, %v8160
  %v8162 = vpop.f32.mrb[0].mxu0
  %8163 = vmatprep.mubr.bf16.mxu0 %v6722
  %8164 = vmatmul.mubr.bf16.gmra.mrb[0].mxu0 %v6721
  %v8165 = vpop.f32.mrb[0].mxu0
  %v8166 = vadd.f32 %v7877, %v8165
  %v8167 = vpop.f32.mrb[0].mxu0
  %v8168 = vpop.f32.mrb[0].mxu0
  %v8169 = vadd.f32 %v7880, %v8168
  %v8170 = vpop.f32.mrb[0].mxu0
  %8171 = vmatprep.mubr.bf16.mxu0 %v6731
  %8172 = vmatmul.mubr.bf16.gmra.mrb[0].mxu0 %v6730
  %v8173 = vpop.f32.mrb[0].mxu0
  %v8174 = vadd.f32 %v7885, %v8173
  %v8175 = vpop.f32.mrb[0].mxu0
  %v8176 = vpop.f32.mrb[0].mxu0
  %v8177 = vadd.f32 %v7888, %v8176
  %v8178 = vpop.f32.mrb[0].mxu0
  %8179 = vmatprep.mubr.bf16.mxu0 %v6740
  %8180 = vmatmul.mubr.bf16.gmra.mrb[0].mxu0 %v6739
  %v8181 = vpop.f32.mrb[0].mxu0
  %v8182 = vadd.f32 %v7893, %v8181
  %v8183 = vpop.f32.mrb[0].mxu0
  %v8184 = vpop.f32.mrb[0].mxu0
  %v8185 = vadd.f32 %v7896, %v8184
  %v8186 = vpop.f32.mrb[0].mxu0
  %8187 = vmatprep.mubr.bf16.mxu0 %v6749
  %8188 = vmatmul.mubr.bf16.gmra.mrb[0].mxu0 %v6748
  %v8189 = vpop.f32.mrb[0].mxu0
  %v8190 = vadd.f32 %v7901, %v8189
  %v8191 = vpop.f32.mrb[0].mxu0
  %v8192 = vpop.f32.mrb[0].mxu0
  %v8193 = vadd.f32 %v7904, %v8192
  %v8194 = vpop.f32.mrb[0].mxu0
  %8195 = vdwg.mxu0
  %8196 = vmatprep.subr.bf16.mxu0 0
  %8197 = vmatpush1.bf16.msra.mxu0 %v7233
  %8198 = vmatprep.subr.bf16.mxu0 0
  %8199 = vmatpush1.bf16.msra.mxu0 %v7234
  %8200 = vmatprep.subr.bf16.mxu0 0
  %8201 = vmatpush1.bf16.msra.mxu0 %v7235
  %8202 = vmatprep.subr.bf16.mxu0 0
  %8203 = vmatpush1.bf16.msra.mxu0 %v7236
  %8204 = vmatprep.subr.bf16.mxu0 0
  %8205 = vmatpush1.bf16.msra.mxu0 %v7237
  %8206 = vmatprep.subr.bf16.mxu0 0
  %8207 = vmatpush1.bf16.msra.mxu0 %v7238
  %8208 = vmatprep.subr.bf16.mxu0 0
  %8209 = vmatpush1.bf16.msra.mxu0 %v7239
  %8210 = vmatprep.subr.bf16.mxu0 0
  %8211 = vmatpush1.bf16.msra.mxu0 %v7240
  %8212 = vmatprep.subr.bf16.mxu0 0
  %8213 = vmatpush1.bf16.msra.mxu0 %v7241
  %8214 = vmatprep.subr.bf16.mxu0 0
  %8215 = vmatpush1.bf16.msra.mxu0 %v7242
  %8216 = vmatprep.subr.bf16.mxu0 0
  %8217 = vmatpush1.bf16.msra.mxu0 %v7243
  %8218 = vmatprep.subr.bf16.mxu0 0
  %8219 = vmatpush1.bf16.msra.mxu0 %v7244
  %8220 = vmatprep.subr.bf16.mxu0 0
  %8221 = vmatpush1.bf16.msra.mxu0 %v7245
  %8222 = vmatprep.subr.bf16.mxu0 0
  %8223 = vmatpush1.bf16.msra.mxu0 %v7246
  %8224 = vmatprep.subr.bf16.mxu0 0
  %8225 = vmatpush1.bf16.msra.mxu0 %v7247
  %8226 = vmatprep.subr.bf16.mxu0 0
  %8227 = vmatpush1.bf16.msra.mxu0 %v7248
  %8228 = vmatprep.mubr.bf16.mxu0 %v6472
  %8229 = vmatmul.mubr.bf16.gmra.mrb[0].mxu0 %v6471
  %v8230 = vpop.f32.mrb[0].mxu0
  %v8231 = vadd.f32 %v7942, %v8230
  %v8232 = vpop.f32.mrb[0].mxu0
  %v8233 = vpop.f32.mrb[0].mxu0
  %v8234 = vadd.f32 %v7945, %v8233
  %v8235 = vpop.f32.mrb[0].mxu0
  %8236 = vmatprep.mubr.bf16.mxu0 %v6481
  %8237 = vmatmul.mubr.bf16.gmra.mrb[0].mxu0 %v6480
  %v8238 = vpop.f32.mrb[0].mxu0
  %v8239 = vadd.f32 %v7950, %v8238
  %v8240 = vpop.f32.mrb[0].mxu0
  %v8241 = vpop.f32.mrb[0].mxu0
  %v8242 = vadd.f32 %v7953, %v8241
  %v8243 = vpop.f32.mrb[0].mxu0
  %8244 = vmatprep.mubr.bf16.mxu0 %v6490
  %8245 = vmatmul.mubr.bf16.gmra.mrb[0].mxu0 %v6489
  %v8246 = vpop.f32.mrb[0].mxu0
  %v8247 = vadd.f32 %v7958, %v8246
  %v8248 = vpop.f32.mrb[0].mxu0
  %v8249 = vpop.f32.mrb[0].mxu0
  %v8250 = vadd.f32 %v7961, %v8249
  %v8251 = vpop.f32.mrb[0].mxu0
  %8252 = vmatprep.mubr.bf16.mxu0 %v6499
  %8253 = vmatmul.mubr.bf16.gmra.mrb[0].mxu0 %v6498
  %v8254 = vpop.f32.mrb[0].mxu0
  %v8255 = vadd.f32 %v7966, %v8254
  %v8256 = vpop.f32.mrb[0].mxu0
  %v8257 = vpop.f32.mrb[0].mxu0
  %v8258 = vadd.f32 %v7969, %v8257
  %v8259 = vpop.f32.mrb[0].mxu0
  %8260 = vmatprep.mubr.bf16.mxu0 %v6508
  %8261 = vmatmul.mubr.bf16.gmra.mrb[0].mxu0 %v6507
  %v8262 = vpop.f32.mrb[0].mxu0
  %v8263 = vadd.f32 %v7974, %v8262
  %v8264 = vpop.f32.mrb[0].mxu0
  %v8265 = vpop.f32.mrb[0].mxu0
  %v8266 = vadd.f32 %v7977, %v8265
  %v8267 = vpop.f32.mrb[0].mxu0
  %8268 = vmatprep.mubr.bf16.mxu0 %v6517
  %8269 = vmatmul.mubr.bf16.gmra.mrb[0].mxu0 %v6516
  %v8270 = vpop.f32.mrb[0].mxu0
  %v8271 = vadd.f32 %v7982, %v8270
  %v8272 = vpop.f32.mrb[0].mxu0
  %v8273 = vpop.f32.mrb[0].mxu0
  %v8274 = vadd.f32 %v7985, %v8273
  %v8275 = vpop.f32.mrb[0].mxu0
  %8276 = vmatprep.mubr.bf16.mxu0 %v6526
  %8277 = vmatmul.mubr.bf16.gmra.mrb[0].mxu0 %v6525
  %v8278 = vpop.f32.mrb[0].mxu0
  %v8279 = vadd.f32 %v7990, %v8278
  %v8280 = vpop.f32.mrb[0].mxu0
  %v8281 = vpop.f32.mrb[0].mxu0
  %v8282 = vadd.f32 %v7993, %v8281
  %v8283 = vpop.f32.mrb[0].mxu0
  %8284 = vmatprep.mubr.bf16.mxu0 %v6535
  %8285 = vmatmul.mubr.bf16.gmra.mrb[0].mxu0 %v6534
  %v8286 = vpop.f32.mrb[0].mxu0
  %v8287 = vadd.f32 %v7998, %v8286
  %v8288 = vpop.f32.mrb[0].mxu0
  %v8289 = vpop.f32.mrb[0].mxu0
  %v8290 = vadd.f32 %v8001, %v8289
  %v8291 = vpop.f32.mrb[0].mxu0
  %8292 = vmatprep.mubr.bf16.mxu0 %v6544
  %8293 = vmatmul.mubr.bf16.gmra.mrb[0].mxu0 %v6543
  %v8294 = vpop.f32.mrb[0].mxu0
  %v8295 = vadd.f32 %v8006, %v8294
  %v8296 = vpop.f32.mrb[0].mxu0
  %v8297 = vpop.f32.mrb[0].mxu0
  %v8298 = vadd.f32 %v8009, %v8297
  %v8299 = vpop.f32.mrb[0].mxu0
  %8300 = vmatprep.mubr.bf16.mxu0 %v6553
  %8301 = vmatmul.mubr.bf16.gmra.mrb[0].mxu0 %v6552
  %v8302 = vpop.f32.mrb[0].mxu0
  %v8303 = vadd.f32 %v8014, %v8302
  %v8304 = vpop.f32.mrb[0].mxu0
  %v8305 = vpop.f32.mrb[0].mxu0
  %v8306 = vadd.f32 %v8017, %v8305
  %v8307 = vpop.f32.mrb[0].mxu0
  %8308 = vmatprep.mubr.bf16.mxu0 %v6562
  %8309 = vmatmul.mubr.bf16.gmra.mrb[0].mxu0 %v6561
  %v8310 = vpop.f32.mrb[0].mxu0
  %v8311 = vadd.f32 %v8022, %v8310
  %v8312 = vpop.f32.mrb[0].mxu0
  %v8313 = vpop.f32.mrb[0].mxu0
  %v8314 = vadd.f32 %v8025, %v8313
  %v8315 = vpop.f32.mrb[0].mxu0
  %8316 = vmatprep.mubr.bf16.mxu0 %v6571
  %8317 = vmatmul.mubr.bf16.gmra.mrb[0].mxu0 %v6570
  %v8318 = vpop.f32.mrb[0].mxu0
  %v8319 = vadd.f32 %v8030, %v8318
  %v8320 = vpop.f32.mrb[0].mxu0
  %v8321 = vpop.f32.mrb[0].mxu0
  %v8322 = vadd.f32 %v8033, %v8321
  %v8323 = vpop.f32.mrb[0].mxu0
  %8324 = vmatprep.mubr.bf16.mxu0 %v6580
  %8325 = vmatmul.mubr.bf16.gmra.mrb[0].mxu0 %v6579
  %v8326 = vpop.f32.mrb[0].mxu0
  %v8327 = vadd.f32 %v8038, %v8326
  %v8328 = vpop.f32.mrb[0].mxu0
  %v8329 = vpop.f32.mrb[0].mxu0
  %v8330 = vadd.f32 %v8041, %v8329
  %v8331 = vpop.f32.mrb[0].mxu0
  %8332 = vmatprep.mubr.bf16.mxu0 %v6589
  %8333 = vmatmul.mubr.bf16.gmra.mrb[0].mxu0 %v6588
  %v8334 = vpop.f32.mrb[0].mxu0
  %v8335 = vadd.f32 %v8046, %v8334
  %v8336 = vpop.f32.mrb[0].mxu0
  %v8337 = vpop.f32.mrb[0].mxu0
  %v8338 = vadd.f32 %v8049, %v8337
  %v8339 = vpop.f32.mrb[0].mxu0
  %8340 = vmatprep.mubr.bf16.mxu0 %v6598
  %8341 = vmatmul.mubr.bf16.gmra.mrb[0].mxu0 %v6597
  %v8342 = vpop.f32.mrb[0].mxu0
  %v8343 = vadd.f32 %v8054, %v8342
  %v8344 = vpop.f32.mrb[0].mxu0
  %v8345 = vpop.f32.mrb[0].mxu0
  %v8346 = vadd.f32 %v8057, %v8345
  %v8347 = vpop.f32.mrb[0].mxu0
  %8348 = vmatprep.mubr.bf16.mxu0 %v6607
  %8349 = vmatmul.mubr.bf16.gmra.mrb[0].mxu0 %v6606
  %v8350 = vpop.f32.mrb[0].mxu0
  %v8351 = vadd.f32 %v8062, %v8350
  %v8352 = vpop.f32.mrb[0].mxu0
  %v8353 = vpop.f32.mrb[0].mxu0
  %v8354 = vadd.f32 %v8065, %v8353
  %v8355 = vpop.f32.mrb[0].mxu0
  %8356 = vmatprep.mubr.bf16.mxu0 %v6616
  %8357 = vmatmul.mubr.bf16.gmra.mrb[0].mxu0 %v6615
  %v8358 = vpop.f32.mrb[0].mxu0
  %v8359 = vadd.f32 %v8070, %v8358
  %v8360 = vpop.f32.mrb[0].mxu0
  %v8361 = vpop.f32.mrb[0].mxu0
  %v8362 = vadd.f32 %v8073, %v8361
  %v8363 = vpop.f32.mrb[0].mxu0
  %8364 = vmatprep.mubr.bf16.mxu0 %v6625
  %8365 = vmatmul.mubr.bf16.gmra.mrb[0].mxu0 %v6624
  %v8366 = vpop.f32.mrb[0].mxu0
  %v8367 = vadd.f32 %v8078, %v8366
  %v8368 = vpop.f32.mrb[0].mxu0
  %v8369 = vpop.f32.mrb[0].mxu0
  %v8370 = vadd.f32 %v8081, %v8369
  %v8371 = vpop.f32.mrb[0].mxu0
  %8372 = vmatprep.mubr.bf16.mxu0 %v6634
  %8373 = vmatmul.mubr.bf16.gmra.mrb[0].mxu0 %v6633
  %v8374 = vpop.f32.mrb[0].mxu0
  %v8375 = vadd.f32 %v8086, %v8374
  %v8376 = vpop.f32.mrb[0].mxu0
  %v8377 = vpop.f32.mrb[0].mxu0
  %v8378 = vadd.f32 %v8089, %v8377
  %v8379 = vpop.f32.mrb[0].mxu0
  %8380 = vmatprep.mubr.bf16.mxu0 %v6643
  %8381 = vmatmul.mubr.bf16.gmra.mrb[0].mxu0 %v6642
  %v8382 = vpop.f32.mrb[0].mxu0
  %v8383 = vadd.f32 %v8094, %v8382
  %v8384 = vpop.f32.mrb[0].mxu0
  %v8385 = vpop.f32.mrb[0].mxu0
  %v8386 = vadd.f32 %v8097, %v8385
  %v8387 = vpop.f32.mrb[0].mxu0
  %8388 = vmatprep.mubr.bf16.mxu0 %v6652
  %8389 = vmatmul.mubr.bf16.gmra.mrb[0].mxu0 %v6651
  %v8390 = vpop.f32.mrb[0].mxu0
  %v8391 = vadd.f32 %v8102, %v8390
  %v8392 = vpop.f32.mrb[0].mxu0
  %v8393 = vpop.f32.mrb[0].mxu0
  %v8394 = vadd.f32 %v8105, %v8393
  %v8395 = vpop.f32.mrb[0].mxu0
  %8396 = vmatprep.mubr.bf16.mxu0 %v6661
  %8397 = vmatmul.mubr.bf16.gmra.mrb[0].mxu0 %v6660
  %v8398 = vpop.f32.mrb[0].mxu0
  %v8399 = vadd.f32 %v8110, %v8398
  %v8400 = vpop.f32.mrb[0].mxu0
  %v8401 = vpop.f32.mrb[0].mxu0
  %v8402 = vadd.f32 %v8113, %v8401
  %v8403 = vpop.f32.mrb[0].mxu0
  %8404 = vmatprep.mubr.bf16.mxu0 %v6670
  %8405 = vmatmul.mubr.bf16.gmra.mrb[0].mxu0 %v6669
  %v8406 = vpop.f32.mrb[0].mxu0
  %v8407 = vadd.f32 %v8118, %v8406
  %v8408 = vpop.f32.mrb[0].mxu0
  %v8409 = vpop.f32.mrb[0].mxu0
  %v8410 = vadd.f32 %v8121, %v8409
  %v8411 = vpop.f32.mrb[0].mxu0
  %8412 = vmatprep.mubr.bf16.mxu0 %v6679
  %8413 = vmatmul.mubr.bf16.gmra.mrb[0].mxu0 %v6678
  %v8414 = vpop.f32.mrb[0].mxu0
  %v8415 = vadd.f32 %v8126, %v8414
  %v8416 = vpop.f32.mrb[0].mxu0
  %v8417 = vpop.f32.mrb[0].mxu0
  %v8418 = vadd.f32 %v8129, %v8417
  %v8419 = vpop.f32.mrb[0].mxu0
  %8420 = vmatprep.mubr.bf16.mxu0 %v6688
  %8421 = vmatmul.mubr.bf16.gmra.mrb[0].mxu0 %v6687
  %v8422 = vpop.f32.mrb[0].mxu0
  %v8423 = vadd.f32 %v8134, %v8422
  %v8424 = vpop.f32.mrb[0].mxu0
  %v8425 = vpop.f32.mrb[0].mxu0
  %v8426 = vadd.f32 %v8137, %v8425
  %v8427 = vpop.f32.mrb[0].mxu0
  %8428 = vmatprep.mubr.bf16.mxu0 %v6697
  %8429 = vmatmul.mubr.bf16.gmra.mrb[0].mxu0 %v6696
  %v8430 = vpop.f32.mrb[0].mxu0
  %v8431 = vadd.f32 %v8142, %v8430
  %v8432 = vpop.f32.mrb[0].mxu0
  %v8433 = vpop.f32.mrb[0].mxu0
  %v8434 = vadd.f32 %v8145, %v8433
  %v8435 = vpop.f32.mrb[0].mxu0
  %8436 = vmatprep.mubr.bf16.mxu0 %v6706
  %8437 = vmatmul.mubr.bf16.gmra.mrb[0].mxu0 %v6705
  %v8438 = vpop.f32.mrb[0].mxu0
  %v8439 = vadd.f32 %v8150, %v8438
  %v8440 = vpop.f32.mrb[0].mxu0
  %v8441 = vpop.f32.mrb[0].mxu0
  %v8442 = vadd.f32 %v8153, %v8441
  %v8443 = vpop.f32.mrb[0].mxu0
  %8444 = vmatprep.mubr.bf16.mxu0 %v6715
  %8445 = vmatmul.mubr.bf16.gmra.mrb[0].mxu0 %v6714
  %v8446 = vpop.f32.mrb[0].mxu0
  %v8447 = vadd.f32 %v8158, %v8446
  %v8448 = vpop.f32.mrb[0].mxu0
  %v8449 = vpop.f32.mrb[0].mxu0
  %v8450 = vadd.f32 %v8161, %v8449
  %v8451 = vpop.f32.mrb[0].mxu0
  %8452 = vmatprep.mubr.bf16.mxu0 %v6724
  %8453 = vmatmul.mubr.bf16.gmra.mrb[0].mxu0 %v6723
  %v8454 = vpop.f32.mrb[0].mxu0
  %v8455 = vadd.f32 %v8166, %v8454
  %v8456 = vpop.f32.mrb[0].mxu0
  %v8457 = vpop.f32.mrb[0].mxu0
  %v8458 = vadd.f32 %v8169, %v8457
  %v8459 = vpop.f32.mrb[0].mxu0
  %8460 = vmatprep.mubr.bf16.mxu0 %v6733
  %8461 = vmatmul.mubr.bf16.gmra.mrb[0].mxu0 %v6732
  %v8462 = vpop.f32.mrb[0].mxu0
  %v8463 = vadd.f32 %v8174, %v8462
  %v8464 = vpop.f32.mrb[0].mxu0
  %v8465 = vpop.f32.mrb[0].mxu0
  %v8466 = vadd.f32 %v8177, %v8465
  %v8467 = vpop.f32.mrb[0].mxu0
  %8468 = vmatprep.mubr.bf16.mxu0 %v6742
  %8469 = vmatmul.mubr.bf16.gmra.mrb[0].mxu0 %v6741
  %v8470 = vpop.f32.mrb[0].mxu0
  %v8471 = vadd.f32 %v8182, %v8470
  %v8472 = vpop.f32.mrb[0].mxu0
  %v8473 = vpop.f32.mrb[0].mxu0
  %v8474 = vadd.f32 %v8185, %v8473
  %v8475 = vpop.f32.mrb[0].mxu0
  %8476 = vmatprep.mubr.bf16.mxu0 %v6751
  %8477 = vmatmul.mubr.bf16.gmra.mrb[0].mxu0 %v6750
  %v8478 = vpop.f32.mrb[0].mxu0
  %v8479 = vadd.f32 %v8190, %v8478
  %v8480 = vpop.f32.mrb[0].mxu0
  %v8481 = vpop.f32.mrb[0].mxu0
  %v8482 = vadd.f32 %v8193, %v8481
  %v8483 = vpop.f32.mrb[0].mxu0
  %8484 = vdwg.mxu0
  %8485 = vmatprep.subr.bf16.mxu0 0
  %8486 = vmatpush1.bf16.msra.mxu0 %v7249
  %8487 = vmatprep.subr.bf16.mxu0 0
  %8488 = vmatpush1.bf16.msra.mxu0 %v7250
  %8489 = vmatprep.subr.bf16.mxu0 0
  %8490 = vmatpush1.bf16.msra.mxu0 %v7251
  %8491 = vmatprep.subr.bf16.mxu0 0
  %8492 = vmatpush1.bf16.msra.mxu0 %v7252
  %8493 = vmatprep.subr.bf16.mxu0 0
  %8494 = vmatpush1.bf16.msra.mxu0 %v7253
  %8495 = vmatprep.subr.bf16.mxu0 0
  %8496 = vmatpush1.bf16.msra.mxu0 %v7254
  %8497 = vmatprep.subr.bf16.mxu0 0
  %8498 = vmatpush1.bf16.msra.mxu0 %v7255
  %8499 = vmatprep.subr.bf16.mxu0 0
  %8500 = vmatpush1.bf16.msra.mxu0 %v7256
  %8501 = vmatprep.subr.bf16.mxu0 0
  %8502 = vmatpush1.bf16.msra.mxu0 0
  %8503 = vmatprep.subr.bf16.mxu0 0
  %8504 = vmatpush1.bf16.msra.mxu0 0
  %8505 = vmatprep.subr.bf16.mxu0 0
  %8506 = vmatpush1.bf16.msra.mxu0 0
  %8507 = vmatprep.subr.bf16.mxu0 0
  %8508 = vmatpush1.bf16.msra.mxu0 0
  %8509 = vmatprep.subr.bf16.mxu0 0
  %8510 = vmatpush1.bf16.msra.mxu0 0
  %8511 = vmatprep.subr.bf16.mxu0 0
  %8512 = vmatpush1.bf16.msra.mxu0 0
  %8513 = vmatprep.subr.bf16.mxu0 0
  %8514 = vmatpush1.bf16.msra.mxu0 0
  %8515 = vmatprep.subr.bf16.mxu0 0
  %8516 = vmatpush1.bf16.msra.mxu0 0
  %8517 = vmatprep.mubr.bf16.mxu0 0
  %8518 = vmatmul.mubr.bf16.gmra.mrb[0].mxu0 %v6473
  %v8519 = vpop.f32.mrb[0].mxu0
  %v8520 = vadd.f32 %v8231, %v8519
  %v8521 = vpop.f32.mrb[0].mxu0
  %v8522 = vpop.f32.mrb[0].mxu0
  %v8523 = vadd.f32 %v8234, %v8522
  %v8524 = vpop.f32.mrb[0].mxu0
  %8525 = vmatprep.mubr.bf16.mxu0 0
  %8526 = vmatmul.mubr.bf16.gmra.mrb[0].mxu0 %v6482
  %v8527 = vpop.f32.mrb[0].mxu0
  %v8528 = vadd.f32 %v8239, %v8527
  %v8529 = vpop.f32.mrb[0].mxu0
  %v8530 = vpop.f32.mrb[0].mxu0
  %v8531 = vadd.f32 %v8242, %v8530
  %v8532 = vpop.f32.mrb[0].mxu0
  %8533 = vmatprep.mubr.bf16.mxu0 0
  %8534 = vmatmul.mubr.bf16.gmra.mrb[0].mxu0 %v6491
  %v8535 = vpop.f32.mrb[0].mxu0
  %v8536 = vadd.f32 %v8247, %v8535
  %v8537 = vpop.f32.mrb[0].mxu0
  %v8538 = vpop.f32.mrb[0].mxu0
  %v8539 = vadd.f32 %v8250, %v8538
  %v8540 = vpop.f32.mrb[0].mxu0
  %8541 = vmatprep.mubr.bf16.mxu0 0
  %8542 = vmatmul.mubr.bf16.gmra.mrb[0].mxu0 %v6500
  %v8543 = vpop.f32.mrb[0].mxu0
  %v8544 = vadd.f32 %v8255, %v8543
  %v8545 = vpop.f32.mrb[0].mxu0
  %v8546 = vpop.f32.mrb[0].mxu0
  %v8547 = vadd.f32 %v8258, %v8546
  %v8548 = vpop.f32.mrb[0].mxu0
  %8549 = vmatprep.mubr.bf16.mxu0 0
  %8550 = vmatmul.mubr.bf16.gmra.mrb[0].mxu0 %v6509
  %v8551 = vpop.f32.mrb[0].mxu0
  %v8552 = vadd.f32 %v8263, %v8551
  %v8553 = vpop.f32.mrb[0].mxu0
  %v8554 = vpop.f32.mrb[0].mxu0
  %v8555 = vadd.f32 %v8266, %v8554
  %v8556 = vpop.f32.mrb[0].mxu0
  %8557 = vmatprep.mubr.bf16.mxu0 0
  %8558 = vmatmul.mubr.bf16.gmra.mrb[0].mxu0 %v6518
  %v8559 = vpop.f32.mrb[0].mxu0
  %v8560 = vadd.f32 %v8271, %v8559
  %v8561 = vpop.f32.mrb[0].mxu0
  %v8562 = vpop.f32.mrb[0].mxu0
  %v8563 = vadd.f32 %v8274, %v8562
  %v8564 = vpop.f32.mrb[0].mxu0
  %8565 = vmatprep.mubr.bf16.mxu0 0
  %8566 = vmatmul.mubr.bf16.gmra.mrb[0].mxu0 %v6527
  %v8567 = vpop.f32.mrb[0].mxu0
  %v8568 = vadd.f32 %v8279, %v8567
  %v8569 = vpop.f32.mrb[0].mxu0
  %v8570 = vpop.f32.mrb[0].mxu0
  %v8571 = vadd.f32 %v8282, %v8570
  %v8572 = vpop.f32.mrb[0].mxu0
  %8573 = vmatprep.mubr.bf16.mxu0 0
  %8574 = vmatmul.mubr.bf16.gmra.mrb[0].mxu0 %v6536
  %v8575 = vpop.f32.mrb[0].mxu0
  %v8576 = vadd.f32 %v8287, %v8575
  %v8577 = vpop.f32.mrb[0].mxu0
  %v8578 = vpop.f32.mrb[0].mxu0
  %v8579 = vadd.f32 %v8290, %v8578
  %v8580 = vpop.f32.mrb[0].mxu0
  %8581 = vmatprep.mubr.bf16.mxu0 0
  %8582 = vmatmul.mubr.bf16.gmra.mrb[0].mxu0 %v6545
  %v8583 = vpop.f32.mrb[0].mxu0
  %v8584 = vadd.f32 %v8295, %v8583
  %v8585 = vpop.f32.mrb[0].mxu0
  %v8586 = vpop.f32.mrb[0].mxu0
  %v8587 = vadd.f32 %v8298, %v8586
  %v8588 = vpop.f32.mrb[0].mxu0
  %8589 = vmatprep.mubr.bf16.mxu0 0
  %8590 = vmatmul.mubr.bf16.gmra.mrb[0].mxu0 %v6554
  %v8591 = vpop.f32.mrb[0].mxu0
  %v8592 = vadd.f32 %v8303, %v8591
  %v8593 = vpop.f32.mrb[0].mxu0
  %v8594 = vpop.f32.mrb[0].mxu0
  %v8595 = vadd.f32 %v8306, %v8594
  %v8596 = vpop.f32.mrb[0].mxu0
  %8597 = vmatprep.mubr.bf16.mxu0 0
  %8598 = vmatmul.mubr.bf16.gmra.mrb[0].mxu0 %v6563
  %v8599 = vpop.f32.mrb[0].mxu0
  %v8600 = vadd.f32 %v8311, %v8599
  %v8601 = vpop.f32.mrb[0].mxu0
  %v8602 = vpop.f32.mrb[0].mxu0
  %v8603 = vadd.f32 %v8314, %v8602
  %v8604 = vpop.f32.mrb[0].mxu0
  %8605 = vmatprep.mubr.bf16.mxu0 0
  %8606 = vmatmul.mubr.bf16.gmra.mrb[0].mxu0 %v6572
  %v8607 = vpop.f32.mrb[0].mxu0
  %v8608 = vadd.f32 %v8319, %v8607
  %v8609 = vpop.f32.mrb[0].mxu0
  %v8610 = vpop.f32.mrb[0].mxu0
  %v8611 = vadd.f32 %v8322, %v8610
  %v8612 = vpop.f32.mrb[0].mxu0
  %8613 = vmatprep.mubr.bf16.mxu0 0
  %8614 = vmatmul.mubr.bf16.gmra.mrb[0].mxu0 %v6581
  %v8615 = vpop.f32.mrb[0].mxu0
  %v8616 = vadd.f32 %v8327, %v8615
  %v8617 = vpop.f32.mrb[0].mxu0
  %v8618 = vpop.f32.mrb[0].mxu0
  %v8619 = vadd.f32 %v8330, %v8618
  %v8620 = vpop.f32.mrb[0].mxu0
  %8621 = vmatprep.mubr.bf16.mxu0 0
  %8622 = vmatmul.mubr.bf16.gmra.mrb[0].mxu0 %v6590
  %v8623 = vpop.f32.mrb[0].mxu0
  %v8624 = vadd.f32 %v8335, %v8623
  %v8625 = vpop.f32.mrb[0].mxu0
  %v8626 = vpop.f32.mrb[0].mxu0
  %v8627 = vadd.f32 %v8338, %v8626
  %v8628 = vpop.f32.mrb[0].mxu0
  %8629 = vmatprep.mubr.bf16.mxu0 0
  %8630 = vmatmul.mubr.bf16.gmra.mrb[0].mxu0 %v6599
  %v8631 = vpop.f32.mrb[0].mxu0
  %v8632 = vadd.f32 %v8343, %v8631
  %v8633 = vpop.f32.mrb[0].mxu0
  %v8634 = vpop.f32.mrb[0].mxu0
  %v8635 = vadd.f32 %v8346, %v8634
  %v8636 = vpop.f32.mrb[0].mxu0
  %8637 = vmatprep.mubr.bf16.mxu0 0
  %8638 = vmatmul.mubr.bf16.gmra.mrb[0].mxu0 %v6608
  %v8639 = vpop.f32.mrb[0].mxu0
  %v8640 = vadd.f32 %v8351, %v8639
  %v8641 = vpop.f32.mrb[0].mxu0
  %v8642 = vpop.f32.mrb[0].mxu0
  %v8643 = vadd.f32 %v8354, %v8642
  %v8644 = vpop.f32.mrb[0].mxu0
  %8645 = vmatprep.mubr.bf16.mxu0 0
  %8646 = vmatmul.mubr.bf16.gmra.mrb[0].mxu0 %v6617
  %v8647 = vpop.f32.mrb[0].mxu0
  %v8648 = vadd.f32 %v8359, %v8647
  %v8649 = vpop.f32.mrb[0].mxu0
  %v8650 = vpop.f32.mrb[0].mxu0
  %v8651 = vadd.f32 %v8362, %v8650
  %v8652 = vpop.f32.mrb[0].mxu0
  %8653 = vmatprep.mubr.bf16.mxu0 0
  %8654 = vmatmul.mubr.bf16.gmra.mrb[0].mxu0 %v6626
  %v8655 = vpop.f32.mrb[0].mxu0
  %v8656 = vadd.f32 %v8367, %v8655
  %v8657 = vpop.f32.mrb[0].mxu0
  %v8658 = vpop.f32.mrb[0].mxu0
  %v8659 = vadd.f32 %v8370, %v8658
  %v8660 = vpop.f32.mrb[0].mxu0
  %8661 = vmatprep.mubr.bf16.mxu0 0
  %8662 = vmatmul.mubr.bf16.gmra.mrb[0].mxu0 %v6635
  %v8663 = vpop.f32.mrb[0].mxu0
  %v8664 = vadd.f32 %v8375, %v8663
  %v8665 = vpop.f32.mrb[0].mxu0
  %v8666 = vpop.f32.mrb[0].mxu0
  %v8667 = vadd.f32 %v8378, %v8666
  %v8668 = vpop.f32.mrb[0].mxu0
  %8669 = vmatprep.mubr.bf16.mxu0 0
  %8670 = vmatmul.mubr.bf16.gmra.mrb[0].mxu0 %v6644
  %v8671 = vpop.f32.mrb[0].mxu0
  %v8672 = vadd.f32 %v8383, %v8671
  %v8673 = vpop.f32.mrb[0].mxu0
  %v8674 = vpop.f32.mrb[0].mxu0
  %v8675 = vadd.f32 %v8386, %v8674
  %v8676 = vpop.f32.mrb[0].mxu0
  %8677 = vmatprep.mubr.bf16.mxu0 0
  %8678 = vmatmul.mubr.bf16.gmra.mrb[0].mxu0 %v6653
  %v8679 = vpop.f32.mrb[0].mxu0
  %v8680 = vadd.f32 %v8391, %v8679
  %v8681 = vpop.f32.mrb[0].mxu0
  %v8682 = vpop.f32.mrb[0].mxu0
  %v8683 = vadd.f32 %v8394, %v8682
  %v8684 = vpop.f32.mrb[0].mxu0
  %8685 = vmatprep.mubr.bf16.mxu0 0
  %8686 = vmatmul.mubr.bf16.gmra.mrb[0].mxu0 %v6662
  %v8687 = vpop.f32.mrb[0].mxu0
  %v8688 = vadd.f32 %v8399, %v8687
  %v8689 = vpop.f32.mrb[0].mxu0
  %v8690 = vpop.f32.mrb[0].mxu0
  %v8691 = vadd.f32 %v8402, %v8690
  %v8692 = vpop.f32.mrb[0].mxu0
  %8693 = vmatprep.mubr.bf16.mxu0 0
  %8694 = vmatmul.mubr.bf16.gmra.mrb[0].mxu0 %v6671
  %v8695 = vpop.f32.mrb[0].mxu0
  %v8696 = vadd.f32 %v8407, %v8695
  %v8697 = vpop.f32.mrb[0].mxu0
  %v8698 = vpop.f32.mrb[0].mxu0
  %v8699 = vadd.f32 %v8410, %v8698
  %v8700 = vpop.f32.mrb[0].mxu0
  %8701 = vmatprep.mubr.bf16.mxu0 0
  %8702 = vmatmul.mubr.bf16.gmra.mrb[0].mxu0 %v6680
  %v8703 = vpop.f32.mrb[0].mxu0
  %v8704 = vadd.f32 %v8415, %v8703
  %v8705 = vpop.f32.mrb[0].mxu0
  %v8706 = vpop.f32.mrb[0].mxu0
  %v8707 = vadd.f32 %v8418, %v8706
  %v8708 = vpop.f32.mrb[0].mxu0
  %8709 = vmatprep.mubr.bf16.mxu0 0
  %8710 = vmatmul.mubr.bf16.gmra.mrb[0].mxu0 %v6689
  %v8711 = vpop.f32.mrb[0].mxu0
  %v8712 = vadd.f32 %v8423, %v8711
  %v8713 = vpop.f32.mrb[0].mxu0
  %v8714 = vpop.f32.mrb[0].mxu0
  %v8715 = vadd.f32 %v8426, %v8714
  %v8716 = vpop.f32.mrb[0].mxu0
  %8717 = vmatprep.mubr.bf16.mxu0 0
  %8718 = vmatmul.mubr.bf16.gmra.mrb[0].mxu0 %v6698
  %v8719 = vpop.f32.mrb[0].mxu0
  %v8720 = vadd.f32 %v8431, %v8719
  %v8721 = vpop.f32.mrb[0].mxu0
  %v8722 = vpop.f32.mrb[0].mxu0
  %v8723 = vadd.f32 %v8434, %v8722
  %v8724 = vpop.f32.mrb[0].mxu0
  %8725 = vmatprep.mubr.bf16.mxu0 0
  %8726 = vmatmul.mubr.bf16.gmra.mrb[0].mxu0 %v6707
  %v8727 = vpop.f32.mrb[0].mxu0
  %v8728 = vadd.f32 %v8439, %v8727
  %v8729 = vpop.f32.mrb[0].mxu0
  %v8730 = vpop.f32.mrb[0].mxu0
  %v8731 = vadd.f32 %v8442, %v8730
  %v8732 = vpop.f32.mrb[0].mxu0
  %8733 = vmatprep.mubr.bf16.mxu0 0
  %8734 = vmatmul.mubr.bf16.gmra.mrb[0].mxu0 %v6716
  %v8735 = vpop.f32.mrb[0].mxu0
  %v8736 = vadd.f32 %v8447, %v8735
  %v8737 = vpop.f32.mrb[0].mxu0
  %v8738 = vpop.f32.mrb[0].mxu0
  %v8739 = vadd.f32 %v8450, %v8738
  %v8740 = vpop.f32.mrb[0].mxu0
  %8741 = vmatprep.mubr.bf16.mxu0 0
  %8742 = vmatmul.mubr.bf16.gmra.mrb[0].mxu0 %v6725
  %v8743 = vpop.f32.mrb[0].mxu0
  %v8744 = vadd.f32 %v8455, %v8743
  %v8745 = vpop.f32.mrb[0].mxu0
  %v8746 = vpop.f32.mrb[0].mxu0
  %v8747 = vadd.f32 %v8458, %v8746
  %v8748 = vpop.f32.mrb[0].mxu0
  %8749 = vmatprep.mubr.bf16.mxu0 0
  %8750 = vmatmul.mubr.bf16.gmra.mrb[0].mxu0 %v6734
  %v8751 = vpop.f32.mrb[0].mxu0
  %v8752 = vadd.f32 %v8463, %v8751
  %v8753 = vpop.f32.mrb[0].mxu0
  %v8754 = vpop.f32.mrb[0].mxu0
  %v8755 = vadd.f32 %v8466, %v8754
  %v8756 = vpop.f32.mrb[0].mxu0
  %8757 = vmatprep.mubr.bf16.mxu0 0
  %8758 = vmatmul.mubr.bf16.gmra.mrb[0].mxu0 %v6743
  %v8759 = vpop.f32.mrb[0].mxu0
  %v8760 = vadd.f32 %v8471, %v8759
  %v8761 = vpop.f32.mrb[0].mxu0
  %v8762 = vpop.f32.mrb[0].mxu0
  %v8763 = vadd.f32 %v8474, %v8762
  %v8764 = vpop.f32.mrb[0].mxu0
  %8765 = vmatprep.mubr.bf16.mxu0 0
  %8766 = vmatmul.mubr.bf16.gmra.mrb[0].mxu0 %v6752
  %v8767 = vpop.f32.mrb[0].mxu0
  %v8768 = vadd.f32 %v8479, %v8767
  %v8769 = vpop.f32.mrb[0].mxu0
  %v8770 = vpop.f32.mrb[0].mxu0
  %v8771 = vadd.f32 %v8482, %v8770
  %v8772 = vpop.f32.mrb[0].mxu0
  %8773 = vdwg.mxu0
  %v8774 = vld [vmem:[%s2] sm:$0x1]
  %v8776 = vlaneseq
  %v8777 = vshrl.u32 %v8776, 7
  %v8778 = vsub.s32 0, %v8777
  %v8779 = vrot.slane %v8774, %v8778
  %v8781 = vadd.f32 %v8520, %v8779
  %v8782 = vadd.f32 %v8523, %v8779
  %v8783 = vadd.f32 %v8528, %v8779
  %v8784 = vadd.f32 %v8531, %v8779
  %v8785 = vadd.f32 %v8536, %v8779
  %v8786 = vadd.f32 %v8539, %v8779
  %v8787 = vadd.f32 %v8544, %v8779
  %v8788 = vadd.f32 %v8547, %v8779
  %v8789 = vadd.f32 %v8552, %v8779
  %v8790 = vadd.f32 %v8555, %v8779
  %v8791 = vadd.f32 %v8560, %v8779
  %v8792 = vadd.f32 %v8563, %v8779
  %v8793 = vadd.f32 %v8568, %v8779
  %v8794 = vadd.f32 %v8571, %v8779
  %v8795 = vadd.f32 %v8576, %v8779
  %v8796 = vadd.f32 %v8579, %v8779
  %v8797 = vadd.f32 %v8584, %v8779
  %v8798 = vadd.f32 %v8587, %v8779
  %v8799 = vadd.f32 %v8592, %v8779
  %v8800 = vadd.f32 %v8595, %v8779
  %v8801 = vadd.f32 %v8600, %v8779
  %v8802 = vadd.f32 %v8603, %v8779
  %v8803 = vadd.f32 %v8608, %v8779
  %v8804 = vadd.f32 %v8611, %v8779
  %v8805 = vadd.f32 %v8616, %v8779
  %v8806 = vadd.f32 %v8619, %v8779
  %v8807 = vadd.f32 %v8624, %v8779
  %v8808 = vadd.f32 %v8627, %v8779
  %v8809 = vadd.f32 %v8632, %v8779
  %v8810 = vadd.f32 %v8635, %v8779
  %v8811 = vadd.f32 %v8640, %v8779
  %v8812 = vadd.f32 %v8643, %v8779
  %v8813 = vadd.f32 %v8648, %v8779
  %v8814 = vadd.f32 %v8651, %v8779
  %v8815 = vadd.f32 %v8656, %v8779
  %v8816 = vadd.f32 %v8659, %v8779
  %v8817 = vadd.f32 %v8664, %v8779
  %v8818 = vadd.f32 %v8667, %v8779
  %v8819 = vadd.f32 %v8672, %v8779
  %v8820 = vadd.f32 %v8675, %v8779
  %v8821 = vadd.f32 %v8680, %v8779
  %v8822 = vadd.f32 %v8683, %v8779
  %v8823 = vadd.f32 %v8688, %v8779
  %v8824 = vadd.f32 %v8691, %v8779
  %v8825 = vadd.f32 %v8696, %v8779
  %v8826 = vadd.f32 %v8699, %v8779
  %v8827 = vadd.f32 %v8704, %v8779
  %v8828 = vadd.f32 %v8707, %v8779
  %v8829 = vadd.f32 %v8712, %v8779
  %v8830 = vadd.f32 %v8715, %v8779
  %v8831 = vadd.f32 %v8720, %v8779
  %v8832 = vadd.f32 %v8723, %v8779
  %v8833 = vadd.f32 %v8728, %v8779
  %v8834 = vadd.f32 %v8731, %v8779
  %v8835 = vadd.f32 %v8736, %v8779
  %v8836 = vadd.f32 %v8739, %v8779
  %v8837 = vadd.f32 %v8744, %v8779
  %v8838 = vadd.f32 %v8747, %v8779
  %v8839 = vadd.f32 %v8752, %v8779
  %v8840 = vadd.f32 %v8755, %v8779
  %v8841 = vadd.f32 %v8760, %v8779
  %v8842 = vadd.f32 %v8763, %v8779
  %v8843 = vadd.f32 %v8768, %v8779
  %v8844 = vadd.f32 %v8771, %v8779
  %8845 = vst [vmem:[%s3] sm:$0xff] %v8781
  %8846 = vst [vmem:[%s3 + $0x8] sm:$0xff] %v8782
  %8847 = vst [vmem:[%s3 + $0x10] sm:$0xff] %v8783
  %8848 = vst [vmem:[%s3 + $0x18] sm:$0xff] %v8784
  %8849 = vst [vmem:[%s3 + $0x20] sm:$0xff] %v8785
  %8850 = vst [vmem:[%s3 + $0x28] sm:$0xff] %v8786
  %8851 = vst [vmem:[%s3 + $0x30] sm:$0xff] %v8787
  %8852 = vst [vmem:[%s3 + $0x38] sm:$0xff] %v8788
  %8853 = vst [vmem:[%s3 + $0x40] sm:$0xff] %v8789
  %8854 = vst [vmem:[%s3 + $0x48] sm:$0xff] %v8790
  %8855 = vst [vmem:[%s3 + $0x50] sm:$0xff] %v8791
  %8856 = vst [vmem:[%s3 + $0x58] sm:$0xff] %v8792
  %8857 = vst [vmem:[%s3 + $0x60] sm:$0xff] %v8793
  %8858 = vst [vmem:[%s3 + $0x68] sm:$0xff] %v8794
  %8859 = vst [vmem:[%s3 + $0x70] sm:$0xff] %v8795
  %8860 = vst [vmem:[%s3 + $0x78] sm:$0xff] %v8796
  %8861 = vst [vmem:[%s3 + $0x80] sm:$0xff] %v8797
  %8862 = vst [vmem:[%s3 + $0x88] sm:$0xff] %v8798
  %8863 = vst [vmem:[%s3 + $0x90] sm:$0xff] %v8799
  %8864 = vst [vmem:[%s3 + $0x98] sm:$0xff] %v8800
  %8865 = vst [vmem:[%s3 + $0xa0] sm:$0xff] %v8801
  %8866 = vst [vmem:[%s3 + $0xa8] sm:$0xff] %v8802
  %8867 = vst [vmem:[%s3 + $0xb0] sm:$0xff] %v8803
  %8868 = vst [vmem:[%s3 + $0xb8] sm:$0xff] %v8804
  %8869 = vst [vmem:[%s3 + $0xc0] sm:$0xff] %v8805
  %8870 = vst [vmem:[%s3 + $0xc8] sm:$0xff] %v8806
  %8871 = vst [vmem:[%s3 + $0xd0] sm:$0xff] %v8807
  %8872 = vst [vmem:[%s3 + $0xd8] sm:$0xff] %v8808
  %8873 = vst [vmem:[%s3 + $0xe0] sm:$0xff] %v8809
  %8874 = vst [vmem:[%s3 + $0xe8] sm:$0xff] %v8810
  %8875 = vst [vmem:[%s3 + $0xf0] sm:$0xff] %v8811
  %8876 = vst [vmem:[%s3 + $0xf8] sm:$0xff] %v8812
  %8877 = vst [vmem:[%s3 + $0x100] sm:$0xff] %v8813
  %8878 = vst [vmem:[%s3 + $0x108] sm:$0xff] %v8814
  %8879 = vst [vmem:[%s3 + $0x110] sm:$0xff] %v8815
  %8880 = vst [vmem:[%s3 + $0x118] sm:$0xff] %v8816
  %8881 = vst [vmem:[%s3 + $0x120] sm:$0xff] %v8817
  %8882 = vst [vmem:[%s3 + $0x128] sm:$0xff] %v8818
  %8883 = vst [vmem:[%s3 + $0x130] sm:$0xff] %v8819
  %8884 = vst [vmem:[%s3 + $0x138] sm:$0xff] %v8820
  %8885 = vst [vmem:[%s3 + $0x140] sm:$0xff] %v8821
  %8886 = vst [vmem:[%s3 + $0x148] sm:$0xff] %v8822
  %8887 = vst [vmem:[%s3 + $0x150] sm:$0xff] %v8823
  %8888 = vst [vmem:[%s3 + $0x158] sm:$0xff] %v8824
  %8889 = vst [vmem:[%s3 + $0x160] sm:$0xff] %v8825
  %8890 = vst [vmem:[%s3 + $0x168] sm:$0xff] %v8826
  %8891 = vst [vmem:[%s3 + $0x170] sm:$0xff] %v8827
  %8892 = vst [vmem:[%s3 + $0x178] sm:$0xff] %v8828
  %8893 = vst [vmem:[%s3 + $0x180] sm:$0xff] %v8829
  %8894 = vst [vmem:[%s3 + $0x188] sm:$0xff] %v8830
  %8895 = vst [vmem:[%s3 + $0x190] sm:$0xff] %v8831
  %8896 = vst [vmem:[%s3 + $0x198] sm:$0xff] %v8832
  %8897 = vst [vmem:[%s3 + $0x1a0] sm:$0xff] %v8833
  %8898 = vst [vmem:[%s3 + $0x1a8] sm:$0xff] %v8834
  %8899 = vst [vmem:[%s3 + $0x1b0] sm:$0xff] %v8835
  %8900 = vst [vmem:[%s3 + $0x1b8] sm:$0xff] %v8836
  %8901 = vst [vmem:[%s3 + $0x1c0] sm:$0xff] %v8837
  %8902 = vst [vmem:[%s3 + $0x1c8] sm:$0xff] %v8838
  %8903 = vst [vmem:[%s3 + $0x1d0] sm:$0xff] %v8839
  %8904 = vst [vmem:[%s3 + $0x1d8] sm:$0xff] %v8840
  %8905 = vst [vmem:[%s3 + $0x1e0] sm:$0xff] %v8841
  %8906 = vst [vmem:[%s3 + $0x1e8] sm:$0xff] %v8842
  %8907 = vst [vmem:[%s3 + $0x1f0] sm:$0xff] %v8843
  %8908 = vst [vmem:[%s3 + $0x1f8] sm:$0xff] %v8844
  // Predicated region
  $region14: #{tada_conv2d.1} parent=0 // pred_check
    _
  $region15: #{tada_conv2d.1} parent=0 // pred_check_branch
    %8910 = sbr.rel (0) target = $region17
  $region16: #{tada_conv2d.1} parent=0 // pred_region
    _
  $region17: #{tada_conv2d.1} parent=0 // pred_fallthru
    _
  // Predicated region
  $region18: #{tada_conv2d.1} parent=0 // pred_check
    _
  $region19: #{tada_conv2d.1} parent=0 // pred_check_branch
    %8912 = sbr.rel (0) target = $region21
  $region20: #{tada_conv2d.1} parent=0 // pred_region
    _
  $region21: #{tada_conv2d.1} parent=0 // pred_fallthru
    _

</llo_original>
